<compile_context>
chip_gen: v7x
topology: tpu7x:2x2x1
jax: 0.10.0
libtpu: 0.0.40
codegen_flags: <defaults>
</compile_context>

<pallas_src>
import math

import numpy as np
import jax
import jax.numpy as jnp
from jax.experimental import pallas as pl
from jax.experimental.pallas import tpu as pltpu


_SELU_ALPHA = 1.6732632423543772848170429916717
_SELU_SCALE = 1.0507009873554804934193349852946


def _selu(x):
    return _SELU_SCALE * jnp.where(x > 0, x, _SELU_ALPHA * (jnp.exp(x) - 1.0))


def _round_up(n, m):
    return ((n + m - 1) // m) * m


def _conv_shift(s, w_ref, b_ref, b, h_in):
    """Valid 3x3 conv via 3 shift-accumulated MXU matmuls (no operand replication).

    s:     (h_in*b, Win*Cin) bf16; row r of the image occupies sublanes [r*b, (r+1)*b),
           lanes ordered width-major / channel-minor.
    w_ref: (3, Win*Cin, Wout*Cout) banded weight; band di applies to input row i+di.
    b_ref: (1, Wout*Cout) bias tiled across width.
    Returns (h_out*b, Wout*Cout) f32 with h_out = h_in - 2, stacked the same way.
    """
    h_out = h_in - 2
    acc = jnp.dot(s[0:h_out * b], w_ref[0], preferred_element_type=jnp.float32)
    acc = acc + jnp.dot(s[b:(h_out + 1) * b], w_ref[1],
                        preferred_element_type=jnp.float32)
    acc = acc + jnp.dot(s[2 * b:(h_out + 2) * b], w_ref[2],
                        preferred_element_type=jnp.float32)
    return acc + b_ref[...]


def _pool_selu(acc, b, h_pool, w_pool, c):
    """MaxPool2d(2, floor semantics) + SELU on a sublane-stacked conv output, cast bf16.

    acc: (h_conv*b, w_conv*c) f32.  Returns (h_pool*b, w_pool*c) bf16 stacked the same
    way (directly usable by the next _conv_shift).  SELU after max is exact since SELU
    is strictly increasing -> 4x fewer transcendentals.
    """
    rows = [jnp.maximum(acc[(2 * io) * b:(2 * io + 1) * b],
                        acc[(2 * io + 1) * b:(2 * io + 2) * b])
            for io in range(h_pool)]
    hm = rows[0] if h_pool == 1 else jnp.concatenate(rows, axis=0)
    # TODO(synk): on v6e/v7x the width decimation below could be folded into the next
    # layer's banded weights (zero columns at odd width positions) to remove this narrow
    # c-lane slice/concat work at ~2x MXU FLOPs; kept explicit so v5e stays off its
    # (much smaller) MXU roofline.
    blocks = [jnp.maximum(hm[:, (2 * jo) * c:(2 * jo + 1) * c],
                          hm[:, (2 * jo + 1) * c:(2 * jo + 2) * c])
              for jo in range(w_pool)]
    pooled = blocks[0] if w_pool == 1 else jnp.concatenate(blocks, axis=1)
    return _selu(pooled).astype(jnp.bfloat16)


def _encoder_b_kernel(x_ref, eps_ref, w1_ref, b1_ref, w2_ref, b2_ref,
                      w3_ref, b3_ref, wh_ref, bh_ref, out_ref):
    x = x_ref[...]                                           # (B_TILE, 784) bf16
    b = x.shape[0]

    # ---- conv block 1: 1 -> 32 ch, 28x28 -> 26x26, pool -> 13x13 ----
    # Each output row's 3-row input window is already lane-contiguous in x.
    stacked1 = jnp.concatenate([x[:, i * 28:(i + 3) * 28] for i in range(26)],
                               axis=0)                       # (26B, 84) bf16
    acc1 = jnp.dot(stacked1, w1_ref[...],
                   preferred_element_type=jnp.float32) + b1_ref[...]   # (26B, 26*32)
    s2 = _pool_selu(acc1, b, h_pool=13, w_pool=13, c=32)     # (13B, 13*32) bf16

    # ---- conv block 2: 32 -> 64 ch, 13x13 -> 11x11, pool -> 5x5 ----
    acc2 = _conv_shift(s2, w2_ref, b2_ref, b, h_in=13)       # (11B, 11*64) f32
    s3 = _pool_selu(acc2, b, h_pool=5, w_pool=5, c=64)       # (5B, 5*64) bf16

    # ---- conv block 3: 64 -> n_hidden ch, 5x5 -> 3x3, pool -> 1x1 ----
    n_hidden = w3_ref.shape[2] // 3
    acc3 = _conv_shift(s3, w3_ref, b3_ref, b, h_in=5)        # (3B, 3*n_hidden) f32
    q = _pool_selu(acc3, b, h_pool=1, w_pool=1, c=n_hidden)  # (B, n_hidden) bf16

    # ---- fused mean/var heads + reparameterized sample ----
    hv = jnp.dot(q, wh_ref[...],
                 preferred_element_type=jnp.float32) + bh_ref[...]     # (B, 2*n_out)
    n_out = hv.shape[1] // 2
    q_m = hv[:, :n_out]
    u = jnp.clip(hv[:, n_out:], -17.0, 10.0)
    q_v = jnp.exp(u)
    latent = q_m + jnp.sqrt(q_v) * eps_ref[...]
    slab = jnp.concatenate([q_m, q_v, latent], axis=1)       # (B, 3*n_out)
    pad = out_ref.shape[1] - slab.shape[1]
    if pad > 0:   # lane-pad to a 128 multiple -> unmasked stores
        slab = jnp.concatenate([slab, jnp.zeros((b, pad), jnp.float32)], axis=1)
    out_ref[...] = slab


def encoder_b_forward(x, eps, packed, *, b_tile=128):
    """x: (B, 784) float; eps: (B, n_output) standard-normal noise for rsample.
    packed: output of pack_params().  Returns dict(q_m, q_v, latent, sum_last=True).

    b_tile: batch rows per grid step.  128 is a good default on v5e/v6e (consider 256 on
    v6e); keep 64-128 on v7x (64 MiB VMEM) and note that only v7x (2 TCs) benefits from
    having >=2 (ideally an even number of) grid tiles.
    """
    B = x.shape[0]
    n_out = packed["b_heads"].shape[1] // 2
    b_tile_eff = min(_round_up(b_tile, 8), _round_up(B, 8))
    n_tiles = pl.cdiv(B, b_tile_eff)
    b_pad = n_tiles * b_tile_eff
    # Tail-tile rows are zero-padded; they produce bias-only garbage inside the kernel and
    # are sliced off below.  (Do not sum/reduce over the padded batch inside the kernel.)
    x_p = jnp.pad(x.astype(jnp.bfloat16), ((0, b_pad - B), (0, 0)))
    eps_p = jnp.pad(eps.astype(jnp.float32), ((0, b_pad - B), (0, 0)))
    out_cols = _round_up(3 * n_out, 128)

    weight_args = (packed["w1"], packed["b1"], packed["w2"], packed["b2"],
                   packed["w3"], packed["b3"], packed["w_heads"], packed["b_heads"])

    def batch_spec(n_cols):
        return pl.BlockSpec((b_tile_eff, n_cols), lambda i: (i, 0))

    def const_spec(a):  # full array, VMEM-resident across grid steps
        nd = a.ndim
        return pl.BlockSpec(a.shape, lambda i, nd=nd: (0,) * nd)

    out = pl.pallas_call(
        _encoder_b_kernel,
        out_shape=jax.ShapeDtypeStruct((b_pad, out_cols), jnp.float32),
        grid=(n_tiles,),
        in_specs=[batch_spec(784), batch_spec(n_out)]
                 + [const_spec(a) for a in weight_args],
        out_specs=batch_spec(out_cols),
        compiler_params=pltpu.CompilerParams(
            dimension_semantics=("parallel",),
            vmem_limit_bytes=40 * 1024 * 1024),   # fits v7x's 64 MiB VMEM with headroom
    )(x_p, eps_p, *weight_args)

    q_m = out[:B, :n_out]
    q_v = out[:B, n_out:2 * n_out]
    latent = out[:B, 2 * n_out:3 * n_out]
    return dict(q_m=q_m, q_v=q_v, latent=latent, sum_last=True)


# ----------------------------- parameters ------------------------------------

def init_raw_params(key, n_hidden, n_output):
    """PyTorch-layout params: conv weights (Cout, Cin, 3, 3), linear weights (out, in)."""
    def conv(k, c_in, c_out):
        kw, kb = jax.random.split(k)
        bound = 1.0 / math.sqrt(c_in * 9)
        w = jax.random.uniform(kw, (c_out, c_in, 3, 3), jnp.float32, -bound, bound)
        b = jax.random.uniform(kb, (c_out,), jnp.float32, -bound, bound)
        return w, b

    def linear(k, fan_in, fan_out):
        kw, kb = jax.random.split(k)
        bound = 1.0 / math.sqrt(fan_in)
        w = jax.random.uniform(kw, (fan_out, fan_in), jnp.float32, -bound, bound)
        b = jax.random.uniform(kb, (fan_out,), jnp.float32, -bound, bound)
        return w, b

    k1, k2, k3, k4, k5 = jax.random.split(key, 5)
    w1, b1 = conv(k1, 1, 32)
    w2, b2 = conv(k2, 32, 64)
    w3, b3 = conv(k3, 64, n_hidden)
    wm, bm = linear(k4, n_hidden, n_output)
    wv, bv = linear(k5, n_hidden, n_output)
    return dict(w1=w1, b1=b1, w2=w2, b2=b2, w3=w3, b3=b3,
                wm=wm, bm=bm, wv=wv, bv=bv)


def _banded_conv_matrix(w_torch, w_in):
    """(Cout, Cin, 3, 3) torch conv kernel -> banded weights (3, w_in*Cin, (w_in-2)*Cout)
    such that sum_di row_{i+di} @ M[di] == valid-3x3-conv output row i, with rows
    lane-packed width-major / channel-minor."""
    w = np.transpose(np.asarray(w_torch, dtype=np.float32), (2, 3, 1, 0))  # (3,3,Cin,Cout)
    c_in, c_out = w.shape[2], w.shape[3]
    w_out = w_in - 2
    m = np.zeros((3, w_in * c_in, w_out * c_out), dtype=np.float32)
    for di in range(3):
        for j in range(w_out):
            for dj in range(3):
                p = j + dj
                m[di, p * c_in:(p + 1) * c_in, j * c_out:(j + 1) * c_out] = w[di, dj]
    return m


def pack_params(raw, compute_dtype=jnp.bfloat16):
    """Host-side packing: banded conv weights, width-tiled biases, fused mean|var head.
    Layer 1 is flattened to 2-D (its 3-row window is lane-contiguous in the input);
    layers 2/3 keep the (3, Win*Cin, Wout*Cout) form for shift-accumulated matmuls."""
    w1 = _banded_conv_matrix(raw["w1"], 28).reshape(3 * 28, 26 * 32)   # (84,   832)
    w2 = _banded_conv_matrix(raw["w2"], 13)                            # (3, 416, 704)
    w3 = _banded_conv_matrix(raw["w3"], 5)                             # (3, 320, 3*n_hidden)
    b1 = np.tile(np.asarray(raw["b1"], np.float32), 26)[None, :]
    b2 = np.tile(np.asarray(raw["b2"], np.float32), 11)[None, :]
    b3 = np.tile(np.asarray(raw["b3"], np.float32), 3)[None, :]
    w_heads = np.concatenate([np.asarray(raw["wm"], np.float32).T,
                              np.asarray(raw["wv"], np.float32).T], axis=1)
    b_heads = np.concatenate([np.asarray(raw["bm"], np.float32),
                              np.asarray(raw["bv"], np.float32)])[None, :]
    cd = compute_dtype
    return dict(w1=jnp.asarray(w1, cd), b1=jnp.asarray(b1),
                w2=jnp.asarray(w2, cd), b2=jnp.asarray(b2),
                w3=jnp.asarray(w3, cd), b3=jnp.asarray(b3),
                w_heads=jnp.asarray(w_heads, cd), b_heads=jnp.asarray(b_heads))


# ----------------------------- reference ------------------------------------

def _maxpool_nhwc(y):
    B, H, W, C = y.shape
    ho, wo = H // 2, W // 2
    return y[:, :2 * ho, :2 * wo, :].reshape(B, ho, 2, wo, 2, C).max(axis=(2, 4))


def reference_forward(x, eps, raw, compute_dtype=jnp.bfloat16):
    """Pure-JAX reference (standard conv/pool ops) mirroring the kernel's precision."""
    B = x.shape[0]
    act = x.reshape(B, 28, 28, 1)
    for wk, bk in (("w1", "b1"), ("w2", "b2"), ("w3", "b3")):
        w_hwio = jnp.transpose(raw[wk], (2, 3, 1, 0))
        y = jax.lax.conv_general_dilated(
            act.astype(compute_dtype), w_hwio.astype(compute_dtype),
            window_strides=(1, 1), padding="VALID",
            dimension_numbers=("NHWC", "HWIO", "NHWC"),
            preferred_element_type=jnp.float32) + raw[bk][None, None, None, :]
        act = _maxpool_nhwc(jax.nn.selu(y))
    q = act.reshape(B, -1)
    qc = q.astype(compute_dtype)
    q_m = jnp.dot(qc, raw["wm"].T.astype(compute_dtype),
                  preferred_element_type=jnp.float32) + raw["bm"]
    u = jnp.clip(jnp.dot(qc, raw["wv"].T.astype(compute_dtype),
                         preferred_element_type=jnp.float32) + raw["bv"], -17.0, 10.0)
    q_v = jnp.exp(u)
    latent = q_m + jnp.sqrt(q_v) * eps
    return q_m, q_v, latent


if __name__ == "__main__":
    # Small shapes consistent with the module: x must be (B, 784) (28x28 images).
    # b_tile=8 here exercises the multi-tile grid + tail-padding path; use the
    # default b_tile=128 (v5e/v6e; 64-128 on v7x) for real batches.
    B, n_hidden, n_output = 20, 64, 16
    compute_dtype = jnp.bfloat16   # MXU-native on v5e/v6e/v7x; accumulation stays f32

    key = jax.random.PRNGKey(0)
    k_params, k_x, k_eps = jax.random.split(key, 3)
    raw = init_raw_params(k_params, n_hidden, n_output)
    packed = pack_params(raw, compute_dtype)

    x = jax.random.uniform(k_x, (B, 784), jnp.float32)        # flattened 28x28 images
    eps = jax.random.normal(k_eps, (B, n_output), jnp.float32)

    out = encoder_b_forward(x, eps, packed, b_tile=8)
    jax.block_until_ready(out)

    q_m_ref, q_v_ref, latent_ref = reference_forward(x, eps, raw, compute_dtype)

    def check(name, got, ref):
        err = float(jnp.max(jnp.abs(got - ref)))
        scale = max(1.0, float(jnp.max(jnp.abs(ref))))
        assert err <= 2e-2 * scale, f"{name} mismatch: max|diff|={err}, scale={scale}"

    check("q_m", out["q_m"], q_m_ref)
    check("q_v", out["q_v"], q_v_ref)
    check("latent", out["latent"], latent_ref)

    print("KERNEL_OK")
</pallas_src>

<mosaic_0001>
module attributes {stable_mosaic.version = 11 : i64} {
  func.func @_encoder_b_kernel(%arg0: i32, %arg1: memref<8x784xbf16, #tpu.memory_space<vmem>>, %arg2: memref<8x16xf32, #tpu.memory_space<vmem>>, %arg3: memref<84x832xbf16, #tpu.memory_space<vmem>>, %arg4: memref<1x832xf32, #tpu.memory_space<vmem>>, %arg5: memref<3x416x704xbf16, #tpu.memory_space<vmem>>, %arg6: memref<1x704xf32, #tpu.memory_space<vmem>>, %arg7: memref<3x320x192xbf16, #tpu.memory_space<vmem>>, %arg8: memref<1x192xf32, #tpu.memory_space<vmem>>, %arg9: memref<64x32xbf16, #tpu.memory_space<vmem>>, %arg10: memref<1x32xf32, #tpu.memory_space<vmem>>, %arg11: memref<8x128xf32, #tpu.memory_space<vmem>>) attributes {dimension_semantics = [#tpu.dimension_semantics<parallel>], iteration_bounds = array<i64: 3>, scalar_prefetch = 0 : i64, scratch_operands = 0 : i64, tpu.core_type = #tpu.core_type<tc>, window_params = [{transform_indices = @transform_0, window_bounds = array<i64: 8, 784>}, {transform_indices = @transform_1, window_bounds = array<i64: 8, 16>}, {pipeline_mode = #tpu.pipeline_mode<synchronous>, transform_indices = @transform_2, window_bounds = array<i64: 84, 832>}, {pipeline_mode = #tpu.pipeline_mode<synchronous>, transform_indices = @transform_3, window_bounds = array<i64: 1, 832>}, {pipeline_mode = #tpu.pipeline_mode<synchronous>, transform_indices = @transform_4, window_bounds = array<i64: 3, 416, 704>}, {pipeline_mode = #tpu.pipeline_mode<synchronous>, transform_indices = @transform_5, window_bounds = array<i64: 1, 704>}, {pipeline_mode = #tpu.pipeline_mode<synchronous>, transform_indices = @transform_6, window_bounds = array<i64: 3, 320, 192>}, {pipeline_mode = #tpu.pipeline_mode<synchronous>, transform_indices = @transform_7, window_bounds = array<i64: 1, 192>}, {pipeline_mode = #tpu.pipeline_mode<synchronous>, transform_indices = @transform_8, window_bounds = array<i64: 64, 32>}, {pipeline_mode = #tpu.pipeline_mode<synchronous>, transform_indices = @transform_9, window_bounds = array<i64: 1, 32>}, {transform_indices = @transform_10, window_bounds = array<i64: 8, 128>}]} {
    %c0 = arith.constant 0 : index
    %c0_0 = arith.constant 0 : index
    %0 = vector.load %arg1[%c0, %c0_0] : memref<8x784xbf16, #tpu.memory_space<vmem>>, vector<8x784xbf16>
    %1 = vector.extract_strided_slice %0 {offsets = [0, 0], sizes = [8, 84], strides = [1, 1]} : vector<8x784xbf16> to vector<8x84xbf16>
    %2 = vector.extract_strided_slice %0 {offsets = [0, 28], sizes = [8, 84], strides = [1, 1]} : vector<8x784xbf16> to vector<8x84xbf16>
    %3 = vector.extract_strided_slice %0 {offsets = [0, 56], sizes = [8, 84], strides = [1, 1]} : vector<8x784xbf16> to vector<8x84xbf16>
    %4 = vector.extract_strided_slice %0 {offsets = [0, 84], sizes = [8, 84], strides = [1, 1]} : vector<8x784xbf16> to vector<8x84xbf16>
    %5 = vector.extract_strided_slice %0 {offsets = [0, 112], sizes = [8, 84], strides = [1, 1]} : vector<8x784xbf16> to vector<8x84xbf16>
    %6 = vector.extract_strided_slice %0 {offsets = [0, 140], sizes = [8, 84], strides = [1, 1]} : vector<8x784xbf16> to vector<8x84xbf16>
    %7 = vector.extract_strided_slice %0 {offsets = [0, 168], sizes = [8, 84], strides = [1, 1]} : vector<8x784xbf16> to vector<8x84xbf16>
    %8 = vector.extract_strided_slice %0 {offsets = [0, 196], sizes = [8, 84], strides = [1, 1]} : vector<8x784xbf16> to vector<8x84xbf16>
    %9 = vector.extract_strided_slice %0 {offsets = [0, 224], sizes = [8, 84], strides = [1, 1]} : vector<8x784xbf16> to vector<8x84xbf16>
    %10 = vector.extract_strided_slice %0 {offsets = [0, 252], sizes = [8, 84], strides = [1, 1]} : vector<8x784xbf16> to vector<8x84xbf16>
    %11 = vector.extract_strided_slice %0 {offsets = [0, 280], sizes = [8, 84], strides = [1, 1]} : vector<8x784xbf16> to vector<8x84xbf16>
    %12 = vector.extract_strided_slice %0 {offsets = [0, 308], sizes = [8, 84], strides = [1, 1]} : vector<8x784xbf16> to vector<8x84xbf16>
    %13 = vector.extract_strided_slice %0 {offsets = [0, 336], sizes = [8, 84], strides = [1, 1]} : vector<8x784xbf16> to vector<8x84xbf16>
    %14 = vector.extract_strided_slice %0 {offsets = [0, 364], sizes = [8, 84], strides = [1, 1]} : vector<8x784xbf16> to vector<8x84xbf16>
    %15 = vector.extract_strided_slice %0 {offsets = [0, 392], sizes = [8, 84], strides = [1, 1]} : vector<8x784xbf16> to vector<8x84xbf16>
    %16 = vector.extract_strided_slice %0 {offsets = [0, 420], sizes = [8, 84], strides = [1, 1]} : vector<8x784xbf16> to vector<8x84xbf16>
    %17 = vector.extract_strided_slice %0 {offsets = [0, 448], sizes = [8, 84], strides = [1, 1]} : vector<8x784xbf16> to vector<8x84xbf16>
    %18 = vector.extract_strided_slice %0 {offsets = [0, 476], sizes = [8, 84], strides = [1, 1]} : vector<8x784xbf16> to vector<8x84xbf16>
    %19 = vector.extract_strided_slice %0 {offsets = [0, 504], sizes = [8, 84], strides = [1, 1]} : vector<8x784xbf16> to vector<8x84xbf16>
    %20 = vector.extract_strided_slice %0 {offsets = [0, 532], sizes = [8, 84], strides = [1, 1]} : vector<8x784xbf16> to vector<8x84xbf16>
    %21 = vector.extract_strided_slice %0 {offsets = [0, 560], sizes = [8, 84], strides = [1, 1]} : vector<8x784xbf16> to vector<8x84xbf16>
    %22 = vector.extract_strided_slice %0 {offsets = [0, 588], sizes = [8, 84], strides = [1, 1]} : vector<8x784xbf16> to vector<8x84xbf16>
    %23 = vector.extract_strided_slice %0 {offsets = [0, 616], sizes = [8, 84], strides = [1, 1]} : vector<8x784xbf16> to vector<8x84xbf16>
    %24 = vector.extract_strided_slice %0 {offsets = [0, 644], sizes = [8, 84], strides = [1, 1]} : vector<8x784xbf16> to vector<8x84xbf16>
    %25 = vector.extract_strided_slice %0 {offsets = [0, 672], sizes = [8, 84], strides = [1, 1]} : vector<8x784xbf16> to vector<8x84xbf16>
    %26 = vector.extract_strided_slice %0 {offsets = [0, 700], sizes = [8, 84], strides = [1, 1]} : vector<8x784xbf16> to vector<8x84xbf16>
    %27 = tpu.concatenate %1, %2, %3, %4, %5, %6, %7, %8, %9, %10, %11, %12, %13, %14, %15, %16 in 0 : vector<8x84xbf16>, vector<8x84xbf16>, vector<8x84xbf16>, vector<8x84xbf16>, vector<8x84xbf16>, vector<8x84xbf16>, vector<8x84xbf16>, vector<8x84xbf16>, vector<8x84xbf16>, vector<8x84xbf16>, vector<8x84xbf16>, vector<8x84xbf16>, vector<8x84xbf16>, vector<8x84xbf16>, vector<8x84xbf16>, vector<8x84xbf16> -> vector<128x84xbf16>
    %28 = tpu.concatenate %17, %18, %19, %20, %21, %22, %23, %24, %25, %26 in 0 : vector<8x84xbf16>, vector<8x84xbf16>, vector<8x84xbf16>, vector<8x84xbf16>, vector<8x84xbf16>, vector<8x84xbf16>, vector<8x84xbf16>, vector<8x84xbf16>, vector<8x84xbf16>, vector<8x84xbf16> -> vector<80x84xbf16>
    %29 = tpu.concatenate %27, %28 in 0 : vector<128x84xbf16>, vector<80x84xbf16> -> vector<208x84xbf16>
    %c0_1 = arith.constant 0 : index
    %c0_2 = arith.constant 0 : index
    %30 = vector.load %arg3[%c0_1, %c0_2] : memref<84x832xbf16, #tpu.memory_space<vmem>>, vector<84x832xbf16>
    %cst = arith.constant dense<0.000000e+00> : vector<208x832xf32>
    %31 = tpu.matmul %29, %30, %cst {dimension_numbers = #tpu.dot_dimension_numbers<[1], [0], [0], [1], [0, 0, 1, 1], [], []>} : vector<208x84xbf16>, vector<84x832xbf16>, vector<208x832xf32> -> vector<208x832xf32>
    %c0_3 = arith.constant 0 : index
    %c0_4 = arith.constant 0 : index
    %32 = vector.load %arg4[%c0_3, %c0_4] : memref<1x832xf32, #tpu.memory_space<vmem>>, vector<1x832xf32>
    %33 = vector.broadcast %32 : vector<1x832xf32> to vector<208x832xf32>
    %34 = arith.addf %31, %33 : vector<208x832xf32>
    %35 = vector.extract_strided_slice %34 {offsets = [0, 0], sizes = [8, 832], strides = [1, 1]} : vector<208x832xf32> to vector<8x832xf32>
    %36 = vector.extract_strided_slice %34 {offsets = [8, 0], sizes = [8, 832], strides = [1, 1]} : vector<208x832xf32> to vector<8x832xf32>
    %37 = arith.maximumf %35, %36 : vector<8x832xf32>
    %38 = vector.extract_strided_slice %34 {offsets = [16, 0], sizes = [8, 832], strides = [1, 1]} : vector<208x832xf32> to vector<8x832xf32>
    %39 = vector.extract_strided_slice %34 {offsets = [24, 0], sizes = [8, 832], strides = [1, 1]} : vector<208x832xf32> to vector<8x832xf32>
    %40 = arith.maximumf %38, %39 : vector<8x832xf32>
    %41 = vector.extract_strided_slice %34 {offsets = [32, 0], sizes = [8, 832], strides = [1, 1]} : vector<208x832xf32> to vector<8x832xf32>
    %42 = vector.extract_strided_slice %34 {offsets = [40, 0], sizes = [8, 832], strides = [1, 1]} : vector<208x832xf32> to vector<8x832xf32>
    %43 = arith.maximumf %41, %42 : vector<8x832xf32>
    %44 = vector.extract_strided_slice %34 {offsets = [48, 0], sizes = [8, 832], strides = [1, 1]} : vector<208x832xf32> to vector<8x832xf32>
    %45 = vector.extract_strided_slice %34 {offsets = [56, 0], sizes = [8, 832], strides = [1, 1]} : vector<208x832xf32> to vector<8x832xf32>
    %46 = arith.maximumf %44, %45 : vector<8x832xf32>
    %47 = vector.extract_strided_slice %34 {offsets = [64, 0], sizes = [8, 832], strides = [1, 1]} : vector<208x832xf32> to vector<8x832xf32>
    %48 = vector.extract_strided_slice %34 {offsets = [72, 0], sizes = [8, 832], strides = [1, 1]} : vector<208x832xf32> to vector<8x832xf32>
    %49 = arith.maximumf %47, %48 : vector<8x832xf32>
    %50 = vector.extract_strided_slice %34 {offsets = [80, 0], sizes = [8, 832], strides = [1, 1]} : vector<208x832xf32> to vector<8x832xf32>
    %51 = vector.extract_strided_slice %34 {offsets = [88, 0], sizes = [8, 832], strides = [1, 1]} : vector<208x832xf32> to vector<8x832xf32>
    %52 = arith.maximumf %50, %51 : vector<8x832xf32>
    %53 = vector.extract_strided_slice %34 {offsets = [96, 0], sizes = [8, 832], strides = [1, 1]} : vector<208x832xf32> to vector<8x832xf32>
    %54 = vector.extract_strided_slice %34 {offsets = [104, 0], sizes = [8, 832], strides = [1, 1]} : vector<208x832xf32> to vector<8x832xf32>
    %55 = arith.maximumf %53, %54 : vector<8x832xf32>
    %56 = vector.extract_strided_slice %34 {offsets = [112, 0], sizes = [8, 832], strides = [1, 1]} : vector<208x832xf32> to vector<8x832xf32>
    %57 = vector.extract_strided_slice %34 {offsets = [120, 0], sizes = [8, 832], strides = [1, 1]} : vector<208x832xf32> to vector<8x832xf32>
    %58 = arith.maximumf %56, %57 : vector<8x832xf32>
    %59 = vector.extract_strided_slice %34 {offsets = [128, 0], sizes = [8, 832], strides = [1, 1]} : vector<208x832xf32> to vector<8x832xf32>
    %60 = vector.extract_strided_slice %34 {offsets = [136, 0], sizes = [8, 832], strides = [1, 1]} : vector<208x832xf32> to vector<8x832xf32>
    %61 = arith.maximumf %59, %60 : vector<8x832xf32>
    %62 = vector.extract_strided_slice %34 {offsets = [144, 0], sizes = [8, 832], strides = [1, 1]} : vector<208x832xf32> to vector<8x832xf32>
    %63 = vector.extract_strided_slice %34 {offsets = [152, 0], sizes = [8, 832], strides = [1, 1]} : vector<208x832xf32> to vector<8x832xf32>
    %64 = arith.maximumf %62, %63 : vector<8x832xf32>
    %65 = vector.extract_strided_slice %34 {offsets = [160, 0], sizes = [8, 832], strides = [1, 1]} : vector<208x832xf32> to vector<8x832xf32>
    %66 = vector.extract_strided_slice %34 {offsets = [168, 0], sizes = [8, 832], strides = [1, 1]} : vector<208x832xf32> to vector<8x832xf32>
    %67 = arith.maximumf %65, %66 : vector<8x832xf32>
    %68 = vector.extract_strided_slice %34 {offsets = [176, 0], sizes = [8, 832], strides = [1, 1]} : vector<208x832xf32> to vector<8x832xf32>
    %69 = vector.extract_strided_slice %34 {offsets = [184, 0], sizes = [8, 832], strides = [1, 1]} : vector<208x832xf32> to vector<8x832xf32>
    %70 = arith.maximumf %68, %69 : vector<8x832xf32>
    %71 = vector.extract_strided_slice %34 {offsets = [192, 0], sizes = [8, 832], strides = [1, 1]} : vector<208x832xf32> to vector<8x832xf32>
    %72 = vector.extract_strided_slice %34 {offsets = [200, 0], sizes = [8, 832], strides = [1, 1]} : vector<208x832xf32> to vector<8x832xf32>
    %73 = arith.maximumf %71, %72 : vector<8x832xf32>
    %74 = tpu.concatenate %37, %40, %43, %46, %49, %52, %55, %58, %61, %64, %67, %70, %73 in 0 : vector<8x832xf32>, vector<8x832xf32>, vector<8x832xf32>, vector<8x832xf32>, vector<8x832xf32>, vector<8x832xf32>, vector<8x832xf32>, vector<8x832xf32>, vector<8x832xf32>, vector<8x832xf32>, vector<8x832xf32>, vector<8x832xf32>, vector<8x832xf32> -> vector<104x832xf32>
    %75 = vector.extract_strided_slice %74 {offsets = [0, 0], sizes = [104, 32], strides = [1, 1]} : vector<104x832xf32> to vector<104x32xf32>
    %76 = vector.extract_strided_slice %74 {offsets = [0, 32], sizes = [104, 32], strides = [1, 1]} : vector<104x832xf32> to vector<104x32xf32>
    %77 = arith.maximumf %75, %76 : vector<104x32xf32>
    %78 = vector.extract_strided_slice %74 {offsets = [0, 64], sizes = [104, 32], strides = [1, 1]} : vector<104x832xf32> to vector<104x32xf32>
    %79 = vector.extract_strided_slice %74 {offsets = [0, 96], sizes = [104, 32], strides = [1, 1]} : vector<104x832xf32> to vector<104x32xf32>
    %80 = arith.maximumf %78, %79 : vector<104x32xf32>
    %81 = vector.extract_strided_slice %74 {offsets = [0, 128], sizes = [104, 32], strides = [1, 1]} : vector<104x832xf32> to vector<104x32xf32>
    %82 = vector.extract_strided_slice %74 {offsets = [0, 160], sizes = [104, 32], strides = [1, 1]} : vector<104x832xf32> to vector<104x32xf32>
    %83 = arith.maximumf %81, %82 : vector<104x32xf32>
    %84 = vector.extract_strided_slice %74 {offsets = [0, 192], sizes = [104, 32], strides = [1, 1]} : vector<104x832xf32> to vector<104x32xf32>
    %85 = vector.extract_strided_slice %74 {offsets = [0, 224], sizes = [104, 32], strides = [1, 1]} : vector<104x832xf32> to vector<104x32xf32>
    %86 = arith.maximumf %84, %85 : vector<104x32xf32>
    %87 = vector.extract_strided_slice %74 {offsets = [0, 256], sizes = [104, 32], strides = [1, 1]} : vector<104x832xf32> to vector<104x32xf32>
    %88 = vector.extract_strided_slice %74 {offsets = [0, 288], sizes = [104, 32], strides = [1, 1]} : vector<104x832xf32> to vector<104x32xf32>
    %89 = arith.maximumf %87, %88 : vector<104x32xf32>
    %90 = vector.extract_strided_slice %74 {offsets = [0, 320], sizes = [104, 32], strides = [1, 1]} : vector<104x832xf32> to vector<104x32xf32>
    %91 = vector.extract_strided_slice %74 {offsets = [0, 352], sizes = [104, 32], strides = [1, 1]} : vector<104x832xf32> to vector<104x32xf32>
    %92 = arith.maximumf %90, %91 : vector<104x32xf32>
    %93 = vector.extract_strided_slice %74 {offsets = [0, 384], sizes = [104, 32], strides = [1, 1]} : vector<104x832xf32> to vector<104x32xf32>
    %94 = vector.extract_strided_slice %74 {offsets = [0, 416], sizes = [104, 32], strides = [1, 1]} : vector<104x832xf32> to vector<104x32xf32>
    %95 = arith.maximumf %93, %94 : vector<104x32xf32>
    %96 = vector.extract_strided_slice %74 {offsets = [0, 448], sizes = [104, 32], strides = [1, 1]} : vector<104x832xf32> to vector<104x32xf32>
    %97 = vector.extract_strided_slice %74 {offsets = [0, 480], sizes = [104, 32], strides = [1, 1]} : vector<104x832xf32> to vector<104x32xf32>
    %98 = arith.maximumf %96, %97 : vector<104x32xf32>
    %99 = vector.extract_strided_slice %74 {offsets = [0, 512], sizes = [104, 32], strides = [1, 1]} : vector<104x832xf32> to vector<104x32xf32>
    %100 = vector.extract_strided_slice %74 {offsets = [0, 544], sizes = [104, 32], strides = [1, 1]} : vector<104x832xf32> to vector<104x32xf32>
    %101 = arith.maximumf %99, %100 : vector<104x32xf32>
    %102 = vector.extract_strided_slice %74 {offsets = [0, 576], sizes = [104, 32], strides = [1, 1]} : vector<104x832xf32> to vector<104x32xf32>
    %103 = vector.extract_strided_slice %74 {offsets = [0, 608], sizes = [104, 32], strides = [1, 1]} : vector<104x832xf32> to vector<104x32xf32>
    %104 = arith.maximumf %102, %103 : vector<104x32xf32>
    %105 = vector.extract_strided_slice %74 {offsets = [0, 640], sizes = [104, 32], strides = [1, 1]} : vector<104x832xf32> to vector<104x32xf32>
    %106 = vector.extract_strided_slice %74 {offsets = [0, 672], sizes = [104, 32], strides = [1, 1]} : vector<104x832xf32> to vector<104x32xf32>
    %107 = arith.maximumf %105, %106 : vector<104x32xf32>
    %108 = vector.extract_strided_slice %74 {offsets = [0, 704], sizes = [104, 32], strides = [1, 1]} : vector<104x832xf32> to vector<104x32xf32>
    %109 = vector.extract_strided_slice %74 {offsets = [0, 736], sizes = [104, 32], strides = [1, 1]} : vector<104x832xf32> to vector<104x32xf32>
    %110 = arith.maximumf %108, %109 : vector<104x32xf32>
    %111 = vector.extract_strided_slice %74 {offsets = [0, 768], sizes = [104, 32], strides = [1, 1]} : vector<104x832xf32> to vector<104x32xf32>
    %112 = vector.extract_strided_slice %74 {offsets = [0, 800], sizes = [104, 32], strides = [1, 1]} : vector<104x832xf32> to vector<104x32xf32>
    %113 = arith.maximumf %111, %112 : vector<104x32xf32>
    %114 = tpu.concatenate %77, %80, %83, %86, %89, %92, %95, %98, %101, %104, %107, %110, %113 in 1 : vector<104x32xf32>, vector<104x32xf32>, vector<104x32xf32>, vector<104x32xf32>, vector<104x32xf32>, vector<104x32xf32>, vector<104x32xf32>, vector<104x32xf32>, vector<104x32xf32>, vector<104x32xf32>, vector<104x32xf32>, vector<104x32xf32>, vector<104x32xf32> -> vector<104x416xf32>
    %cst_5 = arith.constant 0.000000e+00 : f32
    %115 = vector.broadcast %cst_5 : f32 to vector<104x416xf32>
    %116 = arith.cmpf ogt, %114, %115 : vector<104x416xf32>
    %117 = math.exp %114 : vector<104x416xf32>
    %cst_6 = arith.constant 1.000000e+00 : f32
    %118 = vector.broadcast %cst_6 : f32 to vector<104x416xf32>
    %119 = arith.subf %117, %118 : vector<104x416xf32>
    %cst_7 = arith.constant 1.67326319 : f32
    %120 = vector.broadcast %cst_7 : f32 to vector<104x416xf32>
    %121 = arith.mulf %120, %119 : vector<104x416xf32>
    %122 = arith.select %116, %114, %121 : vector<104x416xi1>, vector<104x416xf32>
    %cst_8 = arith.constant 1.05070102 : f32
    %123 = vector.broadcast %cst_8 : f32 to vector<104x416xf32>
    %124 = arith.mulf %123, %122 : vector<104x416xf32>
    %125 = arith.truncf %124 : vector<104x416xf32> to vector<104x416xbf16>
    %126 = vector.extract_strided_slice %125 {offsets = [0, 0], sizes = [88, 416], strides = [1, 1]} : vector<104x416xbf16> to vector<88x416xbf16>
    %c0_9 = arith.constant 0 : index
    %c0_10 = arith.constant 0 : index
    %c0_11 = arith.constant 0 : index
    %127 = vector.load %arg5[%c0_9, %c0_10, %c0_11] : memref<3x416x704xbf16, #tpu.memory_space<vmem>>, vector<1x416x704xbf16>
    %128 = vector.shape_cast %127 : vector<1x416x704xbf16> to vector<416x704xbf16>
    %cst_12 = arith.constant dense<0.000000e+00> : vector<88x704xf32>
    %129 = tpu.matmul %126, %128, %cst_12 {dimension_numbers = #tpu.dot_dimension_numbers<[1], [0], [0], [1], [0, 0, 1, 1], [], []>} : vector<88x416xbf16>, vector<416x704xbf16>, vector<88x704xf32> -> vector<88x704xf32>
    %130 = vector.extract_strided_slice %125 {offsets = [8, 0], sizes = [88, 416], strides = [1, 1]} : vector<104x416xbf16> to vector<88x416xbf16>
    %c1 = arith.constant 1 : index
    %c0_13 = arith.constant 0 : index
    %c0_14 = arith.constant 0 : index
    %131 = vector.load %arg5[%c1, %c0_13, %c0_14] : memref<3x416x704xbf16, #tpu.memory_space<vmem>>, vector<1x416x704xbf16>
    %132 = vector.shape_cast %131 : vector<1x416x704xbf16> to vector<416x704xbf16>
    %cst_15 = arith.constant dense<0.000000e+00> : vector<88x704xf32>
    %133 = tpu.matmul %130, %132, %cst_15 {dimension_numbers = #tpu.dot_dimension_numbers<[1], [0], [0], [1], [0, 0, 1, 1], [], []>} : vector<88x416xbf16>, vector<416x704xbf16>, vector<88x704xf32> -> vector<88x704xf32>
    %134 = arith.addf %129, %133 : vector<88x704xf32>
    %135 = vector.extract_strided_slice %125 {offsets = [16, 0], sizes = [88, 416], strides = [1, 1]} : vector<104x416xbf16> to vector<88x416xbf16>
    %c2 = arith.constant 2 : index
    %c0_16 = arith.constant 0 : index
    %c0_17 = arith.constant 0 : index
    %136 = vector.load %arg5[%c2, %c0_16, %c0_17] : memref<3x416x704xbf16, #tpu.memory_space<vmem>>, vector<1x416x704xbf16>
    %137 = vector.shape_cast %136 : vector<1x416x704xbf16> to vector<416x704xbf16>
    %cst_18 = arith.constant dense<0.000000e+00> : vector<88x704xf32>
    %138 = tpu.matmul %135, %137, %cst_18 {dimension_numbers = #tpu.dot_dimension_numbers<[1], [0], [0], [1], [0, 0, 1, 1], [], []>} : vector<88x416xbf16>, vector<416x704xbf16>, vector<88x704xf32> -> vector<88x704xf32>
    %139 = arith.addf %134, %138 : vector<88x704xf32>
    %c0_19 = arith.constant 0 : index
    %c0_20 = arith.constant 0 : index
    %140 = vector.load %arg6[%c0_19, %c0_20] : memref<1x704xf32, #tpu.memory_space<vmem>>, vector<1x704xf32>
    %141 = vector.broadcast %140 : vector<1x704xf32> to vector<88x704xf32>
    %142 = arith.addf %139, %141 : vector<88x704xf32>
    %143 = vector.extract_strided_slice %142 {offsets = [0, 0], sizes = [8, 704], strides = [1, 1]} : vector<88x704xf32> to vector<8x704xf32>
    %144 = vector.extract_strided_slice %142 {offsets = [8, 0], sizes = [8, 704], strides = [1, 1]} : vector<88x704xf32> to vector<8x704xf32>
    %145 = arith.maximumf %143, %144 : vector<8x704xf32>
    %146 = vector.extract_strided_slice %142 {offsets = [16, 0], sizes = [8, 704], strides = [1, 1]} : vector<88x704xf32> to vector<8x704xf32>
    %147 = vector.extract_strided_slice %142 {offsets = [24, 0], sizes = [8, 704], strides = [1, 1]} : vector<88x704xf32> to vector<8x704xf32>
    %148 = arith.maximumf %146, %147 : vector<8x704xf32>
    %149 = vector.extract_strided_slice %142 {offsets = [32, 0], sizes = [8, 704], strides = [1, 1]} : vector<88x704xf32> to vector<8x704xf32>
    %150 = vector.extract_strided_slice %142 {offsets = [40, 0], sizes = [8, 704], strides = [1, 1]} : vector<88x704xf32> to vector<8x704xf32>
    %151 = arith.maximumf %149, %150 : vector<8x704xf32>
    %152 = vector.extract_strided_slice %142 {offsets = [48, 0], sizes = [8, 704], strides = [1, 1]} : vector<88x704xf32> to vector<8x704xf32>
    %153 = vector.extract_strided_slice %142 {offsets = [56, 0], sizes = [8, 704], strides = [1, 1]} : vector<88x704xf32> to vector<8x704xf32>
    %154 = arith.maximumf %152, %153 : vector<8x704xf32>
    %155 = vector.extract_strided_slice %142 {offsets = [64, 0], sizes = [8, 704], strides = [1, 1]} : vector<88x704xf32> to vector<8x704xf32>
    %156 = vector.extract_strided_slice %142 {offsets = [72, 0], sizes = [8, 704], strides = [1, 1]} : vector<88x704xf32> to vector<8x704xf32>
    %157 = arith.maximumf %155, %156 : vector<8x704xf32>
    %158 = tpu.concatenate %145, %148, %151, %154, %157 in 0 : vector<8x704xf32>, vector<8x704xf32>, vector<8x704xf32>, vector<8x704xf32>, vector<8x704xf32> -> vector<40x704xf32>
    %159 = vector.extract_strided_slice %158 {offsets = [0, 0], sizes = [40, 64], strides = [1, 1]} : vector<40x704xf32> to vector<40x64xf32>
    %160 = vector.extract_strided_slice %158 {offsets = [0, 64], sizes = [40, 64], strides = [1, 1]} : vector<40x704xf32> to vector<40x64xf32>
    %161 = arith.maximumf %159, %160 : vector<40x64xf32>
    %162 = vector.extract_strided_slice %158 {offsets = [0, 128], sizes = [40, 64], strides = [1, 1]} : vector<40x704xf32> to vector<40x64xf32>
    %163 = vector.extract_strided_slice %158 {offsets = [0, 192], sizes = [40, 64], strides = [1, 1]} : vector<40x704xf32> to vector<40x64xf32>
    %164 = arith.maximumf %162, %163 : vector<40x64xf32>
    %165 = vector.extract_strided_slice %158 {offsets = [0, 256], sizes = [40, 64], strides = [1, 1]} : vector<40x704xf32> to vector<40x64xf32>
    %166 = vector.extract_strided_slice %158 {offsets = [0, 320], sizes = [40, 64], strides = [1, 1]} : vector<40x704xf32> to vector<40x64xf32>
    %167 = arith.maximumf %165, %166 : vector<40x64xf32>
    %168 = vector.extract_strided_slice %158 {offsets = [0, 384], sizes = [40, 64], strides = [1, 1]} : vector<40x704xf32> to vector<40x64xf32>
    %169 = vector.extract_strided_slice %158 {offsets = [0, 448], sizes = [40, 64], strides = [1, 1]} : vector<40x704xf32> to vector<40x64xf32>
    %170 = arith.maximumf %168, %169 : vector<40x64xf32>
    %171 = vector.extract_strided_slice %158 {offsets = [0, 512], sizes = [40, 64], strides = [1, 1]} : vector<40x704xf32> to vector<40x64xf32>
    %172 = vector.extract_strided_slice %158 {offsets = [0, 576], sizes = [40, 64], strides = [1, 1]} : vector<40x704xf32> to vector<40x64xf32>
    %173 = arith.maximumf %171, %172 : vector<40x64xf32>
    %174 = tpu.concatenate %161, %164, %167, %170, %173 in 1 : vector<40x64xf32>, vector<40x64xf32>, vector<40x64xf32>, vector<40x64xf32>, vector<40x64xf32> -> vector<40x320xf32>
    %cst_21 = arith.constant 0.000000e+00 : f32
    %175 = vector.broadcast %cst_21 : f32 to vector<40x320xf32>
    %176 = arith.cmpf ogt, %174, %175 : vector<40x320xf32>
    %177 = math.exp %174 : vector<40x320xf32>
    %cst_22 = arith.constant 1.000000e+00 : f32
    %178 = vector.broadcast %cst_22 : f32 to vector<40x320xf32>
    %179 = arith.subf %177, %178 : vector<40x320xf32>
    %cst_23 = arith.constant 1.67326319 : f32
    %180 = vector.broadcast %cst_23 : f32 to vector<40x320xf32>
    %181 = arith.mulf %180, %179 : vector<40x320xf32>
    %182 = arith.select %176, %174, %181 : vector<40x320xi1>, vector<40x320xf32>
    %cst_24 = arith.constant 1.05070102 : f32
    %183 = vector.broadcast %cst_24 : f32 to vector<40x320xf32>
    %184 = arith.mulf %183, %182 : vector<40x320xf32>
    %185 = arith.truncf %184 : vector<40x320xf32> to vector<40x320xbf16>
    %186 = vector.extract_strided_slice %185 {offsets = [0, 0], sizes = [24, 320], strides = [1, 1]} : vector<40x320xbf16> to vector<24x320xbf16>
    %c0_25 = arith.constant 0 : index
    %c0_26 = arith.constant 0 : index
    %c0_27 = arith.constant 0 : index
    %187 = vector.load %arg7[%c0_25, %c0_26, %c0_27] : memref<3x320x192xbf16, #tpu.memory_space<vmem>>, vector<1x320x192xbf16>
    %188 = vector.shape_cast %187 : vector<1x320x192xbf16> to vector<320x192xbf16>
    %cst_28 = arith.constant dense<0.000000e+00> : vector<24x192xf32>
    %189 = tpu.matmul %186, %188, %cst_28 {dimension_numbers = #tpu.dot_dimension_numbers<[1], [0], [0], [1], [0, 0, 1, 1], [], []>} : vector<24x320xbf16>, vector<320x192xbf16>, vector<24x192xf32> -> vector<24x192xf32>
    %190 = vector.extract_strided_slice %185 {offsets = [8, 0], sizes = [24, 320], strides = [1, 1]} : vector<40x320xbf16> to vector<24x320xbf16>
    %c1_29 = arith.constant 1 : index
    %c0_30 = arith.constant 0 : index
    %c0_31 = arith.constant 0 : index
    %191 = vector.load %arg7[%c1_29, %c0_30, %c0_31] : memref<3x320x192xbf16, #tpu.memory_space<vmem>>, vector<1x320x192xbf16>
    %192 = vector.shape_cast %191 : vector<1x320x192xbf16> to vector<320x192xbf16>
    %cst_32 = arith.constant dense<0.000000e+00> : vector<24x192xf32>
    %193 = tpu.matmul %190, %192, %cst_32 {dimension_numbers = #tpu.dot_dimension_numbers<[1], [0], [0], [1], [0, 0, 1, 1], [], []>} : vector<24x320xbf16>, vector<320x192xbf16>, vector<24x192xf32> -> vector<24x192xf32>
    %194 = arith.addf %189, %193 : vector<24x192xf32>
    %195 = vector.extract_strided_slice %185 {offsets = [16, 0], sizes = [24, 320], strides = [1, 1]} : vector<40x320xbf16> to vector<24x320xbf16>
    %c2_33 = arith.constant 2 : index
    %c0_34 = arith.constant 0 : index
    %c0_35 = arith.constant 0 : index
    %196 = vector.load %arg7[%c2_33, %c0_34, %c0_35] : memref<3x320x192xbf16, #tpu.memory_space<vmem>>, vector<1x320x192xbf16>
    %197 = vector.shape_cast %196 : vector<1x320x192xbf16> to vector<320x192xbf16>
    %cst_36 = arith.constant dense<0.000000e+00> : vector<24x192xf32>
    %198 = tpu.matmul %195, %197, %cst_36 {dimension_numbers = #tpu.dot_dimension_numbers<[1], [0], [0], [1], [0, 0, 1, 1], [], []>} : vector<24x320xbf16>, vector<320x192xbf16>, vector<24x192xf32> -> vector<24x192xf32>
    %199 = arith.addf %194, %198 : vector<24x192xf32>
    %c0_37 = arith.constant 0 : index
    %c0_38 = arith.constant 0 : index
    %200 = vector.load %arg8[%c0_37, %c0_38] : memref<1x192xf32, #tpu.memory_space<vmem>>, vector<1x192xf32>
    %201 = vector.broadcast %200 : vector<1x192xf32> to vector<24x192xf32>
    %202 = arith.addf %199, %201 : vector<24x192xf32>
    %203 = vector.extract_strided_slice %202 {offsets = [0, 0], sizes = [8, 192], strides = [1, 1]} : vector<24x192xf32> to vector<8x192xf32>
    %204 = vector.extract_strided_slice %202 {offsets = [8, 0], sizes = [8, 192], strides = [1, 1]} : vector<24x192xf32> to vector<8x192xf32>
    %205 = arith.maximumf %203, %204 : vector<8x192xf32>
    %206 = vector.extract_strided_slice %205 {offsets = [0, 0], sizes = [8, 64], strides = [1, 1]} : vector<8x192xf32> to vector<8x64xf32>
    %207 = vector.extract_strided_slice %205 {offsets = [0, 64], sizes = [8, 64], strides = [1, 1]} : vector<8x192xf32> to vector<8x64xf32>
    %208 = arith.maximumf %206, %207 : vector<8x64xf32>
    %cst_39 = arith.constant 0.000000e+00 : f32
    %209 = vector.broadcast %cst_39 : f32 to vector<8x64xf32>
    %210 = arith.cmpf ogt, %208, %209 : vector<8x64xf32>
    %211 = math.exp %208 : vector<8x64xf32>
    %cst_40 = arith.constant 1.000000e+00 : f32
    %212 = vector.broadcast %cst_40 : f32 to vector<8x64xf32>
    %213 = arith.subf %211, %212 : vector<8x64xf32>
    %cst_41 = arith.constant 1.67326319 : f32
    %214 = vector.broadcast %cst_41 : f32 to vector<8x64xf32>
    %215 = arith.mulf %214, %213 : vector<8x64xf32>
    %216 = arith.select %210, %208, %215 : vector<8x64xi1>, vector<8x64xf32>
    %cst_42 = arith.constant 1.05070102 : f32
    %217 = vector.broadcast %cst_42 : f32 to vector<8x64xf32>
    %218 = arith.mulf %217, %216 : vector<8x64xf32>
    %219 = arith.truncf %218 : vector<8x64xf32> to vector<8x64xbf16>
    %c0_43 = arith.constant 0 : index
    %c0_44 = arith.constant 0 : index
    %220 = vector.load %arg9[%c0_43, %c0_44] : memref<64x32xbf16, #tpu.memory_space<vmem>>, vector<64x32xbf16>
    %cst_45 = arith.constant dense<0.000000e+00> : vector<8x32xf32>
    %221 = tpu.matmul %219, %220, %cst_45 {dimension_numbers = #tpu.dot_dimension_numbers<[1], [0], [0], [1], [0, 0, 1, 1], [], []>} : vector<8x64xbf16>, vector<64x32xbf16>, vector<8x32xf32> -> vector<8x32xf32>
    %c0_46 = arith.constant 0 : index
    %c0_47 = arith.constant 0 : index
    %222 = vector.load %arg10[%c0_46, %c0_47] : memref<1x32xf32, #tpu.memory_space<vmem>>, vector<1x32xf32>
    %223 = vector.broadcast %222 : vector<1x32xf32> to vector<8x32xf32>
    %224 = arith.addf %221, %223 : vector<8x32xf32>
    %225 = vector.extract_strided_slice %224 {offsets = [0, 0], sizes = [8, 16], strides = [1, 1]} : vector<8x32xf32> to vector<8x16xf32>
    %226 = vector.extract_strided_slice %224 {offsets = [0, 16], sizes = [8, 16], strides = [1, 1]} : vector<8x32xf32> to vector<8x16xf32>
    %cst_48 = arith.constant -1.700000e+01 : f32
    %cst_49 = arith.constant 1.000000e+01 : f32
    %227 = vector.broadcast %cst_48 : f32 to vector<8x16xf32>
    %228 = arith.maximumf %227, %226 : vector<8x16xf32>
    %229 = vector.broadcast %cst_49 : f32 to vector<8x16xf32>
    %230 = arith.minimumf %229, %228 : vector<8x16xf32>
    %231 = math.exp %230 : vector<8x16xf32>
    %232 = math.sqrt %231 : vector<8x16xf32>
    %c0_50 = arith.constant 0 : index
    %c0_51 = arith.constant 0 : index
    %233 = vector.load %arg2[%c0_50, %c0_51] : memref<8x16xf32, #tpu.memory_space<vmem>>, vector<8x16xf32>
    %234 = arith.mulf %232, %233 : vector<8x16xf32>
    %235 = arith.addf %225, %234 : vector<8x16xf32>
    %236 = tpu.concatenate %225, %231, %235 in 1 : vector<8x16xf32>, vector<8x16xf32>, vector<8x16xf32> -> vector<8x48xf32>
    %cst_52 = arith.constant 0.000000e+00 : f32
    %237 = vector.broadcast %cst_52 : f32 to vector<8x80xf32>
    %238 = tpu.concatenate %236, %237 in 1 : vector<8x48xf32>, vector<8x80xf32> -> vector<8x128xf32>
    %c0_53 = arith.constant 0 : index
    %c0_54 = arith.constant 0 : index
    %239 = vector.load %arg11[%c0_53, %c0_54] : memref<8x128xf32, #tpu.memory_space<vmem>>, vector<8x128xf32>
    tpu.vector_store %arg11[%c0_53, %c0_54], %238 {strides = array<i32>} : memref<8x128xf32, #tpu.memory_space<vmem>>, vector<8x128xf32>,
    return
  }
  func.func @transform_0(%arg0: i32) -> (i32, i32) {
    %c0_i32 = arith.constant 0 : i32
    %c0_i32_0 = arith.constant 0 : i32
    return %arg0, %c0_i32 : i32, i32
  }
  func.func @transform_1(%arg0: i32) -> (i32, i32) {
    %c0_i32 = arith.constant 0 : i32
    %c0_i32_0 = arith.constant 0 : i32
    return %arg0, %c0_i32 : i32, i32
  }
  func.func @transform_2(%arg0: i32) -> (i32, i32) {
    %c0_i32 = arith.constant 0 : i32
    %c0_i32_0 = arith.constant 0 : i32
    %c0_i32_1 = arith.constant 0 : i32
    return %c0_i32, %c0_i32_0 : i32, i32
  }
  func.func @transform_3(%arg0: i32) -> (i32, i32) {
    %c0_i32 = arith.constant 0 : i32
    %c0_i32_0 = arith.constant 0 : i32
    %c0_i32_1 = arith.constant 0 : i32
    return %c0_i32, %c0_i32_0 : i32, i32
  }
  func.func @transform_4(%arg0: i32) -> (i32, i32, i32) {
    %c0_i32 = arith.constant 0 : i32
    %c0_i32_0 = arith.constant 0 : i32
    %c0_i32_1 = arith.constant 0 : i32
    %c0_i32_2 = arith.constant 0 : i32
    return %c0_i32, %c0_i32_0, %c0_i32_1 : i32, i32, i32
  }
  func.func @transform_5(%arg0: i32) -> (i32, i32) {
    %c0_i32 = arith.constant 0 : i32
    %c0_i32_0 = arith.constant 0 : i32
    %c0_i32_1 = arith.constant 0 : i32
    return %c0_i32, %c0_i32_0 : i32, i32
  }
  func.func @transform_6(%arg0: i32) -> (i32, i32, i32) {
    %c0_i32 = arith.constant 0 : i32
    %c0_i32_0 = arith.constant 0 : i32
    %c0_i32_1 = arith.constant 0 : i32
    %c0_i32_2 = arith.constant 0 : i32
    return %c0_i32, %c0_i32_0, %c0_i32_1 : i32, i32, i32
  }
  func.func @transform_7(%arg0: i32) -> (i32, i32) {
    %c0_i32 = arith.constant 0 : i32
    %c0_i32_0 = arith.constant 0 : i32
    %c0_i32_1 = arith.constant 0 : i32
    return %c0_i32, %c0_i32_0 : i32, i32
  }
  func.func @transform_8(%arg0: i32) -> (i32, i32) {
    %c0_i32 = arith.constant 0 : i32
    %c0_i32_0 = arith.constant 0 : i32
    %c0_i32_1 = arith.constant 0 : i32
    return %c0_i32, %c0_i32_0 : i32, i32
  }
  func.func @transform_9(%arg0: i32) -> (i32, i32) {
    %c0_i32 = arith.constant 0 : i32
    %c0_i32_0 = arith.constant 0 : i32
    %c0_i32_1 = arith.constant 0 : i32
    return %c0_i32, %c0_i32_0 : i32, i32
  }
  func.func @transform_10(%arg0: i32) -> (i32, i32) {
    %c0_i32 = arith.constant 0 : i32
    %c0_i32_0 = arith.constant 0 : i32
    return %arg0, %c0_i32 : i32, i32
  }
}

</mosaic_0001>

<llo_original>
// kernel: tpu_custom_call.1
$region0: #{tpu_custom_call.1}
  #allocation0 [shape = 'u32[]', space=smem, size = 0x4, offset = 0x4, fixed_abs, tag = 'smem constant byte address 0x4 - core index']
  #allocation1 [shape = 'u32[144,128]{1,0:T(1,128)}', space=vmem, size = 0x12000, scoped, tag = 'internal scratch']
  %s0 = inlined_call_operand.hbm [shape: bf16[24,784], index: 0, kind: input, shape index: {}]
  %s1 = inlined_call_operand.vmem [shape: f32[24,16], index: 1, kind: input, shape index: {}]
  %s2 = inlined_call_operand.hbm [shape: bf16[84,832], index: 2, kind: input, shape index: {}]
  %s3 = inlined_call_operand.hbm [shape: f32[1,832], index: 3, kind: input, shape index: {}]
  %s4 = inlined_call_operand.hbm [shape: bf16[3,416,704], index: 4, kind: input, shape index: {}]
  %s5 = inlined_call_operand.hbm [shape: f32[1,704], index: 5, kind: input, shape index: {}]
  %s6 = inlined_call_operand.vmem [shape: bf16[3,320,192], index: 6, kind: input, shape index: {}]
  %s7 = inlined_call_operand.hbm [shape: f32[1,192], index: 7, kind: input, shape index: {}]
  %s8 = inlined_call_operand.vmem [shape: bf16[64,32], index: 8, kind: input, shape index: {}]
  %s9 = inlined_call_operand.hbm [shape: f32[1,32], index: 9, kind: input, shape index: {}]
  %s10 = inlined_call_operand.hbm [shape: f32[24,128], index: 10, kind: output, shape index: {}]
  %s11 = sld [smem:[#allocation0]]
  $region101: #{tpu_custom_call.1} parent=0
    _
  %s13 = ssub.s32 1, %s11
  %s14 = scalar_select 0, %s13, %s11
  $region1: #{tpu_custom_call.1} parent=0
    #allocation2 [shape = 'u8[28672]{0}', space=vmem, size = 0x7000, scoped, tag = 'input window, operand 0']
    #allocation3 [shape = 's32[2]{0}', space=sflag, size = 0x8, scoped, tag = 'scoped memory for tpu_custom_call.1']
    #allocation4 [shape = 's32[2]{0}', space=sflag, size = 0x8, scoped, tag = 'scoped memory for tpu_custom_call.1']
    #allocation5 [shape = 'u8[157696]{0}', space=vmem, size = 0x26800, scoped, tag = 'input window, operand 2, single buffered']
    #allocation6 [shape = 's32[1]{0}', space=sflag, size = 0x4, scoped, tag = 'scoped memory for tpu_custom_call.1']
    #allocation7 [shape = 'u8[3584]{0}', space=vmem, size = 0x1000, scoped, tag = 'input window, operand 3, single buffered']
    #allocation8 [shape = 'u8[1916928]{0}', space=vmem, size = 0x1d4000, scoped, tag = 'input window, operand 4, single buffered']
    #allocation9 [shape = 's32[1]{0}', space=sflag, size = 0x4, scoped, tag = 'scoped memory for tpu_custom_call.1']
    #allocation10 [shape = 'u8[3072]{0}', space=vmem, size = 0xc00, scoped, tag = 'input window, operand 5, single buffered']
    #allocation11 [shape = 'u8[1024]{0}', space=vmem, size = 0x400, scoped, tag = 'input window, operand 7, single buffered']
    #allocation12 [shape = 's32[1]{0}', space=sflag, size = 0x4, scoped, tag = 'scoped memory for tpu_custom_call.1']
    #allocation13 [shape = 'u8[512]{0}', space=vmem, size = 0x400, scoped, tag = 'input window, operand 9, single buffered']
    #allocation14 [shape = 'u8[8192]{0}', space=vmem, size = 0x2000, scoped, tag = 'output window, operand 0']
    %15 = vsyncpa [#allocation3], 0
    %s16 = scalar_lea.sflag [#allocation3], 1
    %17 = vsyncpa %s16, 0
    %18 = vsyncpa [#allocation6], 0
    %19 = vsyncpa [#allocation9], 0
    %20 = vsyncpa [#allocation12], 0
    %21 = vsyncpa [#allocation4], 0
    %s22 = scalar_lea.sflag [#allocation4], 1
    %23 = vsyncpa %s22, 0
    loop: start=0, step=1, limit=5
    $region2: #{tpu_custom_call.1} parent=1 // loop_pre_header
      _
    $region3: #{tpu_custom_call.1} parent=1 // loop_header
      %s25 = sphi 0, %s29
      %p26 = scmp.ge.s32.totalorder %s25, 5
      %s35 = sphi 0, %s37
      %s38 = sphi 0, %s35
      %s39 = sphi 0, %s38
      %s55 = sphi 0, %s39
      %s61 = sphi 0, %s63
      %s64 = sphi 0, %s61
      %s65 = sphi 0, %s64
      %s81 = sphi 0, %s65
      %s85 = sphi 0, %s85
      %s87 = sphi 0, %s85
      %s88 = sphi 0, %s87
      %s102 = sphi 0, %s88
      %s106 = sphi 0, %s106
      %s108 = sphi 0, %s106
      %s109 = sphi 0, %s108
      %s123 = sphi 0, %s109
      %s127 = sphi 0, %s127
      %s129 = sphi 0, %s127
      %s130 = sphi 0, %s129
      %s144 = sphi 0, %s130
      %s148 = sphi 0, %s148
      %s150 = sphi 0, %s148
      %s151 = sphi 0, %s150
      %s165 = sphi 0, %s151
      %s169 = sphi 0, %s169
      %s171 = sphi 0, %s169
      %s172 = sphi 0, %s171
      %s186 = sphi 0, %s172
      %s190 = sphi 0, %s190
      %s192 = sphi 0, %s190
      %s193 = sphi 0, %s192
      %s207 = sphi 0, %s193
      %s211 = sphi 0, %s211
      %s213 = sphi 0, %s211
      %s214 = sphi 0, %s213
      %s228 = sphi 0, %s214
      %s232 = sphi 0, %s232
      %s234 = sphi 0, %s232
      %s235 = sphi 0, %s234
      %s249 = sphi 0, %s235
      %s255 = sphi 0, %s257
      %s258 = sphi 0, %s255
      %s259 = sphi 0, %s258
      %s275 = sphi 0, %s259
    $region4: #{tpu_custom_call.1} parent=1 // loop_header_branch
      %28 = sbr.rel (%p26) target = $region8
    $region5: #{tpu_custom_call.1} parent=1 // loop_body
      %s30 = ssub.s32 %s25, 1
      %s31 = ssub.s32 %s25, 2
      %s32 = sadd.s32 %s25, 1
      %s33 = ssub.s32 %s25, %s32
      %p34 = scmp.eq.s32.totalorder %s33, 0
      %s36 = sadd.s32 %s35, 1
      %s37 = scalar_select %p34, %s35, %s36
      %p40 = pneg %p34
      %p41 = scmp.eq.s32.totalorder %s25, 2
      %p42 = por %p40, %p41
      %p43 = scmp.ne.s32.totalorder %s35, %s38
      %p44 = scmp.eq.s32.totalorder %s25, 0
      %p45 = por %p43, %p44
      %p46 = scmp.ne.s32.totalorder %s35, %s38
      %p47 = scmp.eq.s32.totalorder %s30, 2
      %p48 = por %p46, %p47
      %p49 = scmp.ne.s32.totalorder %s38, %s39
      %p50 = scmp.eq.s32.totalorder %s30, 0
      %p51 = por %p49, %p50
      %p52 = scmp.ne.s32.totalorder %s38, %s39
      %p53 = scmp.eq.s32.totalorder %s31, 2
      %p54 = por %p52, %p53
      %p56 = scmp.ne.s32.totalorder %s39, %s55
      %p57 = scmp.eq.s32.totalorder %s31, 0
      %p58 = por %p56, %p57
      %s59 = ssub.s32 %s25, %s32
      %p60 = scmp.eq.s32.totalorder %s59, 0
      %s62 = sadd.s32 %s61, 1
      %s63 = scalar_select %p60, %s61, %s62
      %p66 = pneg %p60
      %p67 = scmp.eq.s32.totalorder %s25, 2
      %p68 = por %p66, %p67
      %p69 = scmp.ne.s32.totalorder %s61, %s64
      %p70 = scmp.eq.s32.totalorder %s25, 0
      %p71 = por %p69, %p70
      %p72 = scmp.ne.s32.totalorder %s61, %s64
      %p73 = scmp.eq.s32.totalorder %s30, 2
      %p74 = por %p72, %p73
      %p75 = scmp.ne.s32.totalorder %s64, %s65
      %p76 = scmp.eq.s32.totalorder %s30, 0
      %p77 = por %p75, %p76
      %p78 = scmp.ne.s32.totalorder %s64, %s65
      %p79 = scmp.eq.s32.totalorder %s31, 2
      %p80 = por %p78, %p79
      %p82 = scmp.ne.s32.totalorder %s65, %s81
      %p83 = scmp.eq.s32.totalorder %s31, 0
      %p84 = por %p82, %p83
      %s86 = sadd.s32 %s85, 1
      %p89 = scmp.eq.s32.totalorder %s25, 2
      %p90 = scmp.ne.s32.totalorder %s85, %s87
      %p91 = scmp.eq.s32.totalorder %s25, 0
      %p92 = por %p90, %p91
      %p93 = scmp.ne.s32.totalorder %s85, %s87
      %p94 = scmp.eq.s32.totalorder %s30, 2
      %p95 = por %p93, %p94
      %p96 = scmp.ne.s32.totalorder %s87, %s88
      %p97 = scmp.eq.s32.totalorder %s30, 0
      %p98 = por %p96, %p97
      %p99 = scmp.ne.s32.totalorder %s87, %s88
      %p100 = scmp.eq.s32.totalorder %s31, 2
      %p101 = por %p99, %p100
      %p103 = scmp.ne.s32.totalorder %s88, %s102
      %p104 = scmp.eq.s32.totalorder %s31, 0
      %p105 = por %p103, %p104
      %s107 = sadd.s32 %s106, 1
      %p110 = scmp.eq.s32.totalorder %s25, 2
      %p111 = scmp.ne.s32.totalorder %s106, %s108
      %p112 = scmp.eq.s32.totalorder %s25, 0
      %p113 = por %p111, %p112
      %p114 = scmp.ne.s32.totalorder %s106, %s108
      %p115 = scmp.eq.s32.totalorder %s30, 2
      %p116 = por %p114, %p115
      %p117 = scmp.ne.s32.totalorder %s108, %s109
      %p118 = scmp.eq.s32.totalorder %s30, 0
      %p119 = por %p117, %p118
      %p120 = scmp.ne.s32.totalorder %s108, %s109
      %p121 = scmp.eq.s32.totalorder %s31, 2
      %p122 = por %p120, %p121
      %p124 = scmp.ne.s32.totalorder %s109, %s123
      %p125 = scmp.eq.s32.totalorder %s31, 0
      %p126 = por %p124, %p125
      %s128 = sadd.s32 %s127, 1
      %p131 = scmp.eq.s32.totalorder %s25, 2
      %p132 = scmp.ne.s32.totalorder %s127, %s129
      %p133 = scmp.eq.s32.totalorder %s25, 0
      %p134 = por %p132, %p133
      %p135 = scmp.ne.s32.totalorder %s127, %s129
      %p136 = scmp.eq.s32.totalorder %s30, 2
      %p137 = por %p135, %p136
      %p138 = scmp.ne.s32.totalorder %s129, %s130
      %p139 = scmp.eq.s32.totalorder %s30, 0
      %p140 = por %p138, %p139
      %p141 = scmp.ne.s32.totalorder %s129, %s130
      %p142 = scmp.eq.s32.totalorder %s31, 2
      %p143 = por %p141, %p142
      %p145 = scmp.ne.s32.totalorder %s130, %s144
      %p146 = scmp.eq.s32.totalorder %s31, 0
      %p147 = por %p145, %p146
      %s149 = sadd.s32 %s148, 1
      %p152 = scmp.eq.s32.totalorder %s25, 2
      %p153 = scmp.ne.s32.totalorder %s148, %s150
      %p154 = scmp.eq.s32.totalorder %s25, 0
      %p155 = por %p153, %p154
      %p156 = scmp.ne.s32.totalorder %s148, %s150
      %p157 = scmp.eq.s32.totalorder %s30, 2
      %p158 = por %p156, %p157
      %p159 = scmp.ne.s32.totalorder %s150, %s151
      %p160 = scmp.eq.s32.totalorder %s30, 0
      %p161 = por %p159, %p160
      %p162 = scmp.ne.s32.totalorder %s150, %s151
      %p163 = scmp.eq.s32.totalorder %s31, 2
      %p164 = por %p162, %p163
      %p166 = scmp.ne.s32.totalorder %s151, %s165
      %p167 = scmp.eq.s32.totalorder %s31, 0
      %p168 = por %p166, %p167
      %s170 = sadd.s32 %s169, 1
      %p173 = scmp.eq.s32.totalorder %s25, 2
      %p174 = scmp.ne.s32.totalorder %s169, %s171
      %p175 = scmp.eq.s32.totalorder %s25, 0
      %p176 = por %p174, %p175
      %p177 = scmp.ne.s32.totalorder %s169, %s171
      %p178 = scmp.eq.s32.totalorder %s30, 2
      %p179 = por %p177, %p178
      %p180 = scmp.ne.s32.totalorder %s171, %s172
      %p181 = scmp.eq.s32.totalorder %s30, 0
      %p182 = por %p180, %p181
      %p183 = scmp.ne.s32.totalorder %s171, %s172
      %p184 = scmp.eq.s32.totalorder %s31, 2
      %p185 = por %p183, %p184
      %p187 = scmp.ne.s32.totalorder %s172, %s186
      %p188 = scmp.eq.s32.totalorder %s31, 0
      %p189 = por %p187, %p188
      %s191 = sadd.s32 %s190, 1
      %p194 = scmp.eq.s32.totalorder %s25, 2
      %p195 = scmp.ne.s32.totalorder %s190, %s192
      %p196 = scmp.eq.s32.totalorder %s25, 0
      %p197 = por %p195, %p196
      %p198 = scmp.ne.s32.totalorder %s190, %s192
      %p199 = scmp.eq.s32.totalorder %s30, 2
      %p200 = por %p198, %p199
      %p201 = scmp.ne.s32.totalorder %s192, %s193
      %p202 = scmp.eq.s32.totalorder %s30, 0
      %p203 = por %p201, %p202
      %p204 = scmp.ne.s32.totalorder %s192, %s193
      %p205 = scmp.eq.s32.totalorder %s31, 2
      %p206 = por %p204, %p205
      %p208 = scmp.ne.s32.totalorder %s193, %s207
      %p209 = scmp.eq.s32.totalorder %s31, 0
      %p210 = por %p208, %p209
      %s212 = sadd.s32 %s211, 1
      %p215 = scmp.eq.s32.totalorder %s25, 2
      %p216 = scmp.ne.s32.totalorder %s211, %s213
      %p217 = scmp.eq.s32.totalorder %s25, 0
      %p218 = por %p216, %p217
      %p219 = scmp.ne.s32.totalorder %s211, %s213
      %p220 = scmp.eq.s32.totalorder %s30, 2
      %p221 = por %p219, %p220
      %p222 = scmp.ne.s32.totalorder %s213, %s214
      %p223 = scmp.eq.s32.totalorder %s30, 0
      %p224 = por %p222, %p223
      %p225 = scmp.ne.s32.totalorder %s213, %s214
      %p226 = scmp.eq.s32.totalorder %s31, 2
      %p227 = por %p225, %p226
      %p229 = scmp.ne.s32.totalorder %s214, %s228
      %p230 = scmp.eq.s32.totalorder %s31, 0
      %p231 = por %p229, %p230
      %s233 = sadd.s32 %s232, 1
      %p236 = scmp.eq.s32.totalorder %s25, 2
      %p237 = scmp.ne.s32.totalorder %s232, %s234
      %p238 = scmp.eq.s32.totalorder %s25, 0
      %p239 = por %p237, %p238
      %p240 = scmp.ne.s32.totalorder %s232, %s234
      %p241 = scmp.eq.s32.totalorder %s30, 2
      %p242 = por %p240, %p241
      %p243 = scmp.ne.s32.totalorder %s234, %s235
      %p244 = scmp.eq.s32.totalorder %s30, 0
      %p245 = por %p243, %p244
      %p246 = scmp.ne.s32.totalorder %s234, %s235
      %p247 = scmp.eq.s32.totalorder %s31, 2
      %p248 = por %p246, %p247
      %p250 = scmp.ne.s32.totalorder %s235, %s249
      %p251 = scmp.eq.s32.totalorder %s31, 0
      %p252 = por %p250, %p251
      %s253 = ssub.s32 %s25, %s32
      %p254 = scmp.eq.s32.totalorder %s253, 0
      %s256 = sadd.s32 %s255, 1
      %s257 = scalar_select %p254, %s255, %s256
      %p260 = pneg %p254
      %p261 = scmp.eq.s32.totalorder %s25, 2
      %p262 = por %p260, %p261
      %p263 = scmp.ne.s32.totalorder %s255, %s258
      %p264 = scmp.eq.s32.totalorder %s25, 0
      %p265 = por %p263, %p264
      %p266 = scmp.ne.s32.totalorder %s255, %s258
      %p267 = scmp.eq.s32.totalorder %s30, 2
      %p268 = por %p266, %p267
      %p269 = scmp.ne.s32.totalorder %s258, %s259
      %p270 = scmp.eq.s32.totalorder %s30, 0
      %p271 = por %p269, %p270
      %p272 = scmp.ne.s32.totalorder %s258, %s259
      %p273 = scmp.eq.s32.totalorder %s31, 2
      %p274 = por %p272, %p273
      %p276 = scmp.ne.s32.totalorder %s259, %s275
      %p277 = scmp.eq.s32.totalorder %s31, 0
      %p278 = por %p276, %p277
      %p279 = scmp.le.s32.totalorder 1, %s25
      %p280 = scmp.lt.s32.totalorder %s25, 4
      %p281 = pnand %p279, %p280
      %p282 = pneg %p281
      // Predicated region
      $region9: #{tpu_custom_call.1} parent=5 // pred_check
        _
      $region10: #{tpu_custom_call.1} parent=5 // pred_check_branch
        %284 = sbr.rel (%p281) target = $region12
      $region11: #{tpu_custom_call.1} parent=5 // pred_region
        %s285 = ssub.s32 %s25, 1
        // Predicated region
        $region13: #{tpu_custom_call.1} parent=11 // pred_check
          %p286 = pneg %p98
        $region14: #{tpu_custom_call.1} parent=11 // pred_check_branch
          %288 = sbr.rel (%p286) target = $region16
        $region15: #{tpu_custom_call.1} parent=11 // pred_region
          %s290 = ssub.s32 4928, 4928
          %291 = vsyncadd [#allocation6], %s290
          %s292 = sshll.u32 [#allocation5], 4
          %s293 = int_to_ptr.vmem [resolvable:$true] %s292
          %298 = dma.hbm_to_vmem [thread:$0]  %s2, 4928, %s293, [#allocation6], 448, 448, 28
        $region16: #{tpu_custom_call.1} parent=11 // pred_fallthru
          _
        // Predicated region
        $region17: #{tpu_custom_call.1} parent=11 // pred_check
          %p299 = pneg %p119
        $region18: #{tpu_custom_call.1} parent=11 // pred_check_branch
          %301 = sbr.rel (%p299) target = $region20
        $region19: #{tpu_custom_call.1} parent=11 // pred_region
          %s303 = ssub.s32 112, 112
          %304 = vsyncadd [#allocation6], %s303
          %s306 = sshll.u32 [#allocation7], 4
          %s307 = int_to_ptr.vmem [resolvable:$true] %s306
          %309 = dma.hbm_to_vmem [thread:$0]  %s3, 112, %s307, [#allocation6]
        $region20: #{tpu_custom_call.1} parent=11 // pred_fallthru
          _
        // Predicated region
        $region21: #{tpu_custom_call.1} parent=11 // pred_check
          %p310 = pneg %p140
        $region22: #{tpu_custom_call.1} parent=11 // pred_check_branch
          %312 = sbr.rel (%p310) target = $region24
        $region23: #{tpu_custom_call.1} parent=11 // pred_region
          %s314 = ssub.s32 59904, 59904
          %315 = vsyncadd [#allocation9], %s314
          %s316 = sshll.u32 [#allocation8], 4
          %s317 = int_to_ptr.vmem [resolvable:$true] %s316
          %322 = dma.hbm_to_vmem [thread:$0]  %s4, 59904, %s317, [#allocation9], 384, 384, 24
        $region24: #{tpu_custom_call.1} parent=11 // pred_fallthru
          _
        // Predicated region
        $region25: #{tpu_custom_call.1} parent=11 // pred_check
          %p323 = pneg %p161
        $region26: #{tpu_custom_call.1} parent=11 // pred_check_branch
          %325 = sbr.rel (%p323) target = $region28
        $region27: #{tpu_custom_call.1} parent=11 // pred_region
          %s327 = ssub.s32 96, 96
          %328 = vsyncadd [#allocation9], %s327
          %s330 = sshll.u32 [#allocation10], 4
          %s331 = int_to_ptr.vmem [resolvable:$true] %s330
          %333 = dma.hbm_to_vmem [thread:$0]  %s5, 96, %s331, [#allocation9]
        $region28: #{tpu_custom_call.1} parent=11 // pred_fallthru
          _
        // Predicated region
        $region29: #{tpu_custom_call.1} parent=11 // pred_check
          %p334 = pneg %p182
        $region30: #{tpu_custom_call.1} parent=11 // pred_check_branch
          %336 = sbr.rel (%p334) target = $region32
        $region31: #{tpu_custom_call.1} parent=11 // pred_region
          _
        $region32: #{tpu_custom_call.1} parent=11 // pred_fallthru
          _
        // Predicated region
        $region33: #{tpu_custom_call.1} parent=11 // pred_check
          %p337 = pneg %p203
        $region34: #{tpu_custom_call.1} parent=11 // pred_check_branch
          %339 = sbr.rel (%p337) target = $region36
        $region35: #{tpu_custom_call.1} parent=11 // pred_region
          %s341 = ssub.s32 32, 32
          %342 = vsyncadd [#allocation12], %s341
          %s344 = sshll.u32 [#allocation11], 4
          %s345 = int_to_ptr.vmem [resolvable:$true] %s344
          %347 = dma.hbm_to_vmem [thread:$0]  %s7, 32, %s345, [#allocation12]
        $region36: #{tpu_custom_call.1} parent=11 // pred_fallthru
          _
        // Predicated region
        $region37: #{tpu_custom_call.1} parent=11 // pred_check
          %p348 = pneg %p224
        $region38: #{tpu_custom_call.1} parent=11 // pred_check_branch
          %350 = sbr.rel (%p348) target = $region40
        $region39: #{tpu_custom_call.1} parent=11 // pred_region
          _
        $region40: #{tpu_custom_call.1} parent=11 // pred_fallthru
          _
        // Predicated region
        $region41: #{tpu_custom_call.1} parent=11 // pred_check
          %p351 = pneg %p245
        $region42: #{tpu_custom_call.1} parent=11 // pred_check_branch
          %353 = sbr.rel (%p351) target = $region44
        $region43: #{tpu_custom_call.1} parent=11 // pred_region
          %s355 = ssub.s32 16, 16
          %356 = vsyncadd [#allocation12], %s355
          %s358 = sshll.u32 [#allocation13], 4
          %s359 = int_to_ptr.vmem [resolvable:$true] %s358
          %361 = dma.hbm_to_vmem [thread:$0]  %s9, 16, %s359, [#allocation12]
        $region44: #{tpu_custom_call.1} parent=11 // pred_fallthru
          _
      $region12: #{tpu_custom_call.1} parent=5 // pred_fallthru
        _
      %p362 = scmp.lt.s32.totalorder %s25, 3
      // Predicated region
      $region45: #{tpu_custom_call.1} parent=5 // pred_check
        %p363 = pneg %p362
      $region46: #{tpu_custom_call.1} parent=5 // pred_check_branch
        %365 = sbr.rel (%p363) target = $region48
      $region47: #{tpu_custom_call.1} parent=5 // pred_region
        // Predicated region
        $region49: #{tpu_custom_call.1} parent=47 // pred_check
          %p366 = pneg %p45
        $region50: #{tpu_custom_call.1} parent=47 // pred_check_branch
          %368 = sbr.rel (%p366) target = $region52
        $region51: #{tpu_custom_call.1} parent=47 // pred_region
          %s369 = sand.u32 %s35, 1
          %s370 = scalar_lea.sflag [#allocation3], %s369
          %s371 = sand.u32 %s35, 1
          %s372 = smul.addr %s371, 28
          %s373 = scalar_lea.vmem [#allocation2], %s372
          %s375 = ssub.s32 448, 448
          %376 = vsyncadd %s370, %s375
          %s377 = smul.addr %s25, 7
          %s378 = smul.addr %s377, 64
          %s379 = scalar_lea.hbm %s0, %s378
          %s381 = sshll.u32 %s373, 4
          %s382 = int_to_ptr.vmem [resolvable:$true] %s381
          %384 = dma.hbm_to_vmem [thread:$0]  %s379, 448, %s382, %s370
        $region52: #{tpu_custom_call.1} parent=47 // pred_fallthru
          _
        // Predicated region
        $region53: #{tpu_custom_call.1} parent=47 // pred_check
          %p385 = pneg %p71
        $region54: #{tpu_custom_call.1} parent=47 // pred_check_branch
          %387 = sbr.rel (%p385) target = $region56
        $region55: #{tpu_custom_call.1} parent=47 // pred_region
          %p388 = scmp.lt.s32.totalorder %s25, 2
          %s389 = scalar_select %p388, %s25, 2
          %s390 = smul.addr %s389, 8
          %s391 = scalar_lea.vmem %s1, %s390
        $region56: #{tpu_custom_call.1} parent=47 // pred_fallthru
          _
      $region48: #{tpu_custom_call.1} parent=5 // pred_fallthru
        _
      %p392 = scmp.le.s32.totalorder 1, %s25
      %p393 = scmp.lt.s32.totalorder %s25, 4
      %p394 = pnand %p392, %p393
      %p395 = pneg %p394
      // Predicated region
      $region57: #{tpu_custom_call.1} parent=5 // pred_check
        _
      $region58: #{tpu_custom_call.1} parent=5 // pred_check_branch
        %397 = sbr.rel (%p394) target = $region60
      $region59: #{tpu_custom_call.1} parent=5 // pred_region
        %s398 = ssub.s32 %s25, 1
        %s399 = sand.u32 %s38, 1
        %s400 = scalar_lea.sflag [#allocation3], %s399
        %s401 = sand.u32 %s38, 1
        %s402 = smul.addr %s401, 28
        %s403 = scalar_lea.vmem [#allocation2], %s402
        // Predicated region
        $region61: #{tpu_custom_call.1} parent=59 // pred_check
          %p404 = pneg %p51
        $region62: #{tpu_custom_call.1} parent=59 // pred_check_branch
          %406 = sbr.rel (%p404) target = $region64
        $region63: #{tpu_custom_call.1} parent=59 // pred_region
          %407 = dma.done %s400, 448
        $region64: #{tpu_custom_call.1} parent=59 // pred_fallthru
          _
        // Predicated region
        $region65: #{tpu_custom_call.1} parent=59 // pred_check
          %p408 = pneg %p98
        $region66: #{tpu_custom_call.1} parent=59 // pred_check_branch
          %410 = sbr.rel (%p408) target = $region68
        $region67: #{tpu_custom_call.1} parent=59 // pred_region
          %411 = dma.done [#allocation6], 4928
        $region68: #{tpu_custom_call.1} parent=59 // pred_fallthru
          _
        // Predicated region
        $region69: #{tpu_custom_call.1} parent=59 // pred_check
          %p412 = pneg %p119
        $region70: #{tpu_custom_call.1} parent=59 // pred_check_branch
          %414 = sbr.rel (%p412) target = $region72
        $region71: #{tpu_custom_call.1} parent=59 // pred_region
          %415 = dma.done [#allocation6], 112
        $region72: #{tpu_custom_call.1} parent=59 // pred_fallthru
          _
        // Predicated region
        $region73: #{tpu_custom_call.1} parent=59 // pred_check
          %p416 = pneg %p140
        $region74: #{tpu_custom_call.1} parent=59 // pred_check_branch
          %418 = sbr.rel (%p416) target = $region76
        $region75: #{tpu_custom_call.1} parent=59 // pred_region
          %419 = dma.done [#allocation9], 59904
        $region76: #{tpu_custom_call.1} parent=59 // pred_fallthru
          _
        // Predicated region
        $region77: #{tpu_custom_call.1} parent=59 // pred_check
          %p420 = pneg %p161
        $region78: #{tpu_custom_call.1} parent=59 // pred_check_branch
          %422 = sbr.rel (%p420) target = $region80
        $region79: #{tpu_custom_call.1} parent=59 // pred_region
          %423 = dma.done [#allocation9], 96
        $region80: #{tpu_custom_call.1} parent=59 // pred_fallthru
          _
        // Predicated region
        $region81: #{tpu_custom_call.1} parent=59 // pred_check
          %p424 = pneg %p203
        $region82: #{tpu_custom_call.1} parent=59 // pred_check_branch
          %426 = sbr.rel (%p424) target = $region84
        $region83: #{tpu_custom_call.1} parent=59 // pred_region
          %427 = dma.done [#allocation12], 32
        $region84: #{tpu_custom_call.1} parent=59 // pred_fallthru
          _
        // Predicated region
        $region85: #{tpu_custom_call.1} parent=59 // pred_check
          %p428 = pneg %p245
        $region86: #{tpu_custom_call.1} parent=59 // pred_check_branch
          %430 = sbr.rel (%p428) target = $region88
        $region87: #{tpu_custom_call.1} parent=59 // pred_region
          %431 = dma.done [#allocation12], 16
        $region88: #{tpu_custom_call.1} parent=59 // pred_fallthru
          _
        %s432 = sand.u32 %s38, 1
        %s433 = scalar_lea.sflag [#allocation3], %s432
        %s434 = sand.u32 %s38, 1
        %s435 = smul.addr %s434, 28
        %s436 = scalar_lea.vmem [#allocation2], %s435
        %p437 = pneg %p51
        %p438 = pneg %p48
        %p439 = scmp.lt.s32.totalorder %s30, 2
        %s440 = scalar_select %p439, %s30, 2
        %s441 = smul.addr %s440, 8
        %s442 = scalar_lea.vmem %s1, %s441
        %p443 = pneg %p77
        %p444 = pneg %p74
        %p445 = pneg %p98
        %p446 = pneg %p95
        %p447 = pneg %p119
        %p448 = pneg %p116
        %p449 = pneg %p140
        %p450 = pneg %p137
        %p451 = pneg %p161
        %p452 = pneg %p158
        %p453 = pneg %p182
        %p454 = pneg %p179
        %p455 = pneg %p203
        %p456 = pneg %p200
        %p457 = pneg %p224
        %p458 = pneg %p221
        %p459 = pneg %p245
        %p460 = pneg %p242
        %p461 = pneg %p271
        %p462 = pneg %p268
        %s463 = sand.u32 %s258, 1
        %s464 = scalar_lea.sflag [#allocation4], %s463
        %s465 = sand.u32 %s258, 1
        %s466 = smul.addr %s465, 8
        %s467 = scalar_lea.vmem [#allocation14], %s466
        %p468 = scmp.lt.s32.totalorder %s30, 2
        %s469 = scalar_select %p468, %s30, 2
        %s470 = smul.addr %s469, 8
        %s471 = scalar_lea.vmem %s1, %s470
        %v473 = vld [vmem:[%s403] sm:$0xff]
        %v474 = vld [vmem:[%s403 + $0x8] sm:$0xff]
        %v475 = vld [vmem:[%s403 + $0x10] sm:$0xff]
        %v476 = vld [vmem:[%s403 + $0x18] sm:$0xf]
        %v478 = vunpack.c.l.b16 %v473
        %v479 = vpack.c.b16 %v478, %v478
        %480 = vrot.lane.b32.xlu0 %v479, 100
        %v481 = vpop.permute.xlu0 %480
        %v482 = vunpack.c.h.b16 %v473
        %v483 = vpack.c.b16 %v482, %v482
        %484 = vrot.lane.b32.xlu0 %v479, 72
        %v485 = vpop.permute.xlu0 %484
        %486 = vrot.lane.b32.xlu0 %v483, 72
        %v487 = vpop.permute.xlu0 %486
        %vm488 = vcmask 588800
        %v489 = vsel %vm488, %v485, %v487
        %490 = vrot.lane.b32.xlu0 %v479, 44
        %v491 = vpop.permute.xlu0 %490
        %492 = vrot.lane.b32.xlu0 %v483, 44
        %v493 = vpop.permute.xlu0 %492
        %vm494 = vcmask 359424
        %v495 = vsel %vm494, %v491, %v493
        %496 = vrot.lane.b32.xlu0 %v479, 16
        %v497 = vpop.permute.xlu0 %496
        %498 = vrot.lane.b32.xlu0 %v483, 16
        %v499 = vpop.permute.xlu0 %498
        %vm500 = vcmask 130048
        %v501 = vsel %vm500, %v497, %v499
        %502 = vrot.lane.b32.xlu0 %v483, 116
        %v503 = vpop.permute.xlu0 %502
        %504 = vrot.lane.b32.xlu0 %v483, 88
        %v505 = vpop.permute.xlu0 %504
        %v507 = vunpack.c.l.b16 %v474
        %v508 = vpack.c.b16 %v507, %v507
        %509 = vrot.lane.b32.xlu0 %v483, 60
        %v510 = vpop.permute.xlu0 %509
        %511 = vrot.lane.b32.xlu0 %v508, 60
        %v512 = vpop.permute.xlu0 %511
        %vm513 = vcmask 490496
        %v514 = vsel %vm513, %v510, %v512
        %515 = vrot.lane.b32.xlu0 %v483, 32
        %v516 = vpop.permute.xlu0 %515
        %517 = vrot.lane.b32.xlu0 %v508, 32
        %v518 = vpop.permute.xlu0 %517
        %vm519 = vcmask 261120
        %v520 = vsel %vm519, %v516, %v518
        %521 = vrot.lane.b32.xlu0 %v483, 4
        %v522 = vpop.permute.xlu0 %521
        %523 = vrot.lane.b32.xlu0 %v508, 4
        %v524 = vpop.permute.xlu0 %523
        %vm525 = vcmask 31744
        %v526 = vsel %vm525, %v522, %v524
        %527 = vrot.lane.b32.xlu0 %v508, 104
        %v528 = vpop.permute.xlu0 %527
        %v529 = vunpack.c.h.b16 %v474
        %v530 = vpack.c.b16 %v529, %v529
        %531 = vrot.lane.b32.xlu0 %v508, 76
        %v532 = vpop.permute.xlu0 %531
        %533 = vrot.lane.b32.xlu0 %v530, 76
        %v534 = vpop.permute.xlu0 %533
        %vm535 = vcmask 621568
        %v536 = vsel %vm535, %v532, %v534
        %537 = vrot.lane.b32.xlu0 %v508, 48
        %v538 = vpop.permute.xlu0 %537
        %539 = vrot.lane.b32.xlu0 %v530, 48
        %v540 = vpop.permute.xlu0 %539
        %vm541 = vcmask 392192
        %v542 = vsel %vm541, %v538, %v540
        %543 = vrot.lane.b32.xlu0 %v508, 20
        %v544 = vpop.permute.xlu0 %543
        %545 = vrot.lane.b32.xlu0 %v530, 20
        %v546 = vpop.permute.xlu0 %545
        %vm547 = vcmask 162816
        %v548 = vsel %vm547, %v544, %v546
        %549 = vrot.lane.b32.xlu0 %v530, 120
        %v550 = vpop.permute.xlu0 %549
        %551 = vrot.lane.b32.xlu0 %v530, 92
        %v552 = vpop.permute.xlu0 %551
        %vm553 = vcmask 1043456
        %v556 = vsel %vm553, %v473, %v481
        %v559 = vsel %vm553, %v489, %v495
        %v562 = vsel %vm553, %v501, %v503
        %v565 = vsel %vm553, %v505, %v514
        %v568 = vsel %vm553, %v520, %v526
        %v571 = vsel %vm553, %v528, %v536
        %v574 = vsel %vm553, %v542, %v548
        %v577 = vsel %vm553, %v550, %v552
        %v579 = vunpack.c.l.b16 %v475
        %v580 = vpack.c.b16 %v579, %v579
        %581 = vrot.lane.b32.xlu0 %v530, 64
        %v582 = vpop.permute.xlu0 %581
        %583 = vrot.lane.b32.xlu0 %v580, 64
        %v584 = vpop.permute.xlu0 %583
        %vm585 = vcmask 523264
        %v586 = vsel %vm585, %v582, %v584
        %587 = vrot.lane.b32.xlu0 %v530, 36
        %v588 = vpop.permute.xlu0 %587
        %589 = vrot.lane.b32.xlu0 %v580, 36
        %v590 = vpop.permute.xlu0 %589
        %vm591 = vcmask 293888
        %v592 = vsel %vm591, %v588, %v590
        %593 = vrot.lane.b32.xlu0 %v530, 8
        %v594 = vpop.permute.xlu0 %593
        %595 = vrot.lane.b32.xlu0 %v580, 8
        %v596 = vpop.permute.xlu0 %595
        %vm597 = vcmask 64512
        %v598 = vsel %vm597, %v594, %v596
        %599 = vrot.lane.b32.xlu0 %v580, 108
        %v600 = vpop.permute.xlu0 %599
        %v601 = vunpack.c.h.b16 %v475
        %v602 = vpack.c.b16 %v601, %v601
        %603 = vrot.lane.b32.xlu0 %v580, 80
        %v604 = vpop.permute.xlu0 %603
        %605 = vrot.lane.b32.xlu0 %v602, 80
        %v606 = vpop.permute.xlu0 %605
        %vm607 = vcmask 654336
        %v608 = vsel %vm607, %v604, %v606
        %609 = vrot.lane.b32.xlu0 %v580, 52
        %v610 = vpop.permute.xlu0 %609
        %611 = vrot.lane.b32.xlu0 %v602, 52
        %v612 = vpop.permute.xlu0 %611
        %vm613 = vcmask 424960
        %v614 = vsel %vm613, %v610, %v612
        %615 = vrot.lane.b32.xlu0 %v580, 24
        %v616 = vpop.permute.xlu0 %615
        %617 = vrot.lane.b32.xlu0 %v602, 24
        %v618 = vpop.permute.xlu0 %617
        %vm619 = vcmask 195584
        %v620 = vsel %vm619, %v616, %v618
        %621 = vrot.lane.b32.xlu0 %v602, 124
        %v622 = vpop.permute.xlu0 %621
        %623 = vrot.lane.b32.xlu0 %v602, 96
        %v624 = vpop.permute.xlu0 %623
        %v626 = vunpack.c.l.b16 %v476
        %v627 = vpack.c.b16 %v626, %v626
        %628 = vrot.lane.b32.xlu0 %v602, 68
        %v629 = vpop.permute.xlu0 %628
        %630 = vrot.lane.b32.xlu0 %v627, 68
        %v631 = vpop.permute.xlu0 %630
        %vm632 = vcmask 556032
        %v633 = vsel %vm632, %v629, %v631
        %v636 = vsel %vm553, %v586, %v592
        %v639 = vsel %vm553, %v598, %v600
        %v642 = vsel %vm553, %v608, %v614
        %v645 = vsel %vm553, %v620, %v622
        %v648 = vsel %vm553, %v624, %v633
        %v649 = vld [vmem:[#allocation5] sm:$0xff]
        %v650 = vld [vmem:[#allocation5 + $0x8] sm:$0xff]
        %v651 = vld [vmem:[#allocation5 + $0x10] sm:$0xff]
        %v652 = vld [vmem:[#allocation5 + $0x18] sm:$0xf]
        %v653 = vld [vmem:[#allocation5 + $0x1c] sm:$0xff]
        %v654 = vld [vmem:[#allocation5 + $0x24] sm:$0xff]
        %v655 = vld [vmem:[#allocation5 + $0x2c] sm:$0xff]
        %v656 = vld [vmem:[#allocation5 + $0x34] sm:$0xf]
        %v657 = vld [vmem:[#allocation5 + $0x38] sm:$0xff]
        %v658 = vld [vmem:[#allocation5 + $0x40] sm:$0xff]
        %v659 = vld [vmem:[#allocation5 + $0x48] sm:$0xff]
        %v660 = vld [vmem:[#allocation5 + $0x50] sm:$0xf]
        %v661 = vld [vmem:[#allocation5 + $0x54] sm:$0xff]
        %v662 = vld [vmem:[#allocation5 + $0x5c] sm:$0xff]
        %v663 = vld [vmem:[#allocation5 + $0x64] sm:$0xff]
        %v664 = vld [vmem:[#allocation5 + $0x6c] sm:$0xf]
        %v665 = vld [vmem:[#allocation5 + $0x70] sm:$0xff]
        %v666 = vld [vmem:[#allocation5 + $0x78] sm:$0xff]
        %v667 = vld [vmem:[#allocation5 + $0x80] sm:$0xff]
        %v668 = vld [vmem:[#allocation5 + $0x88] sm:$0xf]
        %v669 = vld [vmem:[#allocation5 + $0x8c] sm:$0xff]
        %v670 = vld [vmem:[#allocation5 + $0x94] sm:$0xff]
        %v671 = vld [vmem:[#allocation5 + $0x9c] sm:$0xff]
        %v672 = vld [vmem:[#allocation5 + $0xa4] sm:$0xf]
        %v673 = vld [vmem:[#allocation5 + $0xa8] sm:$0xff]
        %v674 = vld [vmem:[#allocation5 + $0xb0] sm:$0xff]
        %v675 = vld [vmem:[#allocation5 + $0xb8] sm:$0xff]
        %v676 = vld [vmem:[#allocation5 + $0xc0] sm:$0xf]
        %v677 = vld [vmem:[#allocation5 + $0xc4] sm:$0xff]
        %v678 = vld [vmem:[#allocation5 + $0xcc] sm:$0xff]
        %v679 = vld [vmem:[#allocation5 + $0xd4] sm:$0xff]
        %v680 = vld [vmem:[#allocation5 + $0xdc] sm:$0xf]
        %v681 = vld [vmem:[#allocation5 + $0xe0] sm:$0xff]
        %v682 = vld [vmem:[#allocation5 + $0xe8] sm:$0xff]
        %v683 = vld [vmem:[#allocation5 + $0xf0] sm:$0xff]
        %v684 = vld [vmem:[#allocation5 + $0xf8] sm:$0xf]
        %v685 = vld [vmem:[#allocation5 + $0xfc] sm:$0xff]
        %v686 = vld [vmem:[#allocation5 + $0x104] sm:$0xff]
        %v687 = vld [vmem:[#allocation5 + $0x10c] sm:$0xff]
        %v688 = vld [vmem:[#allocation5 + $0x114] sm:$0xf]
        %v689 = vld [vmem:[#allocation5 + $0x118] sm:$0x33]
        %v690 = vld [vmem:[#allocation5 + $0x120] sm:$0x33]
        %v691 = vld [vmem:[#allocation5 + $0x128] sm:$0x33]
        %v692 = vld [vmem:[#allocation5 + $0x130] sm:$0x3]
        %v693 = vld [vmem:[#allocation7] sm:$0x7f]
        %v695 = vlaneseq
        %v696 = vshrl.u32 %v695, 7
        %v697 = vsub.s32 0, %v696
        %v698 = vrot.slane %v693, %v697
        %v699 = vlaneseq
        %v700 = vshrl.u32 %v699, 7
        %v701 = vsub.s32 1, %v700
        %v702 = vrot.slane %v693, %v701
        %v703 = vlaneseq
        %v704 = vshrl.u32 %v703, 7
        %v705 = vsub.s32 2, %v704
        %v706 = vrot.slane %v693, %v705
        %v707 = vlaneseq
        %v708 = vshrl.u32 %v707, 7
        %v709 = vsub.s32 3, %v708
        %v710 = vrot.slane %v693, %v709
        %v711 = vlaneseq
        %v712 = vshrl.u32 %v711, 7
        %v713 = vsub.s32 4, %v712
        %v714 = vrot.slane %v693, %v713
        %v715 = vlaneseq
        %v716 = vshrl.u32 %v715, 7
        %v717 = vsub.s32 5, %v716
        %v718 = vrot.slane %v693, %v717
        %v719 = vlaneseq
        %v720 = vshrl.u32 %v719, 7
        %v721 = vsub.s32 6, %v720
        %v722 = vrot.slane %v693, %v721
        %v774 = vunpack.c.l.b16 %v649
        %v775 = vunpack.c.h.b16 %v649
        %v776 = vunpack.c.l.b16 %v650
        %v777 = vunpack.c.h.b16 %v650
        %v778 = vunpack.c.l.b16 %v651
        %v779 = vunpack.c.h.b16 %v651
        %v780 = vunpack.c.l.b16 %v652
        %v781 = vunpack.c.l.b16 %v653
        %v782 = vunpack.c.h.b16 %v653
        %v783 = vunpack.c.l.b16 %v654
        %v784 = vunpack.c.h.b16 %v654
        %v785 = vunpack.c.l.b16 %v655
        %v786 = vunpack.c.h.b16 %v655
        %v787 = vunpack.c.l.b16 %v656
        %v788 = vunpack.c.l.b16 %v657
        %v789 = vunpack.c.h.b16 %v657
        %v790 = vunpack.c.l.b16 %v658
        %v791 = vunpack.c.h.b16 %v658
        %v792 = vunpack.c.l.b16 %v659
        %v793 = vunpack.c.h.b16 %v659
        %v794 = vunpack.c.l.b16 %v660
        %v795 = vunpack.c.l.b16 %v661
        %v796 = vunpack.c.h.b16 %v661
        %v797 = vunpack.c.l.b16 %v662
        %v798 = vunpack.c.h.b16 %v662
        %v799 = vunpack.c.l.b16 %v663
        %v800 = vunpack.c.h.b16 %v663
        %v801 = vunpack.c.l.b16 %v664
        %v802 = vunpack.c.l.b16 %v665
        %v803 = vunpack.c.h.b16 %v665
        %v804 = vunpack.c.l.b16 %v666
        %v805 = vunpack.c.h.b16 %v666
        %v806 = vunpack.c.l.b16 %v667
        %v807 = vunpack.c.h.b16 %v667
        %v808 = vunpack.c.l.b16 %v668
        %v809 = vunpack.c.l.b16 %v669
        %v810 = vunpack.c.h.b16 %v669
        %v811 = vunpack.c.l.b16 %v670
        %v812 = vunpack.c.h.b16 %v670
        %v813 = vunpack.c.l.b16 %v671
        %v814 = vunpack.c.h.b16 %v671
        %v815 = vunpack.c.l.b16 %v672
        %v816 = vunpack.c.l.b16 %v673
        %v817 = vunpack.c.h.b16 %v673
        %v818 = vunpack.c.l.b16 %v674
        %v819 = vunpack.c.h.b16 %v674
        %v820 = vunpack.c.l.b16 %v675
        %v821 = vunpack.c.h.b16 %v675
        %v822 = vunpack.c.l.b16 %v676
        %v823 = vunpack.c.l.b16 %v677
        %v824 = vunpack.c.h.b16 %v677
        %v825 = vunpack.c.l.b16 %v678
        %v826 = vunpack.c.h.b16 %v678
        %v827 = vunpack.c.l.b16 %v679
        %v828 = vunpack.c.h.b16 %v679
        %v829 = vunpack.c.l.b16 %v680
        %v830 = vunpack.c.l.b16 %v681
        %v831 = vunpack.c.h.b16 %v681
        %v832 = vunpack.c.l.b16 %v682
        %v833 = vunpack.c.h.b16 %v682
        %v834 = vunpack.c.l.b16 %v683
        %v835 = vunpack.c.h.b16 %v683
        %v836 = vunpack.c.l.b16 %v684
        %v837 = vunpack.c.l.b16 %v685
        %v838 = vunpack.c.h.b16 %v685
        %v839 = vunpack.c.l.b16 %v686
        %v840 = vunpack.c.h.b16 %v686
        %v841 = vunpack.c.l.b16 %v687
        %v842 = vunpack.c.h.b16 %v687
        %v843 = vunpack.c.l.b16 %v688
        %v844 = vunpack.c.l.b16 %v689
        %v845 = vunpack.c.h.b16 %v689
        %v846 = vunpack.c.l.b16 %v690
        %v847 = vunpack.c.h.b16 %v690
        %v848 = vunpack.c.l.b16 %v691
        %v849 = vunpack.c.h.b16 %v691
        %v850 = vunpack.c.l.b16 %v692
        %v851 = vpack.c.b16 %v781, %v774
        %v852 = vpack.c.b16 %v782, %v775
        %v853 = vpack.c.b16 %v783, %v776
        %v854 = vpack.c.b16 %v784, %v777
        %v855 = vpack.c.b16 %v785, %v778
        %v856 = vpack.c.b16 %v786, %v779
        %v857 = vpack.c.b16 %v787, %v780
        %v858 = vpack.c.b16 %v795, %v788
        %v859 = vpack.c.b16 %v796, %v789
        %v860 = vpack.c.b16 %v797, %v790
        %v861 = vpack.c.b16 %v798, %v791
        %v862 = vpack.c.b16 %v799, %v792
        %v863 = vpack.c.b16 %v800, %v793
        %v864 = vpack.c.b16 %v801, %v794
        %v865 = vpack.c.b16 %v809, %v802
        %v866 = vpack.c.b16 %v810, %v803
        %v867 = vpack.c.b16 %v811, %v804
        %v868 = vpack.c.b16 %v812, %v805
        %v869 = vpack.c.b16 %v813, %v806
        %v870 = vpack.c.b16 %v814, %v807
        %v871 = vpack.c.b16 %v815, %v808
        %v872 = vpack.c.b16 %v823, %v816
        %v873 = vpack.c.b16 %v824, %v817
        %v874 = vpack.c.b16 %v825, %v818
        %v875 = vpack.c.b16 %v826, %v819
        %v876 = vpack.c.b16 %v827, %v820
        %v877 = vpack.c.b16 %v828, %v821
        %v878 = vpack.c.b16 %v829, %v822
        %v879 = vpack.c.b16 %v837, %v830
        %v880 = vpack.c.b16 %v838, %v831
        %v881 = vpack.c.b16 %v839, %v832
        %v882 = vpack.c.b16 %v840, %v833
        %v883 = vpack.c.b16 %v841, %v834
        %v884 = vpack.c.b16 %v842, %v835
        %v885 = vpack.c.b16 %v843, %v836
        %v886 = vpack.c.b16 %v844, %v844
        %v887 = vpack.c.b16 %v845, %v845
        %v888 = vpack.c.b16 %v846, %v846
        %v889 = vpack.c.b16 %v847, %v847
        %v890 = vpack.c.b16 %v848, %v848
        %v891 = vpack.c.b16 %v849, %v849
        %v892 = vpack.c.b16 %v850, %v850
        %vm928 = vcmask 687104
        %v929 = vsel %vm928, %v556, 0
        %v931 = vsel %vm928, %v559, 0
        %v933 = vsel %vm928, %v562, 0
        %v935 = vsel %vm928, %v565, 0
        %v937 = vsel %vm928, %v568, 0
        %v939 = vsel %vm928, %v571, 0
        %v941 = vsel %vm928, %v574, 0
        %v943 = vsel %vm928, %v577, 0
        %v945 = vsel %vm928, %v636, 0
        %v947 = vsel %vm928, %v639, 0
        %v949 = vsel %vm928, %v642, 0
        %v951 = vsel %vm928, %v645, 0
        %v953 = vsel %vm928, %v648, 0
        %vm955 = vcmask 1041408
        %v957 = vsel %vm955, %v886, 0
        %v960 = vsel %vm955, %v887, 0
        %v963 = vsel %vm955, %v888, 0
        %v966 = vsel %vm955, %v889, 0
        %v969 = vsel %vm955, %v890, 0
        %v972 = vsel %vm955, %v891, 0
        %v975 = vsel %vm955, %v892, 0
        %977 = vmatprep.subr.bf16.mxu0 %v852
        %978 = vmatpush1.bf16.msra.mxu0 %v851
        %979 = vmatprep.subr.bf16.mxu0 %v859
        %980 = vmatpush1.bf16.msra.mxu0 %v858
        %981 = vmatprep.subr.bf16.mxu0 %v866
        %982 = vmatpush1.bf16.msra.mxu0 %v865
        %983 = vmatprep.subr.bf16.mxu0 %v873
        %984 = vmatpush1.bf16.msra.mxu0 %v872
        %985 = vmatprep.subr.bf16.mxu0 %v880
        %986 = vmatpush1.bf16.msra.mxu0 %v879
        %987 = vmatprep.subr.bf16.mxu0 %v960
        %988 = vmatpush1.bf16.msra.mxu0 %v957
        %989 = vmatprep.subr.bf16.mxu0 0
        %990 = vmatpush1.bf16.msra.mxu0 0
        %991 = vmatprep.subr.bf16.mxu0 0
        %992 = vmatpush1.bf16.msra.mxu0 0
        %993 = vmatprep.subr.bf16.mxu0 0
        %994 = vmatpush1.bf16.msra.mxu0 0
        %995 = vmatprep.subr.bf16.mxu0 0
        %996 = vmatpush1.bf16.msra.mxu0 0
        %997 = vmatprep.subr.bf16.mxu0 0
        %998 = vmatpush1.bf16.msra.mxu0 0
        %999 = vmatprep.subr.bf16.mxu0 0
        %1000 = vmatpush1.bf16.msra.mxu0 0
        %1001 = vmatprep.subr.bf16.mxu0 0
        %1002 = vmatpush1.bf16.msra.mxu0 0
        %1003 = vmatprep.subr.bf16.mxu0 0
        %1004 = vmatpush1.bf16.msra.mxu0 0
        %1005 = vmatprep.subr.bf16.mxu0 0
        %1006 = vmatpush1.bf16.msra.mxu0 0
        %1007 = vmatprep.subr.bf16.mxu0 0
        %1008 = vmatpush1.bf16.msra.mxu0 0
        %1009 = vmatprep.mubr.bf16.mxu0 0
        %1010 = vmatmul.mubr.bf16.gmra.mrb[0].mxu0 %v929
        %v1011 = vpop.f32.mrb[0].mxu0
        %v1012 = vadd.f32 %v698, %v1011
        %v1013 = vpop.f32.mrb[0].mxu0
        %v1014 = vadd.f32 %v702, %v1013
        %v1015 = vpop.f32.mrb[0].mxu0
        %v1016 = vadd.f32 %v698, %v1015
        %v1017 = vpop.f32.mrb[0].mxu0
        %v1018 = vadd.f32 %v702, %v1017
        %1019 = vmatprep.mubr.bf16.mxu0 0
        %1020 = vmatmul.mubr.bf16.gmra.mrb[0].mxu0 %v931
        %v1021 = vpop.f32.mrb[0].mxu0
        %v1022 = vadd.f32 %v698, %v1021
        %v1023 = vpop.f32.mrb[0].mxu0
        %v1024 = vadd.f32 %v702, %v1023
        %v1025 = vpop.f32.mrb[0].mxu0
        %v1026 = vadd.f32 %v698, %v1025
        %v1027 = vpop.f32.mrb[0].mxu0
        %v1028 = vadd.f32 %v702, %v1027
        %1029 = vmatprep.mubr.bf16.mxu0 0
        %1030 = vmatmul.mubr.bf16.gmra.mrb[0].mxu0 %v933
        %v1031 = vpop.f32.mrb[0].mxu0
        %v1032 = vadd.f32 %v698, %v1031
        %v1033 = vpop.f32.mrb[0].mxu0
        %v1034 = vadd.f32 %v702, %v1033
        %v1035 = vpop.f32.mrb[0].mxu0
        %v1036 = vadd.f32 %v698, %v1035
        %v1037 = vpop.f32.mrb[0].mxu0
        %v1038 = vadd.f32 %v702, %v1037
        %1039 = vmatprep.mubr.bf16.mxu0 0
        %1040 = vmatmul.mubr.bf16.gmra.mrb[0].mxu0 %v935
        %v1041 = vpop.f32.mrb[0].mxu0
        %v1042 = vadd.f32 %v698, %v1041
        %v1043 = vpop.f32.mrb[0].mxu0
        %v1044 = vadd.f32 %v702, %v1043
        %v1045 = vpop.f32.mrb[0].mxu0
        %v1046 = vadd.f32 %v698, %v1045
        %v1047 = vpop.f32.mrb[0].mxu0
        %v1048 = vadd.f32 %v702, %v1047
        %1049 = vmatprep.mubr.bf16.mxu0 0
        %1050 = vmatmul.mubr.bf16.gmra.mrb[0].mxu0 %v937
        %v1051 = vpop.f32.mrb[0].mxu0
        %v1052 = vadd.f32 %v698, %v1051
        %v1053 = vpop.f32.mrb[0].mxu0
        %v1054 = vadd.f32 %v702, %v1053
        %v1055 = vpop.f32.mrb[0].mxu0
        %v1056 = vadd.f32 %v698, %v1055
        %v1057 = vpop.f32.mrb[0].mxu0
        %v1058 = vadd.f32 %v702, %v1057
        %1059 = vmatprep.mubr.bf16.mxu0 0
        %1060 = vmatmul.mubr.bf16.gmra.mrb[0].mxu0 %v939
        %v1061 = vpop.f32.mrb[0].mxu0
        %v1062 = vadd.f32 %v698, %v1061
        %v1063 = vpop.f32.mrb[0].mxu0
        %v1064 = vadd.f32 %v702, %v1063
        %v1065 = vpop.f32.mrb[0].mxu0
        %v1066 = vadd.f32 %v698, %v1065
        %v1067 = vpop.f32.mrb[0].mxu0
        %v1068 = vadd.f32 %v702, %v1067
        %1069 = vmatprep.mubr.bf16.mxu0 0
        %1070 = vmatmul.mubr.bf16.gmra.mrb[0].mxu0 %v941
        %v1071 = vpop.f32.mrb[0].mxu0
        %v1072 = vadd.f32 %v698, %v1071
        %v1073 = vpop.f32.mrb[0].mxu0
        %v1074 = vadd.f32 %v702, %v1073
        %v1075 = vpop.f32.mrb[0].mxu0
        %v1076 = vadd.f32 %v698, %v1075
        %v1077 = vpop.f32.mrb[0].mxu0
        %v1078 = vadd.f32 %v702, %v1077
        %1079 = vmatprep.mubr.bf16.mxu0 0
        %1080 = vmatmul.mubr.bf16.gmra.mrb[0].mxu0 %v943
        %v1081 = vpop.f32.mrb[0].mxu0
        %v1082 = vadd.f32 %v698, %v1081
        %v1083 = vpop.f32.mrb[0].mxu0
        %v1084 = vadd.f32 %v702, %v1083
        %v1085 = vpop.f32.mrb[0].mxu0
        %v1086 = vadd.f32 %v698, %v1085
        %v1087 = vpop.f32.mrb[0].mxu0
        %v1088 = vadd.f32 %v702, %v1087
        %1089 = vmatprep.mubr.bf16.mxu0 0
        %1090 = vmatmul.mubr.bf16.gmra.mrb[0].mxu0 %v945
        %v1091 = vpop.f32.mrb[0].mxu0
        %v1092 = vadd.f32 %v698, %v1091
        %v1093 = vpop.f32.mrb[0].mxu0
        %v1094 = vadd.f32 %v702, %v1093
        %v1095 = vpop.f32.mrb[0].mxu0
        %v1096 = vadd.f32 %v698, %v1095
        %v1097 = vpop.f32.mrb[0].mxu0
        %v1098 = vadd.f32 %v702, %v1097
        %1099 = vmatprep.mubr.bf16.mxu0 0
        %1100 = vmatmul.mubr.bf16.gmra.mrb[0].mxu0 %v947
        %v1101 = vpop.f32.mrb[0].mxu0
        %v1102 = vadd.f32 %v698, %v1101
        %v1103 = vpop.f32.mrb[0].mxu0
        %v1104 = vadd.f32 %v702, %v1103
        %v1105 = vpop.f32.mrb[0].mxu0
        %v1106 = vadd.f32 %v698, %v1105
        %v1107 = vpop.f32.mrb[0].mxu0
        %v1108 = vadd.f32 %v702, %v1107
        %1109 = vmatprep.mubr.bf16.mxu0 0
        %1110 = vmatmul.mubr.bf16.gmra.mrb[0].mxu0 %v949
        %v1111 = vpop.f32.mrb[0].mxu0
        %v1112 = vadd.f32 %v698, %v1111
        %v1113 = vpop.f32.mrb[0].mxu0
        %v1114 = vadd.f32 %v702, %v1113
        %v1115 = vpop.f32.mrb[0].mxu0
        %v1116 = vadd.f32 %v698, %v1115
        %v1117 = vpop.f32.mrb[0].mxu0
        %v1118 = vadd.f32 %v702, %v1117
        %1119 = vmatprep.mubr.bf16.mxu0 0
        %1120 = vmatmul.mubr.bf16.gmra.mrb[0].mxu0 %v951
        %v1121 = vpop.f32.mrb[0].mxu0
        %v1122 = vadd.f32 %v698, %v1121
        %v1123 = vpop.f32.mrb[0].mxu0
        %v1124 = vadd.f32 %v702, %v1123
        %v1125 = vpop.f32.mrb[0].mxu0
        %v1126 = vadd.f32 %v698, %v1125
        %v1127 = vpop.f32.mrb[0].mxu0
        %v1128 = vadd.f32 %v702, %v1127
        %1129 = vmatprep.mubr.bf16.mxu0 0
        %1130 = vmatmul.mubr.bf16.gmra.mrb[0].mxu0 %v953
        %v1131 = vpop.f32.mrb[0].mxu0
        %v1132 = vadd.f32 %v698, %v1131
        %v1133 = vpop.f32.mrb[0].mxu0
        %v1134 = vadd.f32 %v702, %v1133
        %v1135 = vpop.f32.mrb[0].mxu0
        %v1136 = vadd.f32 %v698, %v1135
        %v1137 = vpop.f32.mrb[0].mxu0
        %v1138 = vadd.f32 %v702, %v1137
        %1139 = vdwg.mxu0
        %1140 = vmatprep.subr.bf16.mxu0 %v854
        %1141 = vmatpush1.bf16.msra.mxu0 %v853
        %1142 = vmatprep.subr.bf16.mxu0 %v861
        %1143 = vmatpush1.bf16.msra.mxu0 %v860
        %1144 = vmatprep.subr.bf16.mxu0 %v868
        %1145 = vmatpush1.bf16.msra.mxu0 %v867
        %1146 = vmatprep.subr.bf16.mxu0 %v875
        %1147 = vmatpush1.bf16.msra.mxu0 %v874
        %1148 = vmatprep.subr.bf16.mxu0 %v882
        %1149 = vmatpush1.bf16.msra.mxu0 %v881
        %1150 = vmatprep.subr.bf16.mxu0 %v966
        %1151 = vmatpush1.bf16.msra.mxu0 %v963
        %1152 = vmatprep.subr.bf16.mxu0 0
        %1153 = vmatpush1.bf16.msra.mxu0 0
        %1154 = vmatprep.subr.bf16.mxu0 0
        %1155 = vmatpush1.bf16.msra.mxu0 0
        %1156 = vmatprep.subr.bf16.mxu0 0
        %1157 = vmatpush1.bf16.msra.mxu0 0
        %1158 = vmatprep.subr.bf16.mxu0 0
        %1159 = vmatpush1.bf16.msra.mxu0 0
        %1160 = vmatprep.subr.bf16.mxu0 0
        %1161 = vmatpush1.bf16.msra.mxu0 0
        %1162 = vmatprep.subr.bf16.mxu0 0
        %1163 = vmatpush1.bf16.msra.mxu0 0
        %1164 = vmatprep.subr.bf16.mxu0 0
        %1165 = vmatpush1.bf16.msra.mxu0 0
        %1166 = vmatprep.subr.bf16.mxu0 0
        %1167 = vmatpush1.bf16.msra.mxu0 0
        %1168 = vmatprep.subr.bf16.mxu0 0
        %1169 = vmatpush1.bf16.msra.mxu0 0
        %1170 = vmatprep.subr.bf16.mxu0 0
        %1171 = vmatpush1.bf16.msra.mxu0 0
        %1172 = vmatprep.mubr.bf16.mxu0 0
        %1173 = vmatmul.mubr.bf16.gmra.mrb[0].mxu0 %v929
        %v1174 = vpop.f32.mrb[0].mxu0
        %v1175 = vadd.f32 %v706, %v1174
        %v1176 = vpop.f32.mrb[0].mxu0
        %v1177 = vadd.f32 %v710, %v1176
        %v1178 = vpop.f32.mrb[0].mxu0
        %v1179 = vadd.f32 %v706, %v1178
        %v1180 = vpop.f32.mrb[0].mxu0
        %v1181 = vadd.f32 %v710, %v1180
        %1182 = vmatprep.mubr.bf16.mxu0 0
        %1183 = vmatmul.mubr.bf16.gmra.mrb[0].mxu0 %v931
        %v1184 = vpop.f32.mrb[0].mxu0
        %v1185 = vadd.f32 %v706, %v1184
        %v1186 = vpop.f32.mrb[0].mxu0
        %v1187 = vadd.f32 %v710, %v1186
        %v1188 = vpop.f32.mrb[0].mxu0
        %v1189 = vadd.f32 %v706, %v1188
        %v1190 = vpop.f32.mrb[0].mxu0
        %v1191 = vadd.f32 %v710, %v1190
        %1192 = vmatprep.mubr.bf16.mxu0 0
        %1193 = vmatmul.mubr.bf16.gmra.mrb[0].mxu0 %v933
        %v1194 = vpop.f32.mrb[0].mxu0
        %v1195 = vadd.f32 %v706, %v1194
        %v1196 = vpop.f32.mrb[0].mxu0
        %v1197 = vadd.f32 %v710, %v1196
        %v1198 = vpop.f32.mrb[0].mxu0
        %v1199 = vadd.f32 %v706, %v1198
        %v1200 = vpop.f32.mrb[0].mxu0
        %v1201 = vadd.f32 %v710, %v1200
        %1202 = vmatprep.mubr.bf16.mxu0 0
        %1203 = vmatmul.mubr.bf16.gmra.mrb[0].mxu0 %v935
        %v1204 = vpop.f32.mrb[0].mxu0
        %v1205 = vadd.f32 %v706, %v1204
        %v1206 = vpop.f32.mrb[0].mxu0
        %v1207 = vadd.f32 %v710, %v1206
        %v1208 = vpop.f32.mrb[0].mxu0
        %v1209 = vadd.f32 %v706, %v1208
        %v1210 = vpop.f32.mrb[0].mxu0
        %v1211 = vadd.f32 %v710, %v1210
        %1212 = vmatprep.mubr.bf16.mxu0 0
        %1213 = vmatmul.mubr.bf16.gmra.mrb[0].mxu0 %v937
        %v1214 = vpop.f32.mrb[0].mxu0
        %v1215 = vadd.f32 %v706, %v1214
        %v1216 = vpop.f32.mrb[0].mxu0
        %v1217 = vadd.f32 %v710, %v1216
        %v1218 = vpop.f32.mrb[0].mxu0
        %v1219 = vadd.f32 %v706, %v1218
        %v1220 = vpop.f32.mrb[0].mxu0
        %v1221 = vadd.f32 %v710, %v1220
        %1222 = vmatprep.mubr.bf16.mxu0 0
        %1223 = vmatmul.mubr.bf16.gmra.mrb[0].mxu0 %v939
        %v1224 = vpop.f32.mrb[0].mxu0
        %v1225 = vadd.f32 %v706, %v1224
        %v1226 = vpop.f32.mrb[0].mxu0
        %v1227 = vadd.f32 %v710, %v1226
        %v1228 = vpop.f32.mrb[0].mxu0
        %v1229 = vadd.f32 %v706, %v1228
        %v1230 = vpop.f32.mrb[0].mxu0
        %v1231 = vadd.f32 %v710, %v1230
        %1232 = vmatprep.mubr.bf16.mxu0 0
        %1233 = vmatmul.mubr.bf16.gmra.mrb[0].mxu0 %v941
        %v1234 = vpop.f32.mrb[0].mxu0
        %v1235 = vadd.f32 %v706, %v1234
        %v1236 = vpop.f32.mrb[0].mxu0
        %v1237 = vadd.f32 %v710, %v1236
        %v1238 = vpop.f32.mrb[0].mxu0
        %v1239 = vadd.f32 %v706, %v1238
        %v1240 = vpop.f32.mrb[0].mxu0
        %v1241 = vadd.f32 %v710, %v1240
        %1242 = vmatprep.mubr.bf16.mxu0 0
        %1243 = vmatmul.mubr.bf16.gmra.mrb[0].mxu0 %v943
        %v1244 = vpop.f32.mrb[0].mxu0
        %v1245 = vadd.f32 %v706, %v1244
        %v1246 = vpop.f32.mrb[0].mxu0
        %v1247 = vadd.f32 %v710, %v1246
        %v1248 = vpop.f32.mrb[0].mxu0
        %v1249 = vadd.f32 %v706, %v1248
        %v1250 = vpop.f32.mrb[0].mxu0
        %v1251 = vadd.f32 %v710, %v1250
        %1252 = vmatprep.mubr.bf16.mxu0 0
        %1253 = vmatmul.mubr.bf16.gmra.mrb[0].mxu0 %v945
        %v1254 = vpop.f32.mrb[0].mxu0
        %v1255 = vadd.f32 %v706, %v1254
        %v1256 = vpop.f32.mrb[0].mxu0
        %v1257 = vadd.f32 %v710, %v1256
        %v1258 = vpop.f32.mrb[0].mxu0
        %v1259 = vadd.f32 %v706, %v1258
        %v1260 = vpop.f32.mrb[0].mxu0
        %v1261 = vadd.f32 %v710, %v1260
        %1262 = vmatprep.mubr.bf16.mxu0 0
        %1263 = vmatmul.mubr.bf16.gmra.mrb[0].mxu0 %v947
        %v1264 = vpop.f32.mrb[0].mxu0
        %v1265 = vadd.f32 %v706, %v1264
        %v1266 = vpop.f32.mrb[0].mxu0
        %v1267 = vadd.f32 %v710, %v1266
        %v1268 = vpop.f32.mrb[0].mxu0
        %v1269 = vadd.f32 %v706, %v1268
        %v1270 = vpop.f32.mrb[0].mxu0
        %v1271 = vadd.f32 %v710, %v1270
        %1272 = vmatprep.mubr.bf16.mxu0 0
        %1273 = vmatmul.mubr.bf16.gmra.mrb[0].mxu0 %v949
        %v1274 = vpop.f32.mrb[0].mxu0
        %v1275 = vadd.f32 %v706, %v1274
        %v1276 = vpop.f32.mrb[0].mxu0
        %v1277 = vadd.f32 %v710, %v1276
        %v1278 = vpop.f32.mrb[0].mxu0
        %v1279 = vadd.f32 %v706, %v1278
        %v1280 = vpop.f32.mrb[0].mxu0
        %v1281 = vadd.f32 %v710, %v1280
        %1282 = vmatprep.mubr.bf16.mxu0 0
        %1283 = vmatmul.mubr.bf16.gmra.mrb[0].mxu0 %v951
        %v1284 = vpop.f32.mrb[0].mxu0
        %v1285 = vadd.f32 %v706, %v1284
        %v1286 = vpop.f32.mrb[0].mxu0
        %v1287 = vadd.f32 %v710, %v1286
        %v1288 = vpop.f32.mrb[0].mxu0
        %v1289 = vadd.f32 %v706, %v1288
        %v1290 = vpop.f32.mrb[0].mxu0
        %v1291 = vadd.f32 %v710, %v1290
        %1292 = vmatprep.mubr.bf16.mxu0 0
        %1293 = vmatmul.mubr.bf16.gmra.mrb[0].mxu0 %v953
        %v1294 = vpop.f32.mrb[0].mxu0
        %v1295 = vadd.f32 %v706, %v1294
        %v1296 = vpop.f32.mrb[0].mxu0
        %v1297 = vadd.f32 %v710, %v1296
        %v1298 = vpop.f32.mrb[0].mxu0
        %v1299 = vadd.f32 %v706, %v1298
        %v1300 = vpop.f32.mrb[0].mxu0
        %v1301 = vadd.f32 %v710, %v1300
        %1302 = vdwg.mxu0
        %1303 = vmatprep.subr.bf16.mxu0 %v856
        %1304 = vmatpush1.bf16.msra.mxu0 %v855
        %1305 = vmatprep.subr.bf16.mxu0 %v863
        %1306 = vmatpush1.bf16.msra.mxu0 %v862
        %1307 = vmatprep.subr.bf16.mxu0 %v870
        %1308 = vmatpush1.bf16.msra.mxu0 %v869
        %1309 = vmatprep.subr.bf16.mxu0 %v877
        %1310 = vmatpush1.bf16.msra.mxu0 %v876
        %1311 = vmatprep.subr.bf16.mxu0 %v884
        %1312 = vmatpush1.bf16.msra.mxu0 %v883
        %1313 = vmatprep.subr.bf16.mxu0 %v972
        %1314 = vmatpush1.bf16.msra.mxu0 %v969
        %1315 = vmatprep.subr.bf16.mxu0 0
        %1316 = vmatpush1.bf16.msra.mxu0 0
        %1317 = vmatprep.subr.bf16.mxu0 0
        %1318 = vmatpush1.bf16.msra.mxu0 0
        %1319 = vmatprep.subr.bf16.mxu0 0
        %1320 = vmatpush1.bf16.msra.mxu0 0
        %1321 = vmatprep.subr.bf16.mxu0 0
        %1322 = vmatpush1.bf16.msra.mxu0 0
        %1323 = vmatprep.subr.bf16.mxu0 0
        %1324 = vmatpush1.bf16.msra.mxu0 0
        %1325 = vmatprep.subr.bf16.mxu0 0
        %1326 = vmatpush1.bf16.msra.mxu0 0
        %1327 = vmatprep.subr.bf16.mxu0 0
        %1328 = vmatpush1.bf16.msra.mxu0 0
        %1329 = vmatprep.subr.bf16.mxu0 0
        %1330 = vmatpush1.bf16.msra.mxu0 0
        %1331 = vmatprep.subr.bf16.mxu0 0
        %1332 = vmatpush1.bf16.msra.mxu0 0
        %1333 = vmatprep.subr.bf16.mxu0 0
        %1334 = vmatpush1.bf16.msra.mxu0 0
        %1335 = vmatprep.mubr.bf16.mxu0 0
        %1336 = vmatmul.mubr.bf16.gmra.mrb[0].mxu0 %v929
        %v1337 = vpop.f32.mrb[0].mxu0
        %v1338 = vadd.f32 %v714, %v1337
        %v1339 = vpop.f32.mrb[0].mxu0
        %v1340 = vadd.f32 %v718, %v1339
        %v1341 = vpop.f32.mrb[0].mxu0
        %v1342 = vadd.f32 %v714, %v1341
        %v1343 = vpop.f32.mrb[0].mxu0
        %v1344 = vadd.f32 %v718, %v1343
        %1345 = vmatprep.mubr.bf16.mxu0 0
        %1346 = vmatmul.mubr.bf16.gmra.mrb[0].mxu0 %v931
        %v1347 = vpop.f32.mrb[0].mxu0
        %v1348 = vadd.f32 %v714, %v1347
        %v1349 = vpop.f32.mrb[0].mxu0
        %v1350 = vadd.f32 %v718, %v1349
        %v1351 = vpop.f32.mrb[0].mxu0
        %v1352 = vadd.f32 %v714, %v1351
        %v1353 = vpop.f32.mrb[0].mxu0
        %v1354 = vadd.f32 %v718, %v1353
        %1355 = vmatprep.mubr.bf16.mxu0 0
        %1356 = vmatmul.mubr.bf16.gmra.mrb[0].mxu0 %v933
        %v1357 = vpop.f32.mrb[0].mxu0
        %v1358 = vadd.f32 %v714, %v1357
        %v1359 = vpop.f32.mrb[0].mxu0
        %v1360 = vadd.f32 %v718, %v1359
        %v1361 = vpop.f32.mrb[0].mxu0
        %v1362 = vadd.f32 %v714, %v1361
        %v1363 = vpop.f32.mrb[0].mxu0
        %v1364 = vadd.f32 %v718, %v1363
        %1365 = vmatprep.mubr.bf16.mxu0 0
        %1366 = vmatmul.mubr.bf16.gmra.mrb[0].mxu0 %v935
        %v1367 = vpop.f32.mrb[0].mxu0
        %v1368 = vadd.f32 %v714, %v1367
        %v1369 = vpop.f32.mrb[0].mxu0
        %v1370 = vadd.f32 %v718, %v1369
        %v1371 = vpop.f32.mrb[0].mxu0
        %v1372 = vadd.f32 %v714, %v1371
        %v1373 = vpop.f32.mrb[0].mxu0
        %v1374 = vadd.f32 %v718, %v1373
        %1375 = vmatprep.mubr.bf16.mxu0 0
        %1376 = vmatmul.mubr.bf16.gmra.mrb[0].mxu0 %v937
        %v1377 = vpop.f32.mrb[0].mxu0
        %v1378 = vadd.f32 %v714, %v1377
        %v1379 = vpop.f32.mrb[0].mxu0
        %v1380 = vadd.f32 %v718, %v1379
        %v1381 = vpop.f32.mrb[0].mxu0
        %v1382 = vadd.f32 %v714, %v1381
        %v1383 = vpop.f32.mrb[0].mxu0
        %v1384 = vadd.f32 %v718, %v1383
        %1385 = vmatprep.mubr.bf16.mxu0 0
        %1386 = vmatmul.mubr.bf16.gmra.mrb[0].mxu0 %v939
        %v1387 = vpop.f32.mrb[0].mxu0
        %v1388 = vadd.f32 %v714, %v1387
        %v1389 = vpop.f32.mrb[0].mxu0
        %v1390 = vadd.f32 %v718, %v1389
        %v1391 = vpop.f32.mrb[0].mxu0
        %v1392 = vadd.f32 %v714, %v1391
        %v1393 = vpop.f32.mrb[0].mxu0
        %v1394 = vadd.f32 %v718, %v1393
        %1395 = vmatprep.mubr.bf16.mxu0 0
        %1396 = vmatmul.mubr.bf16.gmra.mrb[0].mxu0 %v941
        %v1397 = vpop.f32.mrb[0].mxu0
        %v1398 = vadd.f32 %v714, %v1397
        %v1399 = vpop.f32.mrb[0].mxu0
        %v1400 = vadd.f32 %v718, %v1399
        %v1401 = vpop.f32.mrb[0].mxu0
        %v1402 = vadd.f32 %v714, %v1401
        %v1403 = vpop.f32.mrb[0].mxu0
        %v1404 = vadd.f32 %v718, %v1403
        %1405 = vmatprep.mubr.bf16.mxu0 0
        %1406 = vmatmul.mubr.bf16.gmra.mrb[0].mxu0 %v943
        %v1407 = vpop.f32.mrb[0].mxu0
        %v1408 = vadd.f32 %v714, %v1407
        %v1409 = vpop.f32.mrb[0].mxu0
        %v1410 = vadd.f32 %v718, %v1409
        %v1411 = vpop.f32.mrb[0].mxu0
        %v1412 = vadd.f32 %v714, %v1411
        %v1413 = vpop.f32.mrb[0].mxu0
        %v1414 = vadd.f32 %v718, %v1413
        %1415 = vmatprep.mubr.bf16.mxu0 0
        %1416 = vmatmul.mubr.bf16.gmra.mrb[0].mxu0 %v945
        %v1417 = vpop.f32.mrb[0].mxu0
        %v1418 = vadd.f32 %v714, %v1417
        %v1419 = vpop.f32.mrb[0].mxu0
        %v1420 = vadd.f32 %v718, %v1419
        %v1421 = vpop.f32.mrb[0].mxu0
        %v1422 = vadd.f32 %v714, %v1421
        %v1423 = vpop.f32.mrb[0].mxu0
        %v1424 = vadd.f32 %v718, %v1423
        %1425 = vmatprep.mubr.bf16.mxu0 0
        %1426 = vmatmul.mubr.bf16.gmra.mrb[0].mxu0 %v947
        %v1427 = vpop.f32.mrb[0].mxu0
        %v1428 = vadd.f32 %v714, %v1427
        %v1429 = vpop.f32.mrb[0].mxu0
        %v1430 = vadd.f32 %v718, %v1429
        %v1431 = vpop.f32.mrb[0].mxu0
        %v1432 = vadd.f32 %v714, %v1431
        %v1433 = vpop.f32.mrb[0].mxu0
        %v1434 = vadd.f32 %v718, %v1433
        %1435 = vmatprep.mubr.bf16.mxu0 0
        %1436 = vmatmul.mubr.bf16.gmra.mrb[0].mxu0 %v949
        %v1437 = vpop.f32.mrb[0].mxu0
        %v1438 = vadd.f32 %v714, %v1437
        %v1439 = vpop.f32.mrb[0].mxu0
        %v1440 = vadd.f32 %v718, %v1439
        %v1441 = vpop.f32.mrb[0].mxu0
        %v1442 = vadd.f32 %v714, %v1441
        %v1443 = vpop.f32.mrb[0].mxu0
        %v1444 = vadd.f32 %v718, %v1443
        %1445 = vmatprep.mubr.bf16.mxu0 0
        %1446 = vmatmul.mubr.bf16.gmra.mrb[0].mxu0 %v951
        %v1447 = vpop.f32.mrb[0].mxu0
        %v1448 = vadd.f32 %v714, %v1447
        %v1449 = vpop.f32.mrb[0].mxu0
        %v1450 = vadd.f32 %v718, %v1449
        %v1451 = vpop.f32.mrb[0].mxu0
        %v1452 = vadd.f32 %v714, %v1451
        %v1453 = vpop.f32.mrb[0].mxu0
        %v1454 = vadd.f32 %v718, %v1453
        %1455 = vmatprep.mubr.bf16.mxu0 0
        %1456 = vmatmul.mubr.bf16.gmra.mrb[0].mxu0 %v953
        %v1457 = vpop.f32.mrb[0].mxu0
        %v1458 = vadd.f32 %v714, %v1457
        %v1459 = vpop.f32.mrb[0].mxu0
        %v1460 = vadd.f32 %v718, %v1459
        %v1461 = vpop.f32.mrb[0].mxu0
        %v1462 = vadd.f32 %v714, %v1461
        %v1463 = vpop.f32.mrb[0].mxu0
        %v1464 = vadd.f32 %v718, %v1463
        %1465 = vdwg.mxu0
        %1466 = vmatprep.subr.bf16.mxu0 0
        %1467 = vmatpush1.bf16.msra.mxu0 %v857
        %1468 = vmatprep.subr.bf16.mxu0 0
        %1469 = vmatpush1.bf16.msra.mxu0 %v864
        %1470 = vmatprep.subr.bf16.mxu0 0
        %1471 = vmatpush1.bf16.msra.mxu0 %v871
        %1472 = vmatprep.subr.bf16.mxu0 0
        %1473 = vmatpush1.bf16.msra.mxu0 %v878
        %1474 = vmatprep.subr.bf16.mxu0 0
        %1475 = vmatpush1.bf16.msra.mxu0 %v885
        %1476 = vmatprep.subr.bf16.mxu0 0
        %1477 = vmatpush1.bf16.msra.mxu0 %v975
        %1478 = vmatprep.subr.bf16.mxu0 0
        %1479 = vmatpush1.bf16.msra.mxu0 0
        %1480 = vmatprep.subr.bf16.mxu0 0
        %1481 = vmatpush1.bf16.msra.mxu0 0
        %1482 = vmatprep.subr.bf16.mxu0 0
        %1483 = vmatpush1.bf16.msra.mxu0 0
        %1484 = vmatprep.subr.bf16.mxu0 0
        %1485 = vmatpush1.bf16.msra.mxu0 0
        %1486 = vmatprep.subr.bf16.mxu0 0
        %1487 = vmatpush1.bf16.msra.mxu0 0
        %1488 = vmatprep.subr.bf16.mxu0 0
        %1489 = vmatpush1.bf16.msra.mxu0 0
        %1490 = vmatprep.subr.bf16.mxu0 0
        %1491 = vmatpush1.bf16.msra.mxu0 0
        %1492 = vmatprep.subr.bf16.mxu0 0
        %1493 = vmatpush1.bf16.msra.mxu0 0
        %1494 = vmatprep.subr.bf16.mxu0 0
        %1495 = vmatpush1.bf16.msra.mxu0 0
        %1496 = vmatprep.subr.bf16.mxu0 0
        %1497 = vmatpush1.bf16.msra.mxu0 0
        %1498 = vmatprep.mubr.bf16.mxu0 0
        %1499 = vmatmul.mubr.bf16.gmra.mrb[0].mxu0 %v929
        %v1500 = vpop.f32.mrb[0].mxu0
        %v1501 = vadd.f32 %v722, %v1500
        %v1502 = vpop.f32.mrb[0].mxu0
        %v1503 = vpop.f32.mrb[0].mxu0
        %v1504 = vadd.f32 %v722, %v1503
        %v1505 = vpop.f32.mrb[0].mxu0
        %1506 = vmatprep.mubr.bf16.mxu0 0
        %1507 = vmatmul.mubr.bf16.gmra.mrb[0].mxu0 %v931
        %v1508 = vpop.f32.mrb[0].mxu0
        %v1509 = vadd.f32 %v722, %v1508
        %v1510 = vpop.f32.mrb[0].mxu0
        %v1511 = vpop.f32.mrb[0].mxu0
        %v1512 = vadd.f32 %v722, %v1511
        %v1513 = vpop.f32.mrb[0].mxu0
        %1514 = vmatprep.mubr.bf16.mxu0 0
        %1515 = vmatmul.mubr.bf16.gmra.mrb[0].mxu0 %v933
        %v1516 = vpop.f32.mrb[0].mxu0
        %v1517 = vadd.f32 %v722, %v1516
        %v1518 = vpop.f32.mrb[0].mxu0
        %v1519 = vpop.f32.mrb[0].mxu0
        %v1520 = vadd.f32 %v722, %v1519
        %v1521 = vpop.f32.mrb[0].mxu0
        %1522 = vmatprep.mubr.bf16.mxu0 0
        %1523 = vmatmul.mubr.bf16.gmra.mrb[0].mxu0 %v935
        %v1524 = vpop.f32.mrb[0].mxu0
        %v1525 = vadd.f32 %v722, %v1524
        %v1526 = vpop.f32.mrb[0].mxu0
        %v1527 = vpop.f32.mrb[0].mxu0
        %v1528 = vadd.f32 %v722, %v1527
        %v1529 = vpop.f32.mrb[0].mxu0
        %1530 = vmatprep.mubr.bf16.mxu0 0
        %1531 = vmatmul.mubr.bf16.gmra.mrb[0].mxu0 %v937
        %v1532 = vpop.f32.mrb[0].mxu0
        %v1533 = vadd.f32 %v722, %v1532
        %v1534 = vpop.f32.mrb[0].mxu0
        %v1535 = vpop.f32.mrb[0].mxu0
        %v1536 = vadd.f32 %v722, %v1535
        %v1537 = vpop.f32.mrb[0].mxu0
        %1538 = vmatprep.mubr.bf16.mxu0 0
        %1539 = vmatmul.mubr.bf16.gmra.mrb[0].mxu0 %v939
        %v1540 = vpop.f32.mrb[0].mxu0
        %v1541 = vadd.f32 %v722, %v1540
        %v1542 = vpop.f32.mrb[0].mxu0
        %v1543 = vpop.f32.mrb[0].mxu0
        %v1544 = vadd.f32 %v722, %v1543
        %v1545 = vpop.f32.mrb[0].mxu0
        %1546 = vmatprep.mubr.bf16.mxu0 0
        %1547 = vmatmul.mubr.bf16.gmra.mrb[0].mxu0 %v941
        %v1548 = vpop.f32.mrb[0].mxu0
        %v1549 = vadd.f32 %v722, %v1548
        %v1550 = vpop.f32.mrb[0].mxu0
        %v1551 = vpop.f32.mrb[0].mxu0
        %v1552 = vadd.f32 %v722, %v1551
        %v1553 = vpop.f32.mrb[0].mxu0
        %1554 = vmatprep.mubr.bf16.mxu0 0
        %1555 = vmatmul.mubr.bf16.gmra.mrb[0].mxu0 %v943
        %v1556 = vpop.f32.mrb[0].mxu0
        %v1557 = vadd.f32 %v722, %v1556
        %v1558 = vpop.f32.mrb[0].mxu0
        %v1559 = vpop.f32.mrb[0].mxu0
        %v1560 = vadd.f32 %v722, %v1559
        %v1561 = vpop.f32.mrb[0].mxu0
        %1562 = vmatprep.mubr.bf16.mxu0 0
        %1563 = vmatmul.mubr.bf16.gmra.mrb[0].mxu0 %v945
        %v1564 = vpop.f32.mrb[0].mxu0
        %v1565 = vadd.f32 %v722, %v1564
        %v1566 = vpop.f32.mrb[0].mxu0
        %v1567 = vpop.f32.mrb[0].mxu0
        %v1568 = vadd.f32 %v722, %v1567
        %v1569 = vpop.f32.mrb[0].mxu0
        %1570 = vmatprep.mubr.bf16.mxu0 0
        %1571 = vmatmul.mubr.bf16.gmra.mrb[0].mxu0 %v947
        %v1572 = vpop.f32.mrb[0].mxu0
        %v1573 = vadd.f32 %v722, %v1572
        %v1574 = vpop.f32.mrb[0].mxu0
        %v1575 = vpop.f32.mrb[0].mxu0
        %v1576 = vadd.f32 %v722, %v1575
        %v1577 = vpop.f32.mrb[0].mxu0
        %1578 = vmatprep.mubr.bf16.mxu0 0
        %1579 = vmatmul.mubr.bf16.gmra.mrb[0].mxu0 %v949
        %v1580 = vpop.f32.mrb[0].mxu0
        %v1581 = vadd.f32 %v722, %v1580
        %v1582 = vpop.f32.mrb[0].mxu0
        %v1583 = vpop.f32.mrb[0].mxu0
        %v1584 = vadd.f32 %v722, %v1583
        %v1585 = vpop.f32.mrb[0].mxu0
        %1586 = vmatprep.mubr.bf16.mxu0 0
        %1587 = vmatmul.mubr.bf16.gmra.mrb[0].mxu0 %v951
        %v1588 = vpop.f32.mrb[0].mxu0
        %v1589 = vadd.f32 %v722, %v1588
        %v1590 = vpop.f32.mrb[0].mxu0
        %v1591 = vpop.f32.mrb[0].mxu0
        %v1592 = vadd.f32 %v722, %v1591
        %v1593 = vpop.f32.mrb[0].mxu0
        %1594 = vmatprep.mubr.bf16.mxu0 0
        %1595 = vmatmul.mubr.bf16.gmra.mrb[0].mxu0 %v953
        %v1596 = vpop.f32.mrb[0].mxu0
        %v1597 = vadd.f32 %v722, %v1596
        %v1598 = vpop.f32.mrb[0].mxu0
        %v1599 = vpop.f32.mrb[0].mxu0
        %v1600 = vadd.f32 %v722, %v1599
        %v1601 = vpop.f32.mrb[0].mxu0
        %1602 = vdwg.mxu0
        %v1603 = vmax.f32 %v1012, %v1016
        %v1604 = vmax.f32 %v1014, %v1018
        %v1605 = vmax.f32 %v1175, %v1179
        %v1606 = vmax.f32 %v1177, %v1181
        %v1607 = vmax.f32 %v1338, %v1342
        %v1608 = vmax.f32 %v1340, %v1344
        %v1609 = vmax.f32 %v1501, %v1504
        %v1610 = vmax.f32 %v1022, %v1026
        %v1611 = vmax.f32 %v1024, %v1028
        %v1612 = vmax.f32 %v1185, %v1189
        %v1613 = vmax.f32 %v1187, %v1191
        %v1614 = vmax.f32 %v1348, %v1352
        %v1615 = vmax.f32 %v1350, %v1354
        %v1616 = vmax.f32 %v1509, %v1512
        %v1617 = vmax.f32 %v1032, %v1036
        %v1618 = vmax.f32 %v1034, %v1038
        %v1619 = vmax.f32 %v1195, %v1199
        %v1620 = vmax.f32 %v1197, %v1201
        %v1621 = vmax.f32 %v1358, %v1362
        %v1622 = vmax.f32 %v1360, %v1364
        %v1623 = vmax.f32 %v1517, %v1520
        %v1624 = vmax.f32 %v1042, %v1046
        %v1625 = vmax.f32 %v1044, %v1048
        %v1626 = vmax.f32 %v1205, %v1209
        %v1627 = vmax.f32 %v1207, %v1211
        %v1628 = vmax.f32 %v1368, %v1372
        %v1629 = vmax.f32 %v1370, %v1374
        %v1630 = vmax.f32 %v1525, %v1528
        %v1631 = vmax.f32 %v1052, %v1056
        %v1632 = vmax.f32 %v1054, %v1058
        %v1633 = vmax.f32 %v1215, %v1219
        %v1634 = vmax.f32 %v1217, %v1221
        %v1635 = vmax.f32 %v1378, %v1382
        %v1636 = vmax.f32 %v1380, %v1384
        %v1637 = vmax.f32 %v1533, %v1536
        %v1638 = vmax.f32 %v1062, %v1066
        %v1639 = vmax.f32 %v1064, %v1068
        %v1640 = vmax.f32 %v1225, %v1229
        %v1641 = vmax.f32 %v1227, %v1231
        %v1642 = vmax.f32 %v1388, %v1392
        %v1643 = vmax.f32 %v1390, %v1394
        %v1644 = vmax.f32 %v1541, %v1544
        %v1645 = vmax.f32 %v1072, %v1076
        %v1646 = vmax.f32 %v1074, %v1078
        %v1647 = vmax.f32 %v1235, %v1239
        %v1648 = vmax.f32 %v1237, %v1241
        %v1649 = vmax.f32 %v1398, %v1402
        %v1650 = vmax.f32 %v1400, %v1404
        %v1651 = vmax.f32 %v1549, %v1552
        %v1652 = vmax.f32 %v1082, %v1086
        %v1653 = vmax.f32 %v1084, %v1088
        %v1654 = vmax.f32 %v1245, %v1249
        %v1655 = vmax.f32 %v1247, %v1251
        %v1656 = vmax.f32 %v1408, %v1412
        %v1657 = vmax.f32 %v1410, %v1414
        %v1658 = vmax.f32 %v1557, %v1560
        %v1659 = vmax.f32 %v1092, %v1096
        %v1660 = vmax.f32 %v1094, %v1098
        %v1661 = vmax.f32 %v1255, %v1259
        %v1662 = vmax.f32 %v1257, %v1261
        %v1663 = vmax.f32 %v1418, %v1422
        %v1664 = vmax.f32 %v1420, %v1424
        %v1665 = vmax.f32 %v1565, %v1568
        %v1666 = vmax.f32 %v1102, %v1106
        %v1667 = vmax.f32 %v1104, %v1108
        %v1668 = vmax.f32 %v1265, %v1269
        %v1669 = vmax.f32 %v1267, %v1271
        %v1670 = vmax.f32 %v1428, %v1432
        %v1671 = vmax.f32 %v1430, %v1434
        %v1672 = vmax.f32 %v1573, %v1576
        %v1673 = vmax.f32 %v1112, %v1116
        %v1674 = vmax.f32 %v1114, %v1118
        %v1675 = vmax.f32 %v1275, %v1279
        %v1676 = vmax.f32 %v1277, %v1281
        %v1677 = vmax.f32 %v1438, %v1442
        %v1678 = vmax.f32 %v1440, %v1444
        %v1679 = vmax.f32 %v1581, %v1584
        %v1680 = vmax.f32 %v1122, %v1126
        %v1681 = vmax.f32 %v1124, %v1128
        %v1682 = vmax.f32 %v1285, %v1289
        %v1683 = vmax.f32 %v1287, %v1291
        %v1684 = vmax.f32 %v1448, %v1452
        %v1685 = vmax.f32 %v1450, %v1454
        %v1686 = vmax.f32 %v1589, %v1592
        %v1687 = vmax.f32 %v1132, %v1136
        %v1688 = vmax.f32 %v1134, %v1138
        %v1689 = vmax.f32 %v1295, %v1299
        %v1690 = vmax.f32 %v1297, %v1301
        %v1691 = vmax.f32 %v1458, %v1462
        %v1692 = vmax.f32 %v1460, %v1464
        %v1693 = vmax.f32 %v1597, %v1600
        %1707 = vrot.lane.b32.xlu0 %v1603, 96
        %v1708 = vpop.permute.xlu0 %1707
        %1709 = vrot.lane.b32.xlu0 %v1610, 96
        %v1710 = vpop.permute.xlu0 %1709
        %1711 = vrot.lane.b32.xlu0 %v1617, 96
        %v1712 = vpop.permute.xlu0 %1711
        %1713 = vrot.lane.b32.xlu0 %v1624, 96
        %v1714 = vpop.permute.xlu0 %1713
        %1715 = vrot.lane.b32.xlu0 %v1631, 96
        %v1716 = vpop.permute.xlu0 %1715
        %1717 = vrot.lane.b32.xlu0 %v1638, 96
        %v1718 = vpop.permute.xlu0 %1717
        %1719 = vrot.lane.b32.xlu0 %v1645, 96
        %v1720 = vpop.permute.xlu0 %1719
        %1721 = vrot.lane.b32.xlu0 %v1652, 96
        %v1722 = vpop.permute.xlu0 %1721
        %1723 = vrot.lane.b32.xlu0 %v1659, 96
        %v1724 = vpop.permute.xlu0 %1723
        %1725 = vrot.lane.b32.xlu0 %v1666, 96
        %v1726 = vpop.permute.xlu0 %1725
        %1727 = vrot.lane.b32.xlu0 %v1673, 96
        %v1728 = vpop.permute.xlu0 %1727
        %1729 = vrot.lane.b32.xlu0 %v1680, 96
        %v1730 = vpop.permute.xlu0 %1729
        %1731 = vrot.lane.b32.xlu0 %v1687, 96
        %v1732 = vpop.permute.xlu0 %1731
        %v1746 = vmax.f32 %v1603, %v1708
        %v1747 = vmax.f32 %v1610, %v1710
        %v1748 = vmax.f32 %v1617, %v1712
        %v1749 = vmax.f32 %v1624, %v1714
        %v1750 = vmax.f32 %v1631, %v1716
        %v1751 = vmax.f32 %v1638, %v1718
        %v1752 = vmax.f32 %v1645, %v1720
        %v1753 = vmax.f32 %v1652, %v1722
        %v1754 = vmax.f32 %v1659, %v1724
        %v1755 = vmax.f32 %v1666, %v1726
        %v1756 = vmax.f32 %v1673, %v1728
        %v1757 = vmax.f32 %v1680, %v1730
        %v1758 = vmax.f32 %v1687, %v1732
        %1772 = vrot.lane.b32.xlu0 %v1604, 96
        %v1773 = vpop.permute.xlu0 %1772
        %1774 = vrot.lane.b32.xlu0 %v1611, 96
        %v1775 = vpop.permute.xlu0 %1774
        %1776 = vrot.lane.b32.xlu0 %v1618, 96
        %v1777 = vpop.permute.xlu0 %1776
        %1778 = vrot.lane.b32.xlu0 %v1625, 96
        %v1779 = vpop.permute.xlu0 %1778
        %1780 = vrot.lane.b32.xlu0 %v1632, 96
        %v1781 = vpop.permute.xlu0 %1780
        %1782 = vrot.lane.b32.xlu0 %v1639, 96
        %v1783 = vpop.permute.xlu0 %1782
        %1784 = vrot.lane.b32.xlu0 %v1646, 96
        %v1785 = vpop.permute.xlu0 %1784
        %1786 = vrot.lane.b32.xlu0 %v1653, 96
        %v1787 = vpop.permute.xlu0 %1786
        %1788 = vrot.lane.b32.xlu0 %v1660, 96
        %v1789 = vpop.permute.xlu0 %1788
        %1790 = vrot.lane.b32.xlu0 %v1667, 96
        %v1791 = vpop.permute.xlu0 %1790
        %1792 = vrot.lane.b32.xlu0 %v1674, 96
        %v1793 = vpop.permute.xlu0 %1792
        %1794 = vrot.lane.b32.xlu0 %v1681, 96
        %v1795 = vpop.permute.xlu0 %1794
        %1796 = vrot.lane.b32.xlu0 %v1688, 96
        %v1797 = vpop.permute.xlu0 %1796
        %v1811 = vmax.f32 %v1604, %v1773
        %v1812 = vmax.f32 %v1611, %v1775
        %v1813 = vmax.f32 %v1618, %v1777
        %v1814 = vmax.f32 %v1625, %v1779
        %v1815 = vmax.f32 %v1632, %v1781
        %v1816 = vmax.f32 %v1639, %v1783
        %v1817 = vmax.f32 %v1646, %v1785
        %v1818 = vmax.f32 %v1653, %v1787
        %v1819 = vmax.f32 %v1660, %v1789
        %v1820 = vmax.f32 %v1667, %v1791
        %v1821 = vmax.f32 %v1674, %v1793
        %v1822 = vmax.f32 %v1681, %v1795
        %v1823 = vmax.f32 %v1688, %v1797
        %1837 = vrot.lane.b32.xlu0 %v1605, 96
        %v1838 = vpop.permute.xlu0 %1837
        %1839 = vrot.lane.b32.xlu0 %v1612, 96
        %v1840 = vpop.permute.xlu0 %1839
        %1841 = vrot.lane.b32.xlu0 %v1619, 96
        %v1842 = vpop.permute.xlu0 %1841
        %1843 = vrot.lane.b32.xlu0 %v1626, 96
        %v1844 = vpop.permute.xlu0 %1843
        %1845 = vrot.lane.b32.xlu0 %v1633, 96
        %v1846 = vpop.permute.xlu0 %1845
        %1847 = vrot.lane.b32.xlu0 %v1640, 96
        %v1848 = vpop.permute.xlu0 %1847
        %1849 = vrot.lane.b32.xlu0 %v1647, 96
        %v1850 = vpop.permute.xlu0 %1849
        %1851 = vrot.lane.b32.xlu0 %v1654, 96
        %v1852 = vpop.permute.xlu0 %1851
        %1853 = vrot.lane.b32.xlu0 %v1661, 96
        %v1854 = vpop.permute.xlu0 %1853
        %1855 = vrot.lane.b32.xlu0 %v1668, 96
        %v1856 = vpop.permute.xlu0 %1855
        %1857 = vrot.lane.b32.xlu0 %v1675, 96
        %v1858 = vpop.permute.xlu0 %1857
        %1859 = vrot.lane.b32.xlu0 %v1682, 96
        %v1860 = vpop.permute.xlu0 %1859
        %1861 = vrot.lane.b32.xlu0 %v1689, 96
        %v1862 = vpop.permute.xlu0 %1861
        %v1876 = vmax.f32 %v1605, %v1838
        %v1877 = vmax.f32 %v1612, %v1840
        %v1878 = vmax.f32 %v1619, %v1842
        %v1879 = vmax.f32 %v1626, %v1844
        %v1880 = vmax.f32 %v1633, %v1846
        %v1881 = vmax.f32 %v1640, %v1848
        %v1882 = vmax.f32 %v1647, %v1850
        %v1883 = vmax.f32 %v1654, %v1852
        %v1884 = vmax.f32 %v1661, %v1854
        %v1885 = vmax.f32 %v1668, %v1856
        %v1886 = vmax.f32 %v1675, %v1858
        %v1887 = vmax.f32 %v1682, %v1860
        %v1888 = vmax.f32 %v1689, %v1862
        %1902 = vrot.lane.b32.xlu0 %v1606, 96
        %v1903 = vpop.permute.xlu0 %1902
        %1904 = vrot.lane.b32.xlu0 %v1613, 96
        %v1905 = vpop.permute.xlu0 %1904
        %1906 = vrot.lane.b32.xlu0 %v1620, 96
        %v1907 = vpop.permute.xlu0 %1906
        %1908 = vrot.lane.b32.xlu0 %v1627, 96
        %v1909 = vpop.permute.xlu0 %1908
        %1910 = vrot.lane.b32.xlu0 %v1634, 96
        %v1911 = vpop.permute.xlu0 %1910
        %1912 = vrot.lane.b32.xlu0 %v1641, 96
        %v1913 = vpop.permute.xlu0 %1912
        %1914 = vrot.lane.b32.xlu0 %v1648, 96
        %v1915 = vpop.permute.xlu0 %1914
        %1916 = vrot.lane.b32.xlu0 %v1655, 96
        %v1917 = vpop.permute.xlu0 %1916
        %1918 = vrot.lane.b32.xlu0 %v1662, 96
        %v1919 = vpop.permute.xlu0 %1918
        %1920 = vrot.lane.b32.xlu0 %v1669, 96
        %v1921 = vpop.permute.xlu0 %1920
        %1922 = vrot.lane.b32.xlu0 %v1676, 96
        %v1923 = vpop.permute.xlu0 %1922
        %1924 = vrot.lane.b32.xlu0 %v1683, 96
        %v1925 = vpop.permute.xlu0 %1924
        %1926 = vrot.lane.b32.xlu0 %v1690, 96
        %v1927 = vpop.permute.xlu0 %1926
        %v1941 = vmax.f32 %v1606, %v1903
        %v1942 = vmax.f32 %v1613, %v1905
        %v1943 = vmax.f32 %v1620, %v1907
        %v1944 = vmax.f32 %v1627, %v1909
        %v1945 = vmax.f32 %v1634, %v1911
        %v1946 = vmax.f32 %v1641, %v1913
        %v1947 = vmax.f32 %v1648, %v1915
        %v1948 = vmax.f32 %v1655, %v1917
        %v1949 = vmax.f32 %v1662, %v1919
        %v1950 = vmax.f32 %v1669, %v1921
        %v1951 = vmax.f32 %v1676, %v1923
        %v1952 = vmax.f32 %v1683, %v1925
        %v1953 = vmax.f32 %v1690, %v1927
        %1967 = vrot.lane.b32.xlu0 %v1607, 96
        %v1968 = vpop.permute.xlu0 %1967
        %1969 = vrot.lane.b32.xlu0 %v1614, 96
        %v1970 = vpop.permute.xlu0 %1969
        %1971 = vrot.lane.b32.xlu0 %v1621, 96
        %v1972 = vpop.permute.xlu0 %1971
        %1973 = vrot.lane.b32.xlu0 %v1628, 96
        %v1974 = vpop.permute.xlu0 %1973
        %1975 = vrot.lane.b32.xlu0 %v1635, 96
        %v1976 = vpop.permute.xlu0 %1975
        %1977 = vrot.lane.b32.xlu0 %v1642, 96
        %v1978 = vpop.permute.xlu0 %1977
        %1979 = vrot.lane.b32.xlu0 %v1649, 96
        %v1980 = vpop.permute.xlu0 %1979
        %1981 = vrot.lane.b32.xlu0 %v1656, 96
        %v1982 = vpop.permute.xlu0 %1981
        %1983 = vrot.lane.b32.xlu0 %v1663, 96
        %v1984 = vpop.permute.xlu0 %1983
        %1985 = vrot.lane.b32.xlu0 %v1670, 96
        %v1986 = vpop.permute.xlu0 %1985
        %1987 = vrot.lane.b32.xlu0 %v1677, 96
        %v1988 = vpop.permute.xlu0 %1987
        %1989 = vrot.lane.b32.xlu0 %v1684, 96
        %v1990 = vpop.permute.xlu0 %1989
        %1991 = vrot.lane.b32.xlu0 %v1691, 96
        %v1992 = vpop.permute.xlu0 %1991
        %v2006 = vmax.f32 %v1607, %v1968
        %v2007 = vmax.f32 %v1614, %v1970
        %v2008 = vmax.f32 %v1621, %v1972
        %v2009 = vmax.f32 %v1628, %v1974
        %v2010 = vmax.f32 %v1635, %v1976
        %v2011 = vmax.f32 %v1642, %v1978
        %v2012 = vmax.f32 %v1649, %v1980
        %v2013 = vmax.f32 %v1656, %v1982
        %v2014 = vmax.f32 %v1663, %v1984
        %v2015 = vmax.f32 %v1670, %v1986
        %v2016 = vmax.f32 %v1677, %v1988
        %v2017 = vmax.f32 %v1684, %v1990
        %v2018 = vmax.f32 %v1691, %v1992
        %2032 = vrot.lane.b32.xlu0 %v1608, 96
        %v2033 = vpop.permute.xlu0 %2032
        %2034 = vrot.lane.b32.xlu0 %v1615, 96
        %v2035 = vpop.permute.xlu0 %2034
        %2036 = vrot.lane.b32.xlu0 %v1622, 96
        %v2037 = vpop.permute.xlu0 %2036
        %2038 = vrot.lane.b32.xlu0 %v1629, 96
        %v2039 = vpop.permute.xlu0 %2038
        %2040 = vrot.lane.b32.xlu0 %v1636, 96
        %v2041 = vpop.permute.xlu0 %2040
        %2042 = vrot.lane.b32.xlu0 %v1643, 96
        %v2043 = vpop.permute.xlu0 %2042
        %2044 = vrot.lane.b32.xlu0 %v1650, 96
        %v2045 = vpop.permute.xlu0 %2044
        %2046 = vrot.lane.b32.xlu0 %v1657, 96
        %v2047 = vpop.permute.xlu0 %2046
        %2048 = vrot.lane.b32.xlu0 %v1664, 96
        %v2049 = vpop.permute.xlu0 %2048
        %2050 = vrot.lane.b32.xlu0 %v1671, 96
        %v2051 = vpop.permute.xlu0 %2050
        %2052 = vrot.lane.b32.xlu0 %v1678, 96
        %v2053 = vpop.permute.xlu0 %2052
        %2054 = vrot.lane.b32.xlu0 %v1685, 96
        %v2055 = vpop.permute.xlu0 %2054
        %2056 = vrot.lane.b32.xlu0 %v1692, 96
        %v2057 = vpop.permute.xlu0 %2056
        %v2071 = vmax.f32 %v1608, %v2033
        %v2072 = vmax.f32 %v1615, %v2035
        %v2073 = vmax.f32 %v1622, %v2037
        %v2074 = vmax.f32 %v1629, %v2039
        %v2075 = vmax.f32 %v1636, %v2041
        %v2076 = vmax.f32 %v1643, %v2043
        %v2077 = vmax.f32 %v1650, %v2045
        %v2078 = vmax.f32 %v1657, %v2047
        %v2079 = vmax.f32 %v1664, %v2049
        %v2080 = vmax.f32 %v1671, %v2051
        %v2081 = vmax.f32 %v1678, %v2053
        %v2082 = vmax.f32 %v1685, %v2055
        %v2083 = vmax.f32 %v1692, %v2057
        %2097 = vrot.lane.b32.xlu0 %v1609, 96
        %v2098 = vpop.permute.xlu0 %2097
        %2099 = vrot.lane.b32.xlu0 %v1616, 96
        %v2100 = vpop.permute.xlu0 %2099
        %2101 = vrot.lane.b32.xlu0 %v1623, 96
        %v2102 = vpop.permute.xlu0 %2101
        %2103 = vrot.lane.b32.xlu0 %v1630, 96
        %v2104 = vpop.permute.xlu0 %2103
        %2105 = vrot.lane.b32.xlu0 %v1637, 96
        %v2106 = vpop.permute.xlu0 %2105
        %2107 = vrot.lane.b32.xlu0 %v1644, 96
        %v2108 = vpop.permute.xlu0 %2107
        %2109 = vrot.lane.b32.xlu0 %v1651, 96
        %v2110 = vpop.permute.xlu0 %2109
        %2111 = vrot.lane.b32.xlu0 %v1658, 96
        %v2112 = vpop.permute.xlu0 %2111
        %2113 = vrot.lane.b32.xlu0 %v1665, 96
        %v2114 = vpop.permute.xlu0 %2113
        %2115 = vrot.lane.b32.xlu0 %v1672, 96
        %v2116 = vpop.permute.xlu0 %2115
        %2117 = vrot.lane.b32.xlu0 %v1679, 96
        %v2118 = vpop.permute.xlu0 %2117
        %2119 = vrot.lane.b32.xlu0 %v1686, 96
        %v2120 = vpop.permute.xlu0 %2119
        %2121 = vrot.lane.b32.xlu0 %v1693, 96
        %v2122 = vpop.permute.xlu0 %2121
        %v2136 = vmax.f32 %v1609, %v2098
        %v2137 = vmax.f32 %v1616, %v2100
        %v2138 = vmax.f32 %v1623, %v2102
        %v2139 = vmax.f32 %v1630, %v2104
        %v2140 = vmax.f32 %v1637, %v2106
        %v2141 = vmax.f32 %v1644, %v2108
        %v2142 = vmax.f32 %v1651, %v2110
        %v2143 = vmax.f32 %v1658, %v2112
        %v2144 = vmax.f32 %v1665, %v2114
        %v2145 = vmax.f32 %v1672, %v2116
        %v2146 = vmax.f32 %v1679, %v2118
        %v2147 = vmax.f32 %v1686, %v2120
        %v2148 = vmax.f32 %v1693, %v2122
        %2162 = vrot.lane.b32.xlu0 %v1746, 96
        %v2163 = vpop.permute.xlu0 %2162
        %2164 = vrot.lane.b32.xlu0 %v1747, 96
        %v2165 = vpop.permute.xlu0 %2164
        %2166 = vrot.lane.b32.xlu0 %v1748, 96
        %v2167 = vpop.permute.xlu0 %2166
        %2168 = vrot.lane.b32.xlu0 %v1749, 96
        %v2169 = vpop.permute.xlu0 %2168
        %2170 = vrot.lane.b32.xlu0 %v1750, 96
        %v2171 = vpop.permute.xlu0 %2170
        %2172 = vrot.lane.b32.xlu0 %v1751, 96
        %v2173 = vpop.permute.xlu0 %2172
        %2174 = vrot.lane.b32.xlu0 %v1752, 96
        %v2175 = vpop.permute.xlu0 %2174
        %2176 = vrot.lane.b32.xlu0 %v1753, 96
        %v2177 = vpop.permute.xlu0 %2176
        %2178 = vrot.lane.b32.xlu0 %v1754, 96
        %v2179 = vpop.permute.xlu0 %2178
        %2180 = vrot.lane.b32.xlu0 %v1755, 96
        %v2181 = vpop.permute.xlu0 %2180
        %2182 = vrot.lane.b32.xlu0 %v1756, 96
        %v2183 = vpop.permute.xlu0 %2182
        %2184 = vrot.lane.b32.xlu0 %v1757, 96
        %v2185 = vpop.permute.xlu0 %2184
        %2186 = vrot.lane.b32.xlu0 %v1758, 96
        %v2187 = vpop.permute.xlu0 %2186
        %2214 = vrot.lane.b32.xlu0 %v1811, 64
        %v2215 = vpop.permute.xlu0 %2214
        %2216 = vrot.lane.b32.xlu0 %v1812, 64
        %v2217 = vpop.permute.xlu0 %2216
        %2218 = vrot.lane.b32.xlu0 %v1813, 64
        %v2219 = vpop.permute.xlu0 %2218
        %2220 = vrot.lane.b32.xlu0 %v1814, 64
        %v2221 = vpop.permute.xlu0 %2220
        %2222 = vrot.lane.b32.xlu0 %v1815, 64
        %v2223 = vpop.permute.xlu0 %2222
        %2224 = vrot.lane.b32.xlu0 %v1816, 64
        %v2225 = vpop.permute.xlu0 %2224
        %2226 = vrot.lane.b32.xlu0 %v1817, 64
        %v2227 = vpop.permute.xlu0 %2226
        %2228 = vrot.lane.b32.xlu0 %v1818, 64
        %v2229 = vpop.permute.xlu0 %2228
        %2230 = vrot.lane.b32.xlu0 %v1819, 64
        %v2231 = vpop.permute.xlu0 %2230
        %2232 = vrot.lane.b32.xlu0 %v1820, 64
        %v2233 = vpop.permute.xlu0 %2232
        %2234 = vrot.lane.b32.xlu0 %v1821, 64
        %v2235 = vpop.permute.xlu0 %2234
        %2236 = vrot.lane.b32.xlu0 %v1822, 64
        %v2237 = vpop.permute.xlu0 %2236
        %2238 = vrot.lane.b32.xlu0 %v1823, 64
        %v2239 = vpop.permute.xlu0 %2238
        %2253 = vrot.lane.b32.xlu0 %v1811, 32
        %v2254 = vpop.permute.xlu0 %2253
        %2255 = vrot.lane.b32.xlu0 %v1812, 32
        %v2256 = vpop.permute.xlu0 %2255
        %2257 = vrot.lane.b32.xlu0 %v1813, 32
        %v2258 = vpop.permute.xlu0 %2257
        %2259 = vrot.lane.b32.xlu0 %v1814, 32
        %v2260 = vpop.permute.xlu0 %2259
        %2261 = vrot.lane.b32.xlu0 %v1815, 32
        %v2262 = vpop.permute.xlu0 %2261
        %2263 = vrot.lane.b32.xlu0 %v1816, 32
        %v2264 = vpop.permute.xlu0 %2263
        %2265 = vrot.lane.b32.xlu0 %v1817, 32
        %v2266 = vpop.permute.xlu0 %2265
        %2267 = vrot.lane.b32.xlu0 %v1818, 32
        %v2268 = vpop.permute.xlu0 %2267
        %2269 = vrot.lane.b32.xlu0 %v1819, 32
        %v2270 = vpop.permute.xlu0 %2269
        %2271 = vrot.lane.b32.xlu0 %v1820, 32
        %v2272 = vpop.permute.xlu0 %2271
        %2273 = vrot.lane.b32.xlu0 %v1821, 32
        %v2274 = vpop.permute.xlu0 %2273
        %2275 = vrot.lane.b32.xlu0 %v1822, 32
        %v2276 = vpop.permute.xlu0 %2275
        %2277 = vrot.lane.b32.xlu0 %v1823, 32
        %v2278 = vpop.permute.xlu0 %2277
        %2305 = vrot.lane.b32.xlu0 %v1876, 96
        %v2306 = vpop.permute.xlu0 %2305
        %2307 = vrot.lane.b32.xlu0 %v1877, 96
        %v2308 = vpop.permute.xlu0 %2307
        %2309 = vrot.lane.b32.xlu0 %v1878, 96
        %v2310 = vpop.permute.xlu0 %2309
        %2311 = vrot.lane.b32.xlu0 %v1879, 96
        %v2312 = vpop.permute.xlu0 %2311
        %2313 = vrot.lane.b32.xlu0 %v1880, 96
        %v2314 = vpop.permute.xlu0 %2313
        %2315 = vrot.lane.b32.xlu0 %v1881, 96
        %v2316 = vpop.permute.xlu0 %2315
        %2317 = vrot.lane.b32.xlu0 %v1882, 96
        %v2318 = vpop.permute.xlu0 %2317
        %2319 = vrot.lane.b32.xlu0 %v1883, 96
        %v2320 = vpop.permute.xlu0 %2319
        %2321 = vrot.lane.b32.xlu0 %v1884, 96
        %v2322 = vpop.permute.xlu0 %2321
        %2323 = vrot.lane.b32.xlu0 %v1885, 96
        %v2324 = vpop.permute.xlu0 %2323
        %2325 = vrot.lane.b32.xlu0 %v1886, 96
        %v2326 = vpop.permute.xlu0 %2325
        %2327 = vrot.lane.b32.xlu0 %v1887, 96
        %v2328 = vpop.permute.xlu0 %2327
        %2329 = vrot.lane.b32.xlu0 %v1888, 96
        %v2330 = vpop.permute.xlu0 %2329
        %2357 = vrot.lane.b32.xlu0 %v1941, 64
        %v2358 = vpop.permute.xlu0 %2357
        %2359 = vrot.lane.b32.xlu0 %v1942, 64
        %v2360 = vpop.permute.xlu0 %2359
        %2361 = vrot.lane.b32.xlu0 %v1943, 64
        %v2362 = vpop.permute.xlu0 %2361
        %2363 = vrot.lane.b32.xlu0 %v1944, 64
        %v2364 = vpop.permute.xlu0 %2363
        %2365 = vrot.lane.b32.xlu0 %v1945, 64
        %v2366 = vpop.permute.xlu0 %2365
        %2367 = vrot.lane.b32.xlu0 %v1946, 64
        %v2368 = vpop.permute.xlu0 %2367
        %2369 = vrot.lane.b32.xlu0 %v1947, 64
        %v2370 = vpop.permute.xlu0 %2369
        %2371 = vrot.lane.b32.xlu0 %v1948, 64
        %v2372 = vpop.permute.xlu0 %2371
        %2373 = vrot.lane.b32.xlu0 %v1949, 64
        %v2374 = vpop.permute.xlu0 %2373
        %2375 = vrot.lane.b32.xlu0 %v1950, 64
        %v2376 = vpop.permute.xlu0 %2375
        %2377 = vrot.lane.b32.xlu0 %v1951, 64
        %v2378 = vpop.permute.xlu0 %2377
        %2379 = vrot.lane.b32.xlu0 %v1952, 64
        %v2380 = vpop.permute.xlu0 %2379
        %2381 = vrot.lane.b32.xlu0 %v1953, 64
        %v2382 = vpop.permute.xlu0 %2381
        %2396 = vrot.lane.b32.xlu0 %v1941, 32
        %v2397 = vpop.permute.xlu0 %2396
        %2398 = vrot.lane.b32.xlu0 %v1942, 32
        %v2399 = vpop.permute.xlu0 %2398
        %2400 = vrot.lane.b32.xlu0 %v1943, 32
        %v2401 = vpop.permute.xlu0 %2400
        %2402 = vrot.lane.b32.xlu0 %v1944, 32
        %v2403 = vpop.permute.xlu0 %2402
        %2404 = vrot.lane.b32.xlu0 %v1945, 32
        %v2405 = vpop.permute.xlu0 %2404
        %2406 = vrot.lane.b32.xlu0 %v1946, 32
        %v2407 = vpop.permute.xlu0 %2406
        %2408 = vrot.lane.b32.xlu0 %v1947, 32
        %v2409 = vpop.permute.xlu0 %2408
        %2410 = vrot.lane.b32.xlu0 %v1948, 32
        %v2411 = vpop.permute.xlu0 %2410
        %2412 = vrot.lane.b32.xlu0 %v1949, 32
        %v2413 = vpop.permute.xlu0 %2412
        %2414 = vrot.lane.b32.xlu0 %v1950, 32
        %v2415 = vpop.permute.xlu0 %2414
        %2416 = vrot.lane.b32.xlu0 %v1951, 32
        %v2417 = vpop.permute.xlu0 %2416
        %2418 = vrot.lane.b32.xlu0 %v1952, 32
        %v2419 = vpop.permute.xlu0 %2418
        %2420 = vrot.lane.b32.xlu0 %v1953, 32
        %v2421 = vpop.permute.xlu0 %2420
        %2448 = vrot.lane.b32.xlu0 %v2006, 96
        %v2449 = vpop.permute.xlu0 %2448
        %2450 = vrot.lane.b32.xlu0 %v2007, 96
        %v2451 = vpop.permute.xlu0 %2450
        %2452 = vrot.lane.b32.xlu0 %v2008, 96
        %v2453 = vpop.permute.xlu0 %2452
        %2454 = vrot.lane.b32.xlu0 %v2009, 96
        %v2455 = vpop.permute.xlu0 %2454
        %2456 = vrot.lane.b32.xlu0 %v2010, 96
        %v2457 = vpop.permute.xlu0 %2456
        %2458 = vrot.lane.b32.xlu0 %v2011, 96
        %v2459 = vpop.permute.xlu0 %2458
        %2460 = vrot.lane.b32.xlu0 %v2012, 96
        %v2461 = vpop.permute.xlu0 %2460
        %2462 = vrot.lane.b32.xlu0 %v2013, 96
        %v2463 = vpop.permute.xlu0 %2462
        %2464 = vrot.lane.b32.xlu0 %v2014, 96
        %v2465 = vpop.permute.xlu0 %2464
        %2466 = vrot.lane.b32.xlu0 %v2015, 96
        %v2467 = vpop.permute.xlu0 %2466
        %2468 = vrot.lane.b32.xlu0 %v2016, 96
        %v2469 = vpop.permute.xlu0 %2468
        %2470 = vrot.lane.b32.xlu0 %v2017, 96
        %v2471 = vpop.permute.xlu0 %2470
        %2472 = vrot.lane.b32.xlu0 %v2018, 96
        %v2473 = vpop.permute.xlu0 %2472
        %2500 = vrot.lane.b32.xlu0 %v2071, 64
        %v2501 = vpop.permute.xlu0 %2500
        %2502 = vrot.lane.b32.xlu0 %v2072, 64
        %v2503 = vpop.permute.xlu0 %2502
        %2504 = vrot.lane.b32.xlu0 %v2073, 64
        %v2505 = vpop.permute.xlu0 %2504
        %2506 = vrot.lane.b32.xlu0 %v2074, 64
        %v2507 = vpop.permute.xlu0 %2506
        %2508 = vrot.lane.b32.xlu0 %v2075, 64
        %v2509 = vpop.permute.xlu0 %2508
        %2510 = vrot.lane.b32.xlu0 %v2076, 64
        %v2511 = vpop.permute.xlu0 %2510
        %2512 = vrot.lane.b32.xlu0 %v2077, 64
        %v2513 = vpop.permute.xlu0 %2512
        %2514 = vrot.lane.b32.xlu0 %v2078, 64
        %v2515 = vpop.permute.xlu0 %2514
        %2516 = vrot.lane.b32.xlu0 %v2079, 64
        %v2517 = vpop.permute.xlu0 %2516
        %2518 = vrot.lane.b32.xlu0 %v2080, 64
        %v2519 = vpop.permute.xlu0 %2518
        %2520 = vrot.lane.b32.xlu0 %v2081, 64
        %v2521 = vpop.permute.xlu0 %2520
        %2522 = vrot.lane.b32.xlu0 %v2082, 64
        %v2523 = vpop.permute.xlu0 %2522
        %2524 = vrot.lane.b32.xlu0 %v2083, 64
        %v2525 = vpop.permute.xlu0 %2524
        %2539 = vrot.lane.b32.xlu0 %v2071, 32
        %v2540 = vpop.permute.xlu0 %2539
        %2541 = vrot.lane.b32.xlu0 %v2072, 32
        %v2542 = vpop.permute.xlu0 %2541
        %2543 = vrot.lane.b32.xlu0 %v2073, 32
        %v2544 = vpop.permute.xlu0 %2543
        %2545 = vrot.lane.b32.xlu0 %v2074, 32
        %v2546 = vpop.permute.xlu0 %2545
        %2547 = vrot.lane.b32.xlu0 %v2075, 32
        %v2548 = vpop.permute.xlu0 %2547
        %2549 = vrot.lane.b32.xlu0 %v2076, 32
        %v2550 = vpop.permute.xlu0 %2549
        %2551 = vrot.lane.b32.xlu0 %v2077, 32
        %v2552 = vpop.permute.xlu0 %2551
        %2553 = vrot.lane.b32.xlu0 %v2078, 32
        %v2554 = vpop.permute.xlu0 %2553
        %2555 = vrot.lane.b32.xlu0 %v2079, 32
        %v2556 = vpop.permute.xlu0 %2555
        %2557 = vrot.lane.b32.xlu0 %v2080, 32
        %v2558 = vpop.permute.xlu0 %2557
        %2559 = vrot.lane.b32.xlu0 %v2081, 32
        %v2560 = vpop.permute.xlu0 %2559
        %2561 = vrot.lane.b32.xlu0 %v2082, 32
        %v2562 = vpop.permute.xlu0 %2561
        %2563 = vrot.lane.b32.xlu0 %v2083, 32
        %v2564 = vpop.permute.xlu0 %2563
        %vm2578 = vcmask 261120
        %v2579 = vsel %vm2578, %v1746, %v2163
        %v2580 = vsel %vm2578, %v1747, %v2165
        %v2581 = vsel %vm2578, %v1748, %v2167
        %v2582 = vsel %vm2578, %v1749, %v2169
        %v2583 = vsel %vm2578, %v1750, %v2171
        %v2584 = vsel %vm2578, %v1751, %v2173
        %v2585 = vsel %vm2578, %v1752, %v2175
        %v2586 = vsel %vm2578, %v1753, %v2177
        %v2587 = vsel %vm2578, %v1754, %v2179
        %v2588 = vsel %vm2578, %v1755, %v2181
        %v2589 = vsel %vm2578, %v1756, %v2183
        %v2590 = vsel %vm2578, %v1757, %v2185
        %v2591 = vsel %vm2578, %v1758, %v2187
        %vm2592 = vcmask 523264
        %v2593 = vsel %vm2592, %v2579, %v2215
        %v2594 = vsel %vm2592, %v2580, %v2217
        %v2595 = vsel %vm2592, %v2581, %v2219
        %v2596 = vsel %vm2592, %v2582, %v2221
        %v2597 = vsel %vm2592, %v2583, %v2223
        %v2598 = vsel %vm2592, %v2584, %v2225
        %v2599 = vsel %vm2592, %v2585, %v2227
        %v2600 = vsel %vm2592, %v2586, %v2229
        %v2601 = vsel %vm2592, %v2587, %v2231
        %v2602 = vsel %vm2592, %v2588, %v2233
        %v2603 = vsel %vm2592, %v2589, %v2235
        %v2604 = vsel %vm2592, %v2590, %v2237
        %v2605 = vsel %vm2592, %v2591, %v2239
        %vm2606 = vcmask 785408
        %v2607 = vsel %vm2606, %v2593, %v2254
        %v2608 = vsel %vm2606, %v2594, %v2256
        %v2609 = vsel %vm2606, %v2595, %v2258
        %v2610 = vsel %vm2606, %v2596, %v2260
        %v2611 = vsel %vm2606, %v2597, %v2262
        %v2612 = vsel %vm2606, %v2598, %v2264
        %v2613 = vsel %vm2606, %v2599, %v2266
        %v2614 = vsel %vm2606, %v2600, %v2268
        %v2615 = vsel %vm2606, %v2601, %v2270
        %v2616 = vsel %vm2606, %v2602, %v2272
        %v2617 = vsel %vm2606, %v2603, %v2274
        %v2618 = vsel %vm2606, %v2604, %v2276
        %v2619 = vsel %vm2606, %v2605, %v2278
        %v2620 = vsel %vm2578, %v1876, %v2306
        %v2621 = vsel %vm2578, %v1877, %v2308
        %v2622 = vsel %vm2578, %v1878, %v2310
        %v2623 = vsel %vm2578, %v1879, %v2312
        %v2624 = vsel %vm2578, %v1880, %v2314
        %v2625 = vsel %vm2578, %v1881, %v2316
        %v2626 = vsel %vm2578, %v1882, %v2318
        %v2627 = vsel %vm2578, %v1883, %v2320
        %v2628 = vsel %vm2578, %v1884, %v2322
        %v2629 = vsel %vm2578, %v1885, %v2324
        %v2630 = vsel %vm2578, %v1886, %v2326
        %v2631 = vsel %vm2578, %v1887, %v2328
        %v2632 = vsel %vm2578, %v1888, %v2330
        %v2633 = vsel %vm2592, %v2620, %v2358
        %v2634 = vsel %vm2592, %v2621, %v2360
        %v2635 = vsel %vm2592, %v2622, %v2362
        %v2636 = vsel %vm2592, %v2623, %v2364
        %v2637 = vsel %vm2592, %v2624, %v2366
        %v2638 = vsel %vm2592, %v2625, %v2368
        %v2639 = vsel %vm2592, %v2626, %v2370
        %v2640 = vsel %vm2592, %v2627, %v2372
        %v2641 = vsel %vm2592, %v2628, %v2374
        %v2642 = vsel %vm2592, %v2629, %v2376
        %v2643 = vsel %vm2592, %v2630, %v2378
        %v2644 = vsel %vm2592, %v2631, %v2380
        %v2645 = vsel %vm2592, %v2632, %v2382
        %v2646 = vsel %vm2606, %v2633, %v2397
        %v2647 = vsel %vm2606, %v2634, %v2399
        %v2648 = vsel %vm2606, %v2635, %v2401
        %v2649 = vsel %vm2606, %v2636, %v2403
        %v2650 = vsel %vm2606, %v2637, %v2405
        %v2651 = vsel %vm2606, %v2638, %v2407
        %v2652 = vsel %vm2606, %v2639, %v2409
        %v2653 = vsel %vm2606, %v2640, %v2411
        %v2654 = vsel %vm2606, %v2641, %v2413
        %v2655 = vsel %vm2606, %v2642, %v2415
        %v2656 = vsel %vm2606, %v2643, %v2417
        %v2657 = vsel %vm2606, %v2644, %v2419
        %v2658 = vsel %vm2606, %v2645, %v2421
        %v2659 = vsel %vm2578, %v2006, %v2449
        %v2660 = vsel %vm2578, %v2007, %v2451
        %v2661 = vsel %vm2578, %v2008, %v2453
        %v2662 = vsel %vm2578, %v2009, %v2455
        %v2663 = vsel %vm2578, %v2010, %v2457
        %v2664 = vsel %vm2578, %v2011, %v2459
        %v2665 = vsel %vm2578, %v2012, %v2461
        %v2666 = vsel %vm2578, %v2013, %v2463
        %v2667 = vsel %vm2578, %v2014, %v2465
        %v2668 = vsel %vm2578, %v2015, %v2467
        %v2669 = vsel %vm2578, %v2016, %v2469
        %v2670 = vsel %vm2578, %v2017, %v2471
        %v2671 = vsel %vm2578, %v2018, %v2473
        %v2672 = vsel %vm2592, %v2659, %v2501
        %v2673 = vsel %vm2592, %v2660, %v2503
        %v2674 = vsel %vm2592, %v2661, %v2505
        %v2675 = vsel %vm2592, %v2662, %v2507
        %v2676 = vsel %vm2592, %v2663, %v2509
        %v2677 = vsel %vm2592, %v2664, %v2511
        %v2678 = vsel %vm2592, %v2665, %v2513
        %v2679 = vsel %vm2592, %v2666, %v2515
        %v2680 = vsel %vm2592, %v2667, %v2517
        %v2681 = vsel %vm2592, %v2668, %v2519
        %v2682 = vsel %vm2592, %v2669, %v2521
        %v2683 = vsel %vm2592, %v2670, %v2523
        %v2684 = vsel %vm2592, %v2671, %v2525
        %v2685 = vsel %vm2606, %v2672, %v2540
        %v2686 = vsel %vm2606, %v2673, %v2542
        %v2687 = vsel %vm2606, %v2674, %v2544
        %v2688 = vsel %vm2606, %v2675, %v2546
        %v2689 = vsel %vm2606, %v2676, %v2548
        %v2690 = vsel %vm2606, %v2677, %v2550
        %v2691 = vsel %vm2606, %v2678, %v2552
        %v2692 = vsel %vm2606, %v2679, %v2554
        %v2693 = vsel %vm2606, %v2680, %v2556
        %v2694 = vsel %vm2606, %v2681, %v2558
        %v2695 = vsel %vm2606, %v2682, %v2560
        %v2696 = vsel %vm2606, %v2683, %v2562
        %v2697 = vsel %vm2606, %v2684, %v2564
        %vm2698 = vcmp.gt.f32.partialorder %v2607, 0.0
        %vm2699 = vcmp.gt.f32.partialorder %v2646, 0.0
        %vm2700 = vcmp.gt.f32.partialorder %v2685, 0.0
        %vm2701 = vcmp.gt.f32.partialorder %v2136, 0.0
        %vm2702 = vcmp.gt.f32.partialorder %v2608, 0.0
        %vm2703 = vcmp.gt.f32.partialorder %v2647, 0.0
        %vm2704 = vcmp.gt.f32.partialorder %v2686, 0.0
        %vm2705 = vcmp.gt.f32.partialorder %v2137, 0.0
        %vm2706 = vcmp.gt.f32.partialorder %v2609, 0.0
        %vm2707 = vcmp.gt.f32.partialorder %v2648, 0.0
        %vm2708 = vcmp.gt.f32.partialorder %v2687, 0.0
        %vm2709 = vcmp.gt.f32.partialorder %v2138, 0.0
        %vm2710 = vcmp.gt.f32.partialorder %v2610, 0.0
        %vm2711 = vcmp.gt.f32.partialorder %v2649, 0.0
        %vm2712 = vcmp.gt.f32.partialorder %v2688, 0.0
        %vm2713 = vcmp.gt.f32.partialorder %v2139, 0.0
        %vm2714 = vcmp.gt.f32.partialorder %v2611, 0.0
        %vm2715 = vcmp.gt.f32.partialorder %v2650, 0.0
        %vm2716 = vcmp.gt.f32.partialorder %v2689, 0.0
        %vm2717 = vcmp.gt.f32.partialorder %v2140, 0.0
        %vm2718 = vcmp.gt.f32.partialorder %v2612, 0.0
        %vm2719 = vcmp.gt.f32.partialorder %v2651, 0.0
        %vm2720 = vcmp.gt.f32.partialorder %v2690, 0.0
        %vm2721 = vcmp.gt.f32.partialorder %v2141, 0.0
        %vm2722 = vcmp.gt.f32.partialorder %v2613, 0.0
        %vm2723 = vcmp.gt.f32.partialorder %v2652, 0.0
        %vm2724 = vcmp.gt.f32.partialorder %v2691, 0.0
        %vm2725 = vcmp.gt.f32.partialorder %v2142, 0.0
        %vm2726 = vcmp.gt.f32.partialorder %v2614, 0.0
        %vm2727 = vcmp.gt.f32.partialorder %v2653, 0.0
        %vm2728 = vcmp.gt.f32.partialorder %v2692, 0.0
        %vm2729 = vcmp.gt.f32.partialorder %v2143, 0.0
        %vm2730 = vcmp.gt.f32.partialorder %v2615, 0.0
        %vm2731 = vcmp.gt.f32.partialorder %v2654, 0.0
        %vm2732 = vcmp.gt.f32.partialorder %v2693, 0.0
        %vm2733 = vcmp.gt.f32.partialorder %v2144, 0.0
        %vm2734 = vcmp.gt.f32.partialorder %v2616, 0.0
        %vm2735 = vcmp.gt.f32.partialorder %v2655, 0.0
        %vm2736 = vcmp.gt.f32.partialorder %v2694, 0.0
        %vm2737 = vcmp.gt.f32.partialorder %v2145, 0.0
        %vm2738 = vcmp.gt.f32.partialorder %v2617, 0.0
        %vm2739 = vcmp.gt.f32.partialorder %v2656, 0.0
        %vm2740 = vcmp.gt.f32.partialorder %v2695, 0.0
        %vm2741 = vcmp.gt.f32.partialorder %v2146, 0.0
        %vm2742 = vcmp.gt.f32.partialorder %v2618, 0.0
        %vm2743 = vcmp.gt.f32.partialorder %v2657, 0.0
        %vm2744 = vcmp.gt.f32.partialorder %v2696, 0.0
        %vm2745 = vcmp.gt.f32.partialorder %v2147, 0.0
        %vm2746 = vcmp.gt.f32.partialorder %v2619, 0.0
        %vm2747 = vcmp.gt.f32.partialorder %v2658, 0.0
        %vm2748 = vcmp.gt.f32.partialorder %v2697, 0.0
        %vm2749 = vcmp.gt.f32.partialorder %v2148, 0.0
        %v2750 = vmul.f32 %v2607, 1.442695
        %v2751 = vpow.pop %v2750
        %v2752 = vmul.f32 %v2646, 1.442695
        %v2753 = vpow.pop %v2752
        %v2754 = vmul.f32 %v2685, 1.442695
        %v2755 = vpow.pop %v2754
        %v2756 = vmul.f32 %v2136, 1.442695
        %v2757 = vpow.pop %v2756
        %v2758 = vmul.f32 %v2608, 1.442695
        %v2759 = vpow.pop %v2758
        %v2760 = vmul.f32 %v2647, 1.442695
        %v2761 = vpow.pop %v2760
        %v2762 = vmul.f32 %v2686, 1.442695
        %v2763 = vpow.pop %v2762
        %v2764 = vmul.f32 %v2137, 1.442695
        %v2765 = vpow.pop %v2764
        %v2766 = vmul.f32 %v2609, 1.442695
        %v2767 = vpow.pop %v2766
        %v2768 = vmul.f32 %v2648, 1.442695
        %v2769 = vpow.pop %v2768
        %v2770 = vmul.f32 %v2687, 1.442695
        %v2771 = vpow.pop %v2770
        %v2772 = vmul.f32 %v2138, 1.442695
        %v2773 = vpow.pop %v2772
        %v2774 = vmul.f32 %v2610, 1.442695
        %v2775 = vpow.pop %v2774
        %v2776 = vmul.f32 %v2649, 1.442695
        %v2777 = vpow.pop %v2776
        %v2778 = vmul.f32 %v2688, 1.442695
        %v2779 = vpow.pop %v2778
        %v2780 = vmul.f32 %v2139, 1.442695
        %v2781 = vpow.pop %v2780
        %v2782 = vmul.f32 %v2611, 1.442695
        %v2783 = vpow.pop %v2782
        %v2784 = vmul.f32 %v2650, 1.442695
        %v2785 = vpow.pop %v2784
        %v2786 = vmul.f32 %v2689, 1.442695
        %v2787 = vpow.pop %v2786
        %v2788 = vmul.f32 %v2140, 1.442695
        %v2789 = vpow.pop %v2788
        %v2790 = vmul.f32 %v2612, 1.442695
        %v2791 = vpow.pop %v2790
        %v2792 = vmul.f32 %v2651, 1.442695
        %v2793 = vpow.pop %v2792
        %v2794 = vmul.f32 %v2690, 1.442695
        %v2795 = vpow.pop %v2794
        %v2796 = vmul.f32 %v2141, 1.442695
        %v2797 = vpow.pop %v2796
        %v2798 = vmul.f32 %v2613, 1.442695
        %v2799 = vpow.pop %v2798
        %v2800 = vmul.f32 %v2652, 1.442695
        %v2801 = vpow.pop %v2800
        %v2802 = vmul.f32 %v2691, 1.442695
        %v2803 = vpow.pop %v2802
        %v2804 = vmul.f32 %v2142, 1.442695
        %v2805 = vpow.pop %v2804
        %v2806 = vmul.f32 %v2614, 1.442695
        %v2807 = vpow.pop %v2806
        %v2808 = vmul.f32 %v2653, 1.442695
        %v2809 = vpow.pop %v2808
        %v2810 = vmul.f32 %v2692, 1.442695
        %v2811 = vpow.pop %v2810
        %v2812 = vmul.f32 %v2143, 1.442695
        %v2813 = vpow.pop %v2812
        %v2814 = vmul.f32 %v2615, 1.442695
        %v2815 = vpow.pop %v2814
        %v2816 = vmul.f32 %v2654, 1.442695
        %v2817 = vpow.pop %v2816
        %v2818 = vmul.f32 %v2693, 1.442695
        %v2819 = vpow.pop %v2818
        %v2820 = vmul.f32 %v2144, 1.442695
        %v2821 = vpow.pop %v2820
        %v2822 = vmul.f32 %v2616, 1.442695
        %v2823 = vpow.pop %v2822
        %v2824 = vmul.f32 %v2655, 1.442695
        %v2825 = vpow.pop %v2824
        %v2826 = vmul.f32 %v2694, 1.442695
        %v2827 = vpow.pop %v2826
        %v2828 = vmul.f32 %v2145, 1.442695
        %v2829 = vpow.pop %v2828
        %v2830 = vmul.f32 %v2617, 1.442695
        %v2831 = vpow.pop %v2830
        %v2832 = vmul.f32 %v2656, 1.442695
        %v2833 = vpow.pop %v2832
        %v2834 = vmul.f32 %v2695, 1.442695
        %v2835 = vpow.pop %v2834
        %v2836 = vmul.f32 %v2146, 1.442695
        %v2837 = vpow.pop %v2836
        %v2838 = vmul.f32 %v2618, 1.442695
        %v2839 = vpow.pop %v2838
        %v2840 = vmul.f32 %v2657, 1.442695
        %v2841 = vpow.pop %v2840
        %v2842 = vmul.f32 %v2696, 1.442695
        %v2843 = vpow.pop %v2842
        %v2844 = vmul.f32 %v2147, 1.442695
        %v2845 = vpow.pop %v2844
        %v2846 = vmul.f32 %v2619, 1.442695
        %v2847 = vpow.pop %v2846
        %v2848 = vmul.f32 %v2658, 1.442695
        %v2849 = vpow.pop %v2848
        %v2850 = vmul.f32 %v2697, 1.442695
        %v2851 = vpow.pop %v2850
        %v2852 = vmul.f32 %v2148, 1.442695
        %v2853 = vpow.pop %v2852
        %v2854 = vsub.f32 %v2751, 1.0
        %v2855 = vsub.f32 %v2753, 1.0
        %v2856 = vsub.f32 %v2755, 1.0
        %v2857 = vsub.f32 %v2757, 1.0
        %v2858 = vsub.f32 %v2759, 1.0
        %v2859 = vsub.f32 %v2761, 1.0
        %v2860 = vsub.f32 %v2763, 1.0
        %v2861 = vsub.f32 %v2765, 1.0
        %v2862 = vsub.f32 %v2767, 1.0
        %v2863 = vsub.f32 %v2769, 1.0
        %v2864 = vsub.f32 %v2771, 1.0
        %v2865 = vsub.f32 %v2773, 1.0
        %v2866 = vsub.f32 %v2775, 1.0
        %v2867 = vsub.f32 %v2777, 1.0
        %v2868 = vsub.f32 %v2779, 1.0
        %v2869 = vsub.f32 %v2781, 1.0
        %v2870 = vsub.f32 %v2783, 1.0
        %v2871 = vsub.f32 %v2785, 1.0
        %v2872 = vsub.f32 %v2787, 1.0
        %v2873 = vsub.f32 %v2789, 1.0
        %v2874 = vsub.f32 %v2791, 1.0
        %v2875 = vsub.f32 %v2793, 1.0
        %v2876 = vsub.f32 %v2795, 1.0
        %v2877 = vsub.f32 %v2797, 1.0
        %v2878 = vsub.f32 %v2799, 1.0
        %v2879 = vsub.f32 %v2801, 1.0
        %v2880 = vsub.f32 %v2803, 1.0
        %v2881 = vsub.f32 %v2805, 1.0
        %v2882 = vsub.f32 %v2807, 1.0
        %v2883 = vsub.f32 %v2809, 1.0
        %v2884 = vsub.f32 %v2811, 1.0
        %v2885 = vsub.f32 %v2813, 1.0
        %v2886 = vsub.f32 %v2815, 1.0
        %v2887 = vsub.f32 %v2817, 1.0
        %v2888 = vsub.f32 %v2819, 1.0
        %v2889 = vsub.f32 %v2821, 1.0
        %v2890 = vsub.f32 %v2823, 1.0
        %v2891 = vsub.f32 %v2825, 1.0
        %v2892 = vsub.f32 %v2827, 1.0
        %v2893 = vsub.f32 %v2829, 1.0
        %v2894 = vsub.f32 %v2831, 1.0
        %v2895 = vsub.f32 %v2833, 1.0
        %v2896 = vsub.f32 %v2835, 1.0
        %v2897 = vsub.f32 %v2837, 1.0
        %v2898 = vsub.f32 %v2839, 1.0
        %v2899 = vsub.f32 %v2841, 1.0
        %v2900 = vsub.f32 %v2843, 1.0
        %v2901 = vsub.f32 %v2845, 1.0
        %v2902 = vsub.f32 %v2847, 1.0
        %v2903 = vsub.f32 %v2849, 1.0
        %v2904 = vsub.f32 %v2851, 1.0
        %v2905 = vsub.f32 %v2853, 1.0
        %v2906 = vmul.f32 %v2854, 1.6732632
        %v2907 = vmul.f32 %v2855, 1.6732632
        %v2908 = vmul.f32 %v2856, 1.6732632
        %v2909 = vmul.f32 %v2857, 1.6732632
        %v2910 = vmul.f32 %v2858, 1.6732632
        %v2911 = vmul.f32 %v2859, 1.6732632
        %v2912 = vmul.f32 %v2860, 1.6732632
        %v2913 = vmul.f32 %v2861, 1.6732632
        %v2914 = vmul.f32 %v2862, 1.6732632
        %v2915 = vmul.f32 %v2863, 1.6732632
        %v2916 = vmul.f32 %v2864, 1.6732632
        %v2917 = vmul.f32 %v2865, 1.6732632
        %v2918 = vmul.f32 %v2866, 1.6732632
        %v2919 = vmul.f32 %v2867, 1.6732632
        %v2920 = vmul.f32 %v2868, 1.6732632
        %v2921 = vmul.f32 %v2869, 1.6732632
        %v2922 = vmul.f32 %v2870, 1.6732632
        %v2923 = vmul.f32 %v2871, 1.6732632
        %v2924 = vmul.f32 %v2872, 1.6732632
        %v2925 = vmul.f32 %v2873, 1.6732632
        %v2926 = vmul.f32 %v2874, 1.6732632
        %v2927 = vmul.f32 %v2875, 1.6732632
        %v2928 = vmul.f32 %v2876, 1.6732632
        %v2929 = vmul.f32 %v2877, 1.6732632
        %v2930 = vmul.f32 %v2878, 1.6732632
        %v2931 = vmul.f32 %v2879, 1.6732632
        %v2932 = vmul.f32 %v2880, 1.6732632
        %v2933 = vmul.f32 %v2881, 1.6732632
        %v2934 = vmul.f32 %v2882, 1.6732632
        %v2935 = vmul.f32 %v2883, 1.6732632
        %v2936 = vmul.f32 %v2884, 1.6732632
        %v2937 = vmul.f32 %v2885, 1.6732632
        %v2938 = vmul.f32 %v2886, 1.6732632
        %v2939 = vmul.f32 %v2887, 1.6732632
        %v2940 = vmul.f32 %v2888, 1.6732632
        %v2941 = vmul.f32 %v2889, 1.6732632
        %v2942 = vmul.f32 %v2890, 1.6732632
        %v2943 = vmul.f32 %v2891, 1.6732632
        %v2944 = vmul.f32 %v2892, 1.6732632
        %v2945 = vmul.f32 %v2893, 1.6732632
        %v2946 = vmul.f32 %v2894, 1.6732632
        %v2947 = vmul.f32 %v2895, 1.6732632
        %v2948 = vmul.f32 %v2896, 1.6732632
        %v2949 = vmul.f32 %v2897, 1.6732632
        %v2950 = vmul.f32 %v2898, 1.6732632
        %v2951 = vmul.f32 %v2899, 1.6732632
        %v2952 = vmul.f32 %v2900, 1.6732632
        %v2953 = vmul.f32 %v2901, 1.6732632
        %v2954 = vmul.f32 %v2902, 1.6732632
        %v2955 = vmul.f32 %v2903, 1.6732632
        %v2956 = vmul.f32 %v2904, 1.6732632
        %v2957 = vmul.f32 %v2905, 1.6732632
        %v2958 = vsel %vm2698, %v2607, %v2906
        %v2959 = vsel %vm2699, %v2646, %v2907
        %v2960 = vsel %vm2700, %v2685, %v2908
        %v2961 = vsel %vm2701, %v2136, %v2909
        %v2962 = vsel %vm2702, %v2608, %v2910
        %v2963 = vsel %vm2703, %v2647, %v2911
        %v2964 = vsel %vm2704, %v2686, %v2912
        %v2965 = vsel %vm2705, %v2137, %v2913
        %v2966 = vsel %vm2706, %v2609, %v2914
        %v2967 = vsel %vm2707, %v2648, %v2915
        %v2968 = vsel %vm2708, %v2687, %v2916
        %v2969 = vsel %vm2709, %v2138, %v2917
        %v2970 = vsel %vm2710, %v2610, %v2918
        %v2971 = vsel %vm2711, %v2649, %v2919
        %v2972 = vsel %vm2712, %v2688, %v2920
        %v2973 = vsel %vm2713, %v2139, %v2921
        %v2974 = vsel %vm2714, %v2611, %v2922
        %v2975 = vsel %vm2715, %v2650, %v2923
        %v2976 = vsel %vm2716, %v2689, %v2924
        %v2977 = vsel %vm2717, %v2140, %v2925
        %v2978 = vsel %vm2718, %v2612, %v2926
        %v2979 = vsel %vm2719, %v2651, %v2927
        %v2980 = vsel %vm2720, %v2690, %v2928
        %v2981 = vsel %vm2721, %v2141, %v2929
        %v2982 = vsel %vm2722, %v2613, %v2930
        %v2983 = vsel %vm2723, %v2652, %v2931
        %v2984 = vsel %vm2724, %v2691, %v2932
        %v2985 = vsel %vm2725, %v2142, %v2933
        %v2986 = vsel %vm2726, %v2614, %v2934
        %v2987 = vsel %vm2727, %v2653, %v2935
        %v2988 = vsel %vm2728, %v2692, %v2936
        %v2989 = vsel %vm2729, %v2143, %v2937
        %v2990 = vsel %vm2730, %v2615, %v2938
        %v2991 = vsel %vm2731, %v2654, %v2939
        %v2992 = vsel %vm2732, %v2693, %v2940
        %v2993 = vsel %vm2733, %v2144, %v2941
        %v2994 = vsel %vm2734, %v2616, %v2942
        %v2995 = vsel %vm2735, %v2655, %v2943
        %v2996 = vsel %vm2736, %v2694, %v2944
        %v2997 = vsel %vm2737, %v2145, %v2945
        %v2998 = vsel %vm2738, %v2617, %v2946
        %v2999 = vsel %vm2739, %v2656, %v2947
        %v3000 = vsel %vm2740, %v2695, %v2948
        %v3001 = vsel %vm2741, %v2146, %v2949
        %v3002 = vsel %vm2742, %v2618, %v2950
        %v3003 = vsel %vm2743, %v2657, %v2951
        %v3004 = vsel %vm2744, %v2696, %v2952
        %v3005 = vsel %vm2745, %v2147, %v2953
        %v3006 = vsel %vm2746, %v2619, %v2954
        %v3007 = vsel %vm2747, %v2658, %v2955
        %v3008 = vsel %vm2748, %v2697, %v2956
        %v3009 = vsel %vm2749, %v2148, %v2957
        %v3010 = vmul.f32 %v2958, 1.050701
        %v3011 = vmul.f32 %v2959, 1.050701
        %v3012 = vmul.f32 %v2960, 1.050701
        %v3013 = vmul.f32 %v2961, 1.050701
        %v3014 = vmul.f32 %v2962, 1.050701
        %v3015 = vmul.f32 %v2963, 1.050701
        %v3016 = vmul.f32 %v2964, 1.050701
        %v3017 = vmul.f32 %v2965, 1.050701
        %v3018 = vmul.f32 %v2966, 1.050701
        %v3019 = vmul.f32 %v2967, 1.050701
        %v3020 = vmul.f32 %v2968, 1.050701
        %v3021 = vmul.f32 %v2969, 1.050701
        %v3022 = vmul.f32 %v2970, 1.050701
        %v3023 = vmul.f32 %v2971, 1.050701
        %v3024 = vmul.f32 %v2972, 1.050701
        %v3025 = vmul.f32 %v2973, 1.050701
        %v3026 = vmul.f32 %v2974, 1.050701
        %v3027 = vmul.f32 %v2975, 1.050701
        %v3028 = vmul.f32 %v2976, 1.050701
        %v3029 = vmul.f32 %v2977, 1.050701
        %v3030 = vmul.f32 %v2978, 1.050701
        %v3031 = vmul.f32 %v2979, 1.050701
        %v3032 = vmul.f32 %v2980, 1.050701
        %v3033 = vmul.f32 %v2981, 1.050701
        %v3034 = vmul.f32 %v2982, 1.050701
        %v3035 = vmul.f32 %v2983, 1.050701
        %v3036 = vmul.f32 %v2984, 1.050701
        %v3037 = vmul.f32 %v2985, 1.050701
        %v3038 = vmul.f32 %v2986, 1.050701
        %v3039 = vmul.f32 %v2987, 1.050701
        %v3040 = vmul.f32 %v2988, 1.050701
        %v3041 = vmul.f32 %v2989, 1.050701
        %v3042 = vmul.f32 %v2990, 1.050701
        %v3043 = vmul.f32 %v2991, 1.050701
        %v3044 = vmul.f32 %v2992, 1.050701
        %v3045 = vmul.f32 %v2993, 1.050701
        %v3046 = vmul.f32 %v2994, 1.050701
        %v3047 = vmul.f32 %v2995, 1.050701
        %v3048 = vmul.f32 %v2996, 1.050701
        %v3049 = vmul.f32 %v2997, 1.050701
        %v3050 = vmul.f32 %v2998, 1.050701
        %v3051 = vmul.f32 %v2999, 1.050701
        %v3052 = vmul.f32 %v3000, 1.050701
        %v3053 = vmul.f32 %v3001, 1.050701
        %v3054 = vmul.f32 %v3002, 1.050701
        %v3055 = vmul.f32 %v3003, 1.050701
        %v3056 = vmul.f32 %v3004, 1.050701
        %v3057 = vmul.f32 %v3005, 1.050701
        %v3058 = vmul.f32 %v3006, 1.050701
        %v3059 = vmul.f32 %v3007, 1.050701
        %v3060 = vmul.f32 %v3008, 1.050701
        %v3061 = vmul.f32 %v3009, 1.050701
        %v3062 = vpack.c.bf16 %v3014, %v3010
        %v3063 = vpack.c.bf16 %v3015, %v3011
        %v3064 = vpack.c.bf16 %v3016, %v3012
        %v3065 = vpack.c.bf16 %v3017, %v3013
        %v3066 = vpack.c.bf16 %v3022, %v3018
        %v3067 = vpack.c.bf16 %v3023, %v3019
        %v3068 = vpack.c.bf16 %v3024, %v3020
        %v3069 = vpack.c.bf16 %v3025, %v3021
        %v3070 = vpack.c.bf16 %v3030, %v3026
        %v3071 = vpack.c.bf16 %v3031, %v3027
        %v3072 = vpack.c.bf16 %v3032, %v3028
        %v3073 = vpack.c.bf16 %v3033, %v3029
        %v3074 = vpack.c.bf16 %v3038, %v3034
        %v3075 = vpack.c.bf16 %v3039, %v3035
        %v3076 = vpack.c.bf16 %v3040, %v3036
        %v3077 = vpack.c.bf16 %v3041, %v3037
        %v3078 = vpack.c.bf16 %v3046, %v3042
        %v3079 = vpack.c.bf16 %v3047, %v3043
        %v3080 = vpack.c.bf16 %v3048, %v3044
        %v3081 = vpack.c.bf16 %v3049, %v3045
        %v3082 = vpack.c.bf16 %v3054, %v3050
        %v3083 = vpack.c.bf16 %v3055, %v3051
        %v3084 = vpack.c.bf16 %v3056, %v3052
        %v3085 = vpack.c.bf16 %v3057, %v3053
        %v3086 = vpack.c.bf16 %v3058, %v3058
        %v3087 = vpack.c.bf16 %v3059, %v3059
        %v3088 = vpack.c.bf16 %v3060, %v3060
        %v3089 = vpack.c.bf16 %v3061, %v3061
        %v3090 = vld [vmem:[#allocation8] sm:$0xff]
        %v3091 = vld [vmem:[#allocation8 + $0x8] sm:$0xff]
        %v3092 = vld [vmem:[#allocation8 + $0x10] sm:$0xff]
        %v3093 = vld [vmem:[#allocation8 + $0x18] sm:$0xff]
        %v3094 = vld [vmem:[#allocation8 + $0x20] sm:$0xff]
        %v3095 = vld [vmem:[#allocation8 + $0x28] sm:$0xff]
        %v3096 = vld [vmem:[#allocation8 + $0x30] sm:$0xff]
        %v3097 = vld [vmem:[#allocation8 + $0x38] sm:$0xff]
        %v3098 = vld [vmem:[#allocation8 + $0x40] sm:$0xff]
        %v3099 = vld [vmem:[#allocation8 + $0x48] sm:$0xff]
        %v3100 = vld [vmem:[#allocation8 + $0x50] sm:$0xff]
        %v3101 = vld [vmem:[#allocation8 + $0x58] sm:$0xff]
        %v3102 = vld [vmem:[#allocation8 + $0x60] sm:$0xff]
        %v3103 = vld [vmem:[#allocation8 + $0x68] sm:$0xff]
        %v3104 = vld [vmem:[#allocation8 + $0x70] sm:$0xff]
        %v3105 = vld [vmem:[#allocation8 + $0x78] sm:$0xff]
        %v3106 = vld [vmem:[#allocation8 + $0x80] sm:$0xff]
        %v3107 = vld [vmem:[#allocation8 + $0x88] sm:$0xff]
        %v3108 = vld [vmem:[#allocation8 + $0x90] sm:$0xff]
        %v3109 = vld [vmem:[#allocation8 + $0x98] sm:$0xff]
        %v3110 = vld [vmem:[#allocation8 + $0xa0] sm:$0xff]
        %v3111 = vld [vmem:[#allocation8 + $0xa8] sm:$0xff]
        %v3112 = vld [vmem:[#allocation8 + $0xb0] sm:$0xff]
        %v3113 = vld [vmem:[#allocation8 + $0xb8] sm:$0xff]
        %v3114 = vld [vmem:[#allocation8 + $0xc0] sm:$0xff]
        %v3115 = vld [vmem:[#allocation8 + $0xc8] sm:$0xff]
        %v3116 = vld [vmem:[#allocation8 + $0xd0] sm:$0xff]
        %v3117 = vld [vmem:[#allocation8 + $0xd8] sm:$0xff]
        %v3118 = vld [vmem:[#allocation8 + $0xe0] sm:$0xff]
        %v3119 = vld [vmem:[#allocation8 + $0xe8] sm:$0xff]
        %v3120 = vld [vmem:[#allocation8 + $0xf0] sm:$0xff]
        %v3121 = vld [vmem:[#allocation8 + $0xf8] sm:$0xff]
        %v3122 = vld [vmem:[#allocation8 + $0x100] sm:$0xff]
        %v3123 = vld [vmem:[#allocation8 + $0x108] sm:$0xff]
        %v3124 = vld [vmem:[#allocation8 + $0x110] sm:$0xff]
        %v3125 = vld [vmem:[#allocation8 + $0x118] sm:$0xff]
        %v3126 = vld [vmem:[#allocation8 + $0x120] sm:$0xff]
        %v3127 = vld [vmem:[#allocation8 + $0x128] sm:$0xff]
        %v3128 = vld [vmem:[#allocation8 + $0x130] sm:$0xff]
        %v3129 = vld [vmem:[#allocation8 + $0x138] sm:$0xff]
        %v3130 = vld [vmem:[#allocation8 + $0x140] sm:$0xff]
        %v3131 = vld [vmem:[#allocation8 + $0x148] sm:$0xff]
        %v3132 = vld [vmem:[#allocation8 + $0x150] sm:$0xff]
        %v3133 = vld [vmem:[#allocation8 + $0x158] sm:$0xff]
        %v3134 = vld [vmem:[#allocation8 + $0x160] sm:$0xff]
        %v3135 = vld [vmem:[#allocation8 + $0x168] sm:$0xff]
        %v3136 = vld [vmem:[#allocation8 + $0x170] sm:$0xff]
        %v3137 = vld [vmem:[#allocation8 + $0x178] sm:$0xff]
        %v3138 = vld [vmem:[#allocation8 + $0x180] sm:$0xff]
        %v3139 = vld [vmem:[#allocation8 + $0x188] sm:$0xff]
        %v3140 = vld [vmem:[#allocation8 + $0x190] sm:$0xff]
        %v3141 = vld [vmem:[#allocation8 + $0x198] sm:$0xff]
        %v3142 = vld [vmem:[#allocation8 + $0x1a0] sm:$0xff]
        %v3143 = vld [vmem:[#allocation8 + $0x1a8] sm:$0xff]
        %v3144 = vld [vmem:[#allocation8 + $0x1b0] sm:$0xff]
        %v3145 = vld [vmem:[#allocation8 + $0x1b8] sm:$0xff]
        %v3146 = vld [vmem:[#allocation8 + $0x1c0] sm:$0xff]
        %v3147 = vld [vmem:[#allocation8 + $0x1c8] sm:$0xff]
        %v3148 = vld [vmem:[#allocation8 + $0x1d0] sm:$0xff]
        %v3149 = vld [vmem:[#allocation8 + $0x1d8] sm:$0xff]
        %v3150 = vld [vmem:[#allocation8 + $0x1e0] sm:$0xff]
        %v3151 = vld [vmem:[#allocation8 + $0x1e8] sm:$0xff]
        %v3152 = vld [vmem:[#allocation8 + $0x1f0] sm:$0xff]
        %v3153 = vld [vmem:[#allocation8 + $0x1f8] sm:$0xff]
        %v3154 = vld [vmem:[#allocation8 + $0x200] sm:$0xff]
        %v3155 = vld [vmem:[#allocation8 + $0x208] sm:$0xff]
        %v3156 = vld [vmem:[#allocation8 + $0x210] sm:$0xff]
        %v3157 = vld [vmem:[#allocation8 + $0x218] sm:$0xff]
        %v3158 = vld [vmem:[#allocation8 + $0x220] sm:$0xff]
        %v3159 = vld [vmem:[#allocation8 + $0x228] sm:$0xff]
        %v3160 = vld [vmem:[#allocation8 + $0x230] sm:$0xff]
        %v3161 = vld [vmem:[#allocation8 + $0x238] sm:$0xff]
        %v3162 = vld [vmem:[#allocation8 + $0x240] sm:$0xff]
        %v3163 = vld [vmem:[#allocation8 + $0x248] sm:$0xff]
        %v3164 = vld [vmem:[#allocation8 + $0x250] sm:$0xff]
        %v3165 = vld [vmem:[#allocation8 + $0x258] sm:$0xff]
        %v3166 = vld [vmem:[#allocation8 + $0x260] sm:$0xff]
        %v3167 = vld [vmem:[#allocation8 + $0x268] sm:$0xff]
        %v3168 = vld [vmem:[#allocation8 + $0x270] sm:$0xff]
        %v3169 = vld [vmem:[#allocation8 + $0x278] sm:$0xff]
        %v3170 = vld [vmem:[#allocation8 + $0x280] sm:$0xff]
        %v3171 = vld [vmem:[#allocation8 + $0x288] sm:$0xff]
        %v3172 = vld [vmem:[#allocation8 + $0x290] sm:$0xff]
        %v3173 = vld [vmem:[#allocation8 + $0x298] sm:$0xff]
        %v3174 = vld [vmem:[#allocation8 + $0x2a0] sm:$0xff]
        %v3175 = vld [vmem:[#allocation8 + $0x2a8] sm:$0xff]
        %v3176 = vld [vmem:[#allocation8 + $0x2b0] sm:$0xff]
        %v3177 = vld [vmem:[#allocation8 + $0x2b8] sm:$0xff]
        %v3178 = vld [vmem:[#allocation8 + $0x2c0] sm:$0xff]
        %v3179 = vld [vmem:[#allocation8 + $0x2c8] sm:$0xff]
        %v3180 = vld [vmem:[#allocation8 + $0x2d0] sm:$0xff]
        %v3181 = vld [vmem:[#allocation8 + $0x2d8] sm:$0xff]
        %v3182 = vld [vmem:[#allocation8 + $0x2e0] sm:$0xff]
        %v3183 = vld [vmem:[#allocation8 + $0x2e8] sm:$0xff]
        %v3184 = vld [vmem:[#allocation8 + $0x2f0] sm:$0xff]
        %v3185 = vld [vmem:[#allocation8 + $0x2f8] sm:$0xff]
        %v3186 = vld [vmem:[#allocation8 + $0x300] sm:$0xff]
        %v3187 = vld [vmem:[#allocation8 + $0x308] sm:$0xff]
        %v3188 = vld [vmem:[#allocation8 + $0x310] sm:$0xff]
        %v3189 = vld [vmem:[#allocation8 + $0x318] sm:$0xff]
        %v3190 = vld [vmem:[#allocation8 + $0x320] sm:$0xff]
        %v3191 = vld [vmem:[#allocation8 + $0x328] sm:$0xff]
        %v3192 = vld [vmem:[#allocation8 + $0x330] sm:$0xff]
        %v3193 = vld [vmem:[#allocation8 + $0x338] sm:$0xff]
        %v3194 = vld [vmem:[#allocation8 + $0x340] sm:$0xff]
        %v3195 = vld [vmem:[#allocation8 + $0x348] sm:$0xff]
        %v3196 = vld [vmem:[#allocation8 + $0x350] sm:$0xff]
        %v3197 = vld [vmem:[#allocation8 + $0x358] sm:$0xff]
        %v3198 = vld [vmem:[#allocation8 + $0x360] sm:$0xff]
        %v3199 = vld [vmem:[#allocation8 + $0x368] sm:$0xff]
        %v3200 = vld [vmem:[#allocation8 + $0x370] sm:$0xff]
        %v3201 = vld [vmem:[#allocation8 + $0x378] sm:$0xff]
        %v3202 = vld [vmem:[#allocation8 + $0x380] sm:$0xff]
        %v3203 = vld [vmem:[#allocation8 + $0x388] sm:$0xff]
        %v3204 = vld [vmem:[#allocation8 + $0x390] sm:$0xff]
        %v3205 = vld [vmem:[#allocation8 + $0x398] sm:$0xff]
        %v3206 = vld [vmem:[#allocation8 + $0x3a0] sm:$0xff]
        %v3207 = vld [vmem:[#allocation8 + $0x3a8] sm:$0xff]
        %v3208 = vld [vmem:[#allocation8 + $0x3b0] sm:$0xff]
        %v3209 = vld [vmem:[#allocation8 + $0x3b8] sm:$0xff]
        %v3210 = vld [vmem:[#allocation8 + $0x3c0] sm:$0xff]
        %v3211 = vld [vmem:[#allocation8 + $0x3c8] sm:$0xff]
        %v3212 = vld [vmem:[#allocation8 + $0x3d0] sm:$0xff]
        %v3213 = vld [vmem:[#allocation8 + $0x3d8] sm:$0xff]
        %v3214 = vld [vmem:[#allocation8 + $0x3e0] sm:$0xff]
        %v3215 = vld [vmem:[#allocation8 + $0x3e8] sm:$0xff]
        %v3216 = vld [vmem:[#allocation8 + $0x3f0] sm:$0xff]
        %v3217 = vld [vmem:[#allocation8 + $0x3f8] sm:$0xff]
        %v3218 = vld [vmem:[#allocation8 + $0x400] sm:$0xff]
        %v3219 = vld [vmem:[#allocation8 + $0x408] sm:$0xff]
        %v3220 = vld [vmem:[#allocation8 + $0x410] sm:$0xff]
        %v3221 = vld [vmem:[#allocation8 + $0x418] sm:$0xff]
        %v3222 = vld [vmem:[#allocation8 + $0x420] sm:$0xff]
        %v3223 = vld [vmem:[#allocation8 + $0x428] sm:$0xff]
        %v3224 = vld [vmem:[#allocation8 + $0x430] sm:$0xff]
        %v3225 = vld [vmem:[#allocation8 + $0x438] sm:$0xff]
        %v3226 = vld [vmem:[#allocation8 + $0x440] sm:$0xff]
        %v3227 = vld [vmem:[#allocation8 + $0x448] sm:$0xff]
        %v3228 = vld [vmem:[#allocation8 + $0x450] sm:$0xff]
        %v3229 = vld [vmem:[#allocation8 + $0x458] sm:$0xff]
        %v3230 = vld [vmem:[#allocation8 + $0x460] sm:$0xff]
        %v3231 = vld [vmem:[#allocation8 + $0x468] sm:$0xff]
        %v3232 = vld [vmem:[#allocation8 + $0x470] sm:$0xff]
        %v3233 = vld [vmem:[#allocation8 + $0x478] sm:$0xff]
        %v3234 = vld [vmem:[#allocation8 + $0x480] sm:$0xff]
        %v3235 = vld [vmem:[#allocation8 + $0x488] sm:$0xff]
        %v3236 = vld [vmem:[#allocation8 + $0x490] sm:$0xff]
        %v3237 = vld [vmem:[#allocation8 + $0x498] sm:$0xff]
        %v3238 = vld [vmem:[#allocation8 + $0x4a0] sm:$0xff]
        %v3239 = vld [vmem:[#allocation8 + $0x4a8] sm:$0xff]
        %v3240 = vld [vmem:[#allocation8 + $0x4b0] sm:$0xff]
        %v3241 = vld [vmem:[#allocation8 + $0x4b8] sm:$0xff]
        %v3242 = vld [vmem:[#allocation8 + $0x4c0] sm:$0xff]
        %v3243 = vld [vmem:[#allocation8 + $0x4c8] sm:$0xff]
        %v3244 = vld [vmem:[#allocation8 + $0x4d0] sm:$0xff]
        %v3245 = vld [vmem:[#allocation8 + $0x4d8] sm:$0xff]
        %s3246 = scalar_lea.vmem [#allocation8], 1248
        %v3247 = vld [vmem:[%s3246] sm:$0xff]
        %v3248 = vld [vmem:[%s3246 + $0x8] sm:$0xff]
        %v3249 = vld [vmem:[%s3246 + $0x10] sm:$0xff]
        %v3250 = vld [vmem:[%s3246 + $0x18] sm:$0xff]
        %v3251 = vld [vmem:[%s3246 + $0x20] sm:$0xff]
        %v3252 = vld [vmem:[%s3246 + $0x28] sm:$0xff]
        %v3253 = vld [vmem:[%s3246 + $0x30] sm:$0xff]
        %v3254 = vld [vmem:[%s3246 + $0x38] sm:$0xff]
        %v3255 = vld [vmem:[%s3246 + $0x40] sm:$0xff]
        %v3256 = vld [vmem:[%s3246 + $0x48] sm:$0xff]
        %v3257 = vld [vmem:[%s3246 + $0x50] sm:$0xff]
        %v3258 = vld [vmem:[%s3246 + $0x58] sm:$0xff]
        %v3259 = vld [vmem:[%s3246 + $0x60] sm:$0xff]
        %v3260 = vld [vmem:[%s3246 + $0x68] sm:$0xff]
        %v3261 = vld [vmem:[%s3246 + $0x70] sm:$0xff]
        %v3262 = vld [vmem:[%s3246 + $0x78] sm:$0xff]
        %v3263 = vld [vmem:[%s3246 + $0x80] sm:$0xff]
        %v3264 = vld [vmem:[%s3246 + $0x88] sm:$0xff]
        %v3265 = vld [vmem:[%s3246 + $0x90] sm:$0xff]
        %v3266 = vld [vmem:[%s3246 + $0x98] sm:$0xff]
        %v3267 = vld [vmem:[%s3246 + $0xa0] sm:$0xff]
        %v3268 = vld [vmem:[%s3246 + $0xa8] sm:$0xff]
        %v3269 = vld [vmem:[%s3246 + $0xb0] sm:$0xff]
        %v3270 = vld [vmem:[%s3246 + $0xb8] sm:$0xff]
        %v3271 = vld [vmem:[%s3246 + $0xc0] sm:$0xff]
        %v3272 = vld [vmem:[%s3246 + $0xc8] sm:$0xff]
        %v3273 = vld [vmem:[%s3246 + $0xd0] sm:$0xff]
        %v3274 = vld [vmem:[%s3246 + $0xd8] sm:$0xff]
        %v3275 = vld [vmem:[%s3246 + $0xe0] sm:$0xff]
        %v3276 = vld [vmem:[%s3246 + $0xe8] sm:$0xff]
        %v3277 = vld [vmem:[%s3246 + $0xf0] sm:$0xff]
        %v3278 = vld [vmem:[%s3246 + $0xf8] sm:$0xff]
        %v3279 = vld [vmem:[%s3246 + $0x100] sm:$0xff]
        %v3280 = vld [vmem:[%s3246 + $0x108] sm:$0xff]
        %v3281 = vld [vmem:[%s3246 + $0x110] sm:$0xff]
        %v3282 = vld [vmem:[%s3246 + $0x118] sm:$0xff]
        %v3283 = vld [vmem:[%s3246 + $0x120] sm:$0xff]
        %v3284 = vld [vmem:[%s3246 + $0x128] sm:$0xff]
        %v3285 = vld [vmem:[%s3246 + $0x130] sm:$0xff]
        %v3286 = vld [vmem:[%s3246 + $0x138] sm:$0xff]
        %v3287 = vld [vmem:[%s3246 + $0x140] sm:$0xff]
        %v3288 = vld [vmem:[%s3246 + $0x148] sm:$0xff]
        %v3289 = vld [vmem:[%s3246 + $0x150] sm:$0xff]
        %v3290 = vld [vmem:[%s3246 + $0x158] sm:$0xff]
        %v3291 = vld [vmem:[%s3246 + $0x160] sm:$0xff]
        %v3292 = vld [vmem:[%s3246 + $0x168] sm:$0xff]
        %v3293 = vld [vmem:[%s3246 + $0x170] sm:$0xff]
        %v3294 = vld [vmem:[%s3246 + $0x178] sm:$0xff]
        %v3295 = vld [vmem:[%s3246 + $0x180] sm:$0xff]
        %v3296 = vld [vmem:[%s3246 + $0x188] sm:$0xff]
        %v3297 = vld [vmem:[%s3246 + $0x190] sm:$0xff]
        %v3298 = vld [vmem:[%s3246 + $0x198] sm:$0xff]
        %v3299 = vld [vmem:[%s3246 + $0x1a0] sm:$0xff]
        %v3300 = vld [vmem:[%s3246 + $0x1a8] sm:$0xff]
        %v3301 = vld [vmem:[%s3246 + $0x1b0] sm:$0xff]
        %v3302 = vld [vmem:[%s3246 + $0x1b8] sm:$0xff]
        %v3303 = vld [vmem:[%s3246 + $0x1c0] sm:$0xff]
        %v3304 = vld [vmem:[%s3246 + $0x1c8] sm:$0xff]
        %v3305 = vld [vmem:[%s3246 + $0x1d0] sm:$0xff]
        %v3306 = vld [vmem:[%s3246 + $0x1d8] sm:$0xff]
        %v3307 = vld [vmem:[%s3246 + $0x1e0] sm:$0xff]
        %v3308 = vld [vmem:[%s3246 + $0x1e8] sm:$0xff]
        %v3309 = vld [vmem:[%s3246 + $0x1f0] sm:$0xff]
        %v3310 = vld [vmem:[%s3246 + $0x1f8] sm:$0xff]
        %v3311 = vld [vmem:[%s3246 + $0x200] sm:$0xff]
        %v3312 = vld [vmem:[%s3246 + $0x208] sm:$0xff]
        %v3313 = vld [vmem:[%s3246 + $0x210] sm:$0xff]
        %v3314 = vld [vmem:[%s3246 + $0x218] sm:$0xff]
        %v3315 = vld [vmem:[%s3246 + $0x220] sm:$0xff]
        %v3316 = vld [vmem:[%s3246 + $0x228] sm:$0xff]
        %v3317 = vld [vmem:[%s3246 + $0x230] sm:$0xff]
        %v3318 = vld [vmem:[%s3246 + $0x238] sm:$0xff]
        %v3319 = vld [vmem:[%s3246 + $0x240] sm:$0xff]
        %v3320 = vld [vmem:[%s3246 + $0x248] sm:$0xff]
        %v3321 = vld [vmem:[%s3246 + $0x250] sm:$0xff]
        %v3322 = vld [vmem:[%s3246 + $0x258] sm:$0xff]
        %v3323 = vld [vmem:[%s3246 + $0x260] sm:$0xff]
        %v3324 = vld [vmem:[%s3246 + $0x268] sm:$0xff]
        %v3325 = vld [vmem:[%s3246 + $0x270] sm:$0xff]
        %v3326 = vld [vmem:[%s3246 + $0x278] sm:$0xff]
        %v3327 = vld [vmem:[%s3246 + $0x280] sm:$0xff]
        %v3328 = vld [vmem:[%s3246 + $0x288] sm:$0xff]
        %v3329 = vld [vmem:[%s3246 + $0x290] sm:$0xff]
        %v3330 = vld [vmem:[%s3246 + $0x298] sm:$0xff]
        %v3331 = vld [vmem:[%s3246 + $0x2a0] sm:$0xff]
        %v3332 = vld [vmem:[%s3246 + $0x2a8] sm:$0xff]
        %v3333 = vld [vmem:[%s3246 + $0x2b0] sm:$0xff]
        %v3334 = vld [vmem:[%s3246 + $0x2b8] sm:$0xff]
        %v3335 = vld [vmem:[%s3246 + $0x2c0] sm:$0xff]
        %v3336 = vld [vmem:[%s3246 + $0x2c8] sm:$0xff]
        %v3337 = vld [vmem:[%s3246 + $0x2d0] sm:$0xff]
        %v3338 = vld [vmem:[%s3246 + $0x2d8] sm:$0xff]
        %v3339 = vld [vmem:[%s3246 + $0x2e0] sm:$0xff]
        %v3340 = vld [vmem:[%s3246 + $0x2e8] sm:$0xff]
        %v3341 = vld [vmem:[%s3246 + $0x2f0] sm:$0xff]
        %v3342 = vld [vmem:[%s3246 + $0x2f8] sm:$0xff]
        %v3343 = vld [vmem:[%s3246 + $0x300] sm:$0xff]
        %v3344 = vld [vmem:[%s3246 + $0x308] sm:$0xff]
        %v3345 = vld [vmem:[%s3246 + $0x310] sm:$0xff]
        %v3346 = vld [vmem:[%s3246 + $0x318] sm:$0xff]
        %v3347 = vld [vmem:[%s3246 + $0x320] sm:$0xff]
        %v3348 = vld [vmem:[%s3246 + $0x328] sm:$0xff]
        %v3349 = vld [vmem:[%s3246 + $0x330] sm:$0xff]
        %v3350 = vld [vmem:[%s3246 + $0x338] sm:$0xff]
        %v3351 = vld [vmem:[%s3246 + $0x340] sm:$0xff]
        %v3352 = vld [vmem:[%s3246 + $0x348] sm:$0xff]
        %v3353 = vld [vmem:[%s3246 + $0x350] sm:$0xff]
        %v3354 = vld [vmem:[%s3246 + $0x358] sm:$0xff]
        %v3355 = vld [vmem:[%s3246 + $0x360] sm:$0xff]
        %v3356 = vld [vmem:[%s3246 + $0x368] sm:$0xff]
        %v3357 = vld [vmem:[%s3246 + $0x370] sm:$0xff]
        %v3358 = vld [vmem:[%s3246 + $0x378] sm:$0xff]
        %v3359 = vld [vmem:[%s3246 + $0x380] sm:$0xff]
        %v3360 = vld [vmem:[%s3246 + $0x388] sm:$0xff]
        %v3361 = vld [vmem:[%s3246 + $0x390] sm:$0xff]
        %v3362 = vld [vmem:[%s3246 + $0x398] sm:$0xff]
        %v3363 = vld [vmem:[%s3246 + $0x3a0] sm:$0xff]
        %v3364 = vld [vmem:[%s3246 + $0x3a8] sm:$0xff]
        %v3365 = vld [vmem:[%s3246 + $0x3b0] sm:$0xff]
        %v3366 = vld [vmem:[%s3246 + $0x3b8] sm:$0xff]
        %v3367 = vld [vmem:[%s3246 + $0x3c0] sm:$0xff]
        %v3368 = vld [vmem:[%s3246 + $0x3c8] sm:$0xff]
        %v3369 = vld [vmem:[%s3246 + $0x3d0] sm:$0xff]
        %v3370 = vld [vmem:[%s3246 + $0x3d8] sm:$0xff]
        %v3371 = vld [vmem:[%s3246 + $0x3e0] sm:$0xff]
        %v3372 = vld [vmem:[%s3246 + $0x3e8] sm:$0xff]
        %v3373 = vld [vmem:[%s3246 + $0x3f0] sm:$0xff]
        %v3374 = vld [vmem:[%s3246 + $0x3f8] sm:$0xff]
        %v3375 = vld [vmem:[%s3246 + $0x400] sm:$0xff]
        %v3376 = vld [vmem:[%s3246 + $0x408] sm:$0xff]
        %v3377 = vld [vmem:[%s3246 + $0x410] sm:$0xff]
        %v3378 = vld [vmem:[%s3246 + $0x418] sm:$0xff]
        %v3379 = vld [vmem:[%s3246 + $0x420] sm:$0xff]
        %v3380 = vld [vmem:[%s3246 + $0x428] sm:$0xff]
        %v3381 = vld [vmem:[%s3246 + $0x430] sm:$0xff]
        %v3382 = vld [vmem:[%s3246 + $0x438] sm:$0xff]
        %v3383 = vld [vmem:[%s3246 + $0x440] sm:$0xff]
        %v3384 = vld [vmem:[%s3246 + $0x448] sm:$0xff]
        %v3385 = vld [vmem:[%s3246 + $0x450] sm:$0xff]
        %v3386 = vld [vmem:[%s3246 + $0x458] sm:$0xff]
        %v3387 = vld [vmem:[%s3246 + $0x460] sm:$0xff]
        %v3388 = vld [vmem:[%s3246 + $0x468] sm:$0xff]
        %v3389 = vld [vmem:[%s3246 + $0x470] sm:$0xff]
        %v3390 = vld [vmem:[%s3246 + $0x478] sm:$0xff]
        %v3391 = vld [vmem:[%s3246 + $0x480] sm:$0xff]
        %v3392 = vld [vmem:[%s3246 + $0x488] sm:$0xff]
        %v3393 = vld [vmem:[%s3246 + $0x490] sm:$0xff]
        %v3394 = vld [vmem:[%s3246 + $0x498] sm:$0xff]
        %v3395 = vld [vmem:[%s3246 + $0x4a0] sm:$0xff]
        %v3396 = vld [vmem:[%s3246 + $0x4a8] sm:$0xff]
        %v3397 = vld [vmem:[%s3246 + $0x4b0] sm:$0xff]
        %v3398 = vld [vmem:[%s3246 + $0x4b8] sm:$0xff]
        %v3399 = vld [vmem:[%s3246 + $0x4c0] sm:$0xff]
        %v3400 = vld [vmem:[%s3246 + $0x4c8] sm:$0xff]
        %v3401 = vld [vmem:[%s3246 + $0x4d0] sm:$0xff]
        %v3402 = vld [vmem:[%s3246 + $0x4d8] sm:$0xff]
        %vm3427 = vcmask 1043456
        %v3428 = vrot.slane %v3062, 4
        %v3429 = vrot.slane %v3066, 4
        %v3430 = vsel %vm3427, %v3428, %v3429
        %v3431 = vrot.slane %v3063, 4
        %v3432 = vrot.slane %v3067, 4
        %v3433 = vsel %vm3427, %v3431, %v3432
        %v3434 = vrot.slane %v3064, 4
        %v3435 = vrot.slane %v3068, 4
        %v3436 = vsel %vm3427, %v3434, %v3435
        %v3437 = vrot.slane %v3065, 4
        %v3438 = vrot.slane %v3069, 4
        %v3439 = vsel %vm3427, %v3437, %v3438
        %v3440 = vrot.slane %v3070, 4
        %v3441 = vsel %vm3427, %v3429, %v3440
        %v3442 = vrot.slane %v3071, 4
        %v3443 = vsel %vm3427, %v3432, %v3442
        %v3444 = vrot.slane %v3072, 4
        %v3445 = vsel %vm3427, %v3435, %v3444
        %v3446 = vrot.slane %v3073, 4
        %v3447 = vsel %vm3427, %v3438, %v3446
        %v3448 = vrot.slane %v3074, 4
        %v3449 = vsel %vm3427, %v3440, %v3448
        %v3450 = vrot.slane %v3075, 4
        %v3451 = vsel %vm3427, %v3442, %v3450
        %v3452 = vrot.slane %v3076, 4
        %v3453 = vsel %vm3427, %v3444, %v3452
        %v3454 = vrot.slane %v3077, 4
        %v3455 = vsel %vm3427, %v3446, %v3454
        %v3456 = vrot.slane %v3078, 4
        %v3457 = vsel %vm3427, %v3448, %v3456
        %v3458 = vrot.slane %v3079, 4
        %v3459 = vsel %vm3427, %v3450, %v3458
        %v3460 = vrot.slane %v3080, 4
        %v3461 = vsel %vm3427, %v3452, %v3460
        %v3462 = vrot.slane %v3081, 4
        %v3463 = vsel %vm3427, %v3454, %v3462
        %v3464 = vrot.slane %v3082, 4
        %v3465 = vsel %vm3427, %v3456, %v3464
        %v3466 = vrot.slane %v3083, 4
        %v3467 = vsel %vm3427, %v3458, %v3466
        %v3468 = vrot.slane %v3084, 4
        %v3469 = vsel %vm3427, %v3460, %v3468
        %v3470 = vrot.slane %v3085, 4
        %v3471 = vsel %vm3427, %v3462, %v3470
        %v3646 = vunpack.c.l.b16 %v3247
        %v3647 = vunpack.c.h.b16 %v3247
        %v3648 = vunpack.c.l.b16 %v3248
        %v3649 = vunpack.c.h.b16 %v3248
        %v3650 = vunpack.c.l.b16 %v3249
        %v3651 = vunpack.c.h.b16 %v3249
        %v3652 = vunpack.c.l.b16 %v3250
        %v3653 = vunpack.c.h.b16 %v3250
        %v3654 = vunpack.c.l.b16 %v3251
        %v3655 = vunpack.c.h.b16 %v3251
        %v3656 = vunpack.c.l.b16 %v3252
        %v3657 = vunpack.c.h.b16 %v3252
        %v3658 = vunpack.c.l.b16 %v3253
        %v3659 = vunpack.c.h.b16 %v3253
        %v3660 = vunpack.c.l.b16 %v3254
        %v3661 = vunpack.c.h.b16 %v3254
        %v3662 = vunpack.c.l.b16 %v3255
        %v3663 = vunpack.c.h.b16 %v3255
        %v3664 = vunpack.c.l.b16 %v3256
        %v3665 = vunpack.c.h.b16 %v3256
        %v3666 = vunpack.c.l.b16 %v3257
        %v3667 = vunpack.c.h.b16 %v3257
        %v3668 = vunpack.c.l.b16 %v3258
        %v3669 = vunpack.c.h.b16 %v3258
        %v3670 = vunpack.c.l.b16 %v3259
        %v3671 = vunpack.c.h.b16 %v3259
        %v3672 = vunpack.c.l.b16 %v3260
        %v3673 = vunpack.c.h.b16 %v3260
        %v3674 = vunpack.c.l.b16 %v3261
        %v3675 = vunpack.c.h.b16 %v3261
        %v3676 = vunpack.c.l.b16 %v3262
        %v3677 = vunpack.c.h.b16 %v3262
        %v3678 = vunpack.c.l.b16 %v3263
        %v3679 = vunpack.c.h.b16 %v3263
        %v3680 = vunpack.c.l.b16 %v3264
        %v3681 = vunpack.c.h.b16 %v3264
        %v3682 = vunpack.c.l.b16 %v3265
        %v3683 = vunpack.c.h.b16 %v3265
        %v3684 = vunpack.c.l.b16 %v3266
        %v3685 = vunpack.c.h.b16 %v3266
        %v3686 = vunpack.c.l.b16 %v3267
        %v3687 = vunpack.c.h.b16 %v3267
        %v3688 = vunpack.c.l.b16 %v3268
        %v3689 = vunpack.c.h.b16 %v3268
        %v3690 = vunpack.c.l.b16 %v3269
        %v3691 = vunpack.c.h.b16 %v3269
        %v3692 = vunpack.c.l.b16 %v3270
        %v3693 = vunpack.c.h.b16 %v3270
        %v3694 = vunpack.c.l.b16 %v3271
        %v3695 = vunpack.c.h.b16 %v3271
        %v3696 = vunpack.c.l.b16 %v3272
        %v3697 = vunpack.c.h.b16 %v3272
        %v3698 = vunpack.c.l.b16 %v3273
        %v3699 = vunpack.c.h.b16 %v3273
        %v3700 = vunpack.c.l.b16 %v3274
        %v3701 = vunpack.c.h.b16 %v3274
        %v3702 = vunpack.c.l.b16 %v3275
        %v3703 = vunpack.c.h.b16 %v3275
        %v3704 = vunpack.c.l.b16 %v3276
        %v3705 = vunpack.c.h.b16 %v3276
        %v3706 = vunpack.c.l.b16 %v3277
        %v3707 = vunpack.c.h.b16 %v3277
        %v3708 = vunpack.c.l.b16 %v3278
        %v3709 = vunpack.c.h.b16 %v3278
        %v3710 = vunpack.c.l.b16 %v3279
        %v3711 = vunpack.c.h.b16 %v3279
        %v3712 = vunpack.c.l.b16 %v3280
        %v3713 = vunpack.c.h.b16 %v3280
        %v3714 = vunpack.c.l.b16 %v3281
        %v3715 = vunpack.c.h.b16 %v3281
        %v3716 = vunpack.c.l.b16 %v3282
        %v3717 = vunpack.c.h.b16 %v3282
        %v3718 = vunpack.c.l.b16 %v3283
        %v3719 = vunpack.c.h.b16 %v3283
        %v3720 = vunpack.c.l.b16 %v3284
        %v3721 = vunpack.c.h.b16 %v3284
        %v3722 = vunpack.c.l.b16 %v3285
        %v3723 = vunpack.c.h.b16 %v3285
        %v3724 = vunpack.c.l.b16 %v3286
        %v3725 = vunpack.c.h.b16 %v3286
        %v3726 = vunpack.c.l.b16 %v3287
        %v3727 = vunpack.c.h.b16 %v3287
        %v3728 = vunpack.c.l.b16 %v3288
        %v3729 = vunpack.c.h.b16 %v3288
        %v3730 = vunpack.c.l.b16 %v3289
        %v3731 = vunpack.c.h.b16 %v3289
        %v3732 = vunpack.c.l.b16 %v3290
        %v3733 = vunpack.c.h.b16 %v3290
        %v3734 = vunpack.c.l.b16 %v3291
        %v3735 = vunpack.c.h.b16 %v3291
        %v3736 = vunpack.c.l.b16 %v3292
        %v3737 = vunpack.c.h.b16 %v3292
        %v3738 = vunpack.c.l.b16 %v3293
        %v3739 = vunpack.c.h.b16 %v3293
        %v3740 = vunpack.c.l.b16 %v3294
        %v3741 = vunpack.c.h.b16 %v3294
        %v3742 = vunpack.c.l.b16 %v3295
        %v3743 = vunpack.c.h.b16 %v3295
        %v3744 = vunpack.c.l.b16 %v3296
        %v3745 = vunpack.c.h.b16 %v3296
        %v3746 = vunpack.c.l.b16 %v3297
        %v3747 = vunpack.c.h.b16 %v3297
        %v3748 = vunpack.c.l.b16 %v3298
        %v3749 = vunpack.c.h.b16 %v3298
        %v3750 = vunpack.c.l.b16 %v3299
        %v3751 = vunpack.c.h.b16 %v3299
        %v3752 = vunpack.c.l.b16 %v3300
        %v3753 = vunpack.c.h.b16 %v3300
        %v3754 = vunpack.c.l.b16 %v3301
        %v3755 = vunpack.c.h.b16 %v3301
        %v3756 = vunpack.c.l.b16 %v3302
        %v3757 = vunpack.c.h.b16 %v3302
        %v3758 = vunpack.c.l.b16 %v3303
        %v3759 = vunpack.c.h.b16 %v3303
        %v3760 = vunpack.c.l.b16 %v3304
        %v3761 = vunpack.c.h.b16 %v3304
        %v3762 = vunpack.c.l.b16 %v3305
        %v3763 = vunpack.c.h.b16 %v3305
        %v3764 = vunpack.c.l.b16 %v3306
        %v3765 = vunpack.c.h.b16 %v3306
        %v3766 = vunpack.c.l.b16 %v3307
        %v3767 = vunpack.c.h.b16 %v3307
        %v3768 = vunpack.c.l.b16 %v3308
        %v3769 = vunpack.c.h.b16 %v3308
        %v3770 = vunpack.c.l.b16 %v3309
        %v3771 = vunpack.c.h.b16 %v3309
        %v3772 = vunpack.c.l.b16 %v3310
        %v3773 = vunpack.c.h.b16 %v3310
        %v3774 = vunpack.c.l.b16 %v3311
        %v3775 = vunpack.c.h.b16 %v3311
        %v3776 = vunpack.c.l.b16 %v3312
        %v3777 = vunpack.c.h.b16 %v3312
        %v3778 = vunpack.c.l.b16 %v3313
        %v3779 = vunpack.c.h.b16 %v3313
        %v3780 = vunpack.c.l.b16 %v3314
        %v3781 = vunpack.c.h.b16 %v3314
        %v3782 = vunpack.c.l.b16 %v3315
        %v3783 = vunpack.c.h.b16 %v3315
        %v3784 = vunpack.c.l.b16 %v3316
        %v3785 = vunpack.c.h.b16 %v3316
        %v3786 = vunpack.c.l.b16 %v3317
        %v3787 = vunpack.c.h.b16 %v3317
        %v3788 = vunpack.c.l.b16 %v3318
        %v3789 = vunpack.c.h.b16 %v3318
        %v3790 = vunpack.c.l.b16 %v3319
        %v3791 = vunpack.c.h.b16 %v3319
        %v3792 = vunpack.c.l.b16 %v3320
        %v3793 = vunpack.c.h.b16 %v3320
        %v3794 = vunpack.c.l.b16 %v3321
        %v3795 = vunpack.c.h.b16 %v3321
        %v3796 = vunpack.c.l.b16 %v3322
        %v3797 = vunpack.c.h.b16 %v3322
        %v3798 = vunpack.c.l.b16 %v3323
        %v3799 = vunpack.c.h.b16 %v3323
        %v3800 = vunpack.c.l.b16 %v3324
        %v3801 = vunpack.c.h.b16 %v3324
        %v3802 = vunpack.c.l.b16 %v3325
        %v3803 = vunpack.c.h.b16 %v3325
        %v3804 = vunpack.c.l.b16 %v3326
        %v3805 = vunpack.c.h.b16 %v3326
        %v3806 = vunpack.c.l.b16 %v3327
        %v3807 = vunpack.c.h.b16 %v3327
        %v3808 = vunpack.c.l.b16 %v3328
        %v3809 = vunpack.c.h.b16 %v3328
        %v3810 = vunpack.c.l.b16 %v3329
        %v3811 = vunpack.c.h.b16 %v3329
        %v3812 = vunpack.c.l.b16 %v3330
        %v3813 = vunpack.c.h.b16 %v3330
        %v3814 = vunpack.c.l.b16 %v3331
        %v3815 = vunpack.c.h.b16 %v3331
        %v3816 = vunpack.c.l.b16 %v3332
        %v3817 = vunpack.c.h.b16 %v3332
        %v3818 = vunpack.c.l.b16 %v3333
        %v3819 = vunpack.c.h.b16 %v3333
        %v3820 = vunpack.c.l.b16 %v3334
        %v3821 = vunpack.c.h.b16 %v3334
        %v3822 = vunpack.c.l.b16 %v3335
        %v3823 = vunpack.c.h.b16 %v3335
        %v3824 = vunpack.c.l.b16 %v3336
        %v3825 = vunpack.c.h.b16 %v3336
        %v3826 = vunpack.c.l.b16 %v3337
        %v3827 = vunpack.c.h.b16 %v3337
        %v3828 = vunpack.c.l.b16 %v3338
        %v3829 = vunpack.c.h.b16 %v3338
        %v3830 = vunpack.c.l.b16 %v3339
        %v3831 = vunpack.c.h.b16 %v3339
        %v3832 = vunpack.c.l.b16 %v3340
        %v3833 = vunpack.c.h.b16 %v3340
        %v3834 = vunpack.c.l.b16 %v3341
        %v3835 = vunpack.c.h.b16 %v3341
        %v3836 = vunpack.c.l.b16 %v3342
        %v3837 = vunpack.c.h.b16 %v3342
        %v3838 = vunpack.c.l.b16 %v3343
        %v3839 = vunpack.c.h.b16 %v3343
        %v3840 = vunpack.c.l.b16 %v3344
        %v3841 = vunpack.c.h.b16 %v3344
        %v3842 = vunpack.c.l.b16 %v3345
        %v3843 = vunpack.c.h.b16 %v3345
        %v3844 = vunpack.c.l.b16 %v3346
        %v3845 = vunpack.c.h.b16 %v3346
        %v3846 = vunpack.c.l.b16 %v3347
        %v3847 = vunpack.c.h.b16 %v3347
        %v3848 = vunpack.c.l.b16 %v3348
        %v3849 = vunpack.c.h.b16 %v3348
        %v3850 = vunpack.c.l.b16 %v3349
        %v3851 = vunpack.c.h.b16 %v3349
        %v3852 = vunpack.c.l.b16 %v3350
        %v3853 = vunpack.c.h.b16 %v3350
        %v3854 = vunpack.c.l.b16 %v3351
        %v3855 = vunpack.c.h.b16 %v3351
        %v3856 = vunpack.c.l.b16 %v3352
        %v3857 = vunpack.c.h.b16 %v3352
        %v3858 = vunpack.c.l.b16 %v3353
        %v3859 = vunpack.c.h.b16 %v3353
        %v3860 = vunpack.c.l.b16 %v3354
        %v3861 = vunpack.c.h.b16 %v3354
        %v3862 = vunpack.c.l.b16 %v3355
        %v3863 = vunpack.c.h.b16 %v3355
        %v3864 = vunpack.c.l.b16 %v3356
        %v3865 = vunpack.c.h.b16 %v3356
        %v3866 = vunpack.c.l.b16 %v3357
        %v3867 = vunpack.c.h.b16 %v3357
        %v3868 = vunpack.c.l.b16 %v3358
        %v3869 = vunpack.c.h.b16 %v3358
        %v3870 = vunpack.c.l.b16 %v3359
        %v3871 = vunpack.c.h.b16 %v3359
        %v3872 = vunpack.c.l.b16 %v3360
        %v3873 = vunpack.c.h.b16 %v3360
        %v3874 = vunpack.c.l.b16 %v3361
        %v3875 = vunpack.c.h.b16 %v3361
        %v3876 = vunpack.c.l.b16 %v3362
        %v3877 = vunpack.c.h.b16 %v3362
        %v3878 = vunpack.c.l.b16 %v3363
        %v3879 = vunpack.c.h.b16 %v3363
        %v3880 = vunpack.c.l.b16 %v3364
        %v3881 = vunpack.c.h.b16 %v3364
        %v3882 = vunpack.c.l.b16 %v3365
        %v3883 = vunpack.c.h.b16 %v3365
        %v3884 = vunpack.c.l.b16 %v3366
        %v3885 = vunpack.c.h.b16 %v3366
        %v3886 = vunpack.c.l.b16 %v3367
        %v3887 = vunpack.c.h.b16 %v3367
        %v3888 = vunpack.c.l.b16 %v3368
        %v3889 = vunpack.c.h.b16 %v3368
        %v3890 = vunpack.c.l.b16 %v3369
        %v3891 = vunpack.c.h.b16 %v3369
        %v3892 = vunpack.c.l.b16 %v3370
        %v3893 = vunpack.c.h.b16 %v3370
        %v3894 = vunpack.c.l.b16 %v3371
        %v3895 = vunpack.c.h.b16 %v3371
        %v3896 = vunpack.c.l.b16 %v3372
        %v3897 = vunpack.c.h.b16 %v3372
        %v3898 = vunpack.c.l.b16 %v3373
        %v3899 = vunpack.c.h.b16 %v3373
        %v3900 = vunpack.c.l.b16 %v3374
        %v3901 = vunpack.c.h.b16 %v3374
        %v3902 = vunpack.c.l.b16 %v3375
        %v3903 = vunpack.c.h.b16 %v3375
        %v3904 = vunpack.c.l.b16 %v3376
        %v3905 = vunpack.c.h.b16 %v3376
        %v3906 = vunpack.c.l.b16 %v3377
        %v3907 = vunpack.c.h.b16 %v3377
        %v3908 = vunpack.c.l.b16 %v3378
        %v3909 = vunpack.c.h.b16 %v3378
        %v3910 = vunpack.c.l.b16 %v3379
        %v3911 = vunpack.c.h.b16 %v3379
        %v3912 = vunpack.c.l.b16 %v3380
        %v3913 = vunpack.c.h.b16 %v3380
        %v3914 = vunpack.c.l.b16 %v3381
        %v3915 = vunpack.c.h.b16 %v3381
        %v3916 = vunpack.c.l.b16 %v3382
        %v3917 = vunpack.c.h.b16 %v3382
        %v3918 = vunpack.c.l.b16 %v3383
        %v3919 = vunpack.c.h.b16 %v3383
        %v3920 = vunpack.c.l.b16 %v3384
        %v3921 = vunpack.c.h.b16 %v3384
        %v3922 = vunpack.c.l.b16 %v3385
        %v3923 = vunpack.c.h.b16 %v3385
        %v3924 = vunpack.c.l.b16 %v3386
        %v3925 = vunpack.c.h.b16 %v3386
        %v3926 = vunpack.c.l.b16 %v3387
        %v3927 = vunpack.c.h.b16 %v3387
        %v3928 = vunpack.c.l.b16 %v3388
        %v3929 = vunpack.c.h.b16 %v3388
        %v3930 = vunpack.c.l.b16 %v3389
        %v3931 = vunpack.c.h.b16 %v3389
        %v3932 = vunpack.c.l.b16 %v3390
        %v3933 = vunpack.c.h.b16 %v3390
        %v3934 = vunpack.c.l.b16 %v3391
        %v3935 = vunpack.c.h.b16 %v3391
        %v3936 = vunpack.c.l.b16 %v3392
        %v3937 = vunpack.c.h.b16 %v3392
        %v3938 = vunpack.c.l.b16 %v3393
        %v3939 = vunpack.c.h.b16 %v3393
        %v3940 = vunpack.c.l.b16 %v3394
        %v3941 = vunpack.c.h.b16 %v3394
        %v3942 = vunpack.c.l.b16 %v3395
        %v3943 = vunpack.c.h.b16 %v3395
        %v3944 = vunpack.c.l.b16 %v3396
        %v3945 = vunpack.c.h.b16 %v3396
        %v3946 = vunpack.c.l.b16 %v3397
        %v3947 = vunpack.c.h.b16 %v3397
        %v3948 = vunpack.c.l.b16 %v3398
        %v3949 = vunpack.c.h.b16 %v3398
        %v3950 = vunpack.c.l.b16 %v3399
        %v3951 = vunpack.c.h.b16 %v3399
        %v3952 = vunpack.c.l.b16 %v3400
        %v3953 = vunpack.c.h.b16 %v3400
        %v3954 = vunpack.c.l.b16 %v3401
        %v3955 = vunpack.c.h.b16 %v3401
        %v3956 = vunpack.c.l.b16 %v3402
        %v3957 = vunpack.c.h.b16 %v3402
        %v3958 = vpack.c.b16 %v3652, %v3646
        %v3959 = vpack.c.b16 %v3653, %v3647
        %v3960 = vpack.c.b16 %v3654, %v3648
        %v3961 = vpack.c.b16 %v3655, %v3649
        %v3962 = vpack.c.b16 %v3656, %v3650
        %v3963 = vpack.c.b16 %v3657, %v3651
        %v3964 = vpack.c.b16 %v3664, %v3658
        %v3965 = vpack.c.b16 %v3665, %v3659
        %v3966 = vpack.c.b16 %v3666, %v3660
        %v3967 = vpack.c.b16 %v3667, %v3661
        %v3968 = vpack.c.b16 %v3668, %v3662
        %v3969 = vpack.c.b16 %v3669, %v3663
        %v3970 = vpack.c.b16 %v3676, %v3670
        %v3971 = vpack.c.b16 %v3677, %v3671
        %v3972 = vpack.c.b16 %v3678, %v3672
        %v3973 = vpack.c.b16 %v3679, %v3673
        %v3974 = vpack.c.b16 %v3680, %v3674
        %v3975 = vpack.c.b16 %v3681, %v3675
        %v3976 = vpack.c.b16 %v3688, %v3682
        %v3977 = vpack.c.b16 %v3689, %v3683
        %v3978 = vpack.c.b16 %v3690, %v3684
        %v3979 = vpack.c.b16 %v3691, %v3685
        %v3980 = vpack.c.b16 %v3692, %v3686
        %v3981 = vpack.c.b16 %v3693, %v3687
        %v3982 = vpack.c.b16 %v3700, %v3694
        %v3983 = vpack.c.b16 %v3701, %v3695
        %v3984 = vpack.c.b16 %v3702, %v3696
        %v3985 = vpack.c.b16 %v3703, %v3697
        %v3986 = vpack.c.b16 %v3704, %v3698
        %v3987 = vpack.c.b16 %v3705, %v3699
        %v3988 = vpack.c.b16 %v3712, %v3706
        %v3989 = vpack.c.b16 %v3713, %v3707
        %v3990 = vpack.c.b16 %v3714, %v3708
        %v3991 = vpack.c.b16 %v3715, %v3709
        %v3992 = vpack.c.b16 %v3716, %v3710
        %v3993 = vpack.c.b16 %v3717, %v3711
        %v3994 = vpack.c.b16 %v3724, %v3718
        %v3995 = vpack.c.b16 %v3725, %v3719
        %v3996 = vpack.c.b16 %v3726, %v3720
        %v3997 = vpack.c.b16 %v3727, %v3721
        %v3998 = vpack.c.b16 %v3728, %v3722
        %v3999 = vpack.c.b16 %v3729, %v3723
        %v4000 = vpack.c.b16 %v3736, %v3730
        %v4001 = vpack.c.b16 %v3737, %v3731
        %v4002 = vpack.c.b16 %v3738, %v3732
        %v4003 = vpack.c.b16 %v3739, %v3733
        %v4004 = vpack.c.b16 %v3740, %v3734
        %v4005 = vpack.c.b16 %v3741, %v3735
        %v4006 = vpack.c.b16 %v3748, %v3742
        %v4007 = vpack.c.b16 %v3749, %v3743
        %v4008 = vpack.c.b16 %v3750, %v3744
        %v4009 = vpack.c.b16 %v3751, %v3745
        %v4010 = vpack.c.b16 %v3752, %v3746
        %v4011 = vpack.c.b16 %v3753, %v3747
        %v4012 = vpack.c.b16 %v3760, %v3754
        %v4013 = vpack.c.b16 %v3761, %v3755
        %v4014 = vpack.c.b16 %v3762, %v3756
        %v4015 = vpack.c.b16 %v3763, %v3757
        %v4016 = vpack.c.b16 %v3764, %v3758
        %v4017 = vpack.c.b16 %v3765, %v3759
        %v4018 = vpack.c.b16 %v3772, %v3766
        %v4019 = vpack.c.b16 %v3773, %v3767
        %v4020 = vpack.c.b16 %v3774, %v3768
        %v4021 = vpack.c.b16 %v3775, %v3769
        %v4022 = vpack.c.b16 %v3776, %v3770
        %v4023 = vpack.c.b16 %v3777, %v3771
        %v4024 = vpack.c.b16 %v3784, %v3778
        %v4025 = vpack.c.b16 %v3785, %v3779
        %v4026 = vpack.c.b16 %v3786, %v3780
        %v4027 = vpack.c.b16 %v3787, %v3781
        %v4028 = vpack.c.b16 %v3788, %v3782
        %v4029 = vpack.c.b16 %v3789, %v3783
        %v4030 = vpack.c.b16 %v3796, %v3790
        %v4031 = vpack.c.b16 %v3797, %v3791
        %v4032 = vpack.c.b16 %v3798, %v3792
        %v4033 = vpack.c.b16 %v3799, %v3793
        %v4034 = vpack.c.b16 %v3800, %v3794
        %v4035 = vpack.c.b16 %v3801, %v3795
        %v4036 = vpack.c.b16 %v3808, %v3802
        %v4037 = vpack.c.b16 %v3809, %v3803
        %v4038 = vpack.c.b16 %v3810, %v3804
        %v4039 = vpack.c.b16 %v3811, %v3805
        %v4040 = vpack.c.b16 %v3812, %v3806
        %v4041 = vpack.c.b16 %v3813, %v3807
        %v4042 = vpack.c.b16 %v3820, %v3814
        %v4043 = vpack.c.b16 %v3821, %v3815
        %v4044 = vpack.c.b16 %v3822, %v3816
        %v4045 = vpack.c.b16 %v3823, %v3817
        %v4046 = vpack.c.b16 %v3824, %v3818
        %v4047 = vpack.c.b16 %v3825, %v3819
        %v4048 = vpack.c.b16 %v3832, %v3826
        %v4049 = vpack.c.b16 %v3833, %v3827
        %v4050 = vpack.c.b16 %v3834, %v3828
        %v4051 = vpack.c.b16 %v3835, %v3829
        %v4052 = vpack.c.b16 %v3836, %v3830
        %v4053 = vpack.c.b16 %v3837, %v3831
        %v4054 = vpack.c.b16 %v3844, %v3838
        %v4055 = vpack.c.b16 %v3845, %v3839
        %v4056 = vpack.c.b16 %v3846, %v3840
        %v4057 = vpack.c.b16 %v3847, %v3841
        %v4058 = vpack.c.b16 %v3848, %v3842
        %v4059 = vpack.c.b16 %v3849, %v3843
        %v4060 = vpack.c.b16 %v3856, %v3850
        %v4061 = vpack.c.b16 %v3857, %v3851
        %v4062 = vpack.c.b16 %v3858, %v3852
        %v4063 = vpack.c.b16 %v3859, %v3853
        %v4064 = vpack.c.b16 %v3860, %v3854
        %v4065 = vpack.c.b16 %v3861, %v3855
        %v4066 = vpack.c.b16 %v3868, %v3862
        %v4067 = vpack.c.b16 %v3869, %v3863
        %v4068 = vpack.c.b16 %v3870, %v3864
        %v4069 = vpack.c.b16 %v3871, %v3865
        %v4070 = vpack.c.b16 %v3872, %v3866
        %v4071 = vpack.c.b16 %v3873, %v3867
        %v4072 = vpack.c.b16 %v3880, %v3874
        %v4073 = vpack.c.b16 %v3881, %v3875
        %v4074 = vpack.c.b16 %v3882, %v3876
        %v4075 = vpack.c.b16 %v3883, %v3877
        %v4076 = vpack.c.b16 %v3884, %v3878
        %v4077 = vpack.c.b16 %v3885, %v3879
        %v4078 = vpack.c.b16 %v3892, %v3886
        %v4079 = vpack.c.b16 %v3893, %v3887
        %v4080 = vpack.c.b16 %v3894, %v3888
        %v4081 = vpack.c.b16 %v3895, %v3889
        %v4082 = vpack.c.b16 %v3896, %v3890
        %v4083 = vpack.c.b16 %v3897, %v3891
        %v4084 = vpack.c.b16 %v3904, %v3898
        %v4085 = vpack.c.b16 %v3905, %v3899
        %v4086 = vpack.c.b16 %v3906, %v3900
        %v4087 = vpack.c.b16 %v3907, %v3901
        %v4088 = vpack.c.b16 %v3908, %v3902
        %v4089 = vpack.c.b16 %v3909, %v3903
        %v4090 = vpack.c.b16 %v3916, %v3910
        %v4091 = vpack.c.b16 %v3917, %v3911
        %v4092 = vpack.c.b16 %v3918, %v3912
        %v4093 = vpack.c.b16 %v3919, %v3913
        %v4094 = vpack.c.b16 %v3920, %v3914
        %v4095 = vpack.c.b16 %v3921, %v3915
        %v4096 = vpack.c.b16 %v3928, %v3922
        %v4097 = vpack.c.b16 %v3929, %v3923
        %v4098 = vpack.c.b16 %v3930, %v3924
        %v4099 = vpack.c.b16 %v3931, %v3925
        %v4100 = vpack.c.b16 %v3932, %v3926
        %v4101 = vpack.c.b16 %v3933, %v3927
        %v4102 = vpack.c.b16 %v3940, %v3934
        %v4103 = vpack.c.b16 %v3941, %v3935
        %v4104 = vpack.c.b16 %v3942, %v3936
        %v4105 = vpack.c.b16 %v3943, %v3937
        %v4106 = vpack.c.b16 %v3944, %v3938
        %v4107 = vpack.c.b16 %v3945, %v3939
        %v4108 = vpack.c.b16 %v3952, %v3946
        %v4109 = vpack.c.b16 %v3953, %v3947
        %v4110 = vpack.c.b16 %v3954, %v3948
        %v4111 = vpack.c.b16 %v3955, %v3949
        %v4112 = vpack.c.b16 %v3956, %v3950
        %v4113 = vpack.c.b16 %v3957, %v3951
        %v4271 = vsel %vm2578, %v3439, 0
        %v4274 = vsel %vm2578, %v3447, 0
        %v4277 = vsel %vm2578, %v3455, 0
        %v4280 = vsel %vm2578, %v3463, 0
        %v4283 = vsel %vm2578, %v3471, 0
        %v4286 = vsel %vm2578, %v3470, 0
        %4288 = vmatprep.subr.bf16.mxu0 %v3959
        %4289 = vmatpush1.bf16.msra.mxu0 %v3958
        %4290 = vmatprep.subr.bf16.mxu0 %v3965
        %4291 = vmatpush1.bf16.msra.mxu0 %v3964
        %4292 = vmatprep.subr.bf16.mxu0 %v3971
        %4293 = vmatpush1.bf16.msra.mxu0 %v3970
        %4294 = vmatprep.subr.bf16.mxu0 %v3977
        %4295 = vmatpush1.bf16.msra.mxu0 %v3976
        %4296 = vmatprep.subr.bf16.mxu0 %v3983
        %4297 = vmatpush1.bf16.msra.mxu0 %v3982
        %4298 = vmatprep.subr.bf16.mxu0 %v3989
        %4299 = vmatpush1.bf16.msra.mxu0 %v3988
        %4300 = vmatprep.subr.bf16.mxu0 %v3995
        %4301 = vmatpush1.bf16.msra.mxu0 %v3994
        %4302 = vmatprep.subr.bf16.mxu0 %v4001
        %4303 = vmatpush1.bf16.msra.mxu0 %v4000
        %4304 = vmatprep.subr.bf16.mxu0 %v4007
        %4305 = vmatpush1.bf16.msra.mxu0 %v4006
        %4306 = vmatprep.subr.bf16.mxu0 %v4013
        %4307 = vmatpush1.bf16.msra.mxu0 %v4012
        %4308 = vmatprep.subr.bf16.mxu0 %v4019
        %4309 = vmatpush1.bf16.msra.mxu0 %v4018
        %4310 = vmatprep.subr.bf16.mxu0 %v4025
        %4311 = vmatpush1.bf16.msra.mxu0 %v4024
        %4312 = vmatprep.subr.bf16.mxu0 %v4031
        %4313 = vmatpush1.bf16.msra.mxu0 %v4030
        %4314 = vmatprep.subr.bf16.mxu0 %v4037
        %4315 = vmatpush1.bf16.msra.mxu0 %v4036
        %4316 = vmatprep.subr.bf16.mxu0 %v4043
        %4317 = vmatpush1.bf16.msra.mxu0 %v4042
        %4318 = vmatprep.subr.bf16.mxu0 %v4049
        %4319 = vmatpush1.bf16.msra.mxu0 %v4048
        %4320 = vmatprep.mubr.bf16.mxu0 %v3433
        %4321 = vmatmul.mubr.bf16.gmra.mrb[0].mxu0 %v3430
        %v4322 = vpop.f32.mrb[0].mxu0
        %v4323 = vadd.f32 0.0, %v4322
        %v4324 = vpop.f32.mrb[0].mxu0
        %v4325 = vadd.f32 0.0, %v4324
        %v4326 = vpop.f32.mrb[0].mxu0
        %v4327 = vadd.f32 0.0, %v4326
        %v4328 = vpop.f32.mrb[0].mxu0
        %v4329 = vadd.f32 0.0, %v4328
        %4330 = vmatprep.mubr.bf16.mxu0 %v3443
        %4331 = vmatmul.mubr.bf16.gmra.mrb[0].mxu0 %v3441
        %v4332 = vpop.f32.mrb[0].mxu0
        %v4333 = vadd.f32 0.0, %v4332
        %v4334 = vpop.f32.mrb[0].mxu0
        %v4335 = vadd.f32 0.0, %v4334
        %v4336 = vpop.f32.mrb[0].mxu0
        %v4337 = vadd.f32 0.0, %v4336
        %v4338 = vpop.f32.mrb[0].mxu0
        %v4339 = vadd.f32 0.0, %v4338
        %4340 = vmatprep.mubr.bf16.mxu0 %v3451
        %4341 = vmatmul.mubr.bf16.gmra.mrb[0].mxu0 %v3449
        %v4342 = vpop.f32.mrb[0].mxu0
        %v4343 = vadd.f32 0.0, %v4342
        %v4344 = vpop.f32.mrb[0].mxu0
        %v4345 = vadd.f32 0.0, %v4344
        %v4346 = vpop.f32.mrb[0].mxu0
        %v4347 = vadd.f32 0.0, %v4346
        %v4348 = vpop.f32.mrb[0].mxu0
        %v4349 = vadd.f32 0.0, %v4348
        %4350 = vmatprep.mubr.bf16.mxu0 %v3459
        %4351 = vmatmul.mubr.bf16.gmra.mrb[0].mxu0 %v3457
        %v4352 = vpop.f32.mrb[0].mxu0
        %v4353 = vadd.f32 0.0, %v4352
        %v4354 = vpop.f32.mrb[0].mxu0
        %v4355 = vadd.f32 0.0, %v4354
        %v4356 = vpop.f32.mrb[0].mxu0
        %v4357 = vadd.f32 0.0, %v4356
        %v4358 = vpop.f32.mrb[0].mxu0
        %v4359 = vadd.f32 0.0, %v4358
        %4360 = vmatprep.mubr.bf16.mxu0 %v3467
        %4361 = vmatmul.mubr.bf16.gmra.mrb[0].mxu0 %v3465
        %v4362 = vpop.f32.mrb[0].mxu0
        %v4363 = vadd.f32 0.0, %v4362
        %v4364 = vpop.f32.mrb[0].mxu0
        %v4365 = vadd.f32 0.0, %v4364
        %v4366 = vpop.f32.mrb[0].mxu0
        %v4367 = vadd.f32 0.0, %v4366
        %v4368 = vpop.f32.mrb[0].mxu0
        %v4369 = vadd.f32 0.0, %v4368
        %4370 = vmatprep.mubr.bf16.mxu0 %v3466
        %4371 = vmatmul.mubr.bf16.gmra.mrb[0].mxu0 %v3464
        %v4372 = vpop.f32.mrb[0].mxu0
        %v4373 = vpop.f32.mrb[0].mxu0
        %v4374 = vpop.f32.mrb[0].mxu0
        %v4375 = vpop.f32.mrb[0].mxu0
        %4376 = vdwg.mxu0
        %4377 = vmatprep.subr.bf16.mxu0 %v4055
        %4378 = vmatpush1.bf16.msra.mxu0 %v4054
        %4379 = vmatprep.subr.bf16.mxu0 %v4061
        %4380 = vmatpush1.bf16.msra.mxu0 %v4060
        %4381 = vmatprep.subr.bf16.mxu0 %v4067
        %4382 = vmatpush1.bf16.msra.mxu0 %v4066
        %4383 = vmatprep.subr.bf16.mxu0 %v4073
        %4384 = vmatpush1.bf16.msra.mxu0 %v4072
        %4385 = vmatprep.subr.bf16.mxu0 %v4079
        %4386 = vmatpush1.bf16.msra.mxu0 %v4078
        %4387 = vmatprep.subr.bf16.mxu0 %v4085
        %4388 = vmatpush1.bf16.msra.mxu0 %v4084
        %4389 = vmatprep.subr.bf16.mxu0 %v4091
        %4390 = vmatpush1.bf16.msra.mxu0 %v4090
        %4391 = vmatprep.subr.bf16.mxu0 %v4097
        %4392 = vmatpush1.bf16.msra.mxu0 %v4096
        %4393 = vmatprep.subr.bf16.mxu0 %v4103
        %4394 = vmatpush1.bf16.msra.mxu0 %v4102
        %4395 = vmatprep.subr.bf16.mxu0 %v4109
        %4396 = vmatpush1.bf16.msra.mxu0 %v4108
        %4397 = vmatprep.subr.bf16.mxu0 0
        %4398 = vmatpush1.bf16.msra.mxu0 0
        %4399 = vmatprep.subr.bf16.mxu0 0
        %4400 = vmatpush1.bf16.msra.mxu0 0
        %4401 = vmatprep.subr.bf16.mxu0 0
        %4402 = vmatpush1.bf16.msra.mxu0 0
        %4403 = vmatprep.subr.bf16.mxu0 0
        %4404 = vmatpush1.bf16.msra.mxu0 0
        %4405 = vmatprep.subr.bf16.mxu0 0
        %4406 = vmatpush1.bf16.msra.mxu0 0
        %4407 = vmatprep.subr.bf16.mxu0 0
        %4408 = vmatpush1.bf16.msra.mxu0 0
        %4409 = vmatprep.mubr.bf16.mxu0 %v4271
        %4410 = vmatmul.mubr.bf16.gmra.mrb[0].mxu0 %v3436
        %v4411 = vpop.f32.mrb[0].mxu0
        %v4412 = vadd.f32 %v4323, %v4411
        %v4413 = vpop.f32.mrb[0].mxu0
        %v4414 = vadd.f32 %v4325, %v4413
        %v4415 = vpop.f32.mrb[0].mxu0
        %v4416 = vadd.f32 %v4327, %v4415
        %v4417 = vpop.f32.mrb[0].mxu0
        %v4418 = vadd.f32 %v4329, %v4417
        %4419 = vmatprep.mubr.bf16.mxu0 %v4274
        %4420 = vmatmul.mubr.bf16.gmra.mrb[0].mxu0 %v3445
        %v4421 = vpop.f32.mrb[0].mxu0
        %v4422 = vadd.f32 %v4333, %v4421
        %v4423 = vpop.f32.mrb[0].mxu0
        %v4424 = vadd.f32 %v4335, %v4423
        %v4425 = vpop.f32.mrb[0].mxu0
        %v4426 = vadd.f32 %v4337, %v4425
        %v4427 = vpop.f32.mrb[0].mxu0
        %v4428 = vadd.f32 %v4339, %v4427
        %4429 = vmatprep.mubr.bf16.mxu0 %v4277
        %4430 = vmatmul.mubr.bf16.gmra.mrb[0].mxu0 %v3453
        %v4431 = vpop.f32.mrb[0].mxu0
        %v4432 = vadd.f32 %v4343, %v4431
        %v4433 = vpop.f32.mrb[0].mxu0
        %v4434 = vadd.f32 %v4345, %v4433
        %v4435 = vpop.f32.mrb[0].mxu0
        %v4436 = vadd.f32 %v4347, %v4435
        %v4437 = vpop.f32.mrb[0].mxu0
        %v4438 = vadd.f32 %v4349, %v4437
        %4439 = vmatprep.mubr.bf16.mxu0 %v4280
        %4440 = vmatmul.mubr.bf16.gmra.mrb[0].mxu0 %v3461
        %v4441 = vpop.f32.mrb[0].mxu0
        %v4442 = vadd.f32 %v4353, %v4441
        %v4443 = vpop.f32.mrb[0].mxu0
        %v4444 = vadd.f32 %v4355, %v4443
        %v4445 = vpop.f32.mrb[0].mxu0
        %v4446 = vadd.f32 %v4357, %v4445
        %v4447 = vpop.f32.mrb[0].mxu0
        %v4448 = vadd.f32 %v4359, %v4447
        %4449 = vmatprep.mubr.bf16.mxu0 %v4283
        %4450 = vmatmul.mubr.bf16.gmra.mrb[0].mxu0 %v3469
        %v4451 = vpop.f32.mrb[0].mxu0
        %v4452 = vadd.f32 %v4363, %v4451
        %v4453 = vpop.f32.mrb[0].mxu0
        %v4454 = vadd.f32 %v4365, %v4453
        %v4455 = vpop.f32.mrb[0].mxu0
        %v4456 = vadd.f32 %v4367, %v4455
        %v4457 = vpop.f32.mrb[0].mxu0
        %v4458 = vadd.f32 %v4369, %v4457
        %4459 = vmatprep.mubr.bf16.mxu0 %v4286
        %4460 = vmatmul.mubr.bf16.gmra.mrb[0].mxu0 %v3468
        %v4461 = vpop.f32.mrb[0].mxu0
        %v4462 = vpop.f32.mrb[0].mxu0
        %v4463 = vpop.f32.mrb[0].mxu0
        %v4464 = vpop.f32.mrb[0].mxu0
        %4465 = vdwg.mxu0
        %4466 = vmatprep.subr.bf16.mxu0 %v3961
        %4467 = vmatpush1.bf16.msra.mxu0 %v3960
        %4468 = vmatprep.subr.bf16.mxu0 %v3967
        %4469 = vmatpush1.bf16.msra.mxu0 %v3966
        %4470 = vmatprep.subr.bf16.mxu0 %v3973
        %4471 = vmatpush1.bf16.msra.mxu0 %v3972
        %4472 = vmatprep.subr.bf16.mxu0 %v3979
        %4473 = vmatpush1.bf16.msra.mxu0 %v3978
        %4474 = vmatprep.subr.bf16.mxu0 %v3985
        %4475 = vmatpush1.bf16.msra.mxu0 %v3984
        %4476 = vmatprep.subr.bf16.mxu0 %v3991
        %4477 = vmatpush1.bf16.msra.mxu0 %v3990
        %4478 = vmatprep.subr.bf16.mxu0 %v3997
        %4479 = vmatpush1.bf16.msra.mxu0 %v3996
        %4480 = vmatprep.subr.bf16.mxu0 %v4003
        %4481 = vmatpush1.bf16.msra.mxu0 %v4002
        %4482 = vmatprep.subr.bf16.mxu0 %v4009
        %4483 = vmatpush1.bf16.msra.mxu0 %v4008
        %4484 = vmatprep.subr.bf16.mxu0 %v4015
        %4485 = vmatpush1.bf16.msra.mxu0 %v4014
        %4486 = vmatprep.subr.bf16.mxu0 %v4021
        %4487 = vmatpush1.bf16.msra.mxu0 %v4020
        %4488 = vmatprep.subr.bf16.mxu0 %v4027
        %4489 = vmatpush1.bf16.msra.mxu0 %v4026
        %4490 = vmatprep.subr.bf16.mxu0 %v4033
        %4491 = vmatpush1.bf16.msra.mxu0 %v4032
        %4492 = vmatprep.subr.bf16.mxu0 %v4039
        %4493 = vmatpush1.bf16.msra.mxu0 %v4038
        %4494 = vmatprep.subr.bf16.mxu0 %v4045
        %4495 = vmatpush1.bf16.msra.mxu0 %v4044
        %4496 = vmatprep.subr.bf16.mxu0 %v4051
        %4497 = vmatpush1.bf16.msra.mxu0 %v4050
        %4498 = vmatprep.mubr.bf16.mxu0 %v3433
        %4499 = vmatmul.mubr.bf16.gmra.mrb[0].mxu0 %v3430
        %v4500 = vpop.f32.mrb[0].mxu0
        %v4501 = vadd.f32 0.0, %v4500
        %v4502 = vpop.f32.mrb[0].mxu0
        %v4503 = vadd.f32 0.0, %v4502
        %v4504 = vpop.f32.mrb[0].mxu0
        %v4505 = vadd.f32 0.0, %v4504
        %v4506 = vpop.f32.mrb[0].mxu0
        %v4507 = vadd.f32 0.0, %v4506
        %4508 = vmatprep.mubr.bf16.mxu0 %v3443
        %4509 = vmatmul.mubr.bf16.gmra.mrb[0].mxu0 %v3441
        %v4510 = vpop.f32.mrb[0].mxu0
        %v4511 = vadd.f32 0.0, %v4510
        %v4512 = vpop.f32.mrb[0].mxu0
        %v4513 = vadd.f32 0.0, %v4512
        %v4514 = vpop.f32.mrb[0].mxu0
        %v4515 = vadd.f32 0.0, %v4514
        %v4516 = vpop.f32.mrb[0].mxu0
        %v4517 = vadd.f32 0.0, %v4516
        %4518 = vmatprep.mubr.bf16.mxu0 %v3451
        %4519 = vmatmul.mubr.bf16.gmra.mrb[0].mxu0 %v3449
        %v4520 = vpop.f32.mrb[0].mxu0
        %v4521 = vadd.f32 0.0, %v4520
        %v4522 = vpop.f32.mrb[0].mxu0
        %v4523 = vadd.f32 0.0, %v4522
        %v4524 = vpop.f32.mrb[0].mxu0
        %v4525 = vadd.f32 0.0, %v4524
        %v4526 = vpop.f32.mrb[0].mxu0
        %v4527 = vadd.f32 0.0, %v4526
        %4528 = vmatprep.mubr.bf16.mxu0 %v3459
        %4529 = vmatmul.mubr.bf16.gmra.mrb[0].mxu0 %v3457
        %v4530 = vpop.f32.mrb[0].mxu0
        %v4531 = vadd.f32 0.0, %v4530
        %v4532 = vpop.f32.mrb[0].mxu0
        %v4533 = vadd.f32 0.0, %v4532
        %v4534 = vpop.f32.mrb[0].mxu0
        %v4535 = vadd.f32 0.0, %v4534
        %v4536 = vpop.f32.mrb[0].mxu0
        %v4537 = vadd.f32 0.0, %v4536
        %4538 = vmatprep.mubr.bf16.mxu0 %v3467
        %4539 = vmatmul.mubr.bf16.gmra.mrb[0].mxu0 %v3465
        %v4540 = vpop.f32.mrb[0].mxu0
        %v4541 = vadd.f32 0.0, %v4540
        %v4542 = vpop.f32.mrb[0].mxu0
        %v4543 = vadd.f32 0.0, %v4542
        %v4544 = vpop.f32.mrb[0].mxu0
        %v4545 = vadd.f32 0.0, %v4544
        %v4546 = vpop.f32.mrb[0].mxu0
        %v4547 = vadd.f32 0.0, %v4546
        %4548 = vmatprep.mubr.bf16.mxu0 %v3466
        %4549 = vmatmul.mubr.bf16.gmra.mrb[0].mxu0 %v3464
        %v4550 = vpop.f32.mrb[0].mxu0
        %v4551 = vpop.f32.mrb[0].mxu0
        %v4552 = vpop.f32.mrb[0].mxu0
        %v4553 = vpop.f32.mrb[0].mxu0
        %4554 = vdwg.mxu0
        %4555 = vmatprep.subr.bf16.mxu0 %v4057
        %4556 = vmatpush1.bf16.msra.mxu0 %v4056
        %4557 = vmatprep.subr.bf16.mxu0 %v4063
        %4558 = vmatpush1.bf16.msra.mxu0 %v4062
        %4559 = vmatprep.subr.bf16.mxu0 %v4069
        %4560 = vmatpush1.bf16.msra.mxu0 %v4068
        %4561 = vmatprep.subr.bf16.mxu0 %v4075
        %4562 = vmatpush1.bf16.msra.mxu0 %v4074
        %4563 = vmatprep.subr.bf16.mxu0 %v4081
        %4564 = vmatpush1.bf16.msra.mxu0 %v4080
        %4565 = vmatprep.subr.bf16.mxu0 %v4087
        %4566 = vmatpush1.bf16.msra.mxu0 %v4086
        %4567 = vmatprep.subr.bf16.mxu0 %v4093
        %4568 = vmatpush1.bf16.msra.mxu0 %v4092
        %4569 = vmatprep.subr.bf16.mxu0 %v4099
        %4570 = vmatpush1.bf16.msra.mxu0 %v4098
        %4571 = vmatprep.subr.bf16.mxu0 %v4105
        %4572 = vmatpush1.bf16.msra.mxu0 %v4104
        %4573 = vmatprep.subr.bf16.mxu0 %v4111
        %4574 = vmatpush1.bf16.msra.mxu0 %v4110
        %4575 = vmatprep.subr.bf16.mxu0 0
        %4576 = vmatpush1.bf16.msra.mxu0 0
        %4577 = vmatprep.subr.bf16.mxu0 0
        %4578 = vmatpush1.bf16.msra.mxu0 0
        %4579 = vmatprep.subr.bf16.mxu0 0
        %4580 = vmatpush1.bf16.msra.mxu0 0
        %4581 = vmatprep.subr.bf16.mxu0 0
        %4582 = vmatpush1.bf16.msra.mxu0 0
        %4583 = vmatprep.subr.bf16.mxu0 0
        %4584 = vmatpush1.bf16.msra.mxu0 0
        %4585 = vmatprep.subr.bf16.mxu0 0
        %4586 = vmatpush1.bf16.msra.mxu0 0
        %4587 = vmatprep.mubr.bf16.mxu0 %v4271
        %4588 = vmatmul.mubr.bf16.gmra.mrb[0].mxu0 %v3436
        %v4589 = vpop.f32.mrb[0].mxu0
        %v4590 = vadd.f32 %v4501, %v4589
        %v4591 = vpop.f32.mrb[0].mxu0
        %v4592 = vadd.f32 %v4503, %v4591
        %v4593 = vpop.f32.mrb[0].mxu0
        %v4594 = vadd.f32 %v4505, %v4593
        %v4595 = vpop.f32.mrb[0].mxu0
        %v4596 = vadd.f32 %v4507, %v4595
        %4597 = vmatprep.mubr.bf16.mxu0 %v4274
        %4598 = vmatmul.mubr.bf16.gmra.mrb[0].mxu0 %v3445
        %v4599 = vpop.f32.mrb[0].mxu0
        %v4600 = vadd.f32 %v4511, %v4599
        %v4601 = vpop.f32.mrb[0].mxu0
        %v4602 = vadd.f32 %v4513, %v4601
        %v4603 = vpop.f32.mrb[0].mxu0
        %v4604 = vadd.f32 %v4515, %v4603
        %v4605 = vpop.f32.mrb[0].mxu0
        %v4606 = vadd.f32 %v4517, %v4605
        %4607 = vmatprep.mubr.bf16.mxu0 %v4277
        %4608 = vmatmul.mubr.bf16.gmra.mrb[0].mxu0 %v3453
        %v4609 = vpop.f32.mrb[0].mxu0
        %v4610 = vadd.f32 %v4521, %v4609
        %v4611 = vpop.f32.mrb[0].mxu0
        %v4612 = vadd.f32 %v4523, %v4611
        %v4613 = vpop.f32.mrb[0].mxu0
        %v4614 = vadd.f32 %v4525, %v4613
        %v4615 = vpop.f32.mrb[0].mxu0
        %v4616 = vadd.f32 %v4527, %v4615
        %4617 = vmatprep.mubr.bf16.mxu0 %v4280
        %4618 = vmatmul.mubr.bf16.gmra.mrb[0].mxu0 %v3461
        %v4619 = vpop.f32.mrb[0].mxu0
        %v4620 = vadd.f32 %v4531, %v4619
        %v4621 = vpop.f32.mrb[0].mxu0
        %v4622 = vadd.f32 %v4533, %v4621
        %v4623 = vpop.f32.mrb[0].mxu0
        %v4624 = vadd.f32 %v4535, %v4623
        %v4625 = vpop.f32.mrb[0].mxu0
        %v4626 = vadd.f32 %v4537, %v4625
        %4627 = vmatprep.mubr.bf16.mxu0 %v4283
        %4628 = vmatmul.mubr.bf16.gmra.mrb[0].mxu0 %v3469
        %v4629 = vpop.f32.mrb[0].mxu0
        %v4630 = vadd.f32 %v4541, %v4629
        %v4631 = vpop.f32.mrb[0].mxu0
        %v4632 = vadd.f32 %v4543, %v4631
        %v4633 = vpop.f32.mrb[0].mxu0
        %v4634 = vadd.f32 %v4545, %v4633
        %v4635 = vpop.f32.mrb[0].mxu0
        %v4636 = vadd.f32 %v4547, %v4635
        %4637 = vmatprep.mubr.bf16.mxu0 %v4286
        %4638 = vmatmul.mubr.bf16.gmra.mrb[0].mxu0 %v3468
        %v4639 = vpop.f32.mrb[0].mxu0
        %v4640 = vpop.f32.mrb[0].mxu0
        %v4641 = vpop.f32.mrb[0].mxu0
        %v4642 = vpop.f32.mrb[0].mxu0
        %4643 = vdwg.mxu0
        %4644 = vmatprep.subr.bf16.mxu0 %v3963
        %4645 = vmatpush1.bf16.msra.mxu0 %v3962
        %4646 = vmatprep.subr.bf16.mxu0 %v3969
        %4647 = vmatpush1.bf16.msra.mxu0 %v3968
        %4648 = vmatprep.subr.bf16.mxu0 %v3975
        %4649 = vmatpush1.bf16.msra.mxu0 %v3974
        %4650 = vmatprep.subr.bf16.mxu0 %v3981
        %4651 = vmatpush1.bf16.msra.mxu0 %v3980
        %4652 = vmatprep.subr.bf16.mxu0 %v3987
        %4653 = vmatpush1.bf16.msra.mxu0 %v3986
        %4654 = vmatprep.subr.bf16.mxu0 %v3993
        %4655 = vmatpush1.bf16.msra.mxu0 %v3992
        %4656 = vmatprep.subr.bf16.mxu0 %v3999
        %4657 = vmatpush1.bf16.msra.mxu0 %v3998
        %4658 = vmatprep.subr.bf16.mxu0 %v4005
        %4659 = vmatpush1.bf16.msra.mxu0 %v4004
        %4660 = vmatprep.subr.bf16.mxu0 %v4011
        %4661 = vmatpush1.bf16.msra.mxu0 %v4010
        %4662 = vmatprep.subr.bf16.mxu0 %v4017
        %4663 = vmatpush1.bf16.msra.mxu0 %v4016
        %4664 = vmatprep.subr.bf16.mxu0 %v4023
        %4665 = vmatpush1.bf16.msra.mxu0 %v4022
        %4666 = vmatprep.subr.bf16.mxu0 %v4029
        %4667 = vmatpush1.bf16.msra.mxu0 %v4028
        %4668 = vmatprep.subr.bf16.mxu0 %v4035
        %4669 = vmatpush1.bf16.msra.mxu0 %v4034
        %4670 = vmatprep.subr.bf16.mxu0 %v4041
        %4671 = vmatpush1.bf16.msra.mxu0 %v4040
        %4672 = vmatprep.subr.bf16.mxu0 %v4047
        %4673 = vmatpush1.bf16.msra.mxu0 %v4046
        %4674 = vmatprep.subr.bf16.mxu0 %v4053
        %4675 = vmatpush1.bf16.msra.mxu0 %v4052
        %4676 = vmatprep.mubr.bf16.mxu0 %v3433
        %4677 = vmatmul.mubr.bf16.gmra.mrb[0].mxu0 %v3430
        %v4678 = vpop.f32.mrb[0].mxu0
        %v4679 = vadd.f32 0.0, %v4678
        %v4680 = vpop.f32.mrb[0].mxu0
        %v4681 = vpop.f32.mrb[0].mxu0
        %v4682 = vadd.f32 0.0, %v4681
        %v4683 = vpop.f32.mrb[0].mxu0
        %4684 = vmatprep.mubr.bf16.mxu0 %v3443
        %4685 = vmatmul.mubr.bf16.gmra.mrb[0].mxu0 %v3441
        %v4686 = vpop.f32.mrb[0].mxu0
        %v4687 = vadd.f32 0.0, %v4686
        %v4688 = vpop.f32.mrb[0].mxu0
        %v4689 = vpop.f32.mrb[0].mxu0
        %v4690 = vadd.f32 0.0, %v4689
        %v4691 = vpop.f32.mrb[0].mxu0
        %4692 = vmatprep.mubr.bf16.mxu0 %v3451
        %4693 = vmatmul.mubr.bf16.gmra.mrb[0].mxu0 %v3449
        %v4694 = vpop.f32.mrb[0].mxu0
        %v4695 = vadd.f32 0.0, %v4694
        %v4696 = vpop.f32.mrb[0].mxu0
        %v4697 = vpop.f32.mrb[0].mxu0
        %v4698 = vadd.f32 0.0, %v4697
        %v4699 = vpop.f32.mrb[0].mxu0
        %4700 = vmatprep.mubr.bf16.mxu0 %v3459
        %4701 = vmatmul.mubr.bf16.gmra.mrb[0].mxu0 %v3457
        %v4702 = vpop.f32.mrb[0].mxu0
        %v4703 = vadd.f32 0.0, %v4702
        %v4704 = vpop.f32.mrb[0].mxu0
        %v4705 = vpop.f32.mrb[0].mxu0
        %v4706 = vadd.f32 0.0, %v4705
        %v4707 = vpop.f32.mrb[0].mxu0
        %4708 = vmatprep.mubr.bf16.mxu0 %v3467
        %4709 = vmatmul.mubr.bf16.gmra.mrb[0].mxu0 %v3465
        %v4710 = vpop.f32.mrb[0].mxu0
        %v4711 = vadd.f32 0.0, %v4710
        %v4712 = vpop.f32.mrb[0].mxu0
        %v4713 = vpop.f32.mrb[0].mxu0
        %v4714 = vadd.f32 0.0, %v4713
        %v4715 = vpop.f32.mrb[0].mxu0
        %4716 = vmatprep.mubr.bf16.mxu0 %v3466
        %4717 = vmatmul.mubr.bf16.gmra.mrb[0].mxu0 %v3464
        %v4718 = vpop.f32.mrb[0].mxu0
        %v4719 = vpop.f32.mrb[0].mxu0
        %v4720 = vpop.f32.mrb[0].mxu0
        %v4721 = vpop.f32.mrb[0].mxu0
        %4722 = vdwg.mxu0
        %4723 = vmatprep.subr.bf16.mxu0 %v4059
        %4724 = vmatpush1.bf16.msra.mxu0 %v4058
        %4725 = vmatprep.subr.bf16.mxu0 %v4065
        %4726 = vmatpush1.bf16.msra.mxu0 %v4064
        %4727 = vmatprep.subr.bf16.mxu0 %v4071
        %4728 = vmatpush1.bf16.msra.mxu0 %v4070
        %4729 = vmatprep.subr.bf16.mxu0 %v4077
        %4730 = vmatpush1.bf16.msra.mxu0 %v4076
        %4731 = vmatprep.subr.bf16.mxu0 %v4083
        %4732 = vmatpush1.bf16.msra.mxu0 %v4082
        %4733 = vmatprep.subr.bf16.mxu0 %v4089
        %4734 = vmatpush1.bf16.msra.mxu0 %v4088
        %4735 = vmatprep.subr.bf16.mxu0 %v4095
        %4736 = vmatpush1.bf16.msra.mxu0 %v4094
        %4737 = vmatprep.subr.bf16.mxu0 %v4101
        %4738 = vmatpush1.bf16.msra.mxu0 %v4100
        %4739 = vmatprep.subr.bf16.mxu0 %v4107
        %4740 = vmatpush1.bf16.msra.mxu0 %v4106
        %4741 = vmatprep.subr.bf16.mxu0 %v4113
        %4742 = vmatpush1.bf16.msra.mxu0 %v4112
        %4743 = vmatprep.subr.bf16.mxu0 0
        %4744 = vmatpush1.bf16.msra.mxu0 0
        %4745 = vmatprep.subr.bf16.mxu0 0
        %4746 = vmatpush1.bf16.msra.mxu0 0
        %4747 = vmatprep.subr.bf16.mxu0 0
        %4748 = vmatpush1.bf16.msra.mxu0 0
        %4749 = vmatprep.subr.bf16.mxu0 0
        %4750 = vmatpush1.bf16.msra.mxu0 0
        %4751 = vmatprep.subr.bf16.mxu0 0
        %4752 = vmatpush1.bf16.msra.mxu0 0
        %4753 = vmatprep.subr.bf16.mxu0 0
        %4754 = vmatpush1.bf16.msra.mxu0 0
        %4755 = vmatprep.mubr.bf16.mxu0 %v4271
        %4756 = vmatmul.mubr.bf16.gmra.mrb[0].mxu0 %v3436
        %v4757 = vpop.f32.mrb[0].mxu0
        %v4758 = vadd.f32 %v4679, %v4757
        %v4759 = vpop.f32.mrb[0].mxu0
        %v4760 = vpop.f32.mrb[0].mxu0
        %v4761 = vadd.f32 %v4682, %v4760
        %v4762 = vpop.f32.mrb[0].mxu0
        %4763 = vmatprep.mubr.bf16.mxu0 %v4274
        %4764 = vmatmul.mubr.bf16.gmra.mrb[0].mxu0 %v3445
        %v4765 = vpop.f32.mrb[0].mxu0
        %v4766 = vadd.f32 %v4687, %v4765
        %v4767 = vpop.f32.mrb[0].mxu0
        %v4768 = vpop.f32.mrb[0].mxu0
        %v4769 = vadd.f32 %v4690, %v4768
        %v4770 = vpop.f32.mrb[0].mxu0
        %4771 = vmatprep.mubr.bf16.mxu0 %v4277
        %4772 = vmatmul.mubr.bf16.gmra.mrb[0].mxu0 %v3453
        %v4773 = vpop.f32.mrb[0].mxu0
        %v4774 = vadd.f32 %v4695, %v4773
        %v4775 = vpop.f32.mrb[0].mxu0
        %v4776 = vpop.f32.mrb[0].mxu0
        %v4777 = vadd.f32 %v4698, %v4776
        %v4778 = vpop.f32.mrb[0].mxu0
        %4779 = vmatprep.mubr.bf16.mxu0 %v4280
        %4780 = vmatmul.mubr.bf16.gmra.mrb[0].mxu0 %v3461
        %v4781 = vpop.f32.mrb[0].mxu0
        %v4782 = vadd.f32 %v4703, %v4781
        %v4783 = vpop.f32.mrb[0].mxu0
        %v4784 = vpop.f32.mrb[0].mxu0
        %v4785 = vadd.f32 %v4706, %v4784
        %v4786 = vpop.f32.mrb[0].mxu0
        %4787 = vmatprep.mubr.bf16.mxu0 %v4283
        %4788 = vmatmul.mubr.bf16.gmra.mrb[0].mxu0 %v3469
        %v4789 = vpop.f32.mrb[0].mxu0
        %v4790 = vadd.f32 %v4711, %v4789
        %v4791 = vpop.f32.mrb[0].mxu0
        %v4792 = vpop.f32.mrb[0].mxu0
        %v4793 = vadd.f32 %v4714, %v4792
        %v4794 = vpop.f32.mrb[0].mxu0
        %4795 = vmatprep.mubr.bf16.mxu0 %v4286
        %4796 = vmatmul.mubr.bf16.gmra.mrb[0].mxu0 %v3468
        %v4797 = vpop.f32.mrb[0].mxu0
        %v4798 = vpop.f32.mrb[0].mxu0
        %v4799 = vpop.f32.mrb[0].mxu0
        %v4800 = vpop.f32.mrb[0].mxu0
        %4801 = vdwg.mxu0
        %v4958 = vunpack.c.l.b16 %v3090
        %v4959 = vunpack.c.h.b16 %v3090
        %v4960 = vunpack.c.l.b16 %v3091
        %v4961 = vunpack.c.h.b16 %v3091
        %v4962 = vunpack.c.l.b16 %v3092
        %v4963 = vunpack.c.h.b16 %v3092
        %v4964 = vunpack.c.l.b16 %v3093
        %v4965 = vunpack.c.h.b16 %v3093
        %v4966 = vunpack.c.l.b16 %v3094
        %v4967 = vunpack.c.h.b16 %v3094
        %v4968 = vunpack.c.l.b16 %v3095
        %v4969 = vunpack.c.h.b16 %v3095
        %v4970 = vunpack.c.l.b16 %v3096
        %v4971 = vunpack.c.h.b16 %v3096
        %v4972 = vunpack.c.l.b16 %v3097
        %v4973 = vunpack.c.h.b16 %v3097
        %v4974 = vunpack.c.l.b16 %v3098
        %v4975 = vunpack.c.h.b16 %v3098
        %v4976 = vunpack.c.l.b16 %v3099
        %v4977 = vunpack.c.h.b16 %v3099
        %v4978 = vunpack.c.l.b16 %v3100
        %v4979 = vunpack.c.h.b16 %v3100
        %v4980 = vunpack.c.l.b16 %v3101
        %v4981 = vunpack.c.h.b16 %v3101
        %v4982 = vunpack.c.l.b16 %v3102
        %v4983 = vunpack.c.h.b16 %v3102
        %v4984 = vunpack.c.l.b16 %v3103
        %v4985 = vunpack.c.h.b16 %v3103
        %v4986 = vunpack.c.l.b16 %v3104
        %v4987 = vunpack.c.h.b16 %v3104
        %v4988 = vunpack.c.l.b16 %v3105
        %v4989 = vunpack.c.h.b16 %v3105
        %v4990 = vunpack.c.l.b16 %v3106
        %v4991 = vunpack.c.h.b16 %v3106
        %v4992 = vunpack.c.l.b16 %v3107
        %v4993 = vunpack.c.h.b16 %v3107
        %v4994 = vunpack.c.l.b16 %v3108
        %v4995 = vunpack.c.h.b16 %v3108
        %v4996 = vunpack.c.l.b16 %v3109
        %v4997 = vunpack.c.h.b16 %v3109
        %v4998 = vunpack.c.l.b16 %v3110
        %v4999 = vunpack.c.h.b16 %v3110
        %v5000 = vunpack.c.l.b16 %v3111
        %v5001 = vunpack.c.h.b16 %v3111
        %v5002 = vunpack.c.l.b16 %v3112
        %v5003 = vunpack.c.h.b16 %v3112
        %v5004 = vunpack.c.l.b16 %v3113
        %v5005 = vunpack.c.h.b16 %v3113
        %v5006 = vunpack.c.l.b16 %v3114
        %v5007 = vunpack.c.h.b16 %v3114
        %v5008 = vunpack.c.l.b16 %v3115
        %v5009 = vunpack.c.h.b16 %v3115
        %v5010 = vunpack.c.l.b16 %v3116
        %v5011 = vunpack.c.h.b16 %v3116
        %v5012 = vunpack.c.l.b16 %v3117
        %v5013 = vunpack.c.h.b16 %v3117
        %v5014 = vunpack.c.l.b16 %v3118
        %v5015 = vunpack.c.h.b16 %v3118
        %v5016 = vunpack.c.l.b16 %v3119
        %v5017 = vunpack.c.h.b16 %v3119
        %v5018 = vunpack.c.l.b16 %v3120
        %v5019 = vunpack.c.h.b16 %v3120
        %v5020 = vunpack.c.l.b16 %v3121
        %v5021 = vunpack.c.h.b16 %v3121
        %v5022 = vunpack.c.l.b16 %v3122
        %v5023 = vunpack.c.h.b16 %v3122
        %v5024 = vunpack.c.l.b16 %v3123
        %v5025 = vunpack.c.h.b16 %v3123
        %v5026 = vunpack.c.l.b16 %v3124
        %v5027 = vunpack.c.h.b16 %v3124
        %v5028 = vunpack.c.l.b16 %v3125
        %v5029 = vunpack.c.h.b16 %v3125
        %v5030 = vunpack.c.l.b16 %v3126
        %v5031 = vunpack.c.h.b16 %v3126
        %v5032 = vunpack.c.l.b16 %v3127
        %v5033 = vunpack.c.h.b16 %v3127
        %v5034 = vunpack.c.l.b16 %v3128
        %v5035 = vunpack.c.h.b16 %v3128
        %v5036 = vunpack.c.l.b16 %v3129
        %v5037 = vunpack.c.h.b16 %v3129
        %v5038 = vunpack.c.l.b16 %v3130
        %v5039 = vunpack.c.h.b16 %v3130
        %v5040 = vunpack.c.l.b16 %v3131
        %v5041 = vunpack.c.h.b16 %v3131
        %v5042 = vunpack.c.l.b16 %v3132
        %v5043 = vunpack.c.h.b16 %v3132
        %v5044 = vunpack.c.l.b16 %v3133
        %v5045 = vunpack.c.h.b16 %v3133
        %v5046 = vunpack.c.l.b16 %v3134
        %v5047 = vunpack.c.h.b16 %v3134
        %v5048 = vunpack.c.l.b16 %v3135
        %v5049 = vunpack.c.h.b16 %v3135
        %v5050 = vunpack.c.l.b16 %v3136
        %v5051 = vunpack.c.h.b16 %v3136
        %v5052 = vunpack.c.l.b16 %v3137
        %v5053 = vunpack.c.h.b16 %v3137
        %v5054 = vunpack.c.l.b16 %v3138
        %v5055 = vunpack.c.h.b16 %v3138
        %v5056 = vunpack.c.l.b16 %v3139
        %v5057 = vunpack.c.h.b16 %v3139
        %v5058 = vunpack.c.l.b16 %v3140
        %v5059 = vunpack.c.h.b16 %v3140
        %v5060 = vunpack.c.l.b16 %v3141
        %v5061 = vunpack.c.h.b16 %v3141
        %v5062 = vunpack.c.l.b16 %v3142
        %v5063 = vunpack.c.h.b16 %v3142
        %v5064 = vunpack.c.l.b16 %v3143
        %v5065 = vunpack.c.h.b16 %v3143
        %v5066 = vunpack.c.l.b16 %v3144
        %v5067 = vunpack.c.h.b16 %v3144
        %v5068 = vunpack.c.l.b16 %v3145
        %v5069 = vunpack.c.h.b16 %v3145
        %v5070 = vunpack.c.l.b16 %v3146
        %v5071 = vunpack.c.h.b16 %v3146
        %v5072 = vunpack.c.l.b16 %v3147
        %v5073 = vunpack.c.h.b16 %v3147
        %v5074 = vunpack.c.l.b16 %v3148
        %v5075 = vunpack.c.h.b16 %v3148
        %v5076 = vunpack.c.l.b16 %v3149
        %v5077 = vunpack.c.h.b16 %v3149
        %v5078 = vunpack.c.l.b16 %v3150
        %v5079 = vunpack.c.h.b16 %v3150
        %v5080 = vunpack.c.l.b16 %v3151
        %v5081 = vunpack.c.h.b16 %v3151
        %v5082 = vunpack.c.l.b16 %v3152
        %v5083 = vunpack.c.h.b16 %v3152
        %v5084 = vunpack.c.l.b16 %v3153
        %v5085 = vunpack.c.h.b16 %v3153
        %v5086 = vunpack.c.l.b16 %v3154
        %v5087 = vunpack.c.h.b16 %v3154
        %v5088 = vunpack.c.l.b16 %v3155
        %v5089 = vunpack.c.h.b16 %v3155
        %v5090 = vunpack.c.l.b16 %v3156
        %v5091 = vunpack.c.h.b16 %v3156
        %v5092 = vunpack.c.l.b16 %v3157
        %v5093 = vunpack.c.h.b16 %v3157
        %v5094 = vunpack.c.l.b16 %v3158
        %v5095 = vunpack.c.h.b16 %v3158
        %v5096 = vunpack.c.l.b16 %v3159
        %v5097 = vunpack.c.h.b16 %v3159
        %v5098 = vunpack.c.l.b16 %v3160
        %v5099 = vunpack.c.h.b16 %v3160
        %v5100 = vunpack.c.l.b16 %v3161
        %v5101 = vunpack.c.h.b16 %v3161
        %v5102 = vunpack.c.l.b16 %v3162
        %v5103 = vunpack.c.h.b16 %v3162
        %v5104 = vunpack.c.l.b16 %v3163
        %v5105 = vunpack.c.h.b16 %v3163
        %v5106 = vunpack.c.l.b16 %v3164
        %v5107 = vunpack.c.h.b16 %v3164
        %v5108 = vunpack.c.l.b16 %v3165
        %v5109 = vunpack.c.h.b16 %v3165
        %v5110 = vunpack.c.l.b16 %v3166
        %v5111 = vunpack.c.h.b16 %v3166
        %v5112 = vunpack.c.l.b16 %v3167
        %v5113 = vunpack.c.h.b16 %v3167
        %v5114 = vunpack.c.l.b16 %v3168
        %v5115 = vunpack.c.h.b16 %v3168
        %v5116 = vunpack.c.l.b16 %v3169
        %v5117 = vunpack.c.h.b16 %v3169
        %v5118 = vunpack.c.l.b16 %v3170
        %v5119 = vunpack.c.h.b16 %v3170
        %v5120 = vunpack.c.l.b16 %v3171
        %v5121 = vunpack.c.h.b16 %v3171
        %v5122 = vunpack.c.l.b16 %v3172
        %v5123 = vunpack.c.h.b16 %v3172
        %v5124 = vunpack.c.l.b16 %v3173
        %v5125 = vunpack.c.h.b16 %v3173
        %v5126 = vunpack.c.l.b16 %v3174
        %v5127 = vunpack.c.h.b16 %v3174
        %v5128 = vunpack.c.l.b16 %v3175
        %v5129 = vunpack.c.h.b16 %v3175
        %v5130 = vunpack.c.l.b16 %v3176
        %v5131 = vunpack.c.h.b16 %v3176
        %v5132 = vunpack.c.l.b16 %v3177
        %v5133 = vunpack.c.h.b16 %v3177
        %v5134 = vunpack.c.l.b16 %v3178
        %v5135 = vunpack.c.h.b16 %v3178
        %v5136 = vunpack.c.l.b16 %v3179
        %v5137 = vunpack.c.h.b16 %v3179
        %v5138 = vunpack.c.l.b16 %v3180
        %v5139 = vunpack.c.h.b16 %v3180
        %v5140 = vunpack.c.l.b16 %v3181
        %v5141 = vunpack.c.h.b16 %v3181
        %v5142 = vunpack.c.l.b16 %v3182
        %v5143 = vunpack.c.h.b16 %v3182
        %v5144 = vunpack.c.l.b16 %v3183
        %v5145 = vunpack.c.h.b16 %v3183
        %v5146 = vunpack.c.l.b16 %v3184
        %v5147 = vunpack.c.h.b16 %v3184
        %v5148 = vunpack.c.l.b16 %v3185
        %v5149 = vunpack.c.h.b16 %v3185
        %v5150 = vunpack.c.l.b16 %v3186
        %v5151 = vunpack.c.h.b16 %v3186
        %v5152 = vunpack.c.l.b16 %v3187
        %v5153 = vunpack.c.h.b16 %v3187
        %v5154 = vunpack.c.l.b16 %v3188
        %v5155 = vunpack.c.h.b16 %v3188
        %v5156 = vunpack.c.l.b16 %v3189
        %v5157 = vunpack.c.h.b16 %v3189
        %v5158 = vunpack.c.l.b16 %v3190
        %v5159 = vunpack.c.h.b16 %v3190
        %v5160 = vunpack.c.l.b16 %v3191
        %v5161 = vunpack.c.h.b16 %v3191
        %v5162 = vunpack.c.l.b16 %v3192
        %v5163 = vunpack.c.h.b16 %v3192
        %v5164 = vunpack.c.l.b16 %v3193
        %v5165 = vunpack.c.h.b16 %v3193
        %v5166 = vunpack.c.l.b16 %v3194
        %v5167 = vunpack.c.h.b16 %v3194
        %v5168 = vunpack.c.l.b16 %v3195
        %v5169 = vunpack.c.h.b16 %v3195
        %v5170 = vunpack.c.l.b16 %v3196
        %v5171 = vunpack.c.h.b16 %v3196
        %v5172 = vunpack.c.l.b16 %v3197
        %v5173 = vunpack.c.h.b16 %v3197
        %v5174 = vunpack.c.l.b16 %v3198
        %v5175 = vunpack.c.h.b16 %v3198
        %v5176 = vunpack.c.l.b16 %v3199
        %v5177 = vunpack.c.h.b16 %v3199
        %v5178 = vunpack.c.l.b16 %v3200
        %v5179 = vunpack.c.h.b16 %v3200
        %v5180 = vunpack.c.l.b16 %v3201
        %v5181 = vunpack.c.h.b16 %v3201
        %v5182 = vunpack.c.l.b16 %v3202
        %v5183 = vunpack.c.h.b16 %v3202
        %v5184 = vunpack.c.l.b16 %v3203
        %v5185 = vunpack.c.h.b16 %v3203
        %v5186 = vunpack.c.l.b16 %v3204
        %v5187 = vunpack.c.h.b16 %v3204
        %v5188 = vunpack.c.l.b16 %v3205
        %v5189 = vunpack.c.h.b16 %v3205
        %v5190 = vunpack.c.l.b16 %v3206
        %v5191 = vunpack.c.h.b16 %v3206
        %v5192 = vunpack.c.l.b16 %v3207
        %v5193 = vunpack.c.h.b16 %v3207
        %v5194 = vunpack.c.l.b16 %v3208
        %v5195 = vunpack.c.h.b16 %v3208
        %v5196 = vunpack.c.l.b16 %v3209
        %v5197 = vunpack.c.h.b16 %v3209
        %v5198 = vunpack.c.l.b16 %v3210
        %v5199 = vunpack.c.h.b16 %v3210
        %v5200 = vunpack.c.l.b16 %v3211
        %v5201 = vunpack.c.h.b16 %v3211
        %v5202 = vunpack.c.l.b16 %v3212
        %v5203 = vunpack.c.h.b16 %v3212
        %v5204 = vunpack.c.l.b16 %v3213
        %v5205 = vunpack.c.h.b16 %v3213
        %v5206 = vunpack.c.l.b16 %v3214
        %v5207 = vunpack.c.h.b16 %v3214
        %v5208 = vunpack.c.l.b16 %v3215
        %v5209 = vunpack.c.h.b16 %v3215
        %v5210 = vunpack.c.l.b16 %v3216
        %v5211 = vunpack.c.h.b16 %v3216
        %v5212 = vunpack.c.l.b16 %v3217
        %v5213 = vunpack.c.h.b16 %v3217
        %v5214 = vunpack.c.l.b16 %v3218
        %v5215 = vunpack.c.h.b16 %v3218
        %v5216 = vunpack.c.l.b16 %v3219
        %v5217 = vunpack.c.h.b16 %v3219
        %v5218 = vunpack.c.l.b16 %v3220
        %v5219 = vunpack.c.h.b16 %v3220
        %v5220 = vunpack.c.l.b16 %v3221
        %v5221 = vunpack.c.h.b16 %v3221
        %v5222 = vunpack.c.l.b16 %v3222
        %v5223 = vunpack.c.h.b16 %v3222
        %v5224 = vunpack.c.l.b16 %v3223
        %v5225 = vunpack.c.h.b16 %v3223
        %v5226 = vunpack.c.l.b16 %v3224
        %v5227 = vunpack.c.h.b16 %v3224
        %v5228 = vunpack.c.l.b16 %v3225
        %v5229 = vunpack.c.h.b16 %v3225
        %v5230 = vunpack.c.l.b16 %v3226
        %v5231 = vunpack.c.h.b16 %v3226
        %v5232 = vunpack.c.l.b16 %v3227
        %v5233 = vunpack.c.h.b16 %v3227
        %v5234 = vunpack.c.l.b16 %v3228
        %v5235 = vunpack.c.h.b16 %v3228
        %v5236 = vunpack.c.l.b16 %v3229
        %v5237 = vunpack.c.h.b16 %v3229
        %v5238 = vunpack.c.l.b16 %v3230
        %v5239 = vunpack.c.h.b16 %v3230
        %v5240 = vunpack.c.l.b16 %v3231
        %v5241 = vunpack.c.h.b16 %v3231
        %v5242 = vunpack.c.l.b16 %v3232
        %v5243 = vunpack.c.h.b16 %v3232
        %v5244 = vunpack.c.l.b16 %v3233
        %v5245 = vunpack.c.h.b16 %v3233
        %v5246 = vunpack.c.l.b16 %v3234
        %v5247 = vunpack.c.h.b16 %v3234
        %v5248 = vunpack.c.l.b16 %v3235
        %v5249 = vunpack.c.h.b16 %v3235
        %v5250 = vunpack.c.l.b16 %v3236
        %v5251 = vunpack.c.h.b16 %v3236
        %v5252 = vunpack.c.l.b16 %v3237
        %v5253 = vunpack.c.h.b16 %v3237
        %v5254 = vunpack.c.l.b16 %v3238
        %v5255 = vunpack.c.h.b16 %v3238
        %v5256 = vunpack.c.l.b16 %v3239
        %v5257 = vunpack.c.h.b16 %v3239
        %v5258 = vunpack.c.l.b16 %v3240
        %v5259 = vunpack.c.h.b16 %v3240
        %v5260 = vunpack.c.l.b16 %v3241
        %v5261 = vunpack.c.h.b16 %v3241
        %v5262 = vunpack.c.l.b16 %v3242
        %v5263 = vunpack.c.h.b16 %v3242
        %v5264 = vunpack.c.l.b16 %v3243
        %v5265 = vunpack.c.h.b16 %v3243
        %v5266 = vunpack.c.l.b16 %v3244
        %v5267 = vunpack.c.h.b16 %v3244
        %v5268 = vunpack.c.l.b16 %v3245
        %v5269 = vunpack.c.h.b16 %v3245
        %v5270 = vpack.c.b16 %v4964, %v4958
        %v5271 = vpack.c.b16 %v4965, %v4959
        %v5272 = vpack.c.b16 %v4966, %v4960
        %v5273 = vpack.c.b16 %v4967, %v4961
        %v5274 = vpack.c.b16 %v4968, %v4962
        %v5275 = vpack.c.b16 %v4969, %v4963
        %v5276 = vpack.c.b16 %v4976, %v4970
        %v5277 = vpack.c.b16 %v4977, %v4971
        %v5278 = vpack.c.b16 %v4978, %v4972
        %v5279 = vpack.c.b16 %v4979, %v4973
        %v5280 = vpack.c.b16 %v4980, %v4974
        %v5281 = vpack.c.b16 %v4981, %v4975
        %v5282 = vpack.c.b16 %v4988, %v4982
        %v5283 = vpack.c.b16 %v4989, %v4983
        %v5284 = vpack.c.b16 %v4990, %v4984
        %v5285 = vpack.c.b16 %v4991, %v4985
        %v5286 = vpack.c.b16 %v4992, %v4986
        %v5287 = vpack.c.b16 %v4993, %v4987
        %v5288 = vpack.c.b16 %v5000, %v4994
        %v5289 = vpack.c.b16 %v5001, %v4995
        %v5290 = vpack.c.b16 %v5002, %v4996
        %v5291 = vpack.c.b16 %v5003, %v4997
        %v5292 = vpack.c.b16 %v5004, %v4998
        %v5293 = vpack.c.b16 %v5005, %v4999
        %v5294 = vpack.c.b16 %v5012, %v5006
        %v5295 = vpack.c.b16 %v5013, %v5007
        %v5296 = vpack.c.b16 %v5014, %v5008
        %v5297 = vpack.c.b16 %v5015, %v5009
        %v5298 = vpack.c.b16 %v5016, %v5010
        %v5299 = vpack.c.b16 %v5017, %v5011
        %v5300 = vpack.c.b16 %v5024, %v5018
        %v5301 = vpack.c.b16 %v5025, %v5019
        %v5302 = vpack.c.b16 %v5026, %v5020
        %v5303 = vpack.c.b16 %v5027, %v5021
        %v5304 = vpack.c.b16 %v5028, %v5022
        %v5305 = vpack.c.b16 %v5029, %v5023
        %v5306 = vpack.c.b16 %v5036, %v5030
        %v5307 = vpack.c.b16 %v5037, %v5031
        %v5308 = vpack.c.b16 %v5038, %v5032
        %v5309 = vpack.c.b16 %v5039, %v5033
        %v5310 = vpack.c.b16 %v5040, %v5034
        %v5311 = vpack.c.b16 %v5041, %v5035
        %v5312 = vpack.c.b16 %v5048, %v5042
        %v5313 = vpack.c.b16 %v5049, %v5043
        %v5314 = vpack.c.b16 %v5050, %v5044
        %v5315 = vpack.c.b16 %v5051, %v5045
        %v5316 = vpack.c.b16 %v5052, %v5046
        %v5317 = vpack.c.b16 %v5053, %v5047
        %v5318 = vpack.c.b16 %v5060, %v5054
        %v5319 = vpack.c.b16 %v5061, %v5055
        %v5320 = vpack.c.b16 %v5062, %v5056
        %v5321 = vpack.c.b16 %v5063, %v5057
        %v5322 = vpack.c.b16 %v5064, %v5058
        %v5323 = vpack.c.b16 %v5065, %v5059
        %v5324 = vpack.c.b16 %v5072, %v5066
        %v5325 = vpack.c.b16 %v5073, %v5067
        %v5326 = vpack.c.b16 %v5074, %v5068
        %v5327 = vpack.c.b16 %v5075, %v5069
        %v5328 = vpack.c.b16 %v5076, %v5070
        %v5329 = vpack.c.b16 %v5077, %v5071
        %v5330 = vpack.c.b16 %v5084, %v5078
        %v5331 = vpack.c.b16 %v5085, %v5079
        %v5332 = vpack.c.b16 %v5086, %v5080
        %v5333 = vpack.c.b16 %v5087, %v5081
        %v5334 = vpack.c.b16 %v5088, %v5082
        %v5335 = vpack.c.b16 %v5089, %v5083
        %v5336 = vpack.c.b16 %v5096, %v5090
        %v5337 = vpack.c.b16 %v5097, %v5091
        %v5338 = vpack.c.b16 %v5098, %v5092
        %v5339 = vpack.c.b16 %v5099, %v5093
        %v5340 = vpack.c.b16 %v5100, %v5094
        %v5341 = vpack.c.b16 %v5101, %v5095
        %v5342 = vpack.c.b16 %v5108, %v5102
        %v5343 = vpack.c.b16 %v5109, %v5103
        %v5344 = vpack.c.b16 %v5110, %v5104
        %v5345 = vpack.c.b16 %v5111, %v5105
        %v5346 = vpack.c.b16 %v5112, %v5106
        %v5347 = vpack.c.b16 %v5113, %v5107
        %v5348 = vpack.c.b16 %v5120, %v5114
        %v5349 = vpack.c.b16 %v5121, %v5115
        %v5350 = vpack.c.b16 %v5122, %v5116
        %v5351 = vpack.c.b16 %v5123, %v5117
        %v5352 = vpack.c.b16 %v5124, %v5118
        %v5353 = vpack.c.b16 %v5125, %v5119
        %v5354 = vpack.c.b16 %v5132, %v5126
        %v5355 = vpack.c.b16 %v5133, %v5127
        %v5356 = vpack.c.b16 %v5134, %v5128
        %v5357 = vpack.c.b16 %v5135, %v5129
        %v5358 = vpack.c.b16 %v5136, %v5130
        %v5359 = vpack.c.b16 %v5137, %v5131
        %v5360 = vpack.c.b16 %v5144, %v5138
        %v5361 = vpack.c.b16 %v5145, %v5139
        %v5362 = vpack.c.b16 %v5146, %v5140
        %v5363 = vpack.c.b16 %v5147, %v5141
        %v5364 = vpack.c.b16 %v5148, %v5142
        %v5365 = vpack.c.b16 %v5149, %v5143
        %v5366 = vpack.c.b16 %v5156, %v5150
        %v5367 = vpack.c.b16 %v5157, %v5151
        %v5368 = vpack.c.b16 %v5158, %v5152
        %v5369 = vpack.c.b16 %v5159, %v5153
        %v5370 = vpack.c.b16 %v5160, %v5154
        %v5371 = vpack.c.b16 %v5161, %v5155
        %v5372 = vpack.c.b16 %v5168, %v5162
        %v5373 = vpack.c.b16 %v5169, %v5163
        %v5374 = vpack.c.b16 %v5170, %v5164
        %v5375 = vpack.c.b16 %v5171, %v5165
        %v5376 = vpack.c.b16 %v5172, %v5166
        %v5377 = vpack.c.b16 %v5173, %v5167
        %v5378 = vpack.c.b16 %v5180, %v5174
        %v5379 = vpack.c.b16 %v5181, %v5175
        %v5380 = vpack.c.b16 %v5182, %v5176
        %v5381 = vpack.c.b16 %v5183, %v5177
        %v5382 = vpack.c.b16 %v5184, %v5178
        %v5383 = vpack.c.b16 %v5185, %v5179
        %v5384 = vpack.c.b16 %v5192, %v5186
        %v5385 = vpack.c.b16 %v5193, %v5187
        %v5386 = vpack.c.b16 %v5194, %v5188
        %v5387 = vpack.c.b16 %v5195, %v5189
        %v5388 = vpack.c.b16 %v5196, %v5190
        %v5389 = vpack.c.b16 %v5197, %v5191
        %v5390 = vpack.c.b16 %v5204, %v5198
        %v5391 = vpack.c.b16 %v5205, %v5199
        %v5392 = vpack.c.b16 %v5206, %v5200
        %v5393 = vpack.c.b16 %v5207, %v5201
        %v5394 = vpack.c.b16 %v5208, %v5202
        %v5395 = vpack.c.b16 %v5209, %v5203
        %v5396 = vpack.c.b16 %v5216, %v5210
        %v5397 = vpack.c.b16 %v5217, %v5211
        %v5398 = vpack.c.b16 %v5218, %v5212
        %v5399 = vpack.c.b16 %v5219, %v5213
        %v5400 = vpack.c.b16 %v5220, %v5214
        %v5401 = vpack.c.b16 %v5221, %v5215
        %v5402 = vpack.c.b16 %v5228, %v5222
        %v5403 = vpack.c.b16 %v5229, %v5223
        %v5404 = vpack.c.b16 %v5230, %v5224
        %v5405 = vpack.c.b16 %v5231, %v5225
        %v5406 = vpack.c.b16 %v5232, %v5226
        %v5407 = vpack.c.b16 %v5233, %v5227
        %v5408 = vpack.c.b16 %v5240, %v5234
        %v5409 = vpack.c.b16 %v5241, %v5235
        %v5410 = vpack.c.b16 %v5242, %v5236
        %v5411 = vpack.c.b16 %v5243, %v5237
        %v5412 = vpack.c.b16 %v5244, %v5238
        %v5413 = vpack.c.b16 %v5245, %v5239
        %v5414 = vpack.c.b16 %v5252, %v5246
        %v5415 = vpack.c.b16 %v5253, %v5247
        %v5416 = vpack.c.b16 %v5254, %v5248
        %v5417 = vpack.c.b16 %v5255, %v5249
        %v5418 = vpack.c.b16 %v5256, %v5250
        %v5419 = vpack.c.b16 %v5257, %v5251
        %v5420 = vpack.c.b16 %v5264, %v5258
        %v5421 = vpack.c.b16 %v5265, %v5259
        %v5422 = vpack.c.b16 %v5266, %v5260
        %v5423 = vpack.c.b16 %v5267, %v5261
        %v5424 = vpack.c.b16 %v5268, %v5262
        %v5425 = vpack.c.b16 %v5269, %v5263
        %v5583 = vsel %vm2578, %v3065, 0
        %v5586 = vsel %vm2578, %v3069, 0
        %v5589 = vsel %vm2578, %v3073, 0
        %v5592 = vsel %vm2578, %v3077, 0
        %v5595 = vsel %vm2578, %v3081, 0
        %v5598 = vsel %vm2578, %v3085, 0
        %5600 = vmatprep.subr.bf16.mxu0 %v5271
        %5601 = vmatpush1.bf16.msra.mxu0 %v5270
        %5602 = vmatprep.subr.bf16.mxu0 %v5277
        %5603 = vmatpush1.bf16.msra.mxu0 %v5276
        %5604 = vmatprep.subr.bf16.mxu0 %v5283
        %5605 = vmatpush1.bf16.msra.mxu0 %v5282
        %5606 = vmatprep.subr.bf16.mxu0 %v5289
        %5607 = vmatpush1.bf16.msra.mxu0 %v5288
        %5608 = vmatprep.subr.bf16.mxu0 %v5295
        %5609 = vmatpush1.bf16.msra.mxu0 %v5294
        %5610 = vmatprep.subr.bf16.mxu0 %v5301
        %5611 = vmatpush1.bf16.msra.mxu0 %v5300
        %5612 = vmatprep.subr.bf16.mxu0 %v5307
        %5613 = vmatpush1.bf16.msra.mxu0 %v5306
        %5614 = vmatprep.subr.bf16.mxu0 %v5313
        %5615 = vmatpush1.bf16.msra.mxu0 %v5312
        %5616 = vmatprep.subr.bf16.mxu0 %v5319
        %5617 = vmatpush1.bf16.msra.mxu0 %v5318
        %5618 = vmatprep.subr.bf16.mxu0 %v5325
        %5619 = vmatpush1.bf16.msra.mxu0 %v5324
        %5620 = vmatprep.subr.bf16.mxu0 %v5331
        %5621 = vmatpush1.bf16.msra.mxu0 %v5330
        %5622 = vmatprep.subr.bf16.mxu0 %v5337
        %5623 = vmatpush1.bf16.msra.mxu0 %v5336
        %5624 = vmatprep.subr.bf16.mxu0 %v5343
        %5625 = vmatpush1.bf16.msra.mxu0 %v5342
        %5626 = vmatprep.subr.bf16.mxu0 %v5349
        %5627 = vmatpush1.bf16.msra.mxu0 %v5348
        %5628 = vmatprep.subr.bf16.mxu0 %v5355
        %5629 = vmatpush1.bf16.msra.mxu0 %v5354
        %5630 = vmatprep.subr.bf16.mxu0 %v5361
        %5631 = vmatpush1.bf16.msra.mxu0 %v5360
        %5632 = vmatprep.mubr.bf16.mxu0 %v3063
        %5633 = vmatmul.mubr.bf16.gmra.mrb[0].mxu0 %v3062
        %v5634 = vpop.f32.mrb[0].mxu0
        %v5635 = vadd.f32 %v4412, %v5634
        %v5636 = vpop.f32.mrb[0].mxu0
        %v5637 = vadd.f32 %v4414, %v5636
        %v5638 = vpop.f32.mrb[0].mxu0
        %v5639 = vadd.f32 %v4416, %v5638
        %v5640 = vpop.f32.mrb[0].mxu0
        %v5641 = vadd.f32 %v4418, %v5640
        %5642 = vmatprep.mubr.bf16.mxu0 %v3067
        %5643 = vmatmul.mubr.bf16.gmra.mrb[0].mxu0 %v3066
        %v5644 = vpop.f32.mrb[0].mxu0
        %v5645 = vadd.f32 %v4422, %v5644
        %v5646 = vpop.f32.mrb[0].mxu0
        %v5647 = vadd.f32 %v4424, %v5646
        %v5648 = vpop.f32.mrb[0].mxu0
        %v5649 = vadd.f32 %v4426, %v5648
        %v5650 = vpop.f32.mrb[0].mxu0
        %v5651 = vadd.f32 %v4428, %v5650
        %5652 = vmatprep.mubr.bf16.mxu0 %v3071
        %5653 = vmatmul.mubr.bf16.gmra.mrb[0].mxu0 %v3070
        %v5654 = vpop.f32.mrb[0].mxu0
        %v5655 = vadd.f32 %v4432, %v5654
        %v5656 = vpop.f32.mrb[0].mxu0
        %v5657 = vadd.f32 %v4434, %v5656
        %v5658 = vpop.f32.mrb[0].mxu0
        %v5659 = vadd.f32 %v4436, %v5658
        %v5660 = vpop.f32.mrb[0].mxu0
        %v5661 = vadd.f32 %v4438, %v5660
        %5662 = vmatprep.mubr.bf16.mxu0 %v3075
        %5663 = vmatmul.mubr.bf16.gmra.mrb[0].mxu0 %v3074
        %v5664 = vpop.f32.mrb[0].mxu0
        %v5665 = vadd.f32 %v4442, %v5664
        %v5666 = vpop.f32.mrb[0].mxu0
        %v5667 = vadd.f32 %v4444, %v5666
        %v5668 = vpop.f32.mrb[0].mxu0
        %v5669 = vadd.f32 %v4446, %v5668
        %v5670 = vpop.f32.mrb[0].mxu0
        %v5671 = vadd.f32 %v4448, %v5670
        %5672 = vmatprep.mubr.bf16.mxu0 %v3079
        %5673 = vmatmul.mubr.bf16.gmra.mrb[0].mxu0 %v3078
        %v5674 = vpop.f32.mrb[0].mxu0
        %v5675 = vadd.f32 %v4452, %v5674
        %v5676 = vpop.f32.mrb[0].mxu0
        %v5677 = vadd.f32 %v4454, %v5676
        %v5678 = vpop.f32.mrb[0].mxu0
        %v5679 = vadd.f32 %v4456, %v5678
        %v5680 = vpop.f32.mrb[0].mxu0
        %v5681 = vadd.f32 %v4458, %v5680
        %5682 = vmatprep.mubr.bf16.mxu0 %v3083
        %5683 = vmatmul.mubr.bf16.gmra.mrb[0].mxu0 %v3082
        %v5684 = vpop.f32.mrb[0].mxu0
        %v5685 = vpop.f32.mrb[0].mxu0
        %v5686 = vpop.f32.mrb[0].mxu0
        %v5687 = vpop.f32.mrb[0].mxu0
        %5688 = vdwg.mxu0
        %5689 = vmatprep.subr.bf16.mxu0 %v5367
        %5690 = vmatpush1.bf16.msra.mxu0 %v5366
        %5691 = vmatprep.subr.bf16.mxu0 %v5373
        %5692 = vmatpush1.bf16.msra.mxu0 %v5372
        %5693 = vmatprep.subr.bf16.mxu0 %v5379
        %5694 = vmatpush1.bf16.msra.mxu0 %v5378
        %5695 = vmatprep.subr.bf16.mxu0 %v5385
        %5696 = vmatpush1.bf16.msra.mxu0 %v5384
        %5697 = vmatprep.subr.bf16.mxu0 %v5391
        %5698 = vmatpush1.bf16.msra.mxu0 %v5390
        %5699 = vmatprep.subr.bf16.mxu0 %v5397
        %5700 = vmatpush1.bf16.msra.mxu0 %v5396
        %5701 = vmatprep.subr.bf16.mxu0 %v5403
        %5702 = vmatpush1.bf16.msra.mxu0 %v5402
        %5703 = vmatprep.subr.bf16.mxu0 %v5409
        %5704 = vmatpush1.bf16.msra.mxu0 %v5408
        %5705 = vmatprep.subr.bf16.mxu0 %v5415
        %5706 = vmatpush1.bf16.msra.mxu0 %v5414
        %5707 = vmatprep.subr.bf16.mxu0 %v5421
        %5708 = vmatpush1.bf16.msra.mxu0 %v5420
        %5709 = vmatprep.subr.bf16.mxu0 0
        %5710 = vmatpush1.bf16.msra.mxu0 0
        %5711 = vmatprep.subr.bf16.mxu0 0
        %5712 = vmatpush1.bf16.msra.mxu0 0
        %5713 = vmatprep.subr.bf16.mxu0 0
        %5714 = vmatpush1.bf16.msra.mxu0 0
        %5715 = vmatprep.subr.bf16.mxu0 0
        %5716 = vmatpush1.bf16.msra.mxu0 0
        %5717 = vmatprep.subr.bf16.mxu0 0
        %5718 = vmatpush1.bf16.msra.mxu0 0
        %5719 = vmatprep.subr.bf16.mxu0 0
        %5720 = vmatpush1.bf16.msra.mxu0 0
        %5721 = vmatprep.mubr.bf16.mxu0 %v5583
        %5722 = vmatmul.mubr.bf16.gmra.mrb[0].mxu0 %v3064
        %v5723 = vpop.f32.mrb[0].mxu0
        %v5724 = vadd.f32 %v5635, %v5723
        %v5725 = vpop.f32.mrb[0].mxu0
        %v5726 = vadd.f32 %v5637, %v5725
        %v5727 = vpop.f32.mrb[0].mxu0
        %v5728 = vadd.f32 %v5639, %v5727
        %v5729 = vpop.f32.mrb[0].mxu0
        %v5730 = vadd.f32 %v5641, %v5729
        %5731 = vmatprep.mubr.bf16.mxu0 %v5586
        %5732 = vmatmul.mubr.bf16.gmra.mrb[0].mxu0 %v3068
        %v5733 = vpop.f32.mrb[0].mxu0
        %v5734 = vadd.f32 %v5645, %v5733
        %v5735 = vpop.f32.mrb[0].mxu0
        %v5736 = vadd.f32 %v5647, %v5735
        %v5737 = vpop.f32.mrb[0].mxu0
        %v5738 = vadd.f32 %v5649, %v5737
        %v5739 = vpop.f32.mrb[0].mxu0
        %v5740 = vadd.f32 %v5651, %v5739
        %5741 = vmatprep.mubr.bf16.mxu0 %v5589
        %5742 = vmatmul.mubr.bf16.gmra.mrb[0].mxu0 %v3072
        %v5743 = vpop.f32.mrb[0].mxu0
        %v5744 = vadd.f32 %v5655, %v5743
        %v5745 = vpop.f32.mrb[0].mxu0
        %v5746 = vadd.f32 %v5657, %v5745
        %v5747 = vpop.f32.mrb[0].mxu0
        %v5748 = vadd.f32 %v5659, %v5747
        %v5749 = vpop.f32.mrb[0].mxu0
        %v5750 = vadd.f32 %v5661, %v5749
        %5751 = vmatprep.mubr.bf16.mxu0 %v5592
        %5752 = vmatmul.mubr.bf16.gmra.mrb[0].mxu0 %v3076
        %v5753 = vpop.f32.mrb[0].mxu0
        %v5754 = vadd.f32 %v5665, %v5753
        %v5755 = vpop.f32.mrb[0].mxu0
        %v5756 = vadd.f32 %v5667, %v5755
        %v5757 = vpop.f32.mrb[0].mxu0
        %v5758 = vadd.f32 %v5669, %v5757
        %v5759 = vpop.f32.mrb[0].mxu0
        %v5760 = vadd.f32 %v5671, %v5759
        %5761 = vmatprep.mubr.bf16.mxu0 %v5595
        %5762 = vmatmul.mubr.bf16.gmra.mrb[0].mxu0 %v3080
        %v5763 = vpop.f32.mrb[0].mxu0
        %v5764 = vadd.f32 %v5675, %v5763
        %v5765 = vpop.f32.mrb[0].mxu0
        %v5766 = vadd.f32 %v5677, %v5765
        %v5767 = vpop.f32.mrb[0].mxu0
        %v5768 = vadd.f32 %v5679, %v5767
        %v5769 = vpop.f32.mrb[0].mxu0
        %v5770 = vadd.f32 %v5681, %v5769
        %5771 = vmatprep.mubr.bf16.mxu0 %v5598
        %5772 = vmatmul.mubr.bf16.gmra.mrb[0].mxu0 %v3084
        %v5773 = vpop.f32.mrb[0].mxu0
        %v5774 = vpop.f32.mrb[0].mxu0
        %v5775 = vpop.f32.mrb[0].mxu0
        %v5776 = vpop.f32.mrb[0].mxu0
        %5777 = vdwg.mxu0
        %5778 = vmatprep.subr.bf16.mxu0 %v5273
        %5779 = vmatpush1.bf16.msra.mxu0 %v5272
        %5780 = vmatprep.subr.bf16.mxu0 %v5279
        %5781 = vmatpush1.bf16.msra.mxu0 %v5278
        %5782 = vmatprep.subr.bf16.mxu0 %v5285
        %5783 = vmatpush1.bf16.msra.mxu0 %v5284
        %5784 = vmatprep.subr.bf16.mxu0 %v5291
        %5785 = vmatpush1.bf16.msra.mxu0 %v5290
        %5786 = vmatprep.subr.bf16.mxu0 %v5297
        %5787 = vmatpush1.bf16.msra.mxu0 %v5296
        %5788 = vmatprep.subr.bf16.mxu0 %v5303
        %5789 = vmatpush1.bf16.msra.mxu0 %v5302
        %5790 = vmatprep.subr.bf16.mxu0 %v5309
        %5791 = vmatpush1.bf16.msra.mxu0 %v5308
        %5792 = vmatprep.subr.bf16.mxu0 %v5315
        %5793 = vmatpush1.bf16.msra.mxu0 %v5314
        %5794 = vmatprep.subr.bf16.mxu0 %v5321
        %5795 = vmatpush1.bf16.msra.mxu0 %v5320
        %5796 = vmatprep.subr.bf16.mxu0 %v5327
        %5797 = vmatpush1.bf16.msra.mxu0 %v5326
        %5798 = vmatprep.subr.bf16.mxu0 %v5333
        %5799 = vmatpush1.bf16.msra.mxu0 %v5332
        %5800 = vmatprep.subr.bf16.mxu0 %v5339
        %5801 = vmatpush1.bf16.msra.mxu0 %v5338
        %5802 = vmatprep.subr.bf16.mxu0 %v5345
        %5803 = vmatpush1.bf16.msra.mxu0 %v5344
        %5804 = vmatprep.subr.bf16.mxu0 %v5351
        %5805 = vmatpush1.bf16.msra.mxu0 %v5350
        %5806 = vmatprep.subr.bf16.mxu0 %v5357
        %5807 = vmatpush1.bf16.msra.mxu0 %v5356
        %5808 = vmatprep.subr.bf16.mxu0 %v5363
        %5809 = vmatpush1.bf16.msra.mxu0 %v5362
        %5810 = vmatprep.mubr.bf16.mxu0 %v3063
        %5811 = vmatmul.mubr.bf16.gmra.mrb[0].mxu0 %v3062
        %v5812 = vpop.f32.mrb[0].mxu0
        %v5813 = vadd.f32 %v4590, %v5812
        %v5814 = vpop.f32.mrb[0].mxu0
        %v5815 = vadd.f32 %v4592, %v5814
        %v5816 = vpop.f32.mrb[0].mxu0
        %v5817 = vadd.f32 %v4594, %v5816
        %v5818 = vpop.f32.mrb[0].mxu0
        %v5819 = vadd.f32 %v4596, %v5818
        %5820 = vmatprep.mubr.bf16.mxu0 %v3067
        %5821 = vmatmul.mubr.bf16.gmra.mrb[0].mxu0 %v3066
        %v5822 = vpop.f32.mrb[0].mxu0
        %v5823 = vadd.f32 %v4600, %v5822
        %v5824 = vpop.f32.mrb[0].mxu0
        %v5825 = vadd.f32 %v4602, %v5824
        %v5826 = vpop.f32.mrb[0].mxu0
        %v5827 = vadd.f32 %v4604, %v5826
        %v5828 = vpop.f32.mrb[0].mxu0
        %v5829 = vadd.f32 %v4606, %v5828
        %5830 = vmatprep.mubr.bf16.mxu0 %v3071
        %5831 = vmatmul.mubr.bf16.gmra.mrb[0].mxu0 %v3070
        %v5832 = vpop.f32.mrb[0].mxu0
        %v5833 = vadd.f32 %v4610, %v5832
        %v5834 = vpop.f32.mrb[0].mxu0
        %v5835 = vadd.f32 %v4612, %v5834
        %v5836 = vpop.f32.mrb[0].mxu0
        %v5837 = vadd.f32 %v4614, %v5836
        %v5838 = vpop.f32.mrb[0].mxu0
        %v5839 = vadd.f32 %v4616, %v5838
        %5840 = vmatprep.mubr.bf16.mxu0 %v3075
        %5841 = vmatmul.mubr.bf16.gmra.mrb[0].mxu0 %v3074
        %v5842 = vpop.f32.mrb[0].mxu0
        %v5843 = vadd.f32 %v4620, %v5842
        %v5844 = vpop.f32.mrb[0].mxu0
        %v5845 = vadd.f32 %v4622, %v5844
        %v5846 = vpop.f32.mrb[0].mxu0
        %v5847 = vadd.f32 %v4624, %v5846
        %v5848 = vpop.f32.mrb[0].mxu0
        %v5849 = vadd.f32 %v4626, %v5848
        %5850 = vmatprep.mubr.bf16.mxu0 %v3079
        %5851 = vmatmul.mubr.bf16.gmra.mrb[0].mxu0 %v3078
        %v5852 = vpop.f32.mrb[0].mxu0
        %v5853 = vadd.f32 %v4630, %v5852
        %v5854 = vpop.f32.mrb[0].mxu0
        %v5855 = vadd.f32 %v4632, %v5854
        %v5856 = vpop.f32.mrb[0].mxu0
        %v5857 = vadd.f32 %v4634, %v5856
        %v5858 = vpop.f32.mrb[0].mxu0
        %v5859 = vadd.f32 %v4636, %v5858
        %5860 = vmatprep.mubr.bf16.mxu0 %v3083
        %5861 = vmatmul.mubr.bf16.gmra.mrb[0].mxu0 %v3082
        %v5862 = vpop.f32.mrb[0].mxu0
        %v5863 = vpop.f32.mrb[0].mxu0
        %v5864 = vpop.f32.mrb[0].mxu0
        %v5865 = vpop.f32.mrb[0].mxu0
        %5866 = vdwg.mxu0
        %5867 = vmatprep.subr.bf16.mxu0 %v5369
        %5868 = vmatpush1.bf16.msra.mxu0 %v5368
        %5869 = vmatprep.subr.bf16.mxu0 %v5375
        %5870 = vmatpush1.bf16.msra.mxu0 %v5374
        %5871 = vmatprep.subr.bf16.mxu0 %v5381
        %5872 = vmatpush1.bf16.msra.mxu0 %v5380
        %5873 = vmatprep.subr.bf16.mxu0 %v5387
        %5874 = vmatpush1.bf16.msra.mxu0 %v5386
        %5875 = vmatprep.subr.bf16.mxu0 %v5393
        %5876 = vmatpush1.bf16.msra.mxu0 %v5392
        %5877 = vmatprep.subr.bf16.mxu0 %v5399
        %5878 = vmatpush1.bf16.msra.mxu0 %v5398
        %5879 = vmatprep.subr.bf16.mxu0 %v5405
        %5880 = vmatpush1.bf16.msra.mxu0 %v5404
        %5881 = vmatprep.subr.bf16.mxu0 %v5411
        %5882 = vmatpush1.bf16.msra.mxu0 %v5410
        %5883 = vmatprep.subr.bf16.mxu0 %v5417
        %5884 = vmatpush1.bf16.msra.mxu0 %v5416
        %5885 = vmatprep.subr.bf16.mxu0 %v5423
        %5886 = vmatpush1.bf16.msra.mxu0 %v5422
        %5887 = vmatprep.subr.bf16.mxu0 0
        %5888 = vmatpush1.bf16.msra.mxu0 0
        %5889 = vmatprep.subr.bf16.mxu0 0
        %5890 = vmatpush1.bf16.msra.mxu0 0
        %5891 = vmatprep.subr.bf16.mxu0 0
        %5892 = vmatpush1.bf16.msra.mxu0 0
        %5893 = vmatprep.subr.bf16.mxu0 0
        %5894 = vmatpush1.bf16.msra.mxu0 0
        %5895 = vmatprep.subr.bf16.mxu0 0
        %5896 = vmatpush1.bf16.msra.mxu0 0
        %5897 = vmatprep.subr.bf16.mxu0 0
        %5898 = vmatpush1.bf16.msra.mxu0 0
        %5899 = vmatprep.mubr.bf16.mxu0 %v5583
        %5900 = vmatmul.mubr.bf16.gmra.mrb[0].mxu0 %v3064
        %v5901 = vpop.f32.mrb[0].mxu0
        %v5902 = vadd.f32 %v5813, %v5901
        %v5903 = vpop.f32.mrb[0].mxu0
        %v5904 = vadd.f32 %v5815, %v5903
        %v5905 = vpop.f32.mrb[0].mxu0
        %v5906 = vadd.f32 %v5817, %v5905
        %v5907 = vpop.f32.mrb[0].mxu0
        %v5908 = vadd.f32 %v5819, %v5907
        %5909 = vmatprep.mubr.bf16.mxu0 %v5586
        %5910 = vmatmul.mubr.bf16.gmra.mrb[0].mxu0 %v3068
        %v5911 = vpop.f32.mrb[0].mxu0
        %v5912 = vadd.f32 %v5823, %v5911
        %v5913 = vpop.f32.mrb[0].mxu0
        %v5914 = vadd.f32 %v5825, %v5913
        %v5915 = vpop.f32.mrb[0].mxu0
        %v5916 = vadd.f32 %v5827, %v5915
        %v5917 = vpop.f32.mrb[0].mxu0
        %v5918 = vadd.f32 %v5829, %v5917
        %5919 = vmatprep.mubr.bf16.mxu0 %v5589
        %5920 = vmatmul.mubr.bf16.gmra.mrb[0].mxu0 %v3072
        %v5921 = vpop.f32.mrb[0].mxu0
        %v5922 = vadd.f32 %v5833, %v5921
        %v5923 = vpop.f32.mrb[0].mxu0
        %v5924 = vadd.f32 %v5835, %v5923
        %v5925 = vpop.f32.mrb[0].mxu0
        %v5926 = vadd.f32 %v5837, %v5925
        %v5927 = vpop.f32.mrb[0].mxu0
        %v5928 = vadd.f32 %v5839, %v5927
        %5929 = vmatprep.mubr.bf16.mxu0 %v5592
        %5930 = vmatmul.mubr.bf16.gmra.mrb[0].mxu0 %v3076
        %v5931 = vpop.f32.mrb[0].mxu0
        %v5932 = vadd.f32 %v5843, %v5931
        %v5933 = vpop.f32.mrb[0].mxu0
        %v5934 = vadd.f32 %v5845, %v5933
        %v5935 = vpop.f32.mrb[0].mxu0
        %v5936 = vadd.f32 %v5847, %v5935
        %v5937 = vpop.f32.mrb[0].mxu0
        %v5938 = vadd.f32 %v5849, %v5937
        %5939 = vmatprep.mubr.bf16.mxu0 %v5595
        %5940 = vmatmul.mubr.bf16.gmra.mrb[0].mxu0 %v3080
        %v5941 = vpop.f32.mrb[0].mxu0
        %v5942 = vadd.f32 %v5853, %v5941
        %v5943 = vpop.f32.mrb[0].mxu0
        %v5944 = vadd.f32 %v5855, %v5943
        %v5945 = vpop.f32.mrb[0].mxu0
        %v5946 = vadd.f32 %v5857, %v5945
        %v5947 = vpop.f32.mrb[0].mxu0
        %v5948 = vadd.f32 %v5859, %v5947
        %5949 = vmatprep.mubr.bf16.mxu0 %v5598
        %5950 = vmatmul.mubr.bf16.gmra.mrb[0].mxu0 %v3084
        %v5951 = vpop.f32.mrb[0].mxu0
        %v5952 = vpop.f32.mrb[0].mxu0
        %v5953 = vpop.f32.mrb[0].mxu0
        %v5954 = vpop.f32.mrb[0].mxu0
        %5955 = vdwg.mxu0
        %5956 = vmatprep.subr.bf16.mxu0 %v5275
        %5957 = vmatpush1.bf16.msra.mxu0 %v5274
        %5958 = vmatprep.subr.bf16.mxu0 %v5281
        %5959 = vmatpush1.bf16.msra.mxu0 %v5280
        %5960 = vmatprep.subr.bf16.mxu0 %v5287
        %5961 = vmatpush1.bf16.msra.mxu0 %v5286
        %5962 = vmatprep.subr.bf16.mxu0 %v5293
        %5963 = vmatpush1.bf16.msra.mxu0 %v5292
        %5964 = vmatprep.subr.bf16.mxu0 %v5299
        %5965 = vmatpush1.bf16.msra.mxu0 %v5298
        %5966 = vmatprep.subr.bf16.mxu0 %v5305
        %5967 = vmatpush1.bf16.msra.mxu0 %v5304
        %5968 = vmatprep.subr.bf16.mxu0 %v5311
        %5969 = vmatpush1.bf16.msra.mxu0 %v5310
        %5970 = vmatprep.subr.bf16.mxu0 %v5317
        %5971 = vmatpush1.bf16.msra.mxu0 %v5316
        %5972 = vmatprep.subr.bf16.mxu0 %v5323
        %5973 = vmatpush1.bf16.msra.mxu0 %v5322
        %5974 = vmatprep.subr.bf16.mxu0 %v5329
        %5975 = vmatpush1.bf16.msra.mxu0 %v5328
        %5976 = vmatprep.subr.bf16.mxu0 %v5335
        %5977 = vmatpush1.bf16.msra.mxu0 %v5334
        %5978 = vmatprep.subr.bf16.mxu0 %v5341
        %5979 = vmatpush1.bf16.msra.mxu0 %v5340
        %5980 = vmatprep.subr.bf16.mxu0 %v5347
        %5981 = vmatpush1.bf16.msra.mxu0 %v5346
        %5982 = vmatprep.subr.bf16.mxu0 %v5353
        %5983 = vmatpush1.bf16.msra.mxu0 %v5352
        %5984 = vmatprep.subr.bf16.mxu0 %v5359
        %5985 = vmatpush1.bf16.msra.mxu0 %v5358
        %5986 = vmatprep.subr.bf16.mxu0 %v5365
        %5987 = vmatpush1.bf16.msra.mxu0 %v5364
        %5988 = vmatprep.mubr.bf16.mxu0 %v3063
        %5989 = vmatmul.mubr.bf16.gmra.mrb[0].mxu0 %v3062
        %v5990 = vpop.f32.mrb[0].mxu0
        %v5991 = vadd.f32 %v4758, %v5990
        %v5992 = vpop.f32.mrb[0].mxu0
        %v5993 = vpop.f32.mrb[0].mxu0
        %v5994 = vadd.f32 %v4761, %v5993
        %v5995 = vpop.f32.mrb[0].mxu0
        %5996 = vmatprep.mubr.bf16.mxu0 %v3067
        %5997 = vmatmul.mubr.bf16.gmra.mrb[0].mxu0 %v3066
        %v5998 = vpop.f32.mrb[0].mxu0
        %v5999 = vadd.f32 %v4766, %v5998
        %v6000 = vpop.f32.mrb[0].mxu0
        %v6001 = vpop.f32.mrb[0].mxu0
        %v6002 = vadd.f32 %v4769, %v6001
        %v6003 = vpop.f32.mrb[0].mxu0
        %6004 = vmatprep.mubr.bf16.mxu0 %v3071
        %6005 = vmatmul.mubr.bf16.gmra.mrb[0].mxu0 %v3070
        %v6006 = vpop.f32.mrb[0].mxu0
        %v6007 = vadd.f32 %v4774, %v6006
        %v6008 = vpop.f32.mrb[0].mxu0
        %v6009 = vpop.f32.mrb[0].mxu0
        %v6010 = vadd.f32 %v4777, %v6009
        %v6011 = vpop.f32.mrb[0].mxu0
        %6012 = vmatprep.mubr.bf16.mxu0 %v3075
        %6013 = vmatmul.mubr.bf16.gmra.mrb[0].mxu0 %v3074
        %v6014 = vpop.f32.mrb[0].mxu0
        %v6015 = vadd.f32 %v4782, %v6014
        %v6016 = vpop.f32.mrb[0].mxu0
        %v6017 = vpop.f32.mrb[0].mxu0
        %v6018 = vadd.f32 %v4785, %v6017
        %v6019 = vpop.f32.mrb[0].mxu0
        %6020 = vmatprep.mubr.bf16.mxu0 %v3079
        %6021 = vmatmul.mubr.bf16.gmra.mrb[0].mxu0 %v3078
        %v6022 = vpop.f32.mrb[0].mxu0
        %v6023 = vadd.f32 %v4790, %v6022
        %v6024 = vpop.f32.mrb[0].mxu0
        %v6025 = vpop.f32.mrb[0].mxu0
        %v6026 = vadd.f32 %v4793, %v6025
        %v6027 = vpop.f32.mrb[0].mxu0
        %6028 = vmatprep.mubr.bf16.mxu0 %v3083
        %6029 = vmatmul.mubr.bf16.gmra.mrb[0].mxu0 %v3082
        %v6030 = vpop.f32.mrb[0].mxu0
        %v6031 = vpop.f32.mrb[0].mxu0
        %v6032 = vpop.f32.mrb[0].mxu0
        %v6033 = vpop.f32.mrb[0].mxu0
        %6034 = vdwg.mxu0
        %6035 = vmatprep.subr.bf16.mxu0 %v5371
        %6036 = vmatpush1.bf16.msra.mxu0 %v5370
        %6037 = vmatprep.subr.bf16.mxu0 %v5377
        %6038 = vmatpush1.bf16.msra.mxu0 %v5376
        %6039 = vmatprep.subr.bf16.mxu0 %v5383
        %6040 = vmatpush1.bf16.msra.mxu0 %v5382
        %6041 = vmatprep.subr.bf16.mxu0 %v5389
        %6042 = vmatpush1.bf16.msra.mxu0 %v5388
        %6043 = vmatprep.subr.bf16.mxu0 %v5395
        %6044 = vmatpush1.bf16.msra.mxu0 %v5394
        %6045 = vmatprep.subr.bf16.mxu0 %v5401
        %6046 = vmatpush1.bf16.msra.mxu0 %v5400
        %6047 = vmatprep.subr.bf16.mxu0 %v5407
        %6048 = vmatpush1.bf16.msra.mxu0 %v5406
        %6049 = vmatprep.subr.bf16.mxu0 %v5413
        %6050 = vmatpush1.bf16.msra.mxu0 %v5412
        %6051 = vmatprep.subr.bf16.mxu0 %v5419
        %6052 = vmatpush1.bf16.msra.mxu0 %v5418
        %6053 = vmatprep.subr.bf16.mxu0 %v5425
        %6054 = vmatpush1.bf16.msra.mxu0 %v5424
        %6055 = vmatprep.subr.bf16.mxu0 0
        %6056 = vmatpush1.bf16.msra.mxu0 0
        %6057 = vmatprep.subr.bf16.mxu0 0
        %6058 = vmatpush1.bf16.msra.mxu0 0
        %6059 = vmatprep.subr.bf16.mxu0 0
        %6060 = vmatpush1.bf16.msra.mxu0 0
        %6061 = vmatprep.subr.bf16.mxu0 0
        %6062 = vmatpush1.bf16.msra.mxu0 0
        %6063 = vmatprep.subr.bf16.mxu0 0
        %6064 = vmatpush1.bf16.msra.mxu0 0
        %6065 = vmatprep.subr.bf16.mxu0 0
        %6066 = vmatpush1.bf16.msra.mxu0 0
        %6067 = vmatprep.mubr.bf16.mxu0 %v5583
        %6068 = vmatmul.mubr.bf16.gmra.mrb[0].mxu0 %v3064
        %v6069 = vpop.f32.mrb[0].mxu0
        %v6070 = vadd.f32 %v5991, %v6069
        %v6071 = vpop.f32.mrb[0].mxu0
        %v6072 = vpop.f32.mrb[0].mxu0
        %v6073 = vadd.f32 %v5994, %v6072
        %v6074 = vpop.f32.mrb[0].mxu0
        %6075 = vmatprep.mubr.bf16.mxu0 %v5586
        %6076 = vmatmul.mubr.bf16.gmra.mrb[0].mxu0 %v3068
        %v6077 = vpop.f32.mrb[0].mxu0
        %v6078 = vadd.f32 %v5999, %v6077
        %v6079 = vpop.f32.mrb[0].mxu0
        %v6080 = vpop.f32.mrb[0].mxu0
        %v6081 = vadd.f32 %v6002, %v6080
        %v6082 = vpop.f32.mrb[0].mxu0
        %6083 = vmatprep.mubr.bf16.mxu0 %v5589
        %6084 = vmatmul.mubr.bf16.gmra.mrb[0].mxu0 %v3072
        %v6085 = vpop.f32.mrb[0].mxu0
        %v6086 = vadd.f32 %v6007, %v6085
        %v6087 = vpop.f32.mrb[0].mxu0
        %v6088 = vpop.f32.mrb[0].mxu0
        %v6089 = vadd.f32 %v6010, %v6088
        %v6090 = vpop.f32.mrb[0].mxu0
        %6091 = vmatprep.mubr.bf16.mxu0 %v5592
        %6092 = vmatmul.mubr.bf16.gmra.mrb[0].mxu0 %v3076
        %v6093 = vpop.f32.mrb[0].mxu0
        %v6094 = vadd.f32 %v6015, %v6093
        %v6095 = vpop.f32.mrb[0].mxu0
        %v6096 = vpop.f32.mrb[0].mxu0
        %v6097 = vadd.f32 %v6018, %v6096
        %v6098 = vpop.f32.mrb[0].mxu0
        %6099 = vmatprep.mubr.bf16.mxu0 %v5595
        %6100 = vmatmul.mubr.bf16.gmra.mrb[0].mxu0 %v3080
        %v6101 = vpop.f32.mrb[0].mxu0
        %v6102 = vadd.f32 %v6023, %v6101
        %v6103 = vpop.f32.mrb[0].mxu0
        %v6104 = vpop.f32.mrb[0].mxu0
        %v6105 = vadd.f32 %v6026, %v6104
        %v6106 = vpop.f32.mrb[0].mxu0
        %6107 = vmatprep.mubr.bf16.mxu0 %v5598
        %6108 = vmatmul.mubr.bf16.gmra.mrb[0].mxu0 %v3084
        %v6109 = vpop.f32.mrb[0].mxu0
        %v6110 = vpop.f32.mrb[0].mxu0
        %v6111 = vpop.f32.mrb[0].mxu0
        %v6112 = vpop.f32.mrb[0].mxu0
        %6113 = vdwg.mxu0
        %s6114 = scalar_lea.vmem [#allocation8], 2496
        %v6115 = vld [vmem:[%s6114] sm:$0xff]
        %v6116 = vld [vmem:[%s6114 + $0x8] sm:$0xff]
        %v6117 = vld [vmem:[%s6114 + $0x10] sm:$0xff]
        %v6118 = vld [vmem:[%s6114 + $0x18] sm:$0xff]
        %v6119 = vld [vmem:[%s6114 + $0x20] sm:$0xff]
        %v6120 = vld [vmem:[%s6114 + $0x28] sm:$0xff]
        %v6121 = vld [vmem:[%s6114 + $0x30] sm:$0xff]
        %v6122 = vld [vmem:[%s6114 + $0x38] sm:$0xff]
        %v6123 = vld [vmem:[%s6114 + $0x40] sm:$0xff]
        %v6124 = vld [vmem:[%s6114 + $0x48] sm:$0xff]
        %v6125 = vld [vmem:[%s6114 + $0x50] sm:$0xff]
        %v6126 = vld [vmem:[%s6114 + $0x58] sm:$0xff]
        %v6127 = vld [vmem:[%s6114 + $0x60] sm:$0xff]
        %v6128 = vld [vmem:[%s6114 + $0x68] sm:$0xff]
        %v6129 = vld [vmem:[%s6114 + $0x70] sm:$0xff]
        %v6130 = vld [vmem:[%s6114 + $0x78] sm:$0xff]
        %v6131 = vld [vmem:[%s6114 + $0x80] sm:$0xff]
        %v6132 = vld [vmem:[%s6114 + $0x88] sm:$0xff]
        %v6133 = vld [vmem:[%s6114 + $0x90] sm:$0xff]
        %v6134 = vld [vmem:[%s6114 + $0x98] sm:$0xff]
        %v6135 = vld [vmem:[%s6114 + $0xa0] sm:$0xff]
        %v6136 = vld [vmem:[%s6114 + $0xa8] sm:$0xff]
        %v6137 = vld [vmem:[%s6114 + $0xb0] sm:$0xff]
        %v6138 = vld [vmem:[%s6114 + $0xb8] sm:$0xff]
        %v6139 = vld [vmem:[%s6114 + $0xc0] sm:$0xff]
        %v6140 = vld [vmem:[%s6114 + $0xc8] sm:$0xff]
        %v6141 = vld [vmem:[%s6114 + $0xd0] sm:$0xff]
        %v6142 = vld [vmem:[%s6114 + $0xd8] sm:$0xff]
        %v6143 = vld [vmem:[%s6114 + $0xe0] sm:$0xff]
        %v6144 = vld [vmem:[%s6114 + $0xe8] sm:$0xff]
        %v6145 = vld [vmem:[%s6114 + $0xf0] sm:$0xff]
        %v6146 = vld [vmem:[%s6114 + $0xf8] sm:$0xff]
        %v6147 = vld [vmem:[%s6114 + $0x100] sm:$0xff]
        %v6148 = vld [vmem:[%s6114 + $0x108] sm:$0xff]
        %v6149 = vld [vmem:[%s6114 + $0x110] sm:$0xff]
        %v6150 = vld [vmem:[%s6114 + $0x118] sm:$0xff]
        %v6151 = vld [vmem:[%s6114 + $0x120] sm:$0xff]
        %v6152 = vld [vmem:[%s6114 + $0x128] sm:$0xff]
        %v6153 = vld [vmem:[%s6114 + $0x130] sm:$0xff]
        %v6154 = vld [vmem:[%s6114 + $0x138] sm:$0xff]
        %v6155 = vld [vmem:[%s6114 + $0x140] sm:$0xff]
        %v6156 = vld [vmem:[%s6114 + $0x148] sm:$0xff]
        %v6157 = vld [vmem:[%s6114 + $0x150] sm:$0xff]
        %v6158 = vld [vmem:[%s6114 + $0x158] sm:$0xff]
        %v6159 = vld [vmem:[%s6114 + $0x160] sm:$0xff]
        %v6160 = vld [vmem:[%s6114 + $0x168] sm:$0xff]
        %v6161 = vld [vmem:[%s6114 + $0x170] sm:$0xff]
        %v6162 = vld [vmem:[%s6114 + $0x178] sm:$0xff]
        %v6163 = vld [vmem:[%s6114 + $0x180] sm:$0xff]
        %v6164 = vld [vmem:[%s6114 + $0x188] sm:$0xff]
        %v6165 = vld [vmem:[%s6114 + $0x190] sm:$0xff]
        %v6166 = vld [vmem:[%s6114 + $0x198] sm:$0xff]
        %v6167 = vld [vmem:[%s6114 + $0x1a0] sm:$0xff]
        %v6168 = vld [vmem:[%s6114 + $0x1a8] sm:$0xff]
        %v6169 = vld [vmem:[%s6114 + $0x1b0] sm:$0xff]
        %v6170 = vld [vmem:[%s6114 + $0x1b8] sm:$0xff]
        %v6171 = vld [vmem:[%s6114 + $0x1c0] sm:$0xff]
        %v6172 = vld [vmem:[%s6114 + $0x1c8] sm:$0xff]
        %v6173 = vld [vmem:[%s6114 + $0x1d0] sm:$0xff]
        %v6174 = vld [vmem:[%s6114 + $0x1d8] sm:$0xff]
        %v6175 = vld [vmem:[%s6114 + $0x1e0] sm:$0xff]
        %v6176 = vld [vmem:[%s6114 + $0x1e8] sm:$0xff]
        %v6177 = vld [vmem:[%s6114 + $0x1f0] sm:$0xff]
        %v6178 = vld [vmem:[%s6114 + $0x1f8] sm:$0xff]
        %v6179 = vld [vmem:[%s6114 + $0x200] sm:$0xff]
        %v6180 = vld [vmem:[%s6114 + $0x208] sm:$0xff]
        %v6181 = vld [vmem:[%s6114 + $0x210] sm:$0xff]
        %v6182 = vld [vmem:[%s6114 + $0x218] sm:$0xff]
        %v6183 = vld [vmem:[%s6114 + $0x220] sm:$0xff]
        %v6184 = vld [vmem:[%s6114 + $0x228] sm:$0xff]
        %v6185 = vld [vmem:[%s6114 + $0x230] sm:$0xff]
        %v6186 = vld [vmem:[%s6114 + $0x238] sm:$0xff]
        %v6187 = vld [vmem:[%s6114 + $0x240] sm:$0xff]
        %v6188 = vld [vmem:[%s6114 + $0x248] sm:$0xff]
        %v6189 = vld [vmem:[%s6114 + $0x250] sm:$0xff]
        %v6190 = vld [vmem:[%s6114 + $0x258] sm:$0xff]
        %v6191 = vld [vmem:[%s6114 + $0x260] sm:$0xff]
        %v6192 = vld [vmem:[%s6114 + $0x268] sm:$0xff]
        %v6193 = vld [vmem:[%s6114 + $0x270] sm:$0xff]
        %v6194 = vld [vmem:[%s6114 + $0x278] sm:$0xff]
        %v6195 = vld [vmem:[%s6114 + $0x280] sm:$0xff]
        %v6196 = vld [vmem:[%s6114 + $0x288] sm:$0xff]
        %v6197 = vld [vmem:[%s6114 + $0x290] sm:$0xff]
        %v6198 = vld [vmem:[%s6114 + $0x298] sm:$0xff]
        %v6199 = vld [vmem:[%s6114 + $0x2a0] sm:$0xff]
        %v6200 = vld [vmem:[%s6114 + $0x2a8] sm:$0xff]
        %v6201 = vld [vmem:[%s6114 + $0x2b0] sm:$0xff]
        %v6202 = vld [vmem:[%s6114 + $0x2b8] sm:$0xff]
        %v6203 = vld [vmem:[%s6114 + $0x2c0] sm:$0xff]
        %v6204 = vld [vmem:[%s6114 + $0x2c8] sm:$0xff]
        %v6205 = vld [vmem:[%s6114 + $0x2d0] sm:$0xff]
        %v6206 = vld [vmem:[%s6114 + $0x2d8] sm:$0xff]
        %v6207 = vld [vmem:[%s6114 + $0x2e0] sm:$0xff]
        %v6208 = vld [vmem:[%s6114 + $0x2e8] sm:$0xff]
        %v6209 = vld [vmem:[%s6114 + $0x2f0] sm:$0xff]
        %v6210 = vld [vmem:[%s6114 + $0x2f8] sm:$0xff]
        %v6211 = vld [vmem:[%s6114 + $0x300] sm:$0xff]
        %v6212 = vld [vmem:[%s6114 + $0x308] sm:$0xff]
        %v6213 = vld [vmem:[%s6114 + $0x310] sm:$0xff]
        %v6214 = vld [vmem:[%s6114 + $0x318] sm:$0xff]
        %v6215 = vld [vmem:[%s6114 + $0x320] sm:$0xff]
        %v6216 = vld [vmem:[%s6114 + $0x328] sm:$0xff]
        %v6217 = vld [vmem:[%s6114 + $0x330] sm:$0xff]
        %v6218 = vld [vmem:[%s6114 + $0x338] sm:$0xff]
        %v6219 = vld [vmem:[%s6114 + $0x340] sm:$0xff]
        %v6220 = vld [vmem:[%s6114 + $0x348] sm:$0xff]
        %v6221 = vld [vmem:[%s6114 + $0x350] sm:$0xff]
        %v6222 = vld [vmem:[%s6114 + $0x358] sm:$0xff]
        %v6223 = vld [vmem:[%s6114 + $0x360] sm:$0xff]
        %v6224 = vld [vmem:[%s6114 + $0x368] sm:$0xff]
        %v6225 = vld [vmem:[%s6114 + $0x370] sm:$0xff]
        %v6226 = vld [vmem:[%s6114 + $0x378] sm:$0xff]
        %v6227 = vld [vmem:[%s6114 + $0x380] sm:$0xff]
        %v6228 = vld [vmem:[%s6114 + $0x388] sm:$0xff]
        %v6229 = vld [vmem:[%s6114 + $0x390] sm:$0xff]
        %v6230 = vld [vmem:[%s6114 + $0x398] sm:$0xff]
        %v6231 = vld [vmem:[%s6114 + $0x3a0] sm:$0xff]
        %v6232 = vld [vmem:[%s6114 + $0x3a8] sm:$0xff]
        %v6233 = vld [vmem:[%s6114 + $0x3b0] sm:$0xff]
        %v6234 = vld [vmem:[%s6114 + $0x3b8] sm:$0xff]
        %v6235 = vld [vmem:[%s6114 + $0x3c0] sm:$0xff]
        %v6236 = vld [vmem:[%s6114 + $0x3c8] sm:$0xff]
        %v6237 = vld [vmem:[%s6114 + $0x3d0] sm:$0xff]
        %v6238 = vld [vmem:[%s6114 + $0x3d8] sm:$0xff]
        %v6239 = vld [vmem:[%s6114 + $0x3e0] sm:$0xff]
        %v6240 = vld [vmem:[%s6114 + $0x3e8] sm:$0xff]
        %v6241 = vld [vmem:[%s6114 + $0x3f0] sm:$0xff]
        %v6242 = vld [vmem:[%s6114 + $0x3f8] sm:$0xff]
        %v6243 = vld [vmem:[%s6114 + $0x400] sm:$0xff]
        %v6244 = vld [vmem:[%s6114 + $0x408] sm:$0xff]
        %v6245 = vld [vmem:[%s6114 + $0x410] sm:$0xff]
        %v6246 = vld [vmem:[%s6114 + $0x418] sm:$0xff]
        %v6247 = vld [vmem:[%s6114 + $0x420] sm:$0xff]
        %v6248 = vld [vmem:[%s6114 + $0x428] sm:$0xff]
        %v6249 = vld [vmem:[%s6114 + $0x430] sm:$0xff]
        %v6250 = vld [vmem:[%s6114 + $0x438] sm:$0xff]
        %v6251 = vld [vmem:[%s6114 + $0x440] sm:$0xff]
        %v6252 = vld [vmem:[%s6114 + $0x448] sm:$0xff]
        %v6253 = vld [vmem:[%s6114 + $0x450] sm:$0xff]
        %v6254 = vld [vmem:[%s6114 + $0x458] sm:$0xff]
        %v6255 = vld [vmem:[%s6114 + $0x460] sm:$0xff]
        %v6256 = vld [vmem:[%s6114 + $0x468] sm:$0xff]
        %v6257 = vld [vmem:[%s6114 + $0x470] sm:$0xff]
        %v6258 = vld [vmem:[%s6114 + $0x478] sm:$0xff]
        %v6259 = vld [vmem:[%s6114 + $0x480] sm:$0xff]
        %v6260 = vld [vmem:[%s6114 + $0x488] sm:$0xff]
        %v6261 = vld [vmem:[%s6114 + $0x490] sm:$0xff]
        %v6262 = vld [vmem:[%s6114 + $0x498] sm:$0xff]
        %v6263 = vld [vmem:[%s6114 + $0x4a0] sm:$0xff]
        %v6264 = vld [vmem:[%s6114 + $0x4a8] sm:$0xff]
        %v6265 = vld [vmem:[%s6114 + $0x4b0] sm:$0xff]
        %v6266 = vld [vmem:[%s6114 + $0x4b8] sm:$0xff]
        %v6267 = vld [vmem:[%s6114 + $0x4c0] sm:$0xff]
        %v6268 = vld [vmem:[%s6114 + $0x4c8] sm:$0xff]
        %v6269 = vld [vmem:[%s6114 + $0x4d0] sm:$0xff]
        %v6270 = vld [vmem:[%s6114 + $0x4d8] sm:$0xff]
        %v6427 = vunpack.c.l.b16 %v6115
        %v6428 = vunpack.c.h.b16 %v6115
        %v6429 = vunpack.c.l.b16 %v6116
        %v6430 = vunpack.c.h.b16 %v6116
        %v6431 = vunpack.c.l.b16 %v6117
        %v6432 = vunpack.c.h.b16 %v6117
        %v6433 = vunpack.c.l.b16 %v6118
        %v6434 = vunpack.c.h.b16 %v6118
        %v6435 = vunpack.c.l.b16 %v6119
        %v6436 = vunpack.c.h.b16 %v6119
        %v6437 = vunpack.c.l.b16 %v6120
        %v6438 = vunpack.c.h.b16 %v6120
        %v6439 = vunpack.c.l.b16 %v6121
        %v6440 = vunpack.c.h.b16 %v6121
        %v6441 = vunpack.c.l.b16 %v6122
        %v6442 = vunpack.c.h.b16 %v6122
        %v6443 = vunpack.c.l.b16 %v6123
        %v6444 = vunpack.c.h.b16 %v6123
        %v6445 = vunpack.c.l.b16 %v6124
        %v6446 = vunpack.c.h.b16 %v6124
        %v6447 = vunpack.c.l.b16 %v6125
        %v6448 = vunpack.c.h.b16 %v6125
        %v6449 = vunpack.c.l.b16 %v6126
        %v6450 = vunpack.c.h.b16 %v6126
        %v6451 = vunpack.c.l.b16 %v6127
        %v6452 = vunpack.c.h.b16 %v6127
        %v6453 = vunpack.c.l.b16 %v6128
        %v6454 = vunpack.c.h.b16 %v6128
        %v6455 = vunpack.c.l.b16 %v6129
        %v6456 = vunpack.c.h.b16 %v6129
        %v6457 = vunpack.c.l.b16 %v6130
        %v6458 = vunpack.c.h.b16 %v6130
        %v6459 = vunpack.c.l.b16 %v6131
        %v6460 = vunpack.c.h.b16 %v6131
        %v6461 = vunpack.c.l.b16 %v6132
        %v6462 = vunpack.c.h.b16 %v6132
        %v6463 = vunpack.c.l.b16 %v6133
        %v6464 = vunpack.c.h.b16 %v6133
        %v6465 = vunpack.c.l.b16 %v6134
        %v6466 = vunpack.c.h.b16 %v6134
        %v6467 = vunpack.c.l.b16 %v6135
        %v6468 = vunpack.c.h.b16 %v6135
        %v6469 = vunpack.c.l.b16 %v6136
        %v6470 = vunpack.c.h.b16 %v6136
        %v6471 = vunpack.c.l.b16 %v6137
        %v6472 = vunpack.c.h.b16 %v6137
        %v6473 = vunpack.c.l.b16 %v6138
        %v6474 = vunpack.c.h.b16 %v6138
        %v6475 = vunpack.c.l.b16 %v6139
        %v6476 = vunpack.c.h.b16 %v6139
        %v6477 = vunpack.c.l.b16 %v6140
        %v6478 = vunpack.c.h.b16 %v6140
        %v6479 = vunpack.c.l.b16 %v6141
        %v6480 = vunpack.c.h.b16 %v6141
        %v6481 = vunpack.c.l.b16 %v6142
        %v6482 = vunpack.c.h.b16 %v6142
        %v6483 = vunpack.c.l.b16 %v6143
        %v6484 = vunpack.c.h.b16 %v6143
        %v6485 = vunpack.c.l.b16 %v6144
        %v6486 = vunpack.c.h.b16 %v6144
        %v6487 = vunpack.c.l.b16 %v6145
        %v6488 = vunpack.c.h.b16 %v6145
        %v6489 = vunpack.c.l.b16 %v6146
        %v6490 = vunpack.c.h.b16 %v6146
        %v6491 = vunpack.c.l.b16 %v6147
        %v6492 = vunpack.c.h.b16 %v6147
        %v6493 = vunpack.c.l.b16 %v6148
        %v6494 = vunpack.c.h.b16 %v6148
        %v6495 = vunpack.c.l.b16 %v6149
        %v6496 = vunpack.c.h.b16 %v6149
        %v6497 = vunpack.c.l.b16 %v6150
        %v6498 = vunpack.c.h.b16 %v6150
        %v6499 = vunpack.c.l.b16 %v6151
        %v6500 = vunpack.c.h.b16 %v6151
        %v6501 = vunpack.c.l.b16 %v6152
        %v6502 = vunpack.c.h.b16 %v6152
        %v6503 = vunpack.c.l.b16 %v6153
        %v6504 = vunpack.c.h.b16 %v6153
        %v6505 = vunpack.c.l.b16 %v6154
        %v6506 = vunpack.c.h.b16 %v6154
        %v6507 = vunpack.c.l.b16 %v6155
        %v6508 = vunpack.c.h.b16 %v6155
        %v6509 = vunpack.c.l.b16 %v6156
        %v6510 = vunpack.c.h.b16 %v6156
        %v6511 = vunpack.c.l.b16 %v6157
        %v6512 = vunpack.c.h.b16 %v6157
        %v6513 = vunpack.c.l.b16 %v6158
        %v6514 = vunpack.c.h.b16 %v6158
        %v6515 = vunpack.c.l.b16 %v6159
        %v6516 = vunpack.c.h.b16 %v6159
        %v6517 = vunpack.c.l.b16 %v6160
        %v6518 = vunpack.c.h.b16 %v6160
        %v6519 = vunpack.c.l.b16 %v6161
        %v6520 = vunpack.c.h.b16 %v6161
        %v6521 = vunpack.c.l.b16 %v6162
        %v6522 = vunpack.c.h.b16 %v6162
        %v6523 = vunpack.c.l.b16 %v6163
        %v6524 = vunpack.c.h.b16 %v6163
        %v6525 = vunpack.c.l.b16 %v6164
        %v6526 = vunpack.c.h.b16 %v6164
        %v6527 = vunpack.c.l.b16 %v6165
        %v6528 = vunpack.c.h.b16 %v6165
        %v6529 = vunpack.c.l.b16 %v6166
        %v6530 = vunpack.c.h.b16 %v6166
        %v6531 = vunpack.c.l.b16 %v6167
        %v6532 = vunpack.c.h.b16 %v6167
        %v6533 = vunpack.c.l.b16 %v6168
        %v6534 = vunpack.c.h.b16 %v6168
        %v6535 = vunpack.c.l.b16 %v6169
        %v6536 = vunpack.c.h.b16 %v6169
        %v6537 = vunpack.c.l.b16 %v6170
        %v6538 = vunpack.c.h.b16 %v6170
        %v6539 = vunpack.c.l.b16 %v6171
        %v6540 = vunpack.c.h.b16 %v6171
        %v6541 = vunpack.c.l.b16 %v6172
        %v6542 = vunpack.c.h.b16 %v6172
        %v6543 = vunpack.c.l.b16 %v6173
        %v6544 = vunpack.c.h.b16 %v6173
        %v6545 = vunpack.c.l.b16 %v6174
        %v6546 = vunpack.c.h.b16 %v6174
        %v6547 = vunpack.c.l.b16 %v6175
        %v6548 = vunpack.c.h.b16 %v6175
        %v6549 = vunpack.c.l.b16 %v6176
        %v6550 = vunpack.c.h.b16 %v6176
        %v6551 = vunpack.c.l.b16 %v6177
        %v6552 = vunpack.c.h.b16 %v6177
        %v6553 = vunpack.c.l.b16 %v6178
        %v6554 = vunpack.c.h.b16 %v6178
        %v6555 = vunpack.c.l.b16 %v6179
        %v6556 = vunpack.c.h.b16 %v6179
        %v6557 = vunpack.c.l.b16 %v6180
        %v6558 = vunpack.c.h.b16 %v6180
        %v6559 = vunpack.c.l.b16 %v6181
        %v6560 = vunpack.c.h.b16 %v6181
        %v6561 = vunpack.c.l.b16 %v6182
        %v6562 = vunpack.c.h.b16 %v6182
        %v6563 = vunpack.c.l.b16 %v6183
        %v6564 = vunpack.c.h.b16 %v6183
        %v6565 = vunpack.c.l.b16 %v6184
        %v6566 = vunpack.c.h.b16 %v6184
        %v6567 = vunpack.c.l.b16 %v6185
        %v6568 = vunpack.c.h.b16 %v6185
        %v6569 = vunpack.c.l.b16 %v6186
        %v6570 = vunpack.c.h.b16 %v6186
        %v6571 = vunpack.c.l.b16 %v6187
        %v6572 = vunpack.c.h.b16 %v6187
        %v6573 = vunpack.c.l.b16 %v6188
        %v6574 = vunpack.c.h.b16 %v6188
        %v6575 = vunpack.c.l.b16 %v6189
        %v6576 = vunpack.c.h.b16 %v6189
        %v6577 = vunpack.c.l.b16 %v6190
        %v6578 = vunpack.c.h.b16 %v6190
        %v6579 = vunpack.c.l.b16 %v6191
        %v6580 = vunpack.c.h.b16 %v6191
        %v6581 = vunpack.c.l.b16 %v6192
        %v6582 = vunpack.c.h.b16 %v6192
        %v6583 = vunpack.c.l.b16 %v6193
        %v6584 = vunpack.c.h.b16 %v6193
        %v6585 = vunpack.c.l.b16 %v6194
        %v6586 = vunpack.c.h.b16 %v6194
        %v6587 = vunpack.c.l.b16 %v6195
        %v6588 = vunpack.c.h.b16 %v6195
        %v6589 = vunpack.c.l.b16 %v6196
        %v6590 = vunpack.c.h.b16 %v6196
        %v6591 = vunpack.c.l.b16 %v6197
        %v6592 = vunpack.c.h.b16 %v6197
        %v6593 = vunpack.c.l.b16 %v6198
        %v6594 = vunpack.c.h.b16 %v6198
        %v6595 = vunpack.c.l.b16 %v6199
        %v6596 = vunpack.c.h.b16 %v6199
        %v6597 = vunpack.c.l.b16 %v6200
        %v6598 = vunpack.c.h.b16 %v6200
        %v6599 = vunpack.c.l.b16 %v6201
        %v6600 = vunpack.c.h.b16 %v6201
        %v6601 = vunpack.c.l.b16 %v6202
        %v6602 = vunpack.c.h.b16 %v6202
        %v6603 = vunpack.c.l.b16 %v6203
        %v6604 = vunpack.c.h.b16 %v6203
        %v6605 = vunpack.c.l.b16 %v6204
        %v6606 = vunpack.c.h.b16 %v6204
        %v6607 = vunpack.c.l.b16 %v6205
        %v6608 = vunpack.c.h.b16 %v6205
        %v6609 = vunpack.c.l.b16 %v6206
        %v6610 = vunpack.c.h.b16 %v6206
        %v6611 = vunpack.c.l.b16 %v6207
        %v6612 = vunpack.c.h.b16 %v6207
        %v6613 = vunpack.c.l.b16 %v6208
        %v6614 = vunpack.c.h.b16 %v6208
        %v6615 = vunpack.c.l.b16 %v6209
        %v6616 = vunpack.c.h.b16 %v6209
        %v6617 = vunpack.c.l.b16 %v6210
        %v6618 = vunpack.c.h.b16 %v6210
        %v6619 = vunpack.c.l.b16 %v6211
        %v6620 = vunpack.c.h.b16 %v6211
        %v6621 = vunpack.c.l.b16 %v6212
        %v6622 = vunpack.c.h.b16 %v6212
        %v6623 = vunpack.c.l.b16 %v6213
        %v6624 = vunpack.c.h.b16 %v6213
        %v6625 = vunpack.c.l.b16 %v6214
        %v6626 = vunpack.c.h.b16 %v6214
        %v6627 = vunpack.c.l.b16 %v6215
        %v6628 = vunpack.c.h.b16 %v6215
        %v6629 = vunpack.c.l.b16 %v6216
        %v6630 = vunpack.c.h.b16 %v6216
        %v6631 = vunpack.c.l.b16 %v6217
        %v6632 = vunpack.c.h.b16 %v6217
        %v6633 = vunpack.c.l.b16 %v6218
        %v6634 = vunpack.c.h.b16 %v6218
        %v6635 = vunpack.c.l.b16 %v6219
        %v6636 = vunpack.c.h.b16 %v6219
        %v6637 = vunpack.c.l.b16 %v6220
        %v6638 = vunpack.c.h.b16 %v6220
        %v6639 = vunpack.c.l.b16 %v6221
        %v6640 = vunpack.c.h.b16 %v6221
        %v6641 = vunpack.c.l.b16 %v6222
        %v6642 = vunpack.c.h.b16 %v6222
        %v6643 = vunpack.c.l.b16 %v6223
        %v6644 = vunpack.c.h.b16 %v6223
        %v6645 = vunpack.c.l.b16 %v6224
        %v6646 = vunpack.c.h.b16 %v6224
        %v6647 = vunpack.c.l.b16 %v6225
        %v6648 = vunpack.c.h.b16 %v6225
        %v6649 = vunpack.c.l.b16 %v6226
        %v6650 = vunpack.c.h.b16 %v6226
        %v6651 = vunpack.c.l.b16 %v6227
        %v6652 = vunpack.c.h.b16 %v6227
        %v6653 = vunpack.c.l.b16 %v6228
        %v6654 = vunpack.c.h.b16 %v6228
        %v6655 = vunpack.c.l.b16 %v6229
        %v6656 = vunpack.c.h.b16 %v6229
        %v6657 = vunpack.c.l.b16 %v6230
        %v6658 = vunpack.c.h.b16 %v6230
        %v6659 = vunpack.c.l.b16 %v6231
        %v6660 = vunpack.c.h.b16 %v6231
        %v6661 = vunpack.c.l.b16 %v6232
        %v6662 = vunpack.c.h.b16 %v6232
        %v6663 = vunpack.c.l.b16 %v6233
        %v6664 = vunpack.c.h.b16 %v6233
        %v6665 = vunpack.c.l.b16 %v6234
        %v6666 = vunpack.c.h.b16 %v6234
        %v6667 = vunpack.c.l.b16 %v6235
        %v6668 = vunpack.c.h.b16 %v6235
        %v6669 = vunpack.c.l.b16 %v6236
        %v6670 = vunpack.c.h.b16 %v6236
        %v6671 = vunpack.c.l.b16 %v6237
        %v6672 = vunpack.c.h.b16 %v6237
        %v6673 = vunpack.c.l.b16 %v6238
        %v6674 = vunpack.c.h.b16 %v6238
        %v6675 = vunpack.c.l.b16 %v6239
        %v6676 = vunpack.c.h.b16 %v6239
        %v6677 = vunpack.c.l.b16 %v6240
        %v6678 = vunpack.c.h.b16 %v6240
        %v6679 = vunpack.c.l.b16 %v6241
        %v6680 = vunpack.c.h.b16 %v6241
        %v6681 = vunpack.c.l.b16 %v6242
        %v6682 = vunpack.c.h.b16 %v6242
        %v6683 = vunpack.c.l.b16 %v6243
        %v6684 = vunpack.c.h.b16 %v6243
        %v6685 = vunpack.c.l.b16 %v6244
        %v6686 = vunpack.c.h.b16 %v6244
        %v6687 = vunpack.c.l.b16 %v6245
        %v6688 = vunpack.c.h.b16 %v6245
        %v6689 = vunpack.c.l.b16 %v6246
        %v6690 = vunpack.c.h.b16 %v6246
        %v6691 = vunpack.c.l.b16 %v6247
        %v6692 = vunpack.c.h.b16 %v6247
        %v6693 = vunpack.c.l.b16 %v6248
        %v6694 = vunpack.c.h.b16 %v6248
        %v6695 = vunpack.c.l.b16 %v6249
        %v6696 = vunpack.c.h.b16 %v6249
        %v6697 = vunpack.c.l.b16 %v6250
        %v6698 = vunpack.c.h.b16 %v6250
        %v6699 = vunpack.c.l.b16 %v6251
        %v6700 = vunpack.c.h.b16 %v6251
        %v6701 = vunpack.c.l.b16 %v6252
        %v6702 = vunpack.c.h.b16 %v6252
        %v6703 = vunpack.c.l.b16 %v6253
        %v6704 = vunpack.c.h.b16 %v6253
        %v6705 = vunpack.c.l.b16 %v6254
        %v6706 = vunpack.c.h.b16 %v6254
        %v6707 = vunpack.c.l.b16 %v6255
        %v6708 = vunpack.c.h.b16 %v6255
        %v6709 = vunpack.c.l.b16 %v6256
        %v6710 = vunpack.c.h.b16 %v6256
        %v6711 = vunpack.c.l.b16 %v6257
        %v6712 = vunpack.c.h.b16 %v6257
        %v6713 = vunpack.c.l.b16 %v6258
        %v6714 = vunpack.c.h.b16 %v6258
        %v6715 = vunpack.c.l.b16 %v6259
        %v6716 = vunpack.c.h.b16 %v6259
        %v6717 = vunpack.c.l.b16 %v6260
        %v6718 = vunpack.c.h.b16 %v6260
        %v6719 = vunpack.c.l.b16 %v6261
        %v6720 = vunpack.c.h.b16 %v6261
        %v6721 = vunpack.c.l.b16 %v6262
        %v6722 = vunpack.c.h.b16 %v6262
        %v6723 = vunpack.c.l.b16 %v6263
        %v6724 = vunpack.c.h.b16 %v6263
        %v6725 = vunpack.c.l.b16 %v6264
        %v6726 = vunpack.c.h.b16 %v6264
        %v6727 = vunpack.c.l.b16 %v6265
        %v6728 = vunpack.c.h.b16 %v6265
        %v6729 = vunpack.c.l.b16 %v6266
        %v6730 = vunpack.c.h.b16 %v6266
        %v6731 = vunpack.c.l.b16 %v6267
        %v6732 = vunpack.c.h.b16 %v6267
        %v6733 = vunpack.c.l.b16 %v6268
        %v6734 = vunpack.c.h.b16 %v6268
        %v6735 = vunpack.c.l.b16 %v6269
        %v6736 = vunpack.c.h.b16 %v6269
        %v6737 = vunpack.c.l.b16 %v6270
        %v6738 = vunpack.c.h.b16 %v6270
        %v6739 = vpack.c.b16 %v6433, %v6427
        %v6740 = vpack.c.b16 %v6434, %v6428
        %v6741 = vpack.c.b16 %v6435, %v6429
        %v6742 = vpack.c.b16 %v6436, %v6430
        %v6743 = vpack.c.b16 %v6437, %v6431
        %v6744 = vpack.c.b16 %v6438, %v6432
        %v6745 = vpack.c.b16 %v6445, %v6439
        %v6746 = vpack.c.b16 %v6446, %v6440
        %v6747 = vpack.c.b16 %v6447, %v6441
        %v6748 = vpack.c.b16 %v6448, %v6442
        %v6749 = vpack.c.b16 %v6449, %v6443
        %v6750 = vpack.c.b16 %v6450, %v6444
        %v6751 = vpack.c.b16 %v6457, %v6451
        %v6752 = vpack.c.b16 %v6458, %v6452
        %v6753 = vpack.c.b16 %v6459, %v6453
        %v6754 = vpack.c.b16 %v6460, %v6454
        %v6755 = vpack.c.b16 %v6461, %v6455
        %v6756 = vpack.c.b16 %v6462, %v6456
        %v6757 = vpack.c.b16 %v6469, %v6463
        %v6758 = vpack.c.b16 %v6470, %v6464
        %v6759 = vpack.c.b16 %v6471, %v6465
        %v6760 = vpack.c.b16 %v6472, %v6466
        %v6761 = vpack.c.b16 %v6473, %v6467
        %v6762 = vpack.c.b16 %v6474, %v6468
        %v6763 = vpack.c.b16 %v6481, %v6475
        %v6764 = vpack.c.b16 %v6482, %v6476
        %v6765 = vpack.c.b16 %v6483, %v6477
        %v6766 = vpack.c.b16 %v6484, %v6478
        %v6767 = vpack.c.b16 %v6485, %v6479
        %v6768 = vpack.c.b16 %v6486, %v6480
        %v6769 = vpack.c.b16 %v6493, %v6487
        %v6770 = vpack.c.b16 %v6494, %v6488
        %v6771 = vpack.c.b16 %v6495, %v6489
        %v6772 = vpack.c.b16 %v6496, %v6490
        %v6773 = vpack.c.b16 %v6497, %v6491
        %v6774 = vpack.c.b16 %v6498, %v6492
        %v6775 = vpack.c.b16 %v6505, %v6499
        %v6776 = vpack.c.b16 %v6506, %v6500
        %v6777 = vpack.c.b16 %v6507, %v6501
        %v6778 = vpack.c.b16 %v6508, %v6502
        %v6779 = vpack.c.b16 %v6509, %v6503
        %v6780 = vpack.c.b16 %v6510, %v6504
        %v6781 = vpack.c.b16 %v6517, %v6511
        %v6782 = vpack.c.b16 %v6518, %v6512
        %v6783 = vpack.c.b16 %v6519, %v6513
        %v6784 = vpack.c.b16 %v6520, %v6514
        %v6785 = vpack.c.b16 %v6521, %v6515
        %v6786 = vpack.c.b16 %v6522, %v6516
        %v6787 = vpack.c.b16 %v6529, %v6523
        %v6788 = vpack.c.b16 %v6530, %v6524
        %v6789 = vpack.c.b16 %v6531, %v6525
        %v6790 = vpack.c.b16 %v6532, %v6526
        %v6791 = vpack.c.b16 %v6533, %v6527
        %v6792 = vpack.c.b16 %v6534, %v6528
        %v6793 = vpack.c.b16 %v6541, %v6535
        %v6794 = vpack.c.b16 %v6542, %v6536
        %v6795 = vpack.c.b16 %v6543, %v6537
        %v6796 = vpack.c.b16 %v6544, %v6538
        %v6797 = vpack.c.b16 %v6545, %v6539
        %v6798 = vpack.c.b16 %v6546, %v6540
        %v6799 = vpack.c.b16 %v6553, %v6547
        %v6800 = vpack.c.b16 %v6554, %v6548
        %v6801 = vpack.c.b16 %v6555, %v6549
        %v6802 = vpack.c.b16 %v6556, %v6550
        %v6803 = vpack.c.b16 %v6557, %v6551
        %v6804 = vpack.c.b16 %v6558, %v6552
        %v6805 = vpack.c.b16 %v6565, %v6559
        %v6806 = vpack.c.b16 %v6566, %v6560
        %v6807 = vpack.c.b16 %v6567, %v6561
        %v6808 = vpack.c.b16 %v6568, %v6562
        %v6809 = vpack.c.b16 %v6569, %v6563
        %v6810 = vpack.c.b16 %v6570, %v6564
        %v6811 = vpack.c.b16 %v6577, %v6571
        %v6812 = vpack.c.b16 %v6578, %v6572
        %v6813 = vpack.c.b16 %v6579, %v6573
        %v6814 = vpack.c.b16 %v6580, %v6574
        %v6815 = vpack.c.b16 %v6581, %v6575
        %v6816 = vpack.c.b16 %v6582, %v6576
        %v6817 = vpack.c.b16 %v6589, %v6583
        %v6818 = vpack.c.b16 %v6590, %v6584
        %v6819 = vpack.c.b16 %v6591, %v6585
        %v6820 = vpack.c.b16 %v6592, %v6586
        %v6821 = vpack.c.b16 %v6593, %v6587
        %v6822 = vpack.c.b16 %v6594, %v6588
        %v6823 = vpack.c.b16 %v6601, %v6595
        %v6824 = vpack.c.b16 %v6602, %v6596
        %v6825 = vpack.c.b16 %v6603, %v6597
        %v6826 = vpack.c.b16 %v6604, %v6598
        %v6827 = vpack.c.b16 %v6605, %v6599
        %v6828 = vpack.c.b16 %v6606, %v6600
        %v6829 = vpack.c.b16 %v6613, %v6607
        %v6830 = vpack.c.b16 %v6614, %v6608
        %v6831 = vpack.c.b16 %v6615, %v6609
        %v6832 = vpack.c.b16 %v6616, %v6610
        %v6833 = vpack.c.b16 %v6617, %v6611
        %v6834 = vpack.c.b16 %v6618, %v6612
        %v6835 = vpack.c.b16 %v6625, %v6619
        %v6836 = vpack.c.b16 %v6626, %v6620
        %v6837 = vpack.c.b16 %v6627, %v6621
        %v6838 = vpack.c.b16 %v6628, %v6622
        %v6839 = vpack.c.b16 %v6629, %v6623
        %v6840 = vpack.c.b16 %v6630, %v6624
        %v6841 = vpack.c.b16 %v6637, %v6631
        %v6842 = vpack.c.b16 %v6638, %v6632
        %v6843 = vpack.c.b16 %v6639, %v6633
        %v6844 = vpack.c.b16 %v6640, %v6634
        %v6845 = vpack.c.b16 %v6641, %v6635
        %v6846 = vpack.c.b16 %v6642, %v6636
        %v6847 = vpack.c.b16 %v6649, %v6643
        %v6848 = vpack.c.b16 %v6650, %v6644
        %v6849 = vpack.c.b16 %v6651, %v6645
        %v6850 = vpack.c.b16 %v6652, %v6646
        %v6851 = vpack.c.b16 %v6653, %v6647
        %v6852 = vpack.c.b16 %v6654, %v6648
        %v6853 = vpack.c.b16 %v6661, %v6655
        %v6854 = vpack.c.b16 %v6662, %v6656
        %v6855 = vpack.c.b16 %v6663, %v6657
        %v6856 = vpack.c.b16 %v6664, %v6658
        %v6857 = vpack.c.b16 %v6665, %v6659
        %v6858 = vpack.c.b16 %v6666, %v6660
        %v6859 = vpack.c.b16 %v6673, %v6667
        %v6860 = vpack.c.b16 %v6674, %v6668
        %v6861 = vpack.c.b16 %v6675, %v6669
        %v6862 = vpack.c.b16 %v6676, %v6670
        %v6863 = vpack.c.b16 %v6677, %v6671
        %v6864 = vpack.c.b16 %v6678, %v6672
        %v6865 = vpack.c.b16 %v6685, %v6679
        %v6866 = vpack.c.b16 %v6686, %v6680
        %v6867 = vpack.c.b16 %v6687, %v6681
        %v6868 = vpack.c.b16 %v6688, %v6682
        %v6869 = vpack.c.b16 %v6689, %v6683
        %v6870 = vpack.c.b16 %v6690, %v6684
        %v6871 = vpack.c.b16 %v6697, %v6691
        %v6872 = vpack.c.b16 %v6698, %v6692
        %v6873 = vpack.c.b16 %v6699, %v6693
        %v6874 = vpack.c.b16 %v6700, %v6694
        %v6875 = vpack.c.b16 %v6701, %v6695
        %v6876 = vpack.c.b16 %v6702, %v6696
        %v6877 = vpack.c.b16 %v6709, %v6703
        %v6878 = vpack.c.b16 %v6710, %v6704
        %v6879 = vpack.c.b16 %v6711, %v6705
        %v6880 = vpack.c.b16 %v6712, %v6706
        %v6881 = vpack.c.b16 %v6713, %v6707
        %v6882 = vpack.c.b16 %v6714, %v6708
        %v6883 = vpack.c.b16 %v6721, %v6715
        %v6884 = vpack.c.b16 %v6722, %v6716
        %v6885 = vpack.c.b16 %v6723, %v6717
        %v6886 = vpack.c.b16 %v6724, %v6718
        %v6887 = vpack.c.b16 %v6725, %v6719
        %v6888 = vpack.c.b16 %v6726, %v6720
        %v6889 = vpack.c.b16 %v6733, %v6727
        %v6890 = vpack.c.b16 %v6734, %v6728
        %v6891 = vpack.c.b16 %v6735, %v6729
        %v6892 = vpack.c.b16 %v6736, %v6730
        %v6893 = vpack.c.b16 %v6737, %v6731
        %v6894 = vpack.c.b16 %v6738, %v6732
        %v7052 = vsel %vm2578, %v3089, 0
        %7054 = vmatprep.subr.bf16.mxu0 %v6740
        %7055 = vmatpush1.bf16.msra.mxu0 %v6739
        %7056 = vmatprep.subr.bf16.mxu0 %v6746
        %7057 = vmatpush1.bf16.msra.mxu0 %v6745
        %7058 = vmatprep.subr.bf16.mxu0 %v6752
        %7059 = vmatpush1.bf16.msra.mxu0 %v6751
        %7060 = vmatprep.subr.bf16.mxu0 %v6758
        %7061 = vmatpush1.bf16.msra.mxu0 %v6757
        %7062 = vmatprep.subr.bf16.mxu0 %v6764
        %7063 = vmatpush1.bf16.msra.mxu0 %v6763
        %7064 = vmatprep.subr.bf16.mxu0 %v6770
        %7065 = vmatpush1.bf16.msra.mxu0 %v6769
        %7066 = vmatprep.subr.bf16.mxu0 %v6776
        %7067 = vmatpush1.bf16.msra.mxu0 %v6775
        %7068 = vmatprep.subr.bf16.mxu0 %v6782
        %7069 = vmatpush1.bf16.msra.mxu0 %v6781
        %7070 = vmatprep.subr.bf16.mxu0 %v6788
        %7071 = vmatpush1.bf16.msra.mxu0 %v6787
        %7072 = vmatprep.subr.bf16.mxu0 %v6794
        %7073 = vmatpush1.bf16.msra.mxu0 %v6793
        %7074 = vmatprep.subr.bf16.mxu0 %v6800
        %7075 = vmatpush1.bf16.msra.mxu0 %v6799
        %7076 = vmatprep.subr.bf16.mxu0 %v6806
        %7077 = vmatpush1.bf16.msra.mxu0 %v6805
        %7078 = vmatprep.subr.bf16.mxu0 %v6812
        %7079 = vmatpush1.bf16.msra.mxu0 %v6811
        %7080 = vmatprep.subr.bf16.mxu0 %v6818
        %7081 = vmatpush1.bf16.msra.mxu0 %v6817
        %7082 = vmatprep.subr.bf16.mxu0 %v6824
        %7083 = vmatpush1.bf16.msra.mxu0 %v6823
        %7084 = vmatprep.subr.bf16.mxu0 %v6830
        %7085 = vmatpush1.bf16.msra.mxu0 %v6829
        %7086 = vmatprep.mubr.bf16.mxu0 %v3067
        %7087 = vmatmul.mubr.bf16.gmra.mrb[0].mxu0 %v3066
        %v7088 = vpop.f32.mrb[0].mxu0
        %v7089 = vadd.f32 0.0, %v7088
        %v7090 = vpop.f32.mrb[0].mxu0
        %v7091 = vadd.f32 0.0, %v7090
        %v7092 = vpop.f32.mrb[0].mxu0
        %v7093 = vadd.f32 0.0, %v7092
        %v7094 = vpop.f32.mrb[0].mxu0
        %v7095 = vadd.f32 0.0, %v7094
        %7096 = vmatprep.mubr.bf16.mxu0 %v3071
        %7097 = vmatmul.mubr.bf16.gmra.mrb[0].mxu0 %v3070
        %v7098 = vpop.f32.mrb[0].mxu0
        %v7099 = vadd.f32 0.0, %v7098
        %v7100 = vpop.f32.mrb[0].mxu0
        %v7101 = vadd.f32 0.0, %v7100
        %v7102 = vpop.f32.mrb[0].mxu0
        %v7103 = vadd.f32 0.0, %v7102
        %v7104 = vpop.f32.mrb[0].mxu0
        %v7105 = vadd.f32 0.0, %v7104
        %7106 = vmatprep.mubr.bf16.mxu0 %v3075
        %7107 = vmatmul.mubr.bf16.gmra.mrb[0].mxu0 %v3074
        %v7108 = vpop.f32.mrb[0].mxu0
        %v7109 = vadd.f32 0.0, %v7108
        %v7110 = vpop.f32.mrb[0].mxu0
        %v7111 = vadd.f32 0.0, %v7110
        %v7112 = vpop.f32.mrb[0].mxu0
        %v7113 = vadd.f32 0.0, %v7112
        %v7114 = vpop.f32.mrb[0].mxu0
        %v7115 = vadd.f32 0.0, %v7114
        %7116 = vmatprep.mubr.bf16.mxu0 %v3079
        %7117 = vmatmul.mubr.bf16.gmra.mrb[0].mxu0 %v3078
        %v7118 = vpop.f32.mrb[0].mxu0
        %v7119 = vadd.f32 0.0, %v7118
        %v7120 = vpop.f32.mrb[0].mxu0
        %v7121 = vadd.f32 0.0, %v7120
        %v7122 = vpop.f32.mrb[0].mxu0
        %v7123 = vadd.f32 0.0, %v7122
        %v7124 = vpop.f32.mrb[0].mxu0
        %v7125 = vadd.f32 0.0, %v7124
        %7126 = vmatprep.mubr.bf16.mxu0 %v3083
        %7127 = vmatmul.mubr.bf16.gmra.mrb[0].mxu0 %v3082
        %v7128 = vpop.f32.mrb[0].mxu0
        %v7129 = vadd.f32 0.0, %v7128
        %v7130 = vpop.f32.mrb[0].mxu0
        %v7131 = vadd.f32 0.0, %v7130
        %v7132 = vpop.f32.mrb[0].mxu0
        %v7133 = vadd.f32 0.0, %v7132
        %v7134 = vpop.f32.mrb[0].mxu0
        %v7135 = vadd.f32 0.0, %v7134
        %7136 = vmatprep.mubr.bf16.mxu0 %v3087
        %7137 = vmatmul.mubr.bf16.gmra.mrb[0].mxu0 %v3086
        %v7138 = vpop.f32.mrb[0].mxu0
        %v7139 = vpop.f32.mrb[0].mxu0
        %v7140 = vpop.f32.mrb[0].mxu0
        %v7141 = vpop.f32.mrb[0].mxu0
        %7142 = vdwg.mxu0
        %7143 = vmatprep.subr.bf16.mxu0 %v6836
        %7144 = vmatpush1.bf16.msra.mxu0 %v6835
        %7145 = vmatprep.subr.bf16.mxu0 %v6842
        %7146 = vmatpush1.bf16.msra.mxu0 %v6841
        %7147 = vmatprep.subr.bf16.mxu0 %v6848
        %7148 = vmatpush1.bf16.msra.mxu0 %v6847
        %7149 = vmatprep.subr.bf16.mxu0 %v6854
        %7150 = vmatpush1.bf16.msra.mxu0 %v6853
        %7151 = vmatprep.subr.bf16.mxu0 %v6860
        %7152 = vmatpush1.bf16.msra.mxu0 %v6859
        %7153 = vmatprep.subr.bf16.mxu0 %v6866
        %7154 = vmatpush1.bf16.msra.mxu0 %v6865
        %7155 = vmatprep.subr.bf16.mxu0 %v6872
        %7156 = vmatpush1.bf16.msra.mxu0 %v6871
        %7157 = vmatprep.subr.bf16.mxu0 %v6878
        %7158 = vmatpush1.bf16.msra.mxu0 %v6877
        %7159 = vmatprep.subr.bf16.mxu0 %v6884
        %7160 = vmatpush1.bf16.msra.mxu0 %v6883
        %7161 = vmatprep.subr.bf16.mxu0 %v6890
        %7162 = vmatpush1.bf16.msra.mxu0 %v6889
        %7163 = vmatprep.subr.bf16.mxu0 0
        %7164 = vmatpush1.bf16.msra.mxu0 0
        %7165 = vmatprep.subr.bf16.mxu0 0
        %7166 = vmatpush1.bf16.msra.mxu0 0
        %7167 = vmatprep.subr.bf16.mxu0 0
        %7168 = vmatpush1.bf16.msra.mxu0 0
        %7169 = vmatprep.subr.bf16.mxu0 0
        %7170 = vmatpush1.bf16.msra.mxu0 0
        %7171 = vmatprep.subr.bf16.mxu0 0
        %7172 = vmatpush1.bf16.msra.mxu0 0
        %7173 = vmatprep.subr.bf16.mxu0 0
        %7174 = vmatpush1.bf16.msra.mxu0 0
        %7175 = vmatprep.mubr.bf16.mxu0 %v5586
        %7176 = vmatmul.mubr.bf16.gmra.mrb[0].mxu0 %v3068
        %v7177 = vpop.f32.mrb[0].mxu0
        %v7178 = vadd.f32 %v7089, %v7177
        %v7179 = vpop.f32.mrb[0].mxu0
        %v7180 = vadd.f32 %v7091, %v7179
        %v7181 = vpop.f32.mrb[0].mxu0
        %v7182 = vadd.f32 %v7093, %v7181
        %v7183 = vpop.f32.mrb[0].mxu0
        %v7184 = vadd.f32 %v7095, %v7183
        %7185 = vmatprep.mubr.bf16.mxu0 %v5589
        %7186 = vmatmul.mubr.bf16.gmra.mrb[0].mxu0 %v3072
        %v7187 = vpop.f32.mrb[0].mxu0
        %v7188 = vadd.f32 %v7099, %v7187
        %v7189 = vpop.f32.mrb[0].mxu0
        %v7190 = vadd.f32 %v7101, %v7189
        %v7191 = vpop.f32.mrb[0].mxu0
        %v7192 = vadd.f32 %v7103, %v7191
        %v7193 = vpop.f32.mrb[0].mxu0
        %v7194 = vadd.f32 %v7105, %v7193
        %7195 = vmatprep.mubr.bf16.mxu0 %v5592
        %7196 = vmatmul.mubr.bf16.gmra.mrb[0].mxu0 %v3076
        %v7197 = vpop.f32.mrb[0].mxu0
        %v7198 = vadd.f32 %v7109, %v7197
        %v7199 = vpop.f32.mrb[0].mxu0
        %v7200 = vadd.f32 %v7111, %v7199
        %v7201 = vpop.f32.mrb[0].mxu0
        %v7202 = vadd.f32 %v7113, %v7201
        %v7203 = vpop.f32.mrb[0].mxu0
        %v7204 = vadd.f32 %v7115, %v7203
        %7205 = vmatprep.mubr.bf16.mxu0 %v5595
        %7206 = vmatmul.mubr.bf16.gmra.mrb[0].mxu0 %v3080
        %v7207 = vpop.f32.mrb[0].mxu0
        %v7208 = vadd.f32 %v7119, %v7207
        %v7209 = vpop.f32.mrb[0].mxu0
        %v7210 = vadd.f32 %v7121, %v7209
        %v7211 = vpop.f32.mrb[0].mxu0
        %v7212 = vadd.f32 %v7123, %v7211
        %v7213 = vpop.f32.mrb[0].mxu0
        %v7214 = vadd.f32 %v7125, %v7213
        %7215 = vmatprep.mubr.bf16.mxu0 %v5598
        %7216 = vmatmul.mubr.bf16.gmra.mrb[0].mxu0 %v3084
        %v7217 = vpop.f32.mrb[0].mxu0
        %v7218 = vadd.f32 %v7129, %v7217
        %v7219 = vpop.f32.mrb[0].mxu0
        %v7220 = vadd.f32 %v7131, %v7219
        %v7221 = vpop.f32.mrb[0].mxu0
        %v7222 = vadd.f32 %v7133, %v7221
        %v7223 = vpop.f32.mrb[0].mxu0
        %v7224 = vadd.f32 %v7135, %v7223
        %7225 = vmatprep.mubr.bf16.mxu0 %v7052
        %7226 = vmatmul.mubr.bf16.gmra.mrb[0].mxu0 %v3088
        %v7227 = vpop.f32.mrb[0].mxu0
        %v7228 = vpop.f32.mrb[0].mxu0
        %v7229 = vpop.f32.mrb[0].mxu0
        %v7230 = vpop.f32.mrb[0].mxu0
        %7231 = vdwg.mxu0
        %7232 = vmatprep.subr.bf16.mxu0 %v6742
        %7233 = vmatpush1.bf16.msra.mxu0 %v6741
        %7234 = vmatprep.subr.bf16.mxu0 %v6748
        %7235 = vmatpush1.bf16.msra.mxu0 %v6747
        %7236 = vmatprep.subr.bf16.mxu0 %v6754
        %7237 = vmatpush1.bf16.msra.mxu0 %v6753
        %7238 = vmatprep.subr.bf16.mxu0 %v6760
        %7239 = vmatpush1.bf16.msra.mxu0 %v6759
        %7240 = vmatprep.subr.bf16.mxu0 %v6766
        %7241 = vmatpush1.bf16.msra.mxu0 %v6765
        %7242 = vmatprep.subr.bf16.mxu0 %v6772
        %7243 = vmatpush1.bf16.msra.mxu0 %v6771
        %7244 = vmatprep.subr.bf16.mxu0 %v6778
        %7245 = vmatpush1.bf16.msra.mxu0 %v6777
        %7246 = vmatprep.subr.bf16.mxu0 %v6784
        %7247 = vmatpush1.bf16.msra.mxu0 %v6783
        %7248 = vmatprep.subr.bf16.mxu0 %v6790
        %7249 = vmatpush1.bf16.msra.mxu0 %v6789
        %7250 = vmatprep.subr.bf16.mxu0 %v6796
        %7251 = vmatpush1.bf16.msra.mxu0 %v6795
        %7252 = vmatprep.subr.bf16.mxu0 %v6802
        %7253 = vmatpush1.bf16.msra.mxu0 %v6801
        %7254 = vmatprep.subr.bf16.mxu0 %v6808
        %7255 = vmatpush1.bf16.msra.mxu0 %v6807
        %7256 = vmatprep.subr.bf16.mxu0 %v6814
        %7257 = vmatpush1.bf16.msra.mxu0 %v6813
        %7258 = vmatprep.subr.bf16.mxu0 %v6820
        %7259 = vmatpush1.bf16.msra.mxu0 %v6819
        %7260 = vmatprep.subr.bf16.mxu0 %v6826
        %7261 = vmatpush1.bf16.msra.mxu0 %v6825
        %7262 = vmatprep.subr.bf16.mxu0 %v6832
        %7263 = vmatpush1.bf16.msra.mxu0 %v6831
        %7264 = vmatprep.mubr.bf16.mxu0 %v3067
        %7265 = vmatmul.mubr.bf16.gmra.mrb[0].mxu0 %v3066
        %v7266 = vpop.f32.mrb[0].mxu0
        %v7267 = vadd.f32 0.0, %v7266
        %v7268 = vpop.f32.mrb[0].mxu0
        %v7269 = vadd.f32 0.0, %v7268
        %v7270 = vpop.f32.mrb[0].mxu0
        %v7271 = vadd.f32 0.0, %v7270
        %v7272 = vpop.f32.mrb[0].mxu0
        %v7273 = vadd.f32 0.0, %v7272
        %7274 = vmatprep.mubr.bf16.mxu0 %v3071
        %7275 = vmatmul.mubr.bf16.gmra.mrb[0].mxu0 %v3070
        %v7276 = vpop.f32.mrb[0].mxu0
        %v7277 = vadd.f32 0.0, %v7276
        %v7278 = vpop.f32.mrb[0].mxu0
        %v7279 = vadd.f32 0.0, %v7278
        %v7280 = vpop.f32.mrb[0].mxu0
        %v7281 = vadd.f32 0.0, %v7280
        %v7282 = vpop.f32.mrb[0].mxu0
        %v7283 = vadd.f32 0.0, %v7282
        %7284 = vmatprep.mubr.bf16.mxu0 %v3075
        %7285 = vmatmul.mubr.bf16.gmra.mrb[0].mxu0 %v3074
        %v7286 = vpop.f32.mrb[0].mxu0
        %v7287 = vadd.f32 0.0, %v7286
        %v7288 = vpop.f32.mrb[0].mxu0
        %v7289 = vadd.f32 0.0, %v7288
        %v7290 = vpop.f32.mrb[0].mxu0
        %v7291 = vadd.f32 0.0, %v7290
        %v7292 = vpop.f32.mrb[0].mxu0
        %v7293 = vadd.f32 0.0, %v7292
        %7294 = vmatprep.mubr.bf16.mxu0 %v3079
        %7295 = vmatmul.mubr.bf16.gmra.mrb[0].mxu0 %v3078
        %v7296 = vpop.f32.mrb[0].mxu0
        %v7297 = vadd.f32 0.0, %v7296
        %v7298 = vpop.f32.mrb[0].mxu0
        %v7299 = vadd.f32 0.0, %v7298
        %v7300 = vpop.f32.mrb[0].mxu0
        %v7301 = vadd.f32 0.0, %v7300
        %v7302 = vpop.f32.mrb[0].mxu0
        %v7303 = vadd.f32 0.0, %v7302
        %7304 = vmatprep.mubr.bf16.mxu0 %v3083
        %7305 = vmatmul.mubr.bf16.gmra.mrb[0].mxu0 %v3082
        %v7306 = vpop.f32.mrb[0].mxu0
        %v7307 = vadd.f32 0.0, %v7306
        %v7308 = vpop.f32.mrb[0].mxu0
        %v7309 = vadd.f32 0.0, %v7308
        %v7310 = vpop.f32.mrb[0].mxu0
        %v7311 = vadd.f32 0.0, %v7310
        %v7312 = vpop.f32.mrb[0].mxu0
        %v7313 = vadd.f32 0.0, %v7312
        %7314 = vmatprep.mubr.bf16.mxu0 %v3087
        %7315 = vmatmul.mubr.bf16.gmra.mrb[0].mxu0 %v3086
        %v7316 = vpop.f32.mrb[0].mxu0
        %v7317 = vpop.f32.mrb[0].mxu0
        %v7318 = vpop.f32.mrb[0].mxu0
        %v7319 = vpop.f32.mrb[0].mxu0
        %7320 = vdwg.mxu0
        %7321 = vmatprep.subr.bf16.mxu0 %v6838
        %7322 = vmatpush1.bf16.msra.mxu0 %v6837
        %7323 = vmatprep.subr.bf16.mxu0 %v6844
        %7324 = vmatpush1.bf16.msra.mxu0 %v6843
        %7325 = vmatprep.subr.bf16.mxu0 %v6850
        %7326 = vmatpush1.bf16.msra.mxu0 %v6849
        %7327 = vmatprep.subr.bf16.mxu0 %v6856
        %7328 = vmatpush1.bf16.msra.mxu0 %v6855
        %7329 = vmatprep.subr.bf16.mxu0 %v6862
        %7330 = vmatpush1.bf16.msra.mxu0 %v6861
        %7331 = vmatprep.subr.bf16.mxu0 %v6868
        %7332 = vmatpush1.bf16.msra.mxu0 %v6867
        %7333 = vmatprep.subr.bf16.mxu0 %v6874
        %7334 = vmatpush1.bf16.msra.mxu0 %v6873
        %7335 = vmatprep.subr.bf16.mxu0 %v6880
        %7336 = vmatpush1.bf16.msra.mxu0 %v6879
        %7337 = vmatprep.subr.bf16.mxu0 %v6886
        %7338 = vmatpush1.bf16.msra.mxu0 %v6885
        %7339 = vmatprep.subr.bf16.mxu0 %v6892
        %7340 = vmatpush1.bf16.msra.mxu0 %v6891
        %7341 = vmatprep.subr.bf16.mxu0 0
        %7342 = vmatpush1.bf16.msra.mxu0 0
        %7343 = vmatprep.subr.bf16.mxu0 0
        %7344 = vmatpush1.bf16.msra.mxu0 0
        %7345 = vmatprep.subr.bf16.mxu0 0
        %7346 = vmatpush1.bf16.msra.mxu0 0
        %7347 = vmatprep.subr.bf16.mxu0 0
        %7348 = vmatpush1.bf16.msra.mxu0 0
        %7349 = vmatprep.subr.bf16.mxu0 0
        %7350 = vmatpush1.bf16.msra.mxu0 0
        %7351 = vmatprep.subr.bf16.mxu0 0
        %7352 = vmatpush1.bf16.msra.mxu0 0
        %7353 = vmatprep.mubr.bf16.mxu0 %v5586
        %7354 = vmatmul.mubr.bf16.gmra.mrb[0].mxu0 %v3068
        %v7355 = vpop.f32.mrb[0].mxu0
        %v7356 = vadd.f32 %v7267, %v7355
        %v7357 = vpop.f32.mrb[0].mxu0
        %v7358 = vadd.f32 %v7269, %v7357
        %v7359 = vpop.f32.mrb[0].mxu0
        %v7360 = vadd.f32 %v7271, %v7359
        %v7361 = vpop.f32.mrb[0].mxu0
        %v7362 = vadd.f32 %v7273, %v7361
        %7363 = vmatprep.mubr.bf16.mxu0 %v5589
        %7364 = vmatmul.mubr.bf16.gmra.mrb[0].mxu0 %v3072
        %v7365 = vpop.f32.mrb[0].mxu0
        %v7366 = vadd.f32 %v7277, %v7365
        %v7367 = vpop.f32.mrb[0].mxu0
        %v7368 = vadd.f32 %v7279, %v7367
        %v7369 = vpop.f32.mrb[0].mxu0
        %v7370 = vadd.f32 %v7281, %v7369
        %v7371 = vpop.f32.mrb[0].mxu0
        %v7372 = vadd.f32 %v7283, %v7371
        %7373 = vmatprep.mubr.bf16.mxu0 %v5592
        %7374 = vmatmul.mubr.bf16.gmra.mrb[0].mxu0 %v3076
        %v7375 = vpop.f32.mrb[0].mxu0
        %v7376 = vadd.f32 %v7287, %v7375
        %v7377 = vpop.f32.mrb[0].mxu0
        %v7378 = vadd.f32 %v7289, %v7377
        %v7379 = vpop.f32.mrb[0].mxu0
        %v7380 = vadd.f32 %v7291, %v7379
        %v7381 = vpop.f32.mrb[0].mxu0
        %v7382 = vadd.f32 %v7293, %v7381
        %7383 = vmatprep.mubr.bf16.mxu0 %v5595
        %7384 = vmatmul.mubr.bf16.gmra.mrb[0].mxu0 %v3080
        %v7385 = vpop.f32.mrb[0].mxu0
        %v7386 = vadd.f32 %v7297, %v7385
        %v7387 = vpop.f32.mrb[0].mxu0
        %v7388 = vadd.f32 %v7299, %v7387
        %v7389 = vpop.f32.mrb[0].mxu0
        %v7390 = vadd.f32 %v7301, %v7389
        %v7391 = vpop.f32.mrb[0].mxu0
        %v7392 = vadd.f32 %v7303, %v7391
        %7393 = vmatprep.mubr.bf16.mxu0 %v5598
        %7394 = vmatmul.mubr.bf16.gmra.mrb[0].mxu0 %v3084
        %v7395 = vpop.f32.mrb[0].mxu0
        %v7396 = vadd.f32 %v7307, %v7395
        %v7397 = vpop.f32.mrb[0].mxu0
        %v7398 = vadd.f32 %v7309, %v7397
        %v7399 = vpop.f32.mrb[0].mxu0
        %v7400 = vadd.f32 %v7311, %v7399
        %v7401 = vpop.f32.mrb[0].mxu0
        %v7402 = vadd.f32 %v7313, %v7401
        %7403 = vmatprep.mubr.bf16.mxu0 %v7052
        %7404 = vmatmul.mubr.bf16.gmra.mrb[0].mxu0 %v3088
        %v7405 = vpop.f32.mrb[0].mxu0
        %v7406 = vpop.f32.mrb[0].mxu0
        %v7407 = vpop.f32.mrb[0].mxu0
        %v7408 = vpop.f32.mrb[0].mxu0
        %7409 = vdwg.mxu0
        %7410 = vmatprep.subr.bf16.mxu0 %v6744
        %7411 = vmatpush1.bf16.msra.mxu0 %v6743
        %7412 = vmatprep.subr.bf16.mxu0 %v6750
        %7413 = vmatpush1.bf16.msra.mxu0 %v6749
        %7414 = vmatprep.subr.bf16.mxu0 %v6756
        %7415 = vmatpush1.bf16.msra.mxu0 %v6755
        %7416 = vmatprep.subr.bf16.mxu0 %v6762
        %7417 = vmatpush1.bf16.msra.mxu0 %v6761
        %7418 = vmatprep.subr.bf16.mxu0 %v6768
        %7419 = vmatpush1.bf16.msra.mxu0 %v6767
        %7420 = vmatprep.subr.bf16.mxu0 %v6774
        %7421 = vmatpush1.bf16.msra.mxu0 %v6773
        %7422 = vmatprep.subr.bf16.mxu0 %v6780
        %7423 = vmatpush1.bf16.msra.mxu0 %v6779
        %7424 = vmatprep.subr.bf16.mxu0 %v6786
        %7425 = vmatpush1.bf16.msra.mxu0 %v6785
        %7426 = vmatprep.subr.bf16.mxu0 %v6792
        %7427 = vmatpush1.bf16.msra.mxu0 %v6791
        %7428 = vmatprep.subr.bf16.mxu0 %v6798
        %7429 = vmatpush1.bf16.msra.mxu0 %v6797
        %7430 = vmatprep.subr.bf16.mxu0 %v6804
        %7431 = vmatpush1.bf16.msra.mxu0 %v6803
        %7432 = vmatprep.subr.bf16.mxu0 %v6810
        %7433 = vmatpush1.bf16.msra.mxu0 %v6809
        %7434 = vmatprep.subr.bf16.mxu0 %v6816
        %7435 = vmatpush1.bf16.msra.mxu0 %v6815
        %7436 = vmatprep.subr.bf16.mxu0 %v6822
        %7437 = vmatpush1.bf16.msra.mxu0 %v6821
        %7438 = vmatprep.subr.bf16.mxu0 %v6828
        %7439 = vmatpush1.bf16.msra.mxu0 %v6827
        %7440 = vmatprep.subr.bf16.mxu0 %v6834
        %7441 = vmatpush1.bf16.msra.mxu0 %v6833
        %7442 = vmatprep.mubr.bf16.mxu0 %v3067
        %7443 = vmatmul.mubr.bf16.gmra.mrb[0].mxu0 %v3066
        %v7444 = vpop.f32.mrb[0].mxu0
        %v7445 = vadd.f32 0.0, %v7444
        %v7446 = vpop.f32.mrb[0].mxu0
        %v7447 = vpop.f32.mrb[0].mxu0
        %v7448 = vadd.f32 0.0, %v7447
        %v7449 = vpop.f32.mrb[0].mxu0
        %7450 = vmatprep.mubr.bf16.mxu0 %v3071
        %7451 = vmatmul.mubr.bf16.gmra.mrb[0].mxu0 %v3070
        %v7452 = vpop.f32.mrb[0].mxu0
        %v7453 = vadd.f32 0.0, %v7452
        %v7454 = vpop.f32.mrb[0].mxu0
        %v7455 = vpop.f32.mrb[0].mxu0
        %v7456 = vadd.f32 0.0, %v7455
        %v7457 = vpop.f32.mrb[0].mxu0
        %7458 = vmatprep.mubr.bf16.mxu0 %v3075
        %7459 = vmatmul.mubr.bf16.gmra.mrb[0].mxu0 %v3074
        %v7460 = vpop.f32.mrb[0].mxu0
        %v7461 = vadd.f32 0.0, %v7460
        %v7462 = vpop.f32.mrb[0].mxu0
        %v7463 = vpop.f32.mrb[0].mxu0
        %v7464 = vadd.f32 0.0, %v7463
        %v7465 = vpop.f32.mrb[0].mxu0
        %7466 = vmatprep.mubr.bf16.mxu0 %v3079
        %7467 = vmatmul.mubr.bf16.gmra.mrb[0].mxu0 %v3078
        %v7468 = vpop.f32.mrb[0].mxu0
        %v7469 = vadd.f32 0.0, %v7468
        %v7470 = vpop.f32.mrb[0].mxu0
        %v7471 = vpop.f32.mrb[0].mxu0
        %v7472 = vadd.f32 0.0, %v7471
        %v7473 = vpop.f32.mrb[0].mxu0
        %7474 = vmatprep.mubr.bf16.mxu0 %v3083
        %7475 = vmatmul.mubr.bf16.gmra.mrb[0].mxu0 %v3082
        %v7476 = vpop.f32.mrb[0].mxu0
        %v7477 = vadd.f32 0.0, %v7476
        %v7478 = vpop.f32.mrb[0].mxu0
        %v7479 = vpop.f32.mrb[0].mxu0
        %v7480 = vadd.f32 0.0, %v7479
        %v7481 = vpop.f32.mrb[0].mxu0
        %7482 = vmatprep.mubr.bf16.mxu0 %v3087
        %7483 = vmatmul.mubr.bf16.gmra.mrb[0].mxu0 %v3086
        %v7484 = vpop.f32.mrb[0].mxu0
        %v7485 = vpop.f32.mrb[0].mxu0
        %v7486 = vpop.f32.mrb[0].mxu0
        %v7487 = vpop.f32.mrb[0].mxu0
        %7488 = vdwg.mxu0
        %7489 = vmatprep.subr.bf16.mxu0 %v6840
        %7490 = vmatpush1.bf16.msra.mxu0 %v6839
        %7491 = vmatprep.subr.bf16.mxu0 %v6846
        %7492 = vmatpush1.bf16.msra.mxu0 %v6845
        %7493 = vmatprep.subr.bf16.mxu0 %v6852
        %7494 = vmatpush1.bf16.msra.mxu0 %v6851
        %7495 = vmatprep.subr.bf16.mxu0 %v6858
        %7496 = vmatpush1.bf16.msra.mxu0 %v6857
        %7497 = vmatprep.subr.bf16.mxu0 %v6864
        %7498 = vmatpush1.bf16.msra.mxu0 %v6863
        %7499 = vmatprep.subr.bf16.mxu0 %v6870
        %7500 = vmatpush1.bf16.msra.mxu0 %v6869
        %7501 = vmatprep.subr.bf16.mxu0 %v6876
        %7502 = vmatpush1.bf16.msra.mxu0 %v6875
        %7503 = vmatprep.subr.bf16.mxu0 %v6882
        %7504 = vmatpush1.bf16.msra.mxu0 %v6881
        %7505 = vmatprep.subr.bf16.mxu0 %v6888
        %7506 = vmatpush1.bf16.msra.mxu0 %v6887
        %7507 = vmatprep.subr.bf16.mxu0 %v6894
        %7508 = vmatpush1.bf16.msra.mxu0 %v6893
        %7509 = vmatprep.subr.bf16.mxu0 0
        %7510 = vmatpush1.bf16.msra.mxu0 0
        %7511 = vmatprep.subr.bf16.mxu0 0
        %7512 = vmatpush1.bf16.msra.mxu0 0
        %7513 = vmatprep.subr.bf16.mxu0 0
        %7514 = vmatpush1.bf16.msra.mxu0 0
        %7515 = vmatprep.subr.bf16.mxu0 0
        %7516 = vmatpush1.bf16.msra.mxu0 0
        %7517 = vmatprep.subr.bf16.mxu0 0
        %7518 = vmatpush1.bf16.msra.mxu0 0
        %7519 = vmatprep.subr.bf16.mxu0 0
        %7520 = vmatpush1.bf16.msra.mxu0 0
        %7521 = vmatprep.mubr.bf16.mxu0 %v5586
        %7522 = vmatmul.mubr.bf16.gmra.mrb[0].mxu0 %v3068
        %v7523 = vpop.f32.mrb[0].mxu0
        %v7524 = vadd.f32 %v7445, %v7523
        %v7525 = vpop.f32.mrb[0].mxu0
        %v7526 = vpop.f32.mrb[0].mxu0
        %v7527 = vadd.f32 %v7448, %v7526
        %v7528 = vpop.f32.mrb[0].mxu0
        %7529 = vmatprep.mubr.bf16.mxu0 %v5589
        %7530 = vmatmul.mubr.bf16.gmra.mrb[0].mxu0 %v3072
        %v7531 = vpop.f32.mrb[0].mxu0
        %v7532 = vadd.f32 %v7453, %v7531
        %v7533 = vpop.f32.mrb[0].mxu0
        %v7534 = vpop.f32.mrb[0].mxu0
        %v7535 = vadd.f32 %v7456, %v7534
        %v7536 = vpop.f32.mrb[0].mxu0
        %7537 = vmatprep.mubr.bf16.mxu0 %v5592
        %7538 = vmatmul.mubr.bf16.gmra.mrb[0].mxu0 %v3076
        %v7539 = vpop.f32.mrb[0].mxu0
        %v7540 = vadd.f32 %v7461, %v7539
        %v7541 = vpop.f32.mrb[0].mxu0
        %v7542 = vpop.f32.mrb[0].mxu0
        %v7543 = vadd.f32 %v7464, %v7542
        %v7544 = vpop.f32.mrb[0].mxu0
        %7545 = vmatprep.mubr.bf16.mxu0 %v5595
        %7546 = vmatmul.mubr.bf16.gmra.mrb[0].mxu0 %v3080
        %v7547 = vpop.f32.mrb[0].mxu0
        %v7548 = vadd.f32 %v7469, %v7547
        %v7549 = vpop.f32.mrb[0].mxu0
        %v7550 = vpop.f32.mrb[0].mxu0
        %v7551 = vadd.f32 %v7472, %v7550
        %v7552 = vpop.f32.mrb[0].mxu0
        %7553 = vmatprep.mubr.bf16.mxu0 %v5598
        %7554 = vmatmul.mubr.bf16.gmra.mrb[0].mxu0 %v3084
        %v7555 = vpop.f32.mrb[0].mxu0
        %v7556 = vadd.f32 %v7477, %v7555
        %v7557 = vpop.f32.mrb[0].mxu0
        %v7558 = vpop.f32.mrb[0].mxu0
        %v7559 = vadd.f32 %v7480, %v7558
        %v7560 = vpop.f32.mrb[0].mxu0
        %7561 = vmatprep.mubr.bf16.mxu0 %v7052
        %7562 = vmatmul.mubr.bf16.gmra.mrb[0].mxu0 %v3088
        %v7563 = vpop.f32.mrb[0].mxu0
        %v7564 = vpop.f32.mrb[0].mxu0
        %v7565 = vpop.f32.mrb[0].mxu0
        %v7566 = vpop.f32.mrb[0].mxu0
        %7567 = vdwg.mxu0
        %v7568 = vadd.f32 %v5724, %v7178
        %v7569 = vadd.f32 %v5726, %v7180
        %v7570 = vadd.f32 %v5902, %v7356
        %v7571 = vadd.f32 %v5904, %v7358
        %v7572 = vadd.f32 %v6070, %v7524
        %v7573 = vadd.f32 %v5728, %v7182
        %v7574 = vadd.f32 %v5730, %v7184
        %v7575 = vadd.f32 %v5906, %v7360
        %v7576 = vadd.f32 %v5908, %v7362
        %v7577 = vadd.f32 %v6073, %v7527
        %v7578 = vadd.f32 %v5734, %v7188
        %v7579 = vadd.f32 %v5736, %v7190
        %v7580 = vadd.f32 %v5912, %v7366
        %v7581 = vadd.f32 %v5914, %v7368
        %v7582 = vadd.f32 %v6078, %v7532
        %v7583 = vadd.f32 %v5738, %v7192
        %v7584 = vadd.f32 %v5740, %v7194
        %v7585 = vadd.f32 %v5916, %v7370
        %v7586 = vadd.f32 %v5918, %v7372
        %v7587 = vadd.f32 %v6081, %v7535
        %v7588 = vadd.f32 %v5744, %v7198
        %v7589 = vadd.f32 %v5746, %v7200
        %v7590 = vadd.f32 %v5922, %v7376
        %v7591 = vadd.f32 %v5924, %v7378
        %v7592 = vadd.f32 %v6086, %v7540
        %v7593 = vadd.f32 %v5748, %v7202
        %v7594 = vadd.f32 %v5750, %v7204
        %v7595 = vadd.f32 %v5926, %v7380
        %v7596 = vadd.f32 %v5928, %v7382
        %v7597 = vadd.f32 %v6089, %v7543
        %v7598 = vadd.f32 %v5754, %v7208
        %v7599 = vadd.f32 %v5756, %v7210
        %v7600 = vadd.f32 %v5932, %v7386
        %v7601 = vadd.f32 %v5934, %v7388
        %v7602 = vadd.f32 %v6094, %v7548
        %v7603 = vadd.f32 %v5758, %v7212
        %v7604 = vadd.f32 %v5760, %v7214
        %v7605 = vadd.f32 %v5936, %v7390
        %v7606 = vadd.f32 %v5938, %v7392
        %v7607 = vadd.f32 %v6097, %v7551
        %v7608 = vadd.f32 %v5764, %v7218
        %v7609 = vadd.f32 %v5766, %v7220
        %v7610 = vadd.f32 %v5942, %v7396
        %v7611 = vadd.f32 %v5944, %v7398
        %v7612 = vadd.f32 %v6102, %v7556
        %v7613 = vadd.f32 %v5768, %v7222
        %v7614 = vadd.f32 %v5770, %v7224
        %v7615 = vadd.f32 %v5946, %v7400
        %v7616 = vadd.f32 %v5948, %v7402
        %v7617 = vadd.f32 %v6105, %v7559
        %v7618 = vld [vmem:[#allocation10] sm:$0x3f]
        %v7620 = vlaneseq
        %v7621 = vshrl.u32 %v7620, 7
        %v7622 = vsub.s32 0, %v7621
        %v7623 = vrot.slane %v7618, %v7622
        %v7624 = vlaneseq
        %v7625 = vshrl.u32 %v7624, 7
        %v7626 = vsub.s32 1, %v7625
        %v7627 = vrot.slane %v7618, %v7626
        %v7628 = vlaneseq
        %v7629 = vshrl.u32 %v7628, 7
        %v7630 = vsub.s32 2, %v7629
        %v7631 = vrot.slane %v7618, %v7630
        %v7632 = vlaneseq
        %v7633 = vshrl.u32 %v7632, 7
        %v7634 = vsub.s32 3, %v7633
        %v7635 = vrot.slane %v7618, %v7634
        %v7636 = vlaneseq
        %v7637 = vshrl.u32 %v7636, 7
        %v7638 = vsub.s32 4, %v7637
        %v7639 = vrot.slane %v7618, %v7638
        %v7645 = vadd.f32 %v7568, %v7623
        %v7646 = vadd.f32 %v7569, %v7627
        %v7647 = vadd.f32 %v7570, %v7631
        %v7648 = vadd.f32 %v7571, %v7635
        %v7649 = vadd.f32 %v7572, %v7639
        %v7650 = vadd.f32 %v7573, %v7623
        %v7651 = vadd.f32 %v7574, %v7627
        %v7652 = vadd.f32 %v7575, %v7631
        %v7653 = vadd.f32 %v7576, %v7635
        %v7654 = vadd.f32 %v7577, %v7639
        %v7655 = vadd.f32 %v7578, %v7623
        %v7656 = vadd.f32 %v7579, %v7627
        %v7657 = vadd.f32 %v7580, %v7631
        %v7658 = vadd.f32 %v7581, %v7635
        %v7659 = vadd.f32 %v7582, %v7639
        %v7660 = vadd.f32 %v7583, %v7623
        %v7661 = vadd.f32 %v7584, %v7627
        %v7662 = vadd.f32 %v7585, %v7631
        %v7663 = vadd.f32 %v7586, %v7635
        %v7664 = vadd.f32 %v7587, %v7639
        %v7665 = vadd.f32 %v7588, %v7623
        %v7666 = vadd.f32 %v7589, %v7627
        %v7667 = vadd.f32 %v7590, %v7631
        %v7668 = vadd.f32 %v7591, %v7635
        %v7669 = vadd.f32 %v7592, %v7639
        %v7670 = vadd.f32 %v7593, %v7623
        %v7671 = vadd.f32 %v7594, %v7627
        %v7672 = vadd.f32 %v7595, %v7631
        %v7673 = vadd.f32 %v7596, %v7635
        %v7674 = vadd.f32 %v7597, %v7639
        %v7675 = vadd.f32 %v7598, %v7623
        %v7676 = vadd.f32 %v7599, %v7627
        %v7677 = vadd.f32 %v7600, %v7631
        %v7678 = vadd.f32 %v7601, %v7635
        %v7679 = vadd.f32 %v7602, %v7639
        %v7680 = vadd.f32 %v7603, %v7623
        %v7681 = vadd.f32 %v7604, %v7627
        %v7682 = vadd.f32 %v7605, %v7631
        %v7683 = vadd.f32 %v7606, %v7635
        %v7684 = vadd.f32 %v7607, %v7639
        %v7685 = vadd.f32 %v7608, %v7623
        %v7686 = vadd.f32 %v7609, %v7627
        %v7687 = vadd.f32 %v7610, %v7631
        %v7688 = vadd.f32 %v7611, %v7635
        %v7689 = vadd.f32 %v7612, %v7639
        %v7690 = vadd.f32 %v7613, %v7623
        %v7691 = vadd.f32 %v7614, %v7627
        %v7692 = vadd.f32 %v7615, %v7631
        %v7693 = vadd.f32 %v7616, %v7635
        %v7694 = vadd.f32 %v7617, %v7639
        %v7695 = vmax.f32 %v7645, %v7650
        %v7696 = vmax.f32 %v7646, %v7651
        %v7697 = vmax.f32 %v7647, %v7652
        %v7698 = vmax.f32 %v7648, %v7653
        %v7699 = vmax.f32 %v7649, %v7654
        %v7700 = vmax.f32 %v7655, %v7660
        %v7701 = vmax.f32 %v7656, %v7661
        %v7702 = vmax.f32 %v7657, %v7662
        %v7703 = vmax.f32 %v7658, %v7663
        %v7704 = vmax.f32 %v7659, %v7664
        %v7705 = vmax.f32 %v7665, %v7670
        %v7706 = vmax.f32 %v7666, %v7671
        %v7707 = vmax.f32 %v7667, %v7672
        %v7708 = vmax.f32 %v7668, %v7673
        %v7709 = vmax.f32 %v7669, %v7674
        %v7710 = vmax.f32 %v7675, %v7680
        %v7711 = vmax.f32 %v7676, %v7681
        %v7712 = vmax.f32 %v7677, %v7682
        %v7713 = vmax.f32 %v7678, %v7683
        %v7714 = vmax.f32 %v7679, %v7684
        %v7715 = vmax.f32 %v7685, %v7690
        %v7716 = vmax.f32 %v7686, %v7691
        %v7717 = vmax.f32 %v7687, %v7692
        %v7718 = vmax.f32 %v7688, %v7693
        %v7719 = vmax.f32 %v7689, %v7694
        %7725 = vrot.lane.b32.xlu0 %v7695, 64
        %v7726 = vpop.permute.xlu0 %7725
        %7727 = vrot.lane.b32.xlu0 %v7700, 64
        %v7728 = vpop.permute.xlu0 %7727
        %7729 = vrot.lane.b32.xlu0 %v7705, 64
        %v7730 = vpop.permute.xlu0 %7729
        %7731 = vrot.lane.b32.xlu0 %v7710, 64
        %v7732 = vpop.permute.xlu0 %7731
        %7733 = vrot.lane.b32.xlu0 %v7715, 64
        %v7734 = vpop.permute.xlu0 %7733
        %v7740 = vmax.f32 %v7695, %v7726
        %v7741 = vmax.f32 %v7700, %v7728
        %v7742 = vmax.f32 %v7705, %v7730
        %v7743 = vmax.f32 %v7710, %v7732
        %v7744 = vmax.f32 %v7715, %v7734
        %7750 = vrot.lane.b32.xlu0 %v7696, 64
        %v7751 = vpop.permute.xlu0 %7750
        %7752 = vrot.lane.b32.xlu0 %v7701, 64
        %v7753 = vpop.permute.xlu0 %7752
        %7754 = vrot.lane.b32.xlu0 %v7706, 64
        %v7755 = vpop.permute.xlu0 %7754
        %7756 = vrot.lane.b32.xlu0 %v7711, 64
        %v7757 = vpop.permute.xlu0 %7756
        %7758 = vrot.lane.b32.xlu0 %v7716, 64
        %v7759 = vpop.permute.xlu0 %7758
        %v7765 = vmax.f32 %v7696, %v7751
        %v7766 = vmax.f32 %v7701, %v7753
        %v7767 = vmax.f32 %v7706, %v7755
        %v7768 = vmax.f32 %v7711, %v7757
        %v7769 = vmax.f32 %v7716, %v7759
        %7775 = vrot.lane.b32.xlu0 %v7697, 64
        %v7776 = vpop.permute.xlu0 %7775
        %7777 = vrot.lane.b32.xlu0 %v7702, 64
        %v7778 = vpop.permute.xlu0 %7777
        %7779 = vrot.lane.b32.xlu0 %v7707, 64
        %v7780 = vpop.permute.xlu0 %7779
        %7781 = vrot.lane.b32.xlu0 %v7712, 64
        %v7782 = vpop.permute.xlu0 %7781
        %7783 = vrot.lane.b32.xlu0 %v7717, 64
        %v7784 = vpop.permute.xlu0 %7783
        %v7790 = vmax.f32 %v7697, %v7776
        %v7791 = vmax.f32 %v7702, %v7778
        %v7792 = vmax.f32 %v7707, %v7780
        %v7793 = vmax.f32 %v7712, %v7782
        %v7794 = vmax.f32 %v7717, %v7784
        %7800 = vrot.lane.b32.xlu0 %v7698, 64
        %v7801 = vpop.permute.xlu0 %7800
        %7802 = vrot.lane.b32.xlu0 %v7703, 64
        %v7803 = vpop.permute.xlu0 %7802
        %7804 = vrot.lane.b32.xlu0 %v7708, 64
        %v7805 = vpop.permute.xlu0 %7804
        %7806 = vrot.lane.b32.xlu0 %v7713, 64
        %v7807 = vpop.permute.xlu0 %7806
        %7808 = vrot.lane.b32.xlu0 %v7718, 64
        %v7809 = vpop.permute.xlu0 %7808
        %v7815 = vmax.f32 %v7698, %v7801
        %v7816 = vmax.f32 %v7703, %v7803
        %v7817 = vmax.f32 %v7708, %v7805
        %v7818 = vmax.f32 %v7713, %v7807
        %v7819 = vmax.f32 %v7718, %v7809
        %7825 = vrot.lane.b32.xlu0 %v7699, 64
        %v7826 = vpop.permute.xlu0 %7825
        %7827 = vrot.lane.b32.xlu0 %v7704, 64
        %v7828 = vpop.permute.xlu0 %7827
        %7829 = vrot.lane.b32.xlu0 %v7709, 64
        %v7830 = vpop.permute.xlu0 %7829
        %7831 = vrot.lane.b32.xlu0 %v7714, 64
        %v7832 = vpop.permute.xlu0 %7831
        %7833 = vrot.lane.b32.xlu0 %v7719, 64
        %v7834 = vpop.permute.xlu0 %7833
        %v7840 = vmax.f32 %v7699, %v7826
        %v7841 = vmax.f32 %v7704, %v7828
        %v7842 = vmax.f32 %v7709, %v7830
        %v7843 = vmax.f32 %v7714, %v7832
        %v7844 = vmax.f32 %v7719, %v7834
        %7850 = vrot.lane.b32.xlu0 %v7765, 64
        %v7851 = vpop.permute.xlu0 %7850
        %7852 = vrot.lane.b32.xlu0 %v7766, 64
        %v7853 = vpop.permute.xlu0 %7852
        %7854 = vrot.lane.b32.xlu0 %v7767, 64
        %v7855 = vpop.permute.xlu0 %7854
        %7856 = vrot.lane.b32.xlu0 %v7768, 64
        %v7857 = vpop.permute.xlu0 %7856
        %7858 = vrot.lane.b32.xlu0 %v7769, 64
        %v7859 = vpop.permute.xlu0 %7858
        %7870 = vrot.lane.b32.xlu0 %v7815, 64
        %v7871 = vpop.permute.xlu0 %7870
        %7872 = vrot.lane.b32.xlu0 %v7816, 64
        %v7873 = vpop.permute.xlu0 %7872
        %7874 = vrot.lane.b32.xlu0 %v7817, 64
        %v7875 = vpop.permute.xlu0 %7874
        %7876 = vrot.lane.b32.xlu0 %v7818, 64
        %v7877 = vpop.permute.xlu0 %7876
        %7878 = vrot.lane.b32.xlu0 %v7819, 64
        %v7879 = vpop.permute.xlu0 %7878
        %v7885 = vsel %vm2592, %v7740, %v7851
        %v7886 = vsel %vm2592, %v7741, %v7853
        %v7887 = vsel %vm2592, %v7742, %v7855
        %v7888 = vsel %vm2592, %v7743, %v7857
        %v7889 = vsel %vm2592, %v7744, %v7859
        %v7890 = vsel %vm2592, %v7790, %v7871
        %v7891 = vsel %vm2592, %v7791, %v7873
        %v7892 = vsel %vm2592, %v7792, %v7875
        %v7893 = vsel %vm2592, %v7793, %v7877
        %v7894 = vsel %vm2592, %v7794, %v7879
        %vm7895 = vcmp.gt.f32.partialorder %v7885, 0.0
        %vm7896 = vcmp.gt.f32.partialorder %v7890, 0.0
        %vm7897 = vcmp.gt.f32.partialorder %v7840, 0.0
        %vm7898 = vcmp.gt.f32.partialorder %v7886, 0.0
        %vm7899 = vcmp.gt.f32.partialorder %v7891, 0.0
        %vm7900 = vcmp.gt.f32.partialorder %v7841, 0.0
        %vm7901 = vcmp.gt.f32.partialorder %v7887, 0.0
        %vm7902 = vcmp.gt.f32.partialorder %v7892, 0.0
        %vm7903 = vcmp.gt.f32.partialorder %v7842, 0.0
        %vm7904 = vcmp.gt.f32.partialorder %v7888, 0.0
        %vm7905 = vcmp.gt.f32.partialorder %v7893, 0.0
        %vm7906 = vcmp.gt.f32.partialorder %v7843, 0.0
        %vm7907 = vcmp.gt.f32.partialorder %v7889, 0.0
        %vm7908 = vcmp.gt.f32.partialorder %v7894, 0.0
        %vm7909 = vcmp.gt.f32.partialorder %v7844, 0.0
        %v7910 = vmul.f32 %v7885, 1.442695
        %v7911 = vpow.pop %v7910
        %v7912 = vmul.f32 %v7890, 1.442695
        %v7913 = vpow.pop %v7912
        %v7914 = vmul.f32 %v7840, 1.442695
        %v7915 = vpow.pop %v7914
        %v7916 = vmul.f32 %v7886, 1.442695
        %v7917 = vpow.pop %v7916
        %v7918 = vmul.f32 %v7891, 1.442695
        %v7919 = vpow.pop %v7918
        %v7920 = vmul.f32 %v7841, 1.442695
        %v7921 = vpow.pop %v7920
        %v7922 = vmul.f32 %v7887, 1.442695
        %v7923 = vpow.pop %v7922
        %v7924 = vmul.f32 %v7892, 1.442695
        %v7925 = vpow.pop %v7924
        %v7926 = vmul.f32 %v7842, 1.442695
        %v7927 = vpow.pop %v7926
        %v7928 = vmul.f32 %v7888, 1.442695
        %v7929 = vpow.pop %v7928
        %v7930 = vmul.f32 %v7893, 1.442695
        %v7931 = vpow.pop %v7930
        %v7932 = vmul.f32 %v7843, 1.442695
        %v7933 = vpow.pop %v7932
        %v7934 = vmul.f32 %v7889, 1.442695
        %v7935 = vpow.pop %v7934
        %v7936 = vmul.f32 %v7894, 1.442695
        %v7937 = vpow.pop %v7936
        %v7938 = vmul.f32 %v7844, 1.442695
        %v7939 = vpow.pop %v7938
        %v7940 = vsub.f32 %v7911, 1.0
        %v7941 = vsub.f32 %v7913, 1.0
        %v7942 = vsub.f32 %v7915, 1.0
        %v7943 = vsub.f32 %v7917, 1.0
        %v7944 = vsub.f32 %v7919, 1.0
        %v7945 = vsub.f32 %v7921, 1.0
        %v7946 = vsub.f32 %v7923, 1.0
        %v7947 = vsub.f32 %v7925, 1.0
        %v7948 = vsub.f32 %v7927, 1.0
        %v7949 = vsub.f32 %v7929, 1.0
        %v7950 = vsub.f32 %v7931, 1.0
        %v7951 = vsub.f32 %v7933, 1.0
        %v7952 = vsub.f32 %v7935, 1.0
        %v7953 = vsub.f32 %v7937, 1.0
        %v7954 = vsub.f32 %v7939, 1.0
        %v7955 = vmul.f32 %v7940, 1.6732632
        %v7956 = vmul.f32 %v7941, 1.6732632
        %v7957 = vmul.f32 %v7942, 1.6732632
        %v7958 = vmul.f32 %v7943, 1.6732632
        %v7959 = vmul.f32 %v7944, 1.6732632
        %v7960 = vmul.f32 %v7945, 1.6732632
        %v7961 = vmul.f32 %v7946, 1.6732632
        %v7962 = vmul.f32 %v7947, 1.6732632
        %v7963 = vmul.f32 %v7948, 1.6732632
        %v7964 = vmul.f32 %v7949, 1.6732632
        %v7965 = vmul.f32 %v7950, 1.6732632
        %v7966 = vmul.f32 %v7951, 1.6732632
        %v7967 = vmul.f32 %v7952, 1.6732632
        %v7968 = vmul.f32 %v7953, 1.6732632
        %v7969 = vmul.f32 %v7954, 1.6732632
        %v7970 = vsel %vm7895, %v7885, %v7955
        %v7971 = vsel %vm7896, %v7890, %v7956
        %v7972 = vsel %vm7897, %v7840, %v7957
        %v7973 = vsel %vm7898, %v7886, %v7958
        %v7974 = vsel %vm7899, %v7891, %v7959
        %v7975 = vsel %vm7900, %v7841, %v7960
        %v7976 = vsel %vm7901, %v7887, %v7961
        %v7977 = vsel %vm7902, %v7892, %v7962
        %v7978 = vsel %vm7903, %v7842, %v7963
        %v7979 = vsel %vm7904, %v7888, %v7964
        %v7980 = vsel %vm7905, %v7893, %v7965
        %v7981 = vsel %vm7906, %v7843, %v7966
        %v7982 = vsel %vm7907, %v7889, %v7967
        %v7983 = vsel %vm7908, %v7894, %v7968
        %v7984 = vsel %vm7909, %v7844, %v7969
        %v7985 = vmul.f32 %v7970, 1.050701
        %v7986 = vmul.f32 %v7971, 1.050701
        %v7987 = vmul.f32 %v7972, 1.050701
        %v7988 = vmul.f32 %v7973, 1.050701
        %v7989 = vmul.f32 %v7974, 1.050701
        %v7990 = vmul.f32 %v7975, 1.050701
        %v7991 = vmul.f32 %v7976, 1.050701
        %v7992 = vmul.f32 %v7977, 1.050701
        %v7993 = vmul.f32 %v7978, 1.050701
        %v7994 = vmul.f32 %v7979, 1.050701
        %v7995 = vmul.f32 %v7980, 1.050701
        %v7996 = vmul.f32 %v7981, 1.050701
        %v7997 = vmul.f32 %v7982, 1.050701
        %v7998 = vmul.f32 %v7983, 1.050701
        %v7999 = vmul.f32 %v7984, 1.050701
        %v8000 = vpack.c.bf16 %v7988, %v7985
        %v8001 = vpack.c.bf16 %v7989, %v7986
        %v8002 = vpack.c.bf16 %v7990, %v7987
        %v8003 = vpack.c.bf16 %v7994, %v7991
        %v8004 = vpack.c.bf16 %v7995, %v7992
        %v8005 = vpack.c.bf16 %v7996, %v7993
        %v8006 = vpack.c.bf16 %v7997, %v7997
        %v8007 = vpack.c.bf16 %v7998, %v7998
        %v8008 = vpack.c.bf16 %v7999, %v7999
        %v8009 = vld [vmem:[%s6] sm:$0xff]
        %v8010 = vld [vmem:[%s6 + $0x8] sm:$0xff]
        %v8011 = vld [vmem:[%s6 + $0x10] sm:$0xff]
        %v8012 = vld [vmem:[%s6 + $0x18] sm:$0xff]
        %v8013 = vld [vmem:[%s6 + $0x20] sm:$0xff]
        %v8014 = vld [vmem:[%s6 + $0x28] sm:$0xff]
        %v8015 = vld [vmem:[%s6 + $0x30] sm:$0xff]
        %v8016 = vld [vmem:[%s6 + $0x38] sm:$0xff]
        %v8017 = vld [vmem:[%s6 + $0x40] sm:$0xff]
        %v8018 = vld [vmem:[%s6 + $0x48] sm:$0xff]
        %v8019 = vld [vmem:[%s6 + $0x50] sm:$0xff]
        %v8020 = vld [vmem:[%s6 + $0x58] sm:$0xff]
        %v8021 = vld [vmem:[%s6 + $0x60] sm:$0xff]
        %v8022 = vld [vmem:[%s6 + $0x68] sm:$0xff]
        %v8023 = vld [vmem:[%s6 + $0x70] sm:$0xff]
        %v8024 = vld [vmem:[%s6 + $0x78] sm:$0xff]
        %v8025 = vld [vmem:[%s6 + $0x80] sm:$0xff]
        %v8026 = vld [vmem:[%s6 + $0x88] sm:$0xff]
        %v8027 = vld [vmem:[%s6 + $0x90] sm:$0xff]
        %v8028 = vld [vmem:[%s6 + $0x98] sm:$0xff]
        %v8029 = vld [vmem:[%s6 + $0xa0] sm:$0xff]
        %v8030 = vld [vmem:[%s6 + $0xa8] sm:$0xff]
        %v8031 = vld [vmem:[%s6 + $0xb0] sm:$0xff]
        %v8032 = vld [vmem:[%s6 + $0xb8] sm:$0xff]
        %v8033 = vld [vmem:[%s6 + $0xc0] sm:$0xff]
        %v8034 = vld [vmem:[%s6 + $0xc8] sm:$0xff]
        %v8035 = vld [vmem:[%s6 + $0xd0] sm:$0xff]
        %v8036 = vld [vmem:[%s6 + $0xd8] sm:$0xff]
        %v8037 = vld [vmem:[%s6 + $0xe0] sm:$0xff]
        %v8038 = vld [vmem:[%s6 + $0xe8] sm:$0xff]
        %v8039 = vld [vmem:[%s6 + $0xf0] sm:$0xff]
        %v8040 = vld [vmem:[%s6 + $0xf8] sm:$0xff]
        %v8041 = vld [vmem:[%s6 + $0x100] sm:$0xff]
        %v8042 = vld [vmem:[%s6 + $0x108] sm:$0xff]
        %v8043 = vld [vmem:[%s6 + $0x110] sm:$0xff]
        %v8044 = vld [vmem:[%s6 + $0x118] sm:$0xff]
        %v8045 = vld [vmem:[%s6 + $0x120] sm:$0xff]
        %v8046 = vld [vmem:[%s6 + $0x128] sm:$0xff]
        %v8047 = vld [vmem:[%s6 + $0x130] sm:$0xff]
        %v8048 = vld [vmem:[%s6 + $0x138] sm:$0xff]
        %s8049 = scalar_lea.vmem %s6, 320
        %v8050 = vld [vmem:[%s8049] sm:$0xff]
        %v8051 = vld [vmem:[%s8049 + $0x8] sm:$0xff]
        %v8052 = vld [vmem:[%s8049 + $0x10] sm:$0xff]
        %v8053 = vld [vmem:[%s8049 + $0x18] sm:$0xff]
        %v8054 = vld [vmem:[%s8049 + $0x20] sm:$0xff]
        %v8055 = vld [vmem:[%s8049 + $0x28] sm:$0xff]
        %v8056 = vld [vmem:[%s8049 + $0x30] sm:$0xff]
        %v8057 = vld [vmem:[%s8049 + $0x38] sm:$0xff]
        %v8058 = vld [vmem:[%s8049 + $0x40] sm:$0xff]
        %v8059 = vld [vmem:[%s8049 + $0x48] sm:$0xff]
        %v8060 = vld [vmem:[%s8049 + $0x50] sm:$0xff]
        %v8061 = vld [vmem:[%s8049 + $0x58] sm:$0xff]
        %v8062 = vld [vmem:[%s8049 + $0x60] sm:$0xff]
        %v8063 = vld [vmem:[%s8049 + $0x68] sm:$0xff]
        %v8064 = vld [vmem:[%s8049 + $0x70] sm:$0xff]
        %v8065 = vld [vmem:[%s8049 + $0x78] sm:$0xff]
        %v8066 = vld [vmem:[%s8049 + $0x80] sm:$0xff]
        %v8067 = vld [vmem:[%s8049 + $0x88] sm:$0xff]
        %v8068 = vld [vmem:[%s8049 + $0x90] sm:$0xff]
        %v8069 = vld [vmem:[%s8049 + $0x98] sm:$0xff]
        %v8070 = vld [vmem:[%s8049 + $0xa0] sm:$0xff]
        %v8071 = vld [vmem:[%s8049 + $0xa8] sm:$0xff]
        %v8072 = vld [vmem:[%s8049 + $0xb0] sm:$0xff]
        %v8073 = vld [vmem:[%s8049 + $0xb8] sm:$0xff]
        %v8074 = vld [vmem:[%s8049 + $0xc0] sm:$0xff]
        %v8075 = vld [vmem:[%s8049 + $0xc8] sm:$0xff]
        %v8076 = vld [vmem:[%s8049 + $0xd0] sm:$0xff]
        %v8077 = vld [vmem:[%s8049 + $0xd8] sm:$0xff]
        %v8078 = vld [vmem:[%s8049 + $0xe0] sm:$0xff]
        %v8079 = vld [vmem:[%s8049 + $0xe8] sm:$0xff]
        %v8080 = vld [vmem:[%s8049 + $0xf0] sm:$0xff]
        %v8081 = vld [vmem:[%s8049 + $0xf8] sm:$0xff]
        %v8082 = vld [vmem:[%s8049 + $0x100] sm:$0xff]
        %v8083 = vld [vmem:[%s8049 + $0x108] sm:$0xff]
        %v8084 = vld [vmem:[%s8049 + $0x110] sm:$0xff]
        %v8085 = vld [vmem:[%s8049 + $0x118] sm:$0xff]
        %v8086 = vld [vmem:[%s8049 + $0x120] sm:$0xff]
        %v8087 = vld [vmem:[%s8049 + $0x128] sm:$0xff]
        %v8088 = vld [vmem:[%s8049 + $0x130] sm:$0xff]
        %v8089 = vld [vmem:[%s8049 + $0x138] sm:$0xff]
        %v8096 = vrot.slane %v8000, 4
        %v8097 = vrot.slane %v8003, 4
        %v8098 = vsel %vm3427, %v8096, %v8097
        %v8099 = vrot.slane %v8001, 4
        %v8100 = vrot.slane %v8004, 4
        %v8101 = vsel %vm3427, %v8099, %v8100
        %v8102 = vrot.slane %v8002, 4
        %v8103 = vrot.slane %v8005, 4
        %v8104 = vsel %vm3427, %v8102, %v8103
        %v8149 = vunpack.c.l.b16 %v8050
        %v8150 = vunpack.c.h.b16 %v8050
        %v8151 = vunpack.c.l.b16 %v8051
        %v8152 = vunpack.c.h.b16 %v8051
        %v8153 = vunpack.c.l.b16 %v8052
        %v8154 = vunpack.c.h.b16 %v8052
        %v8155 = vunpack.c.l.b16 %v8053
        %v8156 = vunpack.c.h.b16 %v8053
        %v8157 = vunpack.c.l.b16 %v8054
        %v8158 = vunpack.c.h.b16 %v8054
        %v8159 = vunpack.c.l.b16 %v8055
        %v8160 = vunpack.c.h.b16 %v8055
        %v8161 = vunpack.c.l.b16 %v8056
        %v8162 = vunpack.c.h.b16 %v8056
        %v8163 = vunpack.c.l.b16 %v8057
        %v8164 = vunpack.c.h.b16 %v8057
        %v8165 = vunpack.c.l.b16 %v8058
        %v8166 = vunpack.c.h.b16 %v8058
        %v8167 = vunpack.c.l.b16 %v8059
        %v8168 = vunpack.c.h.b16 %v8059
        %v8169 = vunpack.c.l.b16 %v8060
        %v8170 = vunpack.c.h.b16 %v8060
        %v8171 = vunpack.c.l.b16 %v8061
        %v8172 = vunpack.c.h.b16 %v8061
        %v8173 = vunpack.c.l.b16 %v8062
        %v8174 = vunpack.c.h.b16 %v8062
        %v8175 = vunpack.c.l.b16 %v8063
        %v8176 = vunpack.c.h.b16 %v8063
        %v8177 = vunpack.c.l.b16 %v8064
        %v8178 = vunpack.c.h.b16 %v8064
        %v8179 = vunpack.c.l.b16 %v8065
        %v8180 = vunpack.c.h.b16 %v8065
        %v8181 = vunpack.c.l.b16 %v8066
        %v8182 = vunpack.c.h.b16 %v8066
        %v8183 = vunpack.c.l.b16 %v8067
        %v8184 = vunpack.c.h.b16 %v8067
        %v8185 = vunpack.c.l.b16 %v8068
        %v8186 = vunpack.c.h.b16 %v8068
        %v8187 = vunpack.c.l.b16 %v8069
        %v8188 = vunpack.c.h.b16 %v8069
        %v8189 = vunpack.c.l.b16 %v8070
        %v8190 = vunpack.c.h.b16 %v8070
        %v8191 = vunpack.c.l.b16 %v8071
        %v8192 = vunpack.c.h.b16 %v8071
        %v8193 = vunpack.c.l.b16 %v8072
        %v8194 = vunpack.c.h.b16 %v8072
        %v8195 = vunpack.c.l.b16 %v8073
        %v8196 = vunpack.c.h.b16 %v8073
        %v8197 = vunpack.c.l.b16 %v8074
        %v8198 = vunpack.c.h.b16 %v8074
        %v8199 = vunpack.c.l.b16 %v8075
        %v8200 = vunpack.c.h.b16 %v8075
        %v8201 = vunpack.c.l.b16 %v8076
        %v8202 = vunpack.c.h.b16 %v8076
        %v8203 = vunpack.c.l.b16 %v8077
        %v8204 = vunpack.c.h.b16 %v8077
        %v8205 = vunpack.c.l.b16 %v8078
        %v8206 = vunpack.c.h.b16 %v8078
        %v8207 = vunpack.c.l.b16 %v8079
        %v8208 = vunpack.c.h.b16 %v8079
        %v8209 = vunpack.c.l.b16 %v8080
        %v8210 = vunpack.c.h.b16 %v8080
        %v8211 = vunpack.c.l.b16 %v8081
        %v8212 = vunpack.c.h.b16 %v8081
        %v8213 = vunpack.c.l.b16 %v8082
        %v8214 = vunpack.c.h.b16 %v8082
        %v8215 = vunpack.c.l.b16 %v8083
        %v8216 = vunpack.c.h.b16 %v8083
        %v8217 = vunpack.c.l.b16 %v8084
        %v8218 = vunpack.c.h.b16 %v8084
        %v8219 = vunpack.c.l.b16 %v8085
        %v8220 = vunpack.c.h.b16 %v8085
        %v8221 = vunpack.c.l.b16 %v8086
        %v8222 = vunpack.c.h.b16 %v8086
        %v8223 = vunpack.c.l.b16 %v8087
        %v8224 = vunpack.c.h.b16 %v8087
        %v8225 = vunpack.c.l.b16 %v8088
        %v8226 = vunpack.c.h.b16 %v8088
        %v8227 = vunpack.c.l.b16 %v8089
        %v8228 = vunpack.c.h.b16 %v8089
        %v8229 = vpack.c.b16 %v8151, %v8149
        %v8230 = vpack.c.b16 %v8152, %v8150
        %v8231 = vpack.c.b16 %v8155, %v8153
        %v8232 = vpack.c.b16 %v8156, %v8154
        %v8233 = vpack.c.b16 %v8159, %v8157
        %v8234 = vpack.c.b16 %v8160, %v8158
        %v8235 = vpack.c.b16 %v8163, %v8161
        %v8236 = vpack.c.b16 %v8164, %v8162
        %v8237 = vpack.c.b16 %v8167, %v8165
        %v8238 = vpack.c.b16 %v8168, %v8166
        %v8239 = vpack.c.b16 %v8171, %v8169
        %v8240 = vpack.c.b16 %v8172, %v8170
        %v8241 = vpack.c.b16 %v8175, %v8173
        %v8242 = vpack.c.b16 %v8176, %v8174
        %v8243 = vpack.c.b16 %v8179, %v8177
        %v8244 = vpack.c.b16 %v8180, %v8178
        %v8245 = vpack.c.b16 %v8183, %v8181
        %v8246 = vpack.c.b16 %v8184, %v8182
        %v8247 = vpack.c.b16 %v8187, %v8185
        %v8248 = vpack.c.b16 %v8188, %v8186
        %v8249 = vpack.c.b16 %v8191, %v8189
        %v8250 = vpack.c.b16 %v8192, %v8190
        %v8251 = vpack.c.b16 %v8195, %v8193
        %v8252 = vpack.c.b16 %v8196, %v8194
        %v8253 = vpack.c.b16 %v8199, %v8197
        %v8254 = vpack.c.b16 %v8200, %v8198
        %v8255 = vpack.c.b16 %v8203, %v8201
        %v8256 = vpack.c.b16 %v8204, %v8202
        %v8257 = vpack.c.b16 %v8207, %v8205
        %v8258 = vpack.c.b16 %v8208, %v8206
        %v8259 = vpack.c.b16 %v8211, %v8209
        %v8260 = vpack.c.b16 %v8212, %v8210
        %v8261 = vpack.c.b16 %v8215, %v8213
        %v8262 = vpack.c.b16 %v8216, %v8214
        %v8263 = vpack.c.b16 %v8219, %v8217
        %v8264 = vpack.c.b16 %v8220, %v8218
        %v8265 = vpack.c.b16 %v8223, %v8221
        %v8266 = vpack.c.b16 %v8224, %v8222
        %v8267 = vpack.c.b16 %v8227, %v8225
        %v8268 = vpack.c.b16 %v8228, %v8226
        %v8310 = vsel %vm2592, %v8104, 0
        %v8313 = vsel %vm2592, %v8103, 0
        %8315 = vmatprep.subr.bf16.mxu0 %v8230
        %8316 = vmatpush1.bf16.msra.mxu0 %v8229
        %8317 = vmatprep.subr.bf16.mxu0 %v8232
        %8318 = vmatpush1.bf16.msra.mxu0 %v8231
        %8319 = vmatprep.subr.bf16.mxu0 %v8234
        %8320 = vmatpush1.bf16.msra.mxu0 %v8233
        %8321 = vmatprep.subr.bf16.mxu0 %v8236
        %8322 = vmatpush1.bf16.msra.mxu0 %v8235
        %8323 = vmatprep.subr.bf16.mxu0 %v8238
        %8324 = vmatpush1.bf16.msra.mxu0 %v8237
        %8325 = vmatprep.subr.bf16.mxu0 %v8240
        %8326 = vmatpush1.bf16.msra.mxu0 %v8239
        %8327 = vmatprep.subr.bf16.mxu0 %v8242
        %8328 = vmatpush1.bf16.msra.mxu0 %v8241
        %8329 = vmatprep.subr.bf16.mxu0 %v8244
        %8330 = vmatpush1.bf16.msra.mxu0 %v8243
        %8331 = vmatprep.subr.bf16.mxu0 %v8246
        %8332 = vmatpush1.bf16.msra.mxu0 %v8245
        %8333 = vmatprep.subr.bf16.mxu0 %v8248
        %8334 = vmatpush1.bf16.msra.mxu0 %v8247
        %8335 = vmatprep.subr.bf16.mxu0 %v8250
        %8336 = vmatpush1.bf16.msra.mxu0 %v8249
        %8337 = vmatprep.subr.bf16.mxu0 %v8252
        %8338 = vmatpush1.bf16.msra.mxu0 %v8251
        %8339 = vmatprep.subr.bf16.mxu0 %v8254
        %8340 = vmatpush1.bf16.msra.mxu0 %v8253
        %8341 = vmatprep.subr.bf16.mxu0 %v8256
        %8342 = vmatpush1.bf16.msra.mxu0 %v8255
        %8343 = vmatprep.subr.bf16.mxu0 %v8258
        %8344 = vmatpush1.bf16.msra.mxu0 %v8257
        %8345 = vmatprep.subr.bf16.mxu0 %v8260
        %8346 = vmatpush1.bf16.msra.mxu0 %v8259
        %8347 = vmatprep.mubr.bf16.mxu0 %v8101
        %8348 = vmatmul.mubr.bf16.gmra.mrb[0].mxu0 %v8098
        %v8349 = vpop.f32.mrb[0].mxu0
        %v8350 = vadd.f32 0.0, %v8349
        %v8351 = vpop.f32.mrb[0].mxu0
        %v8352 = vpop.f32.mrb[0].mxu0
        %v8353 = vadd.f32 0.0, %v8352
        %v8354 = vpop.f32.mrb[0].mxu0
        %8355 = vmatprep.mubr.bf16.mxu0 %v8100
        %8356 = vmatmul.mubr.bf16.gmra.mrb[0].mxu0 %v8097
        %v8357 = vpop.f32.mrb[0].mxu0
        %v8358 = vpop.f32.mrb[0].mxu0
        %v8359 = vpop.f32.mrb[0].mxu0
        %v8360 = vpop.f32.mrb[0].mxu0
        %8361 = vdwg.mxu0
        %8362 = vmatprep.subr.bf16.mxu0 %v8262
        %8363 = vmatpush1.bf16.msra.mxu0 %v8261
        %8364 = vmatprep.subr.bf16.mxu0 %v8264
        %8365 = vmatpush1.bf16.msra.mxu0 %v8263
        %8366 = vmatprep.subr.bf16.mxu0 %v8266
        %8367 = vmatpush1.bf16.msra.mxu0 %v8265
        %8368 = vmatprep.subr.bf16.mxu0 %v8268
        %8369 = vmatpush1.bf16.msra.mxu0 %v8267
        %8370 = vmatprep.subr.bf16.mxu0 0
        %8371 = vmatpush1.bf16.msra.mxu0 0
        %8372 = vmatprep.subr.bf16.mxu0 0
        %8373 = vmatpush1.bf16.msra.mxu0 0
        %8374 = vmatprep.subr.bf16.mxu0 0
        %8375 = vmatpush1.bf16.msra.mxu0 0
        %8376 = vmatprep.subr.bf16.mxu0 0
        %8377 = vmatpush1.bf16.msra.mxu0 0
        %8378 = vmatprep.subr.bf16.mxu0 0
        %8379 = vmatpush1.bf16.msra.mxu0 0
        %8380 = vmatprep.subr.bf16.mxu0 0
        %8381 = vmatpush1.bf16.msra.mxu0 0
        %8382 = vmatprep.subr.bf16.mxu0 0
        %8383 = vmatpush1.bf16.msra.mxu0 0
        %8384 = vmatprep.subr.bf16.mxu0 0
        %8385 = vmatpush1.bf16.msra.mxu0 0
        %8386 = vmatprep.subr.bf16.mxu0 0
        %8387 = vmatpush1.bf16.msra.mxu0 0
        %8388 = vmatprep.subr.bf16.mxu0 0
        %8389 = vmatpush1.bf16.msra.mxu0 0
        %8390 = vmatprep.subr.bf16.mxu0 0
        %8391 = vmatpush1.bf16.msra.mxu0 0
        %8392 = vmatprep.subr.bf16.mxu0 0
        %8393 = vmatpush1.bf16.msra.mxu0 0
        %8394 = vmatprep.mubr.bf16.mxu0 0
        %8395 = vmatmul.mubr.bf16.gmra.mrb[0].mxu0 %v8310
        %v8396 = vpop.f32.mrb[0].mxu0
        %v8397 = vadd.f32 %v8350, %v8396
        %v8398 = vpop.f32.mrb[0].mxu0
        %v8399 = vpop.f32.mrb[0].mxu0
        %v8400 = vadd.f32 %v8353, %v8399
        %v8401 = vpop.f32.mrb[0].mxu0
        %8402 = vmatprep.mubr.bf16.mxu0 0
        %8403 = vmatmul.mubr.bf16.gmra.mrb[0].mxu0 %v8313
        %v8404 = vpop.f32.mrb[0].mxu0
        %v8405 = vpop.f32.mrb[0].mxu0
        %v8406 = vpop.f32.mrb[0].mxu0
        %v8407 = vpop.f32.mrb[0].mxu0
        %8408 = vdwg.mxu0
        %v8449 = vunpack.c.l.b16 %v8009
        %v8450 = vunpack.c.h.b16 %v8009
        %v8451 = vunpack.c.l.b16 %v8010
        %v8452 = vunpack.c.h.b16 %v8010
        %v8453 = vunpack.c.l.b16 %v8011
        %v8454 = vunpack.c.h.b16 %v8011
        %v8455 = vunpack.c.l.b16 %v8012
        %v8456 = vunpack.c.h.b16 %v8012
        %v8457 = vunpack.c.l.b16 %v8013
        %v8458 = vunpack.c.h.b16 %v8013
        %v8459 = vunpack.c.l.b16 %v8014
        %v8460 = vunpack.c.h.b16 %v8014
        %v8461 = vunpack.c.l.b16 %v8015
        %v8462 = vunpack.c.h.b16 %v8015
        %v8463 = vunpack.c.l.b16 %v8016
        %v8464 = vunpack.c.h.b16 %v8016
        %v8465 = vunpack.c.l.b16 %v8017
        %v8466 = vunpack.c.h.b16 %v8017
        %v8467 = vunpack.c.l.b16 %v8018
        %v8468 = vunpack.c.h.b16 %v8018
        %v8469 = vunpack.c.l.b16 %v8019
        %v8470 = vunpack.c.h.b16 %v8019
        %v8471 = vunpack.c.l.b16 %v8020
        %v8472 = vunpack.c.h.b16 %v8020
        %v8473 = vunpack.c.l.b16 %v8021
        %v8474 = vunpack.c.h.b16 %v8021
        %v8475 = vunpack.c.l.b16 %v8022
        %v8476 = vunpack.c.h.b16 %v8022
        %v8477 = vunpack.c.l.b16 %v8023
        %v8478 = vunpack.c.h.b16 %v8023
        %v8479 = vunpack.c.l.b16 %v8024
        %v8480 = vunpack.c.h.b16 %v8024
        %v8481 = vunpack.c.l.b16 %v8025
        %v8482 = vunpack.c.h.b16 %v8025
        %v8483 = vunpack.c.l.b16 %v8026
        %v8484 = vunpack.c.h.b16 %v8026
        %v8485 = vunpack.c.l.b16 %v8027
        %v8486 = vunpack.c.h.b16 %v8027
        %v8487 = vunpack.c.l.b16 %v8028
        %v8488 = vunpack.c.h.b16 %v8028
        %v8489 = vunpack.c.l.b16 %v8029
        %v8490 = vunpack.c.h.b16 %v8029
        %v8491 = vunpack.c.l.b16 %v8030
        %v8492 = vunpack.c.h.b16 %v8030
        %v8493 = vunpack.c.l.b16 %v8031
        %v8494 = vunpack.c.h.b16 %v8031
        %v8495 = vunpack.c.l.b16 %v8032
        %v8496 = vunpack.c.h.b16 %v8032
        %v8497 = vunpack.c.l.b16 %v8033
        %v8498 = vunpack.c.h.b16 %v8033
        %v8499 = vunpack.c.l.b16 %v8034
        %v8500 = vunpack.c.h.b16 %v8034
        %v8501 = vunpack.c.l.b16 %v8035
        %v8502 = vunpack.c.h.b16 %v8035
        %v8503 = vunpack.c.l.b16 %v8036
        %v8504 = vunpack.c.h.b16 %v8036
        %v8505 = vunpack.c.l.b16 %v8037
        %v8506 = vunpack.c.h.b16 %v8037
        %v8507 = vunpack.c.l.b16 %v8038
        %v8508 = vunpack.c.h.b16 %v8038
        %v8509 = vunpack.c.l.b16 %v8039
        %v8510 = vunpack.c.h.b16 %v8039
        %v8511 = vunpack.c.l.b16 %v8040
        %v8512 = vunpack.c.h.b16 %v8040
        %v8513 = vunpack.c.l.b16 %v8041
        %v8514 = vunpack.c.h.b16 %v8041
        %v8515 = vunpack.c.l.b16 %v8042
        %v8516 = vunpack.c.h.b16 %v8042
        %v8517 = vunpack.c.l.b16 %v8043
        %v8518 = vunpack.c.h.b16 %v8043
        %v8519 = vunpack.c.l.b16 %v8044
        %v8520 = vunpack.c.h.b16 %v8044
        %v8521 = vunpack.c.l.b16 %v8045
        %v8522 = vunpack.c.h.b16 %v8045
        %v8523 = vunpack.c.l.b16 %v8046
        %v8524 = vunpack.c.h.b16 %v8046
        %v8525 = vunpack.c.l.b16 %v8047
        %v8526 = vunpack.c.h.b16 %v8047
        %v8527 = vunpack.c.l.b16 %v8048
        %v8528 = vunpack.c.h.b16 %v8048
        %v8529 = vpack.c.b16 %v8451, %v8449
        %v8530 = vpack.c.b16 %v8452, %v8450
        %v8531 = vpack.c.b16 %v8455, %v8453
        %v8532 = vpack.c.b16 %v8456, %v8454
        %v8533 = vpack.c.b16 %v8459, %v8457
        %v8534 = vpack.c.b16 %v8460, %v8458
        %v8535 = vpack.c.b16 %v8463, %v8461
        %v8536 = vpack.c.b16 %v8464, %v8462
        %v8537 = vpack.c.b16 %v8467, %v8465
        %v8538 = vpack.c.b16 %v8468, %v8466
        %v8539 = vpack.c.b16 %v8471, %v8469
        %v8540 = vpack.c.b16 %v8472, %v8470
        %v8541 = vpack.c.b16 %v8475, %v8473
        %v8542 = vpack.c.b16 %v8476, %v8474
        %v8543 = vpack.c.b16 %v8479, %v8477
        %v8544 = vpack.c.b16 %v8480, %v8478
        %v8545 = vpack.c.b16 %v8483, %v8481
        %v8546 = vpack.c.b16 %v8484, %v8482
        %v8547 = vpack.c.b16 %v8487, %v8485
        %v8548 = vpack.c.b16 %v8488, %v8486
        %v8549 = vpack.c.b16 %v8491, %v8489
        %v8550 = vpack.c.b16 %v8492, %v8490
        %v8551 = vpack.c.b16 %v8495, %v8493
        %v8552 = vpack.c.b16 %v8496, %v8494
        %v8553 = vpack.c.b16 %v8499, %v8497
        %v8554 = vpack.c.b16 %v8500, %v8498
        %v8555 = vpack.c.b16 %v8503, %v8501
        %v8556 = vpack.c.b16 %v8504, %v8502
        %v8557 = vpack.c.b16 %v8507, %v8505
        %v8558 = vpack.c.b16 %v8508, %v8506
        %v8559 = vpack.c.b16 %v8511, %v8509
        %v8560 = vpack.c.b16 %v8512, %v8510
        %v8561 = vpack.c.b16 %v8515, %v8513
        %v8562 = vpack.c.b16 %v8516, %v8514
        %v8563 = vpack.c.b16 %v8519, %v8517
        %v8564 = vpack.c.b16 %v8520, %v8518
        %v8565 = vpack.c.b16 %v8523, %v8521
        %v8566 = vpack.c.b16 %v8524, %v8522
        %v8567 = vpack.c.b16 %v8527, %v8525
        %v8568 = vpack.c.b16 %v8528, %v8526
        %v8610 = vsel %vm2592, %v8002, 0
        %v8613 = vsel %vm2592, %v8005, 0
        %8615 = vmatprep.subr.bf16.mxu0 %v8530
        %8616 = vmatpush1.bf16.msra.mxu0 %v8529
        %8617 = vmatprep.subr.bf16.mxu0 %v8532
        %8618 = vmatpush1.bf16.msra.mxu0 %v8531
        %8619 = vmatprep.subr.bf16.mxu0 %v8534
        %8620 = vmatpush1.bf16.msra.mxu0 %v8533
        %8621 = vmatprep.subr.bf16.mxu0 %v8536
        %8622 = vmatpush1.bf16.msra.mxu0 %v8535
        %8623 = vmatprep.subr.bf16.mxu0 %v8538
        %8624 = vmatpush1.bf16.msra.mxu0 %v8537
        %8625 = vmatprep.subr.bf16.mxu0 %v8540
        %8626 = vmatpush1.bf16.msra.mxu0 %v8539
        %8627 = vmatprep.subr.bf16.mxu0 %v8542
        %8628 = vmatpush1.bf16.msra.mxu0 %v8541
        %8629 = vmatprep.subr.bf16.mxu0 %v8544
        %8630 = vmatpush1.bf16.msra.mxu0 %v8543
        %8631 = vmatprep.subr.bf16.mxu0 %v8546
        %8632 = vmatpush1.bf16.msra.mxu0 %v8545
        %8633 = vmatprep.subr.bf16.mxu0 %v8548
        %8634 = vmatpush1.bf16.msra.mxu0 %v8547
        %8635 = vmatprep.subr.bf16.mxu0 %v8550
        %8636 = vmatpush1.bf16.msra.mxu0 %v8549
        %8637 = vmatprep.subr.bf16.mxu0 %v8552
        %8638 = vmatpush1.bf16.msra.mxu0 %v8551
        %8639 = vmatprep.subr.bf16.mxu0 %v8554
        %8640 = vmatpush1.bf16.msra.mxu0 %v8553
        %8641 = vmatprep.subr.bf16.mxu0 %v8556
        %8642 = vmatpush1.bf16.msra.mxu0 %v8555
        %8643 = vmatprep.subr.bf16.mxu0 %v8558
        %8644 = vmatpush1.bf16.msra.mxu0 %v8557
        %8645 = vmatprep.subr.bf16.mxu0 %v8560
        %8646 = vmatpush1.bf16.msra.mxu0 %v8559
        %8647 = vmatprep.mubr.bf16.mxu0 %v8001
        %8648 = vmatmul.mubr.bf16.gmra.mrb[0].mxu0 %v8000
        %v8649 = vpop.f32.mrb[0].mxu0
        %v8650 = vadd.f32 %v8397, %v8649
        %v8651 = vpop.f32.mrb[0].mxu0
        %v8652 = vpop.f32.mrb[0].mxu0
        %v8653 = vadd.f32 %v8400, %v8652
        %v8654 = vpop.f32.mrb[0].mxu0
        %8655 = vmatprep.mubr.bf16.mxu0 %v8004
        %8656 = vmatmul.mubr.bf16.gmra.mrb[0].mxu0 %v8003
        %v8657 = vpop.f32.mrb[0].mxu0
        %v8658 = vpop.f32.mrb[0].mxu0
        %v8659 = vpop.f32.mrb[0].mxu0
        %v8660 = vpop.f32.mrb[0].mxu0
        %8661 = vdwg.mxu0
        %8662 = vmatprep.subr.bf16.mxu0 %v8562
        %8663 = vmatpush1.bf16.msra.mxu0 %v8561
        %8664 = vmatprep.subr.bf16.mxu0 %v8564
        %8665 = vmatpush1.bf16.msra.mxu0 %v8563
        %8666 = vmatprep.subr.bf16.mxu0 %v8566
        %8667 = vmatpush1.bf16.msra.mxu0 %v8565
        %8668 = vmatprep.subr.bf16.mxu0 %v8568
        %8669 = vmatpush1.bf16.msra.mxu0 %v8567
        %8670 = vmatprep.subr.bf16.mxu0 0
        %8671 = vmatpush1.bf16.msra.mxu0 0
        %8672 = vmatprep.subr.bf16.mxu0 0
        %8673 = vmatpush1.bf16.msra.mxu0 0
        %8674 = vmatprep.subr.bf16.mxu0 0
        %8675 = vmatpush1.bf16.msra.mxu0 0
        %8676 = vmatprep.subr.bf16.mxu0 0
        %8677 = vmatpush1.bf16.msra.mxu0 0
        %8678 = vmatprep.subr.bf16.mxu0 0
        %8679 = vmatpush1.bf16.msra.mxu0 0
        %8680 = vmatprep.subr.bf16.mxu0 0
        %8681 = vmatpush1.bf16.msra.mxu0 0
        %8682 = vmatprep.subr.bf16.mxu0 0
        %8683 = vmatpush1.bf16.msra.mxu0 0
        %8684 = vmatprep.subr.bf16.mxu0 0
        %8685 = vmatpush1.bf16.msra.mxu0 0
        %8686 = vmatprep.subr.bf16.mxu0 0
        %8687 = vmatpush1.bf16.msra.mxu0 0
        %8688 = vmatprep.subr.bf16.mxu0 0
        %8689 = vmatpush1.bf16.msra.mxu0 0
        %8690 = vmatprep.subr.bf16.mxu0 0
        %8691 = vmatpush1.bf16.msra.mxu0 0
        %8692 = vmatprep.subr.bf16.mxu0 0
        %8693 = vmatpush1.bf16.msra.mxu0 0
        %8694 = vmatprep.mubr.bf16.mxu0 0
        %8695 = vmatmul.mubr.bf16.gmra.mrb[0].mxu0 %v8610
        %v8696 = vpop.f32.mrb[0].mxu0
        %v8697 = vadd.f32 %v8650, %v8696
        %v8698 = vpop.f32.mrb[0].mxu0
        %v8699 = vpop.f32.mrb[0].mxu0
        %v8700 = vadd.f32 %v8653, %v8699
        %v8701 = vpop.f32.mrb[0].mxu0
        %8702 = vmatprep.mubr.bf16.mxu0 0
        %8703 = vmatmul.mubr.bf16.gmra.mrb[0].mxu0 %v8613
        %v8704 = vpop.f32.mrb[0].mxu0
        %v8705 = vpop.f32.mrb[0].mxu0
        %v8706 = vpop.f32.mrb[0].mxu0
        %v8707 = vpop.f32.mrb[0].mxu0
        %8708 = vdwg.mxu0
        %s8709 = scalar_lea.vmem %s6, 640
        %v8710 = vld [vmem:[%s8709] sm:$0xff]
        %v8711 = vld [vmem:[%s8709 + $0x8] sm:$0xff]
        %v8712 = vld [vmem:[%s8709 + $0x10] sm:$0xff]
        %v8713 = vld [vmem:[%s8709 + $0x18] sm:$0xff]
        %v8714 = vld [vmem:[%s8709 + $0x20] sm:$0xff]
        %v8715 = vld [vmem:[%s8709 + $0x28] sm:$0xff]
        %v8716 = vld [vmem:[%s8709 + $0x30] sm:$0xff]
        %v8717 = vld [vmem:[%s8709 + $0x38] sm:$0xff]
        %v8718 = vld [vmem:[%s8709 + $0x40] sm:$0xff]
        %v8719 = vld [vmem:[%s8709 + $0x48] sm:$0xff]
        %v8720 = vld [vmem:[%s8709 + $0x50] sm:$0xff]
        %v8721 = vld [vmem:[%s8709 + $0x58] sm:$0xff]
        %v8722 = vld [vmem:[%s8709 + $0x60] sm:$0xff]
        %v8723 = vld [vmem:[%s8709 + $0x68] sm:$0xff]
        %v8724 = vld [vmem:[%s8709 + $0x70] sm:$0xff]
        %v8725 = vld [vmem:[%s8709 + $0x78] sm:$0xff]
        %v8726 = vld [vmem:[%s8709 + $0x80] sm:$0xff]
        %v8727 = vld [vmem:[%s8709 + $0x88] sm:$0xff]
        %v8728 = vld [vmem:[%s8709 + $0x90] sm:$0xff]
        %v8729 = vld [vmem:[%s8709 + $0x98] sm:$0xff]
        %v8730 = vld [vmem:[%s8709 + $0xa0] sm:$0xff]
        %v8731 = vld [vmem:[%s8709 + $0xa8] sm:$0xff]
        %v8732 = vld [vmem:[%s8709 + $0xb0] sm:$0xff]
        %v8733 = vld [vmem:[%s8709 + $0xb8] sm:$0xff]
        %v8734 = vld [vmem:[%s8709 + $0xc0] sm:$0xff]
        %v8735 = vld [vmem:[%s8709 + $0xc8] sm:$0xff]
        %v8736 = vld [vmem:[%s8709 + $0xd0] sm:$0xff]
        %v8737 = vld [vmem:[%s8709 + $0xd8] sm:$0xff]
        %v8738 = vld [vmem:[%s8709 + $0xe0] sm:$0xff]
        %v8739 = vld [vmem:[%s8709 + $0xe8] sm:$0xff]
        %v8740 = vld [vmem:[%s8709 + $0xf0] sm:$0xff]
        %v8741 = vld [vmem:[%s8709 + $0xf8] sm:$0xff]
        %v8742 = vld [vmem:[%s8709 + $0x100] sm:$0xff]
        %v8743 = vld [vmem:[%s8709 + $0x108] sm:$0xff]
        %v8744 = vld [vmem:[%s8709 + $0x110] sm:$0xff]
        %v8745 = vld [vmem:[%s8709 + $0x118] sm:$0xff]
        %v8746 = vld [vmem:[%s8709 + $0x120] sm:$0xff]
        %v8747 = vld [vmem:[%s8709 + $0x128] sm:$0xff]
        %v8748 = vld [vmem:[%s8709 + $0x130] sm:$0xff]
        %v8749 = vld [vmem:[%s8709 + $0x138] sm:$0xff]
        %v8790 = vunpack.c.l.b16 %v8710
        %v8791 = vunpack.c.h.b16 %v8710
        %v8792 = vunpack.c.l.b16 %v8711
        %v8793 = vunpack.c.h.b16 %v8711
        %v8794 = vunpack.c.l.b16 %v8712
        %v8795 = vunpack.c.h.b16 %v8712
        %v8796 = vunpack.c.l.b16 %v8713
        %v8797 = vunpack.c.h.b16 %v8713
        %v8798 = vunpack.c.l.b16 %v8714
        %v8799 = vunpack.c.h.b16 %v8714
        %v8800 = vunpack.c.l.b16 %v8715
        %v8801 = vunpack.c.h.b16 %v8715
        %v8802 = vunpack.c.l.b16 %v8716
        %v8803 = vunpack.c.h.b16 %v8716
        %v8804 = vunpack.c.l.b16 %v8717
        %v8805 = vunpack.c.h.b16 %v8717
        %v8806 = vunpack.c.l.b16 %v8718
        %v8807 = vunpack.c.h.b16 %v8718
        %v8808 = vunpack.c.l.b16 %v8719
        %v8809 = vunpack.c.h.b16 %v8719
        %v8810 = vunpack.c.l.b16 %v8720
        %v8811 = vunpack.c.h.b16 %v8720
        %v8812 = vunpack.c.l.b16 %v8721
        %v8813 = vunpack.c.h.b16 %v8721
        %v8814 = vunpack.c.l.b16 %v8722
        %v8815 = vunpack.c.h.b16 %v8722
        %v8816 = vunpack.c.l.b16 %v8723
        %v8817 = vunpack.c.h.b16 %v8723
        %v8818 = vunpack.c.l.b16 %v8724
        %v8819 = vunpack.c.h.b16 %v8724
        %v8820 = vunpack.c.l.b16 %v8725
        %v8821 = vunpack.c.h.b16 %v8725
        %v8822 = vunpack.c.l.b16 %v8726
        %v8823 = vunpack.c.h.b16 %v8726
        %v8824 = vunpack.c.l.b16 %v8727
        %v8825 = vunpack.c.h.b16 %v8727
        %v8826 = vunpack.c.l.b16 %v8728
        %v8827 = vunpack.c.h.b16 %v8728
        %v8828 = vunpack.c.l.b16 %v8729
        %v8829 = vunpack.c.h.b16 %v8729
        %v8830 = vunpack.c.l.b16 %v8730
        %v8831 = vunpack.c.h.b16 %v8730
        %v8832 = vunpack.c.l.b16 %v8731
        %v8833 = vunpack.c.h.b16 %v8731
        %v8834 = vunpack.c.l.b16 %v8732
        %v8835 = vunpack.c.h.b16 %v8732
        %v8836 = vunpack.c.l.b16 %v8733
        %v8837 = vunpack.c.h.b16 %v8733
        %v8838 = vunpack.c.l.b16 %v8734
        %v8839 = vunpack.c.h.b16 %v8734
        %v8840 = vunpack.c.l.b16 %v8735
        %v8841 = vunpack.c.h.b16 %v8735
        %v8842 = vunpack.c.l.b16 %v8736
        %v8843 = vunpack.c.h.b16 %v8736
        %v8844 = vunpack.c.l.b16 %v8737
        %v8845 = vunpack.c.h.b16 %v8737
        %v8846 = vunpack.c.l.b16 %v8738
        %v8847 = vunpack.c.h.b16 %v8738
        %v8848 = vunpack.c.l.b16 %v8739
        %v8849 = vunpack.c.h.b16 %v8739
        %v8850 = vunpack.c.l.b16 %v8740
        %v8851 = vunpack.c.h.b16 %v8740
        %v8852 = vunpack.c.l.b16 %v8741
        %v8853 = vunpack.c.h.b16 %v8741
        %v8854 = vunpack.c.l.b16 %v8742
        %v8855 = vunpack.c.h.b16 %v8742
        %v8856 = vunpack.c.l.b16 %v8743
        %v8857 = vunpack.c.h.b16 %v8743
        %v8858 = vunpack.c.l.b16 %v8744
        %v8859 = vunpack.c.h.b16 %v8744
        %v8860 = vunpack.c.l.b16 %v8745
        %v8861 = vunpack.c.h.b16 %v8745
        %v8862 = vunpack.c.l.b16 %v8746
        %v8863 = vunpack.c.h.b16 %v8746
        %v8864 = vunpack.c.l.b16 %v8747
        %v8865 = vunpack.c.h.b16 %v8747
        %v8866 = vunpack.c.l.b16 %v8748
        %v8867 = vunpack.c.h.b16 %v8748
        %v8868 = vunpack.c.l.b16 %v8749
        %v8869 = vunpack.c.h.b16 %v8749
        %v8870 = vpack.c.b16 %v8792, %v8790
        %v8871 = vpack.c.b16 %v8793, %v8791
        %v8872 = vpack.c.b16 %v8796, %v8794
        %v8873 = vpack.c.b16 %v8797, %v8795
        %v8874 = vpack.c.b16 %v8800, %v8798
        %v8875 = vpack.c.b16 %v8801, %v8799
        %v8876 = vpack.c.b16 %v8804, %v8802
        %v8877 = vpack.c.b16 %v8805, %v8803
        %v8878 = vpack.c.b16 %v8808, %v8806
        %v8879 = vpack.c.b16 %v8809, %v8807
        %v8880 = vpack.c.b16 %v8812, %v8810
        %v8881 = vpack.c.b16 %v8813, %v8811
        %v8882 = vpack.c.b16 %v8816, %v8814
        %v8883 = vpack.c.b16 %v8817, %v8815
        %v8884 = vpack.c.b16 %v8820, %v8818
        %v8885 = vpack.c.b16 %v8821, %v8819
        %v8886 = vpack.c.b16 %v8824, %v8822
        %v8887 = vpack.c.b16 %v8825, %v8823
        %v8888 = vpack.c.b16 %v8828, %v8826
        %v8889 = vpack.c.b16 %v8829, %v8827
        %v8890 = vpack.c.b16 %v8832, %v8830
        %v8891 = vpack.c.b16 %v8833, %v8831
        %v8892 = vpack.c.b16 %v8836, %v8834
        %v8893 = vpack.c.b16 %v8837, %v8835
        %v8894 = vpack.c.b16 %v8840, %v8838
        %v8895 = vpack.c.b16 %v8841, %v8839
        %v8896 = vpack.c.b16 %v8844, %v8842
        %v8897 = vpack.c.b16 %v8845, %v8843
        %v8898 = vpack.c.b16 %v8848, %v8846
        %v8899 = vpack.c.b16 %v8849, %v8847
        %v8900 = vpack.c.b16 %v8852, %v8850
        %v8901 = vpack.c.b16 %v8853, %v8851
        %v8902 = vpack.c.b16 %v8856, %v8854
        %v8903 = vpack.c.b16 %v8857, %v8855
        %v8904 = vpack.c.b16 %v8860, %v8858
        %v8905 = vpack.c.b16 %v8861, %v8859
        %v8906 = vpack.c.b16 %v8864, %v8862
        %v8907 = vpack.c.b16 %v8865, %v8863
        %v8908 = vpack.c.b16 %v8868, %v8866
        %v8909 = vpack.c.b16 %v8869, %v8867
        %v8951 = vsel %vm2592, %v8008, 0
        %8953 = vmatprep.subr.bf16.mxu0 %v8871
        %8954 = vmatpush1.bf16.msra.mxu0 %v8870
        %8955 = vmatprep.subr.bf16.mxu0 %v8873
        %8956 = vmatpush1.bf16.msra.mxu0 %v8872
        %8957 = vmatprep.subr.bf16.mxu0 %v8875
        %8958 = vmatpush1.bf16.msra.mxu0 %v8874
        %8959 = vmatprep.subr.bf16.mxu0 %v8877
        %8960 = vmatpush1.bf16.msra.mxu0 %v8876
        %8961 = vmatprep.subr.bf16.mxu0 %v8879
        %8962 = vmatpush1.bf16.msra.mxu0 %v8878
        %8963 = vmatprep.subr.bf16.mxu0 %v8881
        %8964 = vmatpush1.bf16.msra.mxu0 %v8880
        %8965 = vmatprep.subr.bf16.mxu0 %v8883
        %8966 = vmatpush1.bf16.msra.mxu0 %v8882
        %8967 = vmatprep.subr.bf16.mxu0 %v8885
        %8968 = vmatpush1.bf16.msra.mxu0 %v8884
        %8969 = vmatprep.subr.bf16.mxu0 %v8887
        %8970 = vmatpush1.bf16.msra.mxu0 %v8886
        %8971 = vmatprep.subr.bf16.mxu0 %v8889
        %8972 = vmatpush1.bf16.msra.mxu0 %v8888
        %8973 = vmatprep.subr.bf16.mxu0 %v8891
        %8974 = vmatpush1.bf16.msra.mxu0 %v8890
        %8975 = vmatprep.subr.bf16.mxu0 %v8893
        %8976 = vmatpush1.bf16.msra.mxu0 %v8892
        %8977 = vmatprep.subr.bf16.mxu0 %v8895
        %8978 = vmatpush1.bf16.msra.mxu0 %v8894
        %8979 = vmatprep.subr.bf16.mxu0 %v8897
        %8980 = vmatpush1.bf16.msra.mxu0 %v8896
        %8981 = vmatprep.subr.bf16.mxu0 %v8899
        %8982 = vmatpush1.bf16.msra.mxu0 %v8898
        %8983 = vmatprep.subr.bf16.mxu0 %v8901
        %8984 = vmatpush1.bf16.msra.mxu0 %v8900
        %8985 = vmatprep.mubr.bf16.mxu0 %v8004
        %8986 = vmatmul.mubr.bf16.gmra.mrb[0].mxu0 %v8003
        %v8987 = vpop.f32.mrb[0].mxu0
        %v8988 = vadd.f32 0.0, %v8987
        %v8989 = vpop.f32.mrb[0].mxu0
        %v8990 = vpop.f32.mrb[0].mxu0
        %v8991 = vadd.f32 0.0, %v8990
        %v8992 = vpop.f32.mrb[0].mxu0
        %8993 = vmatprep.mubr.bf16.mxu0 %v8007
        %8994 = vmatmul.mubr.bf16.gmra.mrb[0].mxu0 %v8006
        %v8995 = vpop.f32.mrb[0].mxu0
        %v8996 = vpop.f32.mrb[0].mxu0
        %v8997 = vpop.f32.mrb[0].mxu0
        %v8998 = vpop.f32.mrb[0].mxu0
        %8999 = vdwg.mxu0
        %9000 = vmatprep.subr.bf16.mxu0 %v8903
        %9001 = vmatpush1.bf16.msra.mxu0 %v8902
        %9002 = vmatprep.subr.bf16.mxu0 %v8905
        %9003 = vmatpush1.bf16.msra.mxu0 %v8904
        %9004 = vmatprep.subr.bf16.mxu0 %v8907
        %9005 = vmatpush1.bf16.msra.mxu0 %v8906
        %9006 = vmatprep.subr.bf16.mxu0 %v8909
        %9007 = vmatpush1.bf16.msra.mxu0 %v8908
        %9008 = vmatprep.subr.bf16.mxu0 0
        %9009 = vmatpush1.bf16.msra.mxu0 0
        %9010 = vmatprep.subr.bf16.mxu0 0
        %9011 = vmatpush1.bf16.msra.mxu0 0
        %9012 = vmatprep.subr.bf16.mxu0 0
        %9013 = vmatpush1.bf16.msra.mxu0 0
        %9014 = vmatprep.subr.bf16.mxu0 0
        %9015 = vmatpush1.bf16.msra.mxu0 0
        %9016 = vmatprep.subr.bf16.mxu0 0
        %9017 = vmatpush1.bf16.msra.mxu0 0
        %9018 = vmatprep.subr.bf16.mxu0 0
        %9019 = vmatpush1.bf16.msra.mxu0 0
        %9020 = vmatprep.subr.bf16.mxu0 0
        %9021 = vmatpush1.bf16.msra.mxu0 0
        %9022 = vmatprep.subr.bf16.mxu0 0
        %9023 = vmatpush1.bf16.msra.mxu0 0
        %9024 = vmatprep.subr.bf16.mxu0 0
        %9025 = vmatpush1.bf16.msra.mxu0 0
        %9026 = vmatprep.subr.bf16.mxu0 0
        %9027 = vmatpush1.bf16.msra.mxu0 0
        %9028 = vmatprep.subr.bf16.mxu0 0
        %9029 = vmatpush1.bf16.msra.mxu0 0
        %9030 = vmatprep.subr.bf16.mxu0 0
        %9031 = vmatpush1.bf16.msra.mxu0 0
        %9032 = vmatprep.mubr.bf16.mxu0 0
        %9033 = vmatmul.mubr.bf16.gmra.mrb[0].mxu0 %v8613
        %v9034 = vpop.f32.mrb[0].mxu0
        %v9035 = vadd.f32 %v8988, %v9034
        %v9036 = vpop.f32.mrb[0].mxu0
        %v9037 = vpop.f32.mrb[0].mxu0
        %v9038 = vadd.f32 %v8991, %v9037
        %v9039 = vpop.f32.mrb[0].mxu0
        %9040 = vmatprep.mubr.bf16.mxu0 0
        %9041 = vmatmul.mubr.bf16.gmra.mrb[0].mxu0 %v8951
        %v9042 = vpop.f32.mrb[0].mxu0
        %v9043 = vpop.f32.mrb[0].mxu0
        %v9044 = vpop.f32.mrb[0].mxu0
        %v9045 = vpop.f32.mrb[0].mxu0
        %9046 = vdwg.mxu0
        %v9047 = vadd.f32 %v8697, %v9035
        %v9048 = vadd.f32 %v8700, %v9038
        %v9049 = vld [vmem:[#allocation11] sm:$0x3]
        %v9051 = vlaneseq
        %v9052 = vshrl.u32 %v9051, 7
        %v9053 = vsub.s32 0, %v9052
        %v9054 = vrot.slane %v9049, %v9053
        %v9056 = vadd.f32 %v9047, %v9054
        %v9057 = vadd.f32 %v9048, %v9054
        %v9058 = vmax.f32 %v9056, %v9057
        %9060 = vrot.lane.b32.xlu0 %v9058, 64
        %v9061 = vpop.permute.xlu0 %9060
        %v9063 = vmax.f32 %v9058, %v9061
        %vm9064 = vcmp.gt.f32.partialorder %v9063, 0.0
        %v9065 = vmul.f32 %v9063, 1.442695
        %v9066 = vpow.pop %v9065
        %v9067 = vsub.f32 %v9066, 1.0
        %v9068 = vmul.f32 %v9067, 1.6732632
        %v9069 = vsel %vm9064, %v9063, %v9068
        %v9070 = vmul.f32 %v9069, 1.050701
        %v9071 = vpack.c.bf16 %v9070, %v9070
        %v9072 = vld [vmem:[%s8] sm:$0xf]
        %v9073 = vld [vmem:[%s8 + $0x4] sm:$0xf]
        %v9074 = vld [vmem:[%s8 + $0x8] sm:$0xf]
        %v9075 = vld [vmem:[%s8 + $0xc] sm:$0xf]
        %v9076 = vld [vmem:[%s8 + $0x10] sm:$0xf]
        %v9077 = vld [vmem:[%s8 + $0x14] sm:$0xf]
        %v9078 = vld [vmem:[%s8 + $0x18] sm:$0xf]
        %v9079 = vld [vmem:[%s8 + $0x1c] sm:$0xf]
        %v9080 = vld [vmem:[#allocation13] sm:$0x1]
        %v9082 = vlaneseq
        %v9083 = vshrl.u32 %v9082, 7
        %v9084 = vsub.s32 0, %v9083
        %v9085 = vrot.slane %v9080, %v9084
        %v9095 = vunpack.c.l.b16 %v9072
        %v9096 = vunpack.c.l.b16 %v9073
        %v9097 = vunpack.c.l.b16 %v9074
        %v9098 = vunpack.c.l.b16 %v9075
        %v9099 = vunpack.c.l.b16 %v9076
        %v9100 = vunpack.c.l.b16 %v9077
        %v9101 = vunpack.c.l.b16 %v9078
        %v9102 = vunpack.c.l.b16 %v9079
        %v9103 = vpack.c.b16 %v9096, %v9095
        %v9104 = vpack.c.b16 %v9098, %v9097
        %v9105 = vpack.c.b16 %v9100, %v9099
        %v9106 = vpack.c.b16 %v9102, %v9101
        %v9112 = vsel %vm2592, %v9071, 0
        %9114 = vmatprep.subr.bf16.mxu0 0
        %9115 = vmatpush1.bf16.msra.mxu0 %v9103
        %9116 = vmatprep.subr.bf16.mxu0 0
        %9117 = vmatpush1.bf16.msra.mxu0 %v9104
        %9118 = vmatprep.subr.bf16.mxu0 0
        %9119 = vmatpush1.bf16.msra.mxu0 %v9105
        %9120 = vmatprep.subr.bf16.mxu0 0
        %9121 = vmatpush1.bf16.msra.mxu0 %v9106
        %9122 = vmatprep.subr.bf16.mxu0 0
        %9123 = vmatpush1.bf16.msra.mxu0 0
        %9124 = vmatprep.subr.bf16.mxu0 0
        %9125 = vmatpush1.bf16.msra.mxu0 0
        %9126 = vmatprep.subr.bf16.mxu0 0
        %9127 = vmatpush1.bf16.msra.mxu0 0
        %9128 = vmatprep.subr.bf16.mxu0 0
        %9129 = vmatpush1.bf16.msra.mxu0 0
        %9130 = vmatprep.subr.bf16.mxu0 0
        %9131 = vmatpush1.bf16.msra.mxu0 0
        %9132 = vmatprep.subr.bf16.mxu0 0
        %9133 = vmatpush1.bf16.msra.mxu0 0
        %9134 = vmatprep.subr.bf16.mxu0 0
        %9135 = vmatpush1.bf16.msra.mxu0 0
        %9136 = vmatprep.subr.bf16.mxu0 0
        %9137 = vmatpush1.bf16.msra.mxu0 0
        %9138 = vmatprep.subr.bf16.mxu0 0
        %9139 = vmatpush1.bf16.msra.mxu0 0
        %9140 = vmatprep.subr.bf16.mxu0 0
        %9141 = vmatpush1.bf16.msra.mxu0 0
        %9142 = vmatprep.subr.bf16.mxu0 0
        %9143 = vmatpush1.bf16.msra.mxu0 0
        %9144 = vmatprep.subr.bf16.mxu0 0
        %9145 = vmatpush1.bf16.msra.mxu0 0
        %9146 = vmatprep.mubr.bf16.mxu0 0
        %9147 = vmatmul.mubr.bf16.gmra.mrb[0].mxu0 %v9112
        %v9148 = vpop.f32.mrb[0].mxu0
        %v9149 = vadd.f32 %v9085, %v9148
        %v9150 = vpop.f32.mrb[0].mxu0
        %v9151 = vpop.f32.mrb[0].mxu0
        %v9152 = vpop.f32.mrb[0].mxu0
        %9153 = vdwg.mxu0
        %v9154 = vmax.f32 %v9149, -17.0
        %v9155 = vmin.f32 %v9154, 10.0
        %v9156 = vmul.f32 %v9155, 1.442695
        %v9157 = vpow.pop %v9156
        %v9158 = vrsqrt.pop %v9157
        %v9159 = vmul.f32 %v9157, %v9158
        %vm9160 = vcmp.eq.f32.partialorder %v9157, inf
        %v9161 = vsel %vm9160, %v9157, %v9159
        %vm9162 = vcmp.eq.f32.partialorder %v9157, 0.0
        %v9163 = vand.u32 %v9157, 2147483648
        %v9164 = vsel %vm9162, %v9163, %v9161
        %v9165 = vld [vmem:[%s471] sm:$0xff]
        %9167 = vrot.lane.b32.xlu0 %v9165, 16
        %v9168 = vpop.permute.xlu0 %9167
        %v9170 = vmul.f32 %v9164, %v9168
        %9172 = vrot.lane.b32.xlu0 %v9170, 112
        %v9173 = vpop.permute.xlu0 %9172
        %v9175 = vadd.f32 %v9149, %v9173
        %9177 = vrot.lane.b32.xlu0 %v9175, 32
        %v9178 = vpop.permute.xlu0 %9177
        %vm9180 = vcmask 130048
        %v9181 = vsel %vm9180, %v9149, %v9157
        %v9182 = vsel %vm2578, %v9181, %v9178
        %vm9183 = vcmask 392192
        %v9184 = vsel %vm9183, %v9182, 0.0
        %9185 = vst [vmem:[%s467] sm:$0xff] %v9184
        %s9186 = sand.u32 %s258, 1
        %s9187 = scalar_lea.sflag [#allocation4], %s9186
        %s9188 = sand.u32 %s258, 1
        %s9189 = smul.addr %s9188, 8
        %s9190 = scalar_lea.vmem [#allocation14], %s9189
        // Predicated region
        $region89: #{tpu_custom_call.1} parent=59 // pred_check
          %p9191 = pneg %p268
        $region90: #{tpu_custom_call.1} parent=59 // pred_check_branch
          %9193 = sbr.rel (%p9191) target = $region92
        $region91: #{tpu_custom_call.1} parent=59 // pred_region
          %s9195 = ssub.s32 128, 128
          %9196 = vsyncadd %s9187, %s9195
          %s9197 = smul.addr %s30, 128
          %s9198 = scalar_lea.hbm %s10, %s9197
          %s9200 = sshll.u32 %s9190, 4
          %s9201 = int_to_ptr.vmem [resolvable:$true] %s9200
          %9203 = dma.vmem_to_hbm [thread:$0]  %s9201, 128, %s9198, %s9187
        $region92: #{tpu_custom_call.1} parent=59 // pred_fallthru
          _
      $region60: #{tpu_custom_call.1} parent=5 // pred_fallthru
        _
      %p9204 = scmp.le.s32.totalorder 2, %s25
      // Predicated region
      $region93: #{tpu_custom_call.1} parent=5 // pred_check
        %p9205 = pneg %p9204
      $region94: #{tpu_custom_call.1} parent=5 // pred_check_branch
        %9207 = sbr.rel (%p9205) target = $region96
      $region95: #{tpu_custom_call.1} parent=5 // pred_region
        %s9208 = ssub.s32 %s25, 2
        // Predicated region
        $region97: #{tpu_custom_call.1} parent=95 // pred_check
          %p9209 = pneg %p274
        $region98: #{tpu_custom_call.1} parent=95 // pred_check_branch
          %9211 = sbr.rel (%p9209) target = $region100
        $region99: #{tpu_custom_call.1} parent=95 // pred_region
          %s9212 = sand.u32 %s259, 1
          %s9213 = scalar_lea.sflag [#allocation4], %s9212
          %s9214 = sand.u32 %s259, 1
          %s9215 = smul.addr %s9214, 8
          %s9216 = scalar_lea.vmem [#allocation14], %s9215
          %9217 = dma.done %s9213, 128
        $region100: #{tpu_custom_call.1} parent=95 // pred_fallthru
          _
      $region96: #{tpu_custom_call.1} parent=5 // pred_fallthru
        _
    $region6: #{tpu_custom_call.1} parent=1 // loop_footer
      %s29 = sadd.s32 1, %s25
    $region7: #{tpu_custom_call.1} parent=1 // loop_footer_branch
      %24 = sbr.rel target = $region3
    $region8: #{tpu_custom_call.1} parent=1 // loop_exit
      _
    %9218 = vsyncpa [#allocation3], 1
    %s9219 = scalar_lea.sflag [#allocation3], 1
    %9220 = vsyncpa %s9219, 1
    %9221 = vsyncpa [#allocation6], 1
    %9222 = vsyncpa [#allocation9], 1
    %9223 = vsyncpa [#allocation12], 1
    %9224 = vsyncpa [#allocation4], 1
    %s9225 = scalar_lea.sflag [#allocation4], 1
    %9226 = vsyncpa %s9225, 1

</llo_original>
